<compile_context>
chip_gen: v7x
topology: tpu7x:2x2x1
jax: 0.10.0
libtpu: 0.0.40
codegen_flags: <defaults>
</compile_context>

<pallas_src>
import jax
import jax.numpy as jnp
from jax import lax
from jax.experimental import pallas as pl
from jax.experimental.pallas import tpu as pltpu


def _round_up(x, m):
    return (x + m - 1) // m * m


# ----------------------------------------------------------------------------
# Recurrent kernel: only the h-dependent part of GRU-D.
# ----------------------------------------------------------------------------
def grud_recurrent_kernel(pre_ref, dh_ref, wzr_ref, wh_ref, out_ref, h_scr):
    """Sequential GRU-D recurrence over one chunk of time steps.

    pre_ref : (TC, Bt, 3*Hp)  h-independent gate pre-activations [z | r | h~]
    dh_ref  : (TC, Bt, Hp)    hidden decay exp(-relu(gamma_h(delta)))
    wzr_ref : (Hp, 2*Hp)      fused [Wz_h | Wr_h]
    wh_ref  : (Hp, Hp)        Wh_h
    out_ref : (TC, Bt, Hp)    per-step hidden states
    h_scr   : (Bt, Hp) f32    hidden state, persists across grid iterations
    """
    Hp = dh_ref.shape[-1]
    tc = pre_ref.shape[0]
    wdt = wzr_ref.dtype

    # chunk axis (axis 1 of the grid) restarts the recurrence per batch block
    @pl.when(pl.program_id(1) == 0)
    def _():
        h_scr[...] = jnp.zeros_like(h_scr)

    def body(s, h):
        hd = dh_ref[s] * h                                    # decayed hidden (Bt, Hp)
        pre = pre_ref[s]                                      # (Bt, 3Hp)
        zr = jnp.dot(hd.astype(wdt), wzr_ref[...],
                     preferred_element_type=jnp.float32)      # (Bt, 2Hp)
        z = jax.nn.sigmoid(pre[:, :Hp] + zr[:, :Hp])
        r = jax.nn.sigmoid(pre[:, Hp:2 * Hp] + zr[:, Hp:])
        ht = jnp.tanh(pre[:, 2 * Hp:]
                      + jnp.dot((r * hd).astype(wdt), wh_ref[...],
                                preferred_element_type=jnp.float32))
        h_new = (1.0 - z) * hd + z * ht
        out_ref[s] = h_new.astype(out_ref.dtype)
        return h_new

    h_scr[...] = lax.fori_loop(0, tc, body, h_scr[...], unroll=True)


# ----------------------------------------------------------------------------
# Wrapper: hoisted precompute (plain XLA) + padded, chunked pallas_call.
# ----------------------------------------------------------------------------
def grud_forward(x, mask, delta_t, params, output_last=False,
                 time_chunk=8, matmul_dtype=jnp.float32):
    B, T, D = x.shape
    H = params["wz_h"].shape[0]
    steps = T - 1

    # ---------- h-independent work, hoisted out of the recurrence ----------
    now_x = x[:, 1:]                                          # (B, steps, D)
    last_x = x[:, :-1]
    m = mask[:, 1:]
    d = delta_t[:, 1:, None]                                  # (B, steps, 1)

    gx = d * params["wgx"] + params["bgx"]                    # (B, steps, D)
    dx = jnp.exp(-jnp.maximum(gx, 0.0))
    x_imp = m * now_x + (1.0 - m) * (dx * last_x + (1.0 - dx) * params["x_mean"])

    gh = d * params["wgh"] + params["bgh"]                    # (B, steps, H)
    dh = jnp.exp(-jnp.maximum(gh, 0.0))

    # fused input/mask projections, one big MXU-friendly matmul
    Wx = jnp.concatenate([params["wz_x"], params["wr_x"], params["wh_x"]], axis=1)  # (D,3H)
    Wm = jnp.concatenate([params["wz_m"], params["wr_m"], params["wh_m"]], axis=1)  # (D,3H)
    bc = jnp.concatenate([params["bz"], params["br"], params["bh"]], axis=1)        # (1,3H)
    pre = (jnp.einsum("bsd,dh->bsh", x_imp, Wx)
           + jnp.einsum("bsd,dh->bsh", m, Wm) + bc)           # (B, steps, 3H)

    # ---------- padding: lane-dense Hp (x128), sublane-aligned Bp (x8) ----------
    Hp = _round_up(H, 128)
    Bp = _round_up(B, 8)
    tc = max(1, min(time_chunk, steps))
    steps_pad = _round_up(steps, tc)

    def pad_gate(a):                                          # (..., H) -> (..., Hp)
        return jnp.pad(a, [(0, 0)] * (a.ndim - 1) + [(0, Hp - H)])

    pre = jnp.concatenate(
        [pad_gate(pre[..., i * H:(i + 1) * H]) for i in range(3)], axis=-1)  # (B,steps,3Hp)
    dh = pad_gate(dh)                                                        # (B,steps,Hp)

    # time-major; pad batch and time (zero padding keeps padded lanes at 0)
    pre_t = jnp.transpose(pre, (1, 0, 2))
    dh_t = jnp.transpose(dh, (1, 0, 2))
    pre_t = jnp.pad(pre_t, ((0, steps_pad - steps), (0, Bp - B), (0, 0)))
    dh_t = jnp.pad(dh_t, ((0, steps_pad - steps), (0, Bp - B), (0, 0)))

    def pad_hh(w):                                            # (H,H) -> (Hp,Hp)
        return jnp.pad(w, ((0, Hp - H), (0, Hp - H)))

    wzr = jnp.concatenate([pad_hh(params["wz_h"]), pad_hh(params["wr_h"])],
                          axis=1).astype(matmul_dtype)        # (Hp, 2Hp)
    whh = pad_hh(params["wh_h"]).astype(matmul_dtype)         # (Hp, Hp)

    nchunks = steps_pad // tc
    bt = Bp                # one batch block here; larger B can be tiled and the
    nb = Bp // bt          # "parallel" axis sharded across v7x's 2 TensorCores

    grid_spec = pltpu.PrefetchScalarGridSpec(
        num_scalar_prefetch=0,
        grid=(nb, nchunks),
        in_specs=[
            pl.BlockSpec((tc, bt, 3 * Hp), lambda b, c: (c, b, 0)),   # pre-activations
            pl.BlockSpec((tc, bt, Hp), lambda b, c: (c, b, 0)),       # hidden decay
            pl.BlockSpec((Hp, 2 * Hp), lambda b, c: (0, 0)),          # [Wz_h|Wr_h]
            pl.BlockSpec((Hp, Hp), lambda b, c: (0, 0)),              # Wh_h
        ],
        out_specs=pl.BlockSpec((tc, bt, Hp), lambda b, c: (c, b, 0)),
        scratch_shapes=[pltpu.VMEM((bt, Hp), jnp.float32)],
    )

    out_pad = pl.pallas_call(
        grud_recurrent_kernel,
        out_shape=jax.ShapeDtypeStruct((steps_pad, Bp, Hp), jnp.float32),
        grid_spec=grid_spec,
        compiler_params=pltpu.CompilerParams(
            dimension_semantics=("parallel", "arbitrary")),   # time axis is recurrent
    )(pre_t, dh_t, wzr, whh)

    out = jnp.transpose(out_pad[:steps, :B, :H], (1, 0, 2))   # (B, steps, H)
    return out[:, -1] if output_last else out


# ----------------------------------------------------------------------------
# Pure-JAX reference mirroring the PyTorch module step-for-step.
# ----------------------------------------------------------------------------
def grud_reference(x, mask, delta_t, params, output_last=False):
    B, T, D = x.shape
    H = params["wz_h"].shape[0]
    x_mean = params["x_mean"]

    def step(h, inputs):
        xt, xl, mt, dt = inputs
        dt = dt[:, None]
        gx = dt * params["wgx"] + params["bgx"]
        gh = dt * params["wgh"] + params["bgh"]
        dx = jnp.exp(-jnp.maximum(gx, 0.0))
        dhh = jnp.exp(-jnp.maximum(gh, 0.0))
        xi = mt * xt + (1 - mt) * (dx * xl + (1 - dx) * x_mean)
        h = dhh * h
        lin = lambda a, b, c, wa, wb, wc, bias: a @ wa + b @ wb + c @ wc + bias
        z = jax.nn.sigmoid(lin(xi, h, mt, params["wz_x"], params["wz_h"],
                               params["wz_m"], params["bz"]))
        r = jax.nn.sigmoid(lin(xi, h, mt, params["wr_x"], params["wr_h"],
                               params["wr_m"], params["br"]))
        ht = jnp.tanh(lin(xi, r * h, mt, params["wh_x"], params["wh_h"],
                          params["wh_m"], params["bh"]))
        h = (1 - z) * h + z * ht
        return h, h

    seq = (jnp.transpose(x[:, 1:], (1, 0, 2)),
           jnp.transpose(x[:, :-1], (1, 0, 2)),
           jnp.transpose(mask[:, 1:], (1, 0, 2)),
           jnp.transpose(delta_t[:, 1:], (1, 0)))
    _, hs = jax.lax.scan(step, jnp.zeros((B, H), jnp.float32), seq)
    out = jnp.transpose(hs, (1, 0, 2))
    return out[:, -1] if output_last else out


def init_params(key, D, H):
    """Deterministic init following nn.Linear U(-1/sqrt(fan_in), 1/sqrt(fan_in))."""
    keys = jax.random.split(key, 16)
    kI = 2 * D + H
    ks = 1.0 / jnp.sqrt(jnp.float32(kI))
    k1 = 1.0                                   # fan_in = 1 for gamma linears

    def u(k, shape, scale):
        return jax.random.uniform(k, shape, jnp.float32, -scale, scale)

    # zl / rl / hl weights stored transposed (in_features, H) and split into
    # [x | h | mask] row blocks matching torch.cat((x, h, mask), 1).
    Wz = u(keys[0], (kI, H), ks); Wr = u(keys[1], (kI, H), ks); Wh = u(keys[2], (kI, H), ks)
    params = {
        "x_mean": u(keys[3], (1, D), 1.0),
        "wgx": u(keys[4], (1, D), k1), "bgx": u(keys[5], (1, D), k1),
        "wgh": u(keys[6], (1, H), k1), "bgh": u(keys[7], (1, H), k1),
        "wz_x": Wz[:D], "wz_h": Wz[D:D + H], "wz_m": Wz[D + H:], "bz": u(keys[8], (1, H), ks),
        "wr_x": Wr[:D], "wr_h": Wr[D:D + H], "wr_m": Wr[D + H:], "br": u(keys[9], (1, H), ks),
        "wh_x": Wh[:D], "wh_h": Wh[D:D + H], "wh_m": Wh[D + H:], "bh": u(keys[10], (1, H), ks),
    }
    return params


if __name__ == "__main__":
    # keep wrapper/reference matmuls at full f32 precision for the comparison
    jax.config.update("jax_default_matmul_precision", "highest")

    B, T, D, H = 2, 8, 4, 32
    key = jax.random.PRNGKey(0)
    kx, km, kd, kp = jax.random.split(key, 4)

    x = jax.random.normal(kx, (B, T, D), jnp.float32)
    mask = (jax.random.uniform(km, (B, T, D)) > 0.3).astype(jnp.float32)
    delta_t = jax.random.uniform(kd, (B, T), jnp.float32, 0.0, 2.0)
    params = init_params(kp, D, H)

    out = grud_forward(x, mask, delta_t, params, output_last=False)
    out = jax.block_until_ready(out)

    ref = grud_reference(x, mask, delta_t, params, output_last=False)
    assert out.shape == (B, T - 1, H), out.shape
    err = float(jnp.max(jnp.abs(out - ref)))
    assert jnp.allclose(out, ref, atol=1e-4, rtol=1e-4), err

    print("KERNEL_OK")
</pallas_src>

<mosaic_0001>
module attributes {stable_mosaic.version = 11 : i64} {
  func.func @grud_recurrent_kernel(%arg0: i32, %arg1: i32, %arg2: memref<7x8x384xf32, #tpu.memory_space<vmem>>, %arg3: memref<7x8x128xf32, #tpu.memory_space<vmem>>, %arg4: memref<128x256xf32, #tpu.memory_space<vmem>>, %arg5: memref<128x128xf32, #tpu.memory_space<vmem>>, %arg6: memref<7x8x128xf32, #tpu.memory_space<vmem>>, %arg7: memref<8x128xf32, #tpu.memory_space<vmem>>) attributes {dimension_semantics = [#tpu.dimension_semantics<parallel>, #tpu.dimension_semantics<arbitrary>], iteration_bounds = array<i64: 1, 1>, scalar_prefetch = 0 : i64, scratch_operands = 1 : i64, tpu.core_type = #tpu.core_type<tc>, window_params = [{transform_indices = @transform_0, window_bounds = array<i64: 7, 8, 384>}, {transform_indices = @transform_1, window_bounds = array<i64: 7, 8, 128>}, {pipeline_mode = #tpu.pipeline_mode<synchronous>, transform_indices = @transform_2, window_bounds = array<i64: 128, 256>}, {pipeline_mode = #tpu.pipeline_mode<synchronous>, transform_indices = @transform_3, window_bounds = array<i64: 128, 128>}, {transform_indices = @transform_4, window_bounds = array<i64: 7, 8, 128>}]} {
    %c0_i32 = arith.constant 0 : i32
    %0 = arith.cmpi eq, %arg1, %c0_i32 : i32
    %1 = arith.extui %0 : i1 to i32
    %c0_i32_0 = arith.constant 0 : i32
    %2 = arith.cmpi ne, %1, %c0_i32_0 : i32
    scf.if %2 {
      %cst_109 = arith.constant 0.000000e+00 : f32
      %285 = vector.broadcast %cst_109 : f32 to vector<8x128xf32>
      %c0_110 = arith.constant 0 : index
      %c0_111 = arith.constant 0 : index
      %286 = vector.load %arg7[%c0_110, %c0_111] : memref<8x128xf32, #tpu.memory_space<vmem>>, vector<8x128xf32>
      tpu.vector_store %arg7[%c0_110, %c0_111], %285 {strides = array<i32>} : memref<8x128xf32, #tpu.memory_space<vmem>>, vector<8x128xf32>,
    } else {
    }
    %c0 = arith.constant 0 : index
    %c0_1 = arith.constant 0 : index
    %3 = vector.load %arg7[%c0, %c0_1] : memref<8x128xf32, #tpu.memory_space<vmem>>, vector<8x128xf32>
    %c0_i32_2 = arith.constant 0 : i32
    %4 = arith.index_cast %c0_i32_2 : i32 to index
    %c0_3 = arith.constant 0 : index
    %c0_4 = arith.constant 0 : index
    %5 = vector.load %arg3[%4, %c0_3, %c0_4] : memref<7x8x128xf32, #tpu.memory_space<vmem>>, vector<1x8x128xf32>
    %6 = vector.shape_cast %5 : vector<1x8x128xf32> to vector<8x128xf32>
    %7 = arith.mulf %6, %3 : vector<8x128xf32>
    %8 = arith.index_cast %c0_i32_2 : i32 to index
    %c0_5 = arith.constant 0 : index
    %c0_6 = arith.constant 0 : index
    %9 = vector.load %arg2[%8, %c0_5, %c0_6] : memref<7x8x384xf32, #tpu.memory_space<vmem>>, vector<1x8x384xf32>
    %10 = vector.shape_cast %9 : vector<1x8x384xf32> to vector<8x384xf32>
    %c0_7 = arith.constant 0 : index
    %c0_8 = arith.constant 0 : index
    %11 = vector.load %arg4[%c0_7, %c0_8] : memref<128x256xf32, #tpu.memory_space<vmem>>, vector<128x256xf32>
    %cst = arith.constant dense<0.000000e+00> : vector<8x256xf32>
    %12 = tpu.matmul %7, %11, %cst {dimension_numbers = #tpu.dot_dimension_numbers<[1], [0], [0], [1], [0, 0, 1, 1], [], []>, precision = #tpu.contract_precision<fp32>} : vector<8x128xf32>, vector<128x256xf32>, vector<8x256xf32> -> vector<8x256xf32>
    %13 = vector.extract_strided_slice %10 {offsets = [0, 0], sizes = [8, 128], strides = [1, 1]} : vector<8x384xf32> to vector<8x128xf32>
    %14 = vector.extract_strided_slice %12 {offsets = [0, 0], sizes = [8, 128], strides = [1, 1]} : vector<8x256xf32> to vector<8x128xf32>
    %15 = arith.addf %13, %14 : vector<8x128xf32>
    %16 = arith.negf %15 : vector<8x128xf32>
    %17 = math.exp %16 : vector<8x128xf32>
    %cst_9 = arith.constant 1.000000e+00 : f32
    %18 = vector.broadcast %cst_9 : f32 to vector<8x128xf32>
    %19 = arith.addf %18, %17 : vector<8x128xf32>
    %20 = arith.divf %18, %19 : vector<8x128xf32>
    %21 = vector.extract_strided_slice %10 {offsets = [0, 128], sizes = [8, 128], strides = [1, 1]} : vector<8x384xf32> to vector<8x128xf32>
    %22 = vector.extract_strided_slice %12 {offsets = [0, 128], sizes = [8, 128], strides = [1, 1]} : vector<8x256xf32> to vector<8x128xf32>
    %23 = arith.addf %21, %22 : vector<8x128xf32>
    %24 = arith.negf %23 : vector<8x128xf32>
    %25 = math.exp %24 : vector<8x128xf32>
    %cst_10 = arith.constant 1.000000e+00 : f32
    %26 = vector.broadcast %cst_10 : f32 to vector<8x128xf32>
    %27 = arith.addf %26, %25 : vector<8x128xf32>
    %28 = arith.divf %26, %27 : vector<8x128xf32>
    %29 = vector.extract_strided_slice %10 {offsets = [0, 256], sizes = [8, 128], strides = [1, 1]} : vector<8x384xf32> to vector<8x128xf32>
    %30 = arith.mulf %28, %7 : vector<8x128xf32>
    %c0_11 = arith.constant 0 : index
    %c0_12 = arith.constant 0 : index
    %31 = vector.load %arg5[%c0_11, %c0_12] : memref<128x128xf32, #tpu.memory_space<vmem>>, vector<128x128xf32>
    %cst_13 = arith.constant dense<0.000000e+00> : vector<8x128xf32>
    %32 = tpu.matmul %30, %31, %cst_13 {dimension_numbers = #tpu.dot_dimension_numbers<[1], [0], [0], [1], [0, 0, 1, 1], [], []>, precision = #tpu.contract_precision<fp32>} : vector<8x128xf32>, vector<128x128xf32>, vector<8x128xf32> -> vector<8x128xf32>
    %33 = arith.addf %29, %32 : vector<8x128xf32>
    %34 = math.tanh %33 : vector<8x128xf32>
    %cst_14 = arith.constant 1.000000e+00 : f32
    %35 = vector.broadcast %cst_14 : f32 to vector<8x128xf32>
    %36 = arith.subf %35, %20 : vector<8x128xf32>
    %37 = arith.mulf %36, %7 : vector<8x128xf32>
    %38 = arith.mulf %20, %34 : vector<8x128xf32>
    %39 = arith.addf %37, %38 : vector<8x128xf32>
    %40 = arith.index_cast %c0_i32_2 : i32 to index
    %c0_15 = arith.constant 0 : index
    %c0_16 = arith.constant 0 : index
    %41 = vector.load %arg6[%40, %c0_15, %c0_16] : memref<7x8x128xf32, #tpu.memory_space<vmem>>, vector<1x8x128xf32>
    %42 = vector.shape_cast %41 : vector<1x8x128xf32> to vector<8x128xf32>
    %43 = vector.shape_cast %39 : vector<8x128xf32> to vector<1x8x128xf32>
    tpu.vector_store %arg6[%40, %c0_15, %c0_16], %43 {strides = array<i32>} : memref<7x8x128xf32, #tpu.memory_space<vmem>>, vector<1x8x128xf32>,
    %c1_i32 = arith.constant 1 : i32
    %44 = arith.index_cast %c1_i32 : i32 to index
    %c0_17 = arith.constant 0 : index
    %c0_18 = arith.constant 0 : index
    %45 = vector.load %arg3[%44, %c0_17, %c0_18] : memref<7x8x128xf32, #tpu.memory_space<vmem>>, vector<1x8x128xf32>
    %46 = vector.shape_cast %45 : vector<1x8x128xf32> to vector<8x128xf32>
    %47 = arith.mulf %46, %39 : vector<8x128xf32>
    %48 = arith.index_cast %c1_i32 : i32 to index
    %c0_19 = arith.constant 0 : index
    %c0_20 = arith.constant 0 : index
    %49 = vector.load %arg2[%48, %c0_19, %c0_20] : memref<7x8x384xf32, #tpu.memory_space<vmem>>, vector<1x8x384xf32>
    %50 = vector.shape_cast %49 : vector<1x8x384xf32> to vector<8x384xf32>
    %c0_21 = arith.constant 0 : index
    %c0_22 = arith.constant 0 : index
    %51 = vector.load %arg4[%c0_21, %c0_22] : memref<128x256xf32, #tpu.memory_space<vmem>>, vector<128x256xf32>
    %cst_23 = arith.constant dense<0.000000e+00> : vector<8x256xf32>
    %52 = tpu.matmul %47, %51, %cst_23 {dimension_numbers = #tpu.dot_dimension_numbers<[1], [0], [0], [1], [0, 0, 1, 1], [], []>, precision = #tpu.contract_precision<fp32>} : vector<8x128xf32>, vector<128x256xf32>, vector<8x256xf32> -> vector<8x256xf32>
    %53 = vector.extract_strided_slice %50 {offsets = [0, 0], sizes = [8, 128], strides = [1, 1]} : vector<8x384xf32> to vector<8x128xf32>
    %54 = vector.extract_strided_slice %52 {offsets = [0, 0], sizes = [8, 128], strides = [1, 1]} : vector<8x256xf32> to vector<8x128xf32>
    %55 = arith.addf %53, %54 : vector<8x128xf32>
    %56 = arith.negf %55 : vector<8x128xf32>
    %57 = math.exp %56 : vector<8x128xf32>
    %cst_24 = arith.constant 1.000000e+00 : f32
    %58 = vector.broadcast %cst_24 : f32 to vector<8x128xf32>
    %59 = arith.addf %58, %57 : vector<8x128xf32>
    %60 = arith.divf %58, %59 : vector<8x128xf32>
    %61 = vector.extract_strided_slice %50 {offsets = [0, 128], sizes = [8, 128], strides = [1, 1]} : vector<8x384xf32> to vector<8x128xf32>
    %62 = vector.extract_strided_slice %52 {offsets = [0, 128], sizes = [8, 128], strides = [1, 1]} : vector<8x256xf32> to vector<8x128xf32>
    %63 = arith.addf %61, %62 : vector<8x128xf32>
    %64 = arith.negf %63 : vector<8x128xf32>
    %65 = math.exp %64 : vector<8x128xf32>
    %cst_25 = arith.constant 1.000000e+00 : f32
    %66 = vector.broadcast %cst_25 : f32 to vector<8x128xf32>
    %67 = arith.addf %66, %65 : vector<8x128xf32>
    %68 = arith.divf %66, %67 : vector<8x128xf32>
    %69 = vector.extract_strided_slice %50 {offsets = [0, 256], sizes = [8, 128], strides = [1, 1]} : vector<8x384xf32> to vector<8x128xf32>
    %70 = arith.mulf %68, %47 : vector<8x128xf32>
    %c0_26 = arith.constant 0 : index
    %c0_27 = arith.constant 0 : index
    %71 = vector.load %arg5[%c0_26, %c0_27] : memref<128x128xf32, #tpu.memory_space<vmem>>, vector<128x128xf32>
    %cst_28 = arith.constant dense<0.000000e+00> : vector<8x128xf32>
    %72 = tpu.matmul %70, %71, %cst_28 {dimension_numbers = #tpu.dot_dimension_numbers<[1], [0], [0], [1], [0, 0, 1, 1], [], []>, precision = #tpu.contract_precision<fp32>} : vector<8x128xf32>, vector<128x128xf32>, vector<8x128xf32> -> vector<8x128xf32>
    %73 = arith.addf %69, %72 : vector<8x128xf32>
    %74 = math.tanh %73 : vector<8x128xf32>
    %cst_29 = arith.constant 1.000000e+00 : f32
    %75 = vector.broadcast %cst_29 : f32 to vector<8x128xf32>
    %76 = arith.subf %75, %60 : vector<8x128xf32>
    %77 = arith.mulf %76, %47 : vector<8x128xf32>
    %78 = arith.mulf %60, %74 : vector<8x128xf32>
    %79 = arith.addf %77, %78 : vector<8x128xf32>
    %80 = arith.index_cast %c1_i32 : i32 to index
    %c0_30 = arith.constant 0 : index
    %c0_31 = arith.constant 0 : index
    %81 = vector.load %arg6[%80, %c0_30, %c0_31] : memref<7x8x128xf32, #tpu.memory_space<vmem>>, vector<1x8x128xf32>
    %82 = vector.shape_cast %81 : vector<1x8x128xf32> to vector<8x128xf32>
    %83 = vector.shape_cast %79 : vector<8x128xf32> to vector<1x8x128xf32>
    tpu.vector_store %arg6[%80, %c0_30, %c0_31], %83 {strides = array<i32>} : memref<7x8x128xf32, #tpu.memory_space<vmem>>, vector<1x8x128xf32>,
    %c2_i32 = arith.constant 2 : i32
    %84 = arith.index_cast %c2_i32 : i32 to index
    %c0_32 = arith.constant 0 : index
    %c0_33 = arith.constant 0 : index
    %85 = vector.load %arg3[%84, %c0_32, %c0_33] : memref<7x8x128xf32, #tpu.memory_space<vmem>>, vector<1x8x128xf32>
    %86 = vector.shape_cast %85 : vector<1x8x128xf32> to vector<8x128xf32>
    %87 = arith.mulf %86, %79 : vector<8x128xf32>
    %88 = arith.index_cast %c2_i32 : i32 to index
    %c0_34 = arith.constant 0 : index
    %c0_35 = arith.constant 0 : index
    %89 = vector.load %arg2[%88, %c0_34, %c0_35] : memref<7x8x384xf32, #tpu.memory_space<vmem>>, vector<1x8x384xf32>
    %90 = vector.shape_cast %89 : vector<1x8x384xf32> to vector<8x384xf32>
    %c0_36 = arith.constant 0 : index
    %c0_37 = arith.constant 0 : index
    %91 = vector.load %arg4[%c0_36, %c0_37] : memref<128x256xf32, #tpu.memory_space<vmem>>, vector<128x256xf32>
    %cst_38 = arith.constant dense<0.000000e+00> : vector<8x256xf32>
    %92 = tpu.matmul %87, %91, %cst_38 {dimension_numbers = #tpu.dot_dimension_numbers<[1], [0], [0], [1], [0, 0, 1, 1], [], []>, precision = #tpu.contract_precision<fp32>} : vector<8x128xf32>, vector<128x256xf32>, vector<8x256xf32> -> vector<8x256xf32>
    %93 = vector.extract_strided_slice %90 {offsets = [0, 0], sizes = [8, 128], strides = [1, 1]} : vector<8x384xf32> to vector<8x128xf32>
    %94 = vector.extract_strided_slice %92 {offsets = [0, 0], sizes = [8, 128], strides = [1, 1]} : vector<8x256xf32> to vector<8x128xf32>
    %95 = arith.addf %93, %94 : vector<8x128xf32>
    %96 = arith.negf %95 : vector<8x128xf32>
    %97 = math.exp %96 : vector<8x128xf32>
    %cst_39 = arith.constant 1.000000e+00 : f32
    %98 = vector.broadcast %cst_39 : f32 to vector<8x128xf32>
    %99 = arith.addf %98, %97 : vector<8x128xf32>
    %100 = arith.divf %98, %99 : vector<8x128xf32>
    %101 = vector.extract_strided_slice %90 {offsets = [0, 128], sizes = [8, 128], strides = [1, 1]} : vector<8x384xf32> to vector<8x128xf32>
    %102 = vector.extract_strided_slice %92 {offsets = [0, 128], sizes = [8, 128], strides = [1, 1]} : vector<8x256xf32> to vector<8x128xf32>
    %103 = arith.addf %101, %102 : vector<8x128xf32>
    %104 = arith.negf %103 : vector<8x128xf32>
    %105 = math.exp %104 : vector<8x128xf32>
    %cst_40 = arith.constant 1.000000e+00 : f32
    %106 = vector.broadcast %cst_40 : f32 to vector<8x128xf32>
    %107 = arith.addf %106, %105 : vector<8x128xf32>
    %108 = arith.divf %106, %107 : vector<8x128xf32>
    %109 = vector.extract_strided_slice %90 {offsets = [0, 256], sizes = [8, 128], strides = [1, 1]} : vector<8x384xf32> to vector<8x128xf32>
    %110 = arith.mulf %108, %87 : vector<8x128xf32>
    %c0_41 = arith.constant 0 : index
    %c0_42 = arith.constant 0 : index
    %111 = vector.load %arg5[%c0_41, %c0_42] : memref<128x128xf32, #tpu.memory_space<vmem>>, vector<128x128xf32>
    %cst_43 = arith.constant dense<0.000000e+00> : vector<8x128xf32>
    %112 = tpu.matmul %110, %111, %cst_43 {dimension_numbers = #tpu.dot_dimension_numbers<[1], [0], [0], [1], [0, 0, 1, 1], [], []>, precision = #tpu.contract_precision<fp32>} : vector<8x128xf32>, vector<128x128xf32>, vector<8x128xf32> -> vector<8x128xf32>
    %113 = arith.addf %109, %112 : vector<8x128xf32>
    %114 = math.tanh %113 : vector<8x128xf32>
    %cst_44 = arith.constant 1.000000e+00 : f32
    %115 = vector.broadcast %cst_44 : f32 to vector<8x128xf32>
    %116 = arith.subf %115, %100 : vector<8x128xf32>
    %117 = arith.mulf %116, %87 : vector<8x128xf32>
    %118 = arith.mulf %100, %114 : vector<8x128xf32>
    %119 = arith.addf %117, %118 : vector<8x128xf32>
    %120 = arith.index_cast %c2_i32 : i32 to index
    %c0_45 = arith.constant 0 : index
    %c0_46 = arith.constant 0 : index
    %121 = vector.load %arg6[%120, %c0_45, %c0_46] : memref<7x8x128xf32, #tpu.memory_space<vmem>>, vector<1x8x128xf32>
    %122 = vector.shape_cast %121 : vector<1x8x128xf32> to vector<8x128xf32>
    %123 = vector.shape_cast %119 : vector<8x128xf32> to vector<1x8x128xf32>
    tpu.vector_store %arg6[%120, %c0_45, %c0_46], %123 {strides = array<i32>} : memref<7x8x128xf32, #tpu.memory_space<vmem>>, vector<1x8x128xf32>,
    %c3_i32 = arith.constant 3 : i32
    %124 = arith.index_cast %c3_i32 : i32 to index
    %c0_47 = arith.constant 0 : index
    %c0_48 = arith.constant 0 : index
    %125 = vector.load %arg3[%124, %c0_47, %c0_48] : memref<7x8x128xf32, #tpu.memory_space<vmem>>, vector<1x8x128xf32>
    %126 = vector.shape_cast %125 : vector<1x8x128xf32> to vector<8x128xf32>
    %127 = arith.mulf %126, %119 : vector<8x128xf32>
    %128 = arith.index_cast %c3_i32 : i32 to index
    %c0_49 = arith.constant 0 : index
    %c0_50 = arith.constant 0 : index
    %129 = vector.load %arg2[%128, %c0_49, %c0_50] : memref<7x8x384xf32, #tpu.memory_space<vmem>>, vector<1x8x384xf32>
    %130 = vector.shape_cast %129 : vector<1x8x384xf32> to vector<8x384xf32>
    %c0_51 = arith.constant 0 : index
    %c0_52 = arith.constant 0 : index
    %131 = vector.load %arg4[%c0_51, %c0_52] : memref<128x256xf32, #tpu.memory_space<vmem>>, vector<128x256xf32>
    %cst_53 = arith.constant dense<0.000000e+00> : vector<8x256xf32>
    %132 = tpu.matmul %127, %131, %cst_53 {dimension_numbers = #tpu.dot_dimension_numbers<[1], [0], [0], [1], [0, 0, 1, 1], [], []>, precision = #tpu.contract_precision<fp32>} : vector<8x128xf32>, vector<128x256xf32>, vector<8x256xf32> -> vector<8x256xf32>
    %133 = vector.extract_strided_slice %130 {offsets = [0, 0], sizes = [8, 128], strides = [1, 1]} : vector<8x384xf32> to vector<8x128xf32>
    %134 = vector.extract_strided_slice %132 {offsets = [0, 0], sizes = [8, 128], strides = [1, 1]} : vector<8x256xf32> to vector<8x128xf32>
    %135 = arith.addf %133, %134 : vector<8x128xf32>
    %136 = arith.negf %135 : vector<8x128xf32>
    %137 = math.exp %136 : vector<8x128xf32>
    %cst_54 = arith.constant 1.000000e+00 : f32
    %138 = vector.broadcast %cst_54 : f32 to vector<8x128xf32>
    %139 = arith.addf %138, %137 : vector<8x128xf32>
    %140 = arith.divf %138, %139 : vector<8x128xf32>
    %141 = vector.extract_strided_slice %130 {offsets = [0, 128], sizes = [8, 128], strides = [1, 1]} : vector<8x384xf32> to vector<8x128xf32>
    %142 = vector.extract_strided_slice %132 {offsets = [0, 128], sizes = [8, 128], strides = [1, 1]} : vector<8x256xf32> to vector<8x128xf32>
    %143 = arith.addf %141, %142 : vector<8x128xf32>
    %144 = arith.negf %143 : vector<8x128xf32>
    %145 = math.exp %144 : vector<8x128xf32>
    %cst_55 = arith.constant 1.000000e+00 : f32
    %146 = vector.broadcast %cst_55 : f32 to vector<8x128xf32>
    %147 = arith.addf %146, %145 : vector<8x128xf32>
    %148 = arith.divf %146, %147 : vector<8x128xf32>
    %149 = vector.extract_strided_slice %130 {offsets = [0, 256], sizes = [8, 128], strides = [1, 1]} : vector<8x384xf32> to vector<8x128xf32>
    %150 = arith.mulf %148, %127 : vector<8x128xf32>
    %c0_56 = arith.constant 0 : index
    %c0_57 = arith.constant 0 : index
    %151 = vector.load %arg5[%c0_56, %c0_57] : memref<128x128xf32, #tpu.memory_space<vmem>>, vector<128x128xf32>
    %cst_58 = arith.constant dense<0.000000e+00> : vector<8x128xf32>
    %152 = tpu.matmul %150, %151, %cst_58 {dimension_numbers = #tpu.dot_dimension_numbers<[1], [0], [0], [1], [0, 0, 1, 1], [], []>, precision = #tpu.contract_precision<fp32>} : vector<8x128xf32>, vector<128x128xf32>, vector<8x128xf32> -> vector<8x128xf32>
    %153 = arith.addf %149, %152 : vector<8x128xf32>
    %154 = math.tanh %153 : vector<8x128xf32>
    %cst_59 = arith.constant 1.000000e+00 : f32
    %155 = vector.broadcast %cst_59 : f32 to vector<8x128xf32>
    %156 = arith.subf %155, %140 : vector<8x128xf32>
    %157 = arith.mulf %156, %127 : vector<8x128xf32>
    %158 = arith.mulf %140, %154 : vector<8x128xf32>
    %159 = arith.addf %157, %158 : vector<8x128xf32>
    %160 = arith.index_cast %c3_i32 : i32 to index
    %c0_60 = arith.constant 0 : index
    %c0_61 = arith.constant 0 : index
    %161 = vector.load %arg6[%160, %c0_60, %c0_61] : memref<7x8x128xf32, #tpu.memory_space<vmem>>, vector<1x8x128xf32>
    %162 = vector.shape_cast %161 : vector<1x8x128xf32> to vector<8x128xf32>
    %163 = vector.shape_cast %159 : vector<8x128xf32> to vector<1x8x128xf32>
    tpu.vector_store %arg6[%160, %c0_60, %c0_61], %163 {strides = array<i32>} : memref<7x8x128xf32, #tpu.memory_space<vmem>>, vector<1x8x128xf32>,
    %c4_i32 = arith.constant 4 : i32
    %164 = arith.index_cast %c4_i32 : i32 to index
    %c0_62 = arith.constant 0 : index
    %c0_63 = arith.constant 0 : index
    %165 = vector.load %arg3[%164, %c0_62, %c0_63] : memref<7x8x128xf32, #tpu.memory_space<vmem>>, vector<1x8x128xf32>
    %166 = vector.shape_cast %165 : vector<1x8x128xf32> to vector<8x128xf32>
    %167 = arith.mulf %166, %159 : vector<8x128xf32>
    %168 = arith.index_cast %c4_i32 : i32 to index
    %c0_64 = arith.constant 0 : index
    %c0_65 = arith.constant 0 : index
    %169 = vector.load %arg2[%168, %c0_64, %c0_65] : memref<7x8x384xf32, #tpu.memory_space<vmem>>, vector<1x8x384xf32>
    %170 = vector.shape_cast %169 : vector<1x8x384xf32> to vector<8x384xf32>
    %c0_66 = arith.constant 0 : index
    %c0_67 = arith.constant 0 : index
    %171 = vector.load %arg4[%c0_66, %c0_67] : memref<128x256xf32, #tpu.memory_space<vmem>>, vector<128x256xf32>
    %cst_68 = arith.constant dense<0.000000e+00> : vector<8x256xf32>
    %172 = tpu.matmul %167, %171, %cst_68 {dimension_numbers = #tpu.dot_dimension_numbers<[1], [0], [0], [1], [0, 0, 1, 1], [], []>, precision = #tpu.contract_precision<fp32>} : vector<8x128xf32>, vector<128x256xf32>, vector<8x256xf32> -> vector<8x256xf32>
    %173 = vector.extract_strided_slice %170 {offsets = [0, 0], sizes = [8, 128], strides = [1, 1]} : vector<8x384xf32> to vector<8x128xf32>
    %174 = vector.extract_strided_slice %172 {offsets = [0, 0], sizes = [8, 128], strides = [1, 1]} : vector<8x256xf32> to vector<8x128xf32>
    %175 = arith.addf %173, %174 : vector<8x128xf32>
    %176 = arith.negf %175 : vector<8x128xf32>
    %177 = math.exp %176 : vector<8x128xf32>
    %cst_69 = arith.constant 1.000000e+00 : f32
    %178 = vector.broadcast %cst_69 : f32 to vector<8x128xf32>
    %179 = arith.addf %178, %177 : vector<8x128xf32>
    %180 = arith.divf %178, %179 : vector<8x128xf32>
    %181 = vector.extract_strided_slice %170 {offsets = [0, 128], sizes = [8, 128], strides = [1, 1]} : vector<8x384xf32> to vector<8x128xf32>
    %182 = vector.extract_strided_slice %172 {offsets = [0, 128], sizes = [8, 128], strides = [1, 1]} : vector<8x256xf32> to vector<8x128xf32>
    %183 = arith.addf %181, %182 : vector<8x128xf32>
    %184 = arith.negf %183 : vector<8x128xf32>
    %185 = math.exp %184 : vector<8x128xf32>
    %cst_70 = arith.constant 1.000000e+00 : f32
    %186 = vector.broadcast %cst_70 : f32 to vector<8x128xf32>
    %187 = arith.addf %186, %185 : vector<8x128xf32>
    %188 = arith.divf %186, %187 : vector<8x128xf32>
    %189 = vector.extract_strided_slice %170 {offsets = [0, 256], sizes = [8, 128], strides = [1, 1]} : vector<8x384xf32> to vector<8x128xf32>
    %190 = arith.mulf %188, %167 : vector<8x128xf32>
    %c0_71 = arith.constant 0 : index
    %c0_72 = arith.constant 0 : index
    %191 = vector.load %arg5[%c0_71, %c0_72] : memref<128x128xf32, #tpu.memory_space<vmem>>, vector<128x128xf32>
    %cst_73 = arith.constant dense<0.000000e+00> : vector<8x128xf32>
    %192 = tpu.matmul %190, %191, %cst_73 {dimension_numbers = #tpu.dot_dimension_numbers<[1], [0], [0], [1], [0, 0, 1, 1], [], []>, precision = #tpu.contract_precision<fp32>} : vector<8x128xf32>, vector<128x128xf32>, vector<8x128xf32> -> vector<8x128xf32>
    %193 = arith.addf %189, %192 : vector<8x128xf32>
    %194 = math.tanh %193 : vector<8x128xf32>
    %cst_74 = arith.constant 1.000000e+00 : f32
    %195 = vector.broadcast %cst_74 : f32 to vector<8x128xf32>
    %196 = arith.subf %195, %180 : vector<8x128xf32>
    %197 = arith.mulf %196, %167 : vector<8x128xf32>
    %198 = arith.mulf %180, %194 : vector<8x128xf32>
    %199 = arith.addf %197, %198 : vector<8x128xf32>
    %200 = arith.index_cast %c4_i32 : i32 to index
    %c0_75 = arith.constant 0 : index
    %c0_76 = arith.constant 0 : index
    %201 = vector.load %arg6[%200, %c0_75, %c0_76] : memref<7x8x128xf32, #tpu.memory_space<vmem>>, vector<1x8x128xf32>
    %202 = vector.shape_cast %201 : vector<1x8x128xf32> to vector<8x128xf32>
    %203 = vector.shape_cast %199 : vector<8x128xf32> to vector<1x8x128xf32>
    tpu.vector_store %arg6[%200, %c0_75, %c0_76], %203 {strides = array<i32>} : memref<7x8x128xf32, #tpu.memory_space<vmem>>, vector<1x8x128xf32>,
    %c5_i32 = arith.constant 5 : i32
    %204 = arith.index_cast %c5_i32 : i32 to index
    %c0_77 = arith.constant 0 : index
    %c0_78 = arith.constant 0 : index
    %205 = vector.load %arg3[%204, %c0_77, %c0_78] : memref<7x8x128xf32, #tpu.memory_space<vmem>>, vector<1x8x128xf32>
    %206 = vector.shape_cast %205 : vector<1x8x128xf32> to vector<8x128xf32>
    %207 = arith.mulf %206, %199 : vector<8x128xf32>
    %208 = arith.index_cast %c5_i32 : i32 to index
    %c0_79 = arith.constant 0 : index
    %c0_80 = arith.constant 0 : index
    %209 = vector.load %arg2[%208, %c0_79, %c0_80] : memref<7x8x384xf32, #tpu.memory_space<vmem>>, vector<1x8x384xf32>
    %210 = vector.shape_cast %209 : vector<1x8x384xf32> to vector<8x384xf32>
    %c0_81 = arith.constant 0 : index
    %c0_82 = arith.constant 0 : index
    %211 = vector.load %arg4[%c0_81, %c0_82] : memref<128x256xf32, #tpu.memory_space<vmem>>, vector<128x256xf32>
    %cst_83 = arith.constant dense<0.000000e+00> : vector<8x256xf32>
    %212 = tpu.matmul %207, %211, %cst_83 {dimension_numbers = #tpu.dot_dimension_numbers<[1], [0], [0], [1], [0, 0, 1, 1], [], []>, precision = #tpu.contract_precision<fp32>} : vector<8x128xf32>, vector<128x256xf32>, vector<8x256xf32> -> vector<8x256xf32>
    %213 = vector.extract_strided_slice %210 {offsets = [0, 0], sizes = [8, 128], strides = [1, 1]} : vector<8x384xf32> to vector<8x128xf32>
    %214 = vector.extract_strided_slice %212 {offsets = [0, 0], sizes = [8, 128], strides = [1, 1]} : vector<8x256xf32> to vector<8x128xf32>
    %215 = arith.addf %213, %214 : vector<8x128xf32>
    %216 = arith.negf %215 : vector<8x128xf32>
    %217 = math.exp %216 : vector<8x128xf32>
    %cst_84 = arith.constant 1.000000e+00 : f32
    %218 = vector.broadcast %cst_84 : f32 to vector<8x128xf32>
    %219 = arith.addf %218, %217 : vector<8x128xf32>
    %220 = arith.divf %218, %219 : vector<8x128xf32>
    %221 = vector.extract_strided_slice %210 {offsets = [0, 128], sizes = [8, 128], strides = [1, 1]} : vector<8x384xf32> to vector<8x128xf32>
    %222 = vector.extract_strided_slice %212 {offsets = [0, 128], sizes = [8, 128], strides = [1, 1]} : vector<8x256xf32> to vector<8x128xf32>
    %223 = arith.addf %221, %222 : vector<8x128xf32>
    %224 = arith.negf %223 : vector<8x128xf32>
    %225 = math.exp %224 : vector<8x128xf32>
    %cst_85 = arith.constant 1.000000e+00 : f32
    %226 = vector.broadcast %cst_85 : f32 to vector<8x128xf32>
    %227 = arith.addf %226, %225 : vector<8x128xf32>
    %228 = arith.divf %226, %227 : vector<8x128xf32>
    %229 = vector.extract_strided_slice %210 {offsets = [0, 256], sizes = [8, 128], strides = [1, 1]} : vector<8x384xf32> to vector<8x128xf32>
    %230 = arith.mulf %228, %207 : vector<8x128xf32>
    %c0_86 = arith.constant 0 : index
    %c0_87 = arith.constant 0 : index
    %231 = vector.load %arg5[%c0_86, %c0_87] : memref<128x128xf32, #tpu.memory_space<vmem>>, vector<128x128xf32>
    %cst_88 = arith.constant dense<0.000000e+00> : vector<8x128xf32>
    %232 = tpu.matmul %230, %231, %cst_88 {dimension_numbers = #tpu.dot_dimension_numbers<[1], [0], [0], [1], [0, 0, 1, 1], [], []>, precision = #tpu.contract_precision<fp32>} : vector<8x128xf32>, vector<128x128xf32>, vector<8x128xf32> -> vector<8x128xf32>
    %233 = arith.addf %229, %232 : vector<8x128xf32>
    %234 = math.tanh %233 : vector<8x128xf32>
    %cst_89 = arith.constant 1.000000e+00 : f32
    %235 = vector.broadcast %cst_89 : f32 to vector<8x128xf32>
    %236 = arith.subf %235, %220 : vector<8x128xf32>
    %237 = arith.mulf %236, %207 : vector<8x128xf32>
    %238 = arith.mulf %220, %234 : vector<8x128xf32>
    %239 = arith.addf %237, %238 : vector<8x128xf32>
    %240 = arith.index_cast %c5_i32 : i32 to index
    %c0_90 = arith.constant 0 : index
    %c0_91 = arith.constant 0 : index
    %241 = vector.load %arg6[%240, %c0_90, %c0_91] : memref<7x8x128xf32, #tpu.memory_space<vmem>>, vector<1x8x128xf32>
    %242 = vector.shape_cast %241 : vector<1x8x128xf32> to vector<8x128xf32>
    %243 = vector.shape_cast %239 : vector<8x128xf32> to vector<1x8x128xf32>
    tpu.vector_store %arg6[%240, %c0_90, %c0_91], %243 {strides = array<i32>} : memref<7x8x128xf32, #tpu.memory_space<vmem>>, vector<1x8x128xf32>,
    %c6_i32 = arith.constant 6 : i32
    %244 = arith.index_cast %c6_i32 : i32 to index
    %c0_92 = arith.constant 0 : index
    %c0_93 = arith.constant 0 : index
    %245 = vector.load %arg3[%244, %c0_92, %c0_93] : memref<7x8x128xf32, #tpu.memory_space<vmem>>, vector<1x8x128xf32>
    %246 = vector.shape_cast %245 : vector<1x8x128xf32> to vector<8x128xf32>
    %247 = arith.mulf %246, %239 : vector<8x128xf32>
    %248 = arith.index_cast %c6_i32 : i32 to index
    %c0_94 = arith.constant 0 : index
    %c0_95 = arith.constant 0 : index
    %249 = vector.load %arg2[%248, %c0_94, %c0_95] : memref<7x8x384xf32, #tpu.memory_space<vmem>>, vector<1x8x384xf32>
    %250 = vector.shape_cast %249 : vector<1x8x384xf32> to vector<8x384xf32>
    %c0_96 = arith.constant 0 : index
    %c0_97 = arith.constant 0 : index
    %251 = vector.load %arg4[%c0_96, %c0_97] : memref<128x256xf32, #tpu.memory_space<vmem>>, vector<128x256xf32>
    %cst_98 = arith.constant dense<0.000000e+00> : vector<8x256xf32>
    %252 = tpu.matmul %247, %251, %cst_98 {dimension_numbers = #tpu.dot_dimension_numbers<[1], [0], [0], [1], [0, 0, 1, 1], [], []>, precision = #tpu.contract_precision<fp32>} : vector<8x128xf32>, vector<128x256xf32>, vector<8x256xf32> -> vector<8x256xf32>
    %253 = vector.extract_strided_slice %250 {offsets = [0, 0], sizes = [8, 128], strides = [1, 1]} : vector<8x384xf32> to vector<8x128xf32>
    %254 = vector.extract_strided_slice %252 {offsets = [0, 0], sizes = [8, 128], strides = [1, 1]} : vector<8x256xf32> to vector<8x128xf32>
    %255 = arith.addf %253, %254 : vector<8x128xf32>
    %256 = arith.negf %255 : vector<8x128xf32>
    %257 = math.exp %256 : vector<8x128xf32>
    %cst_99 = arith.constant 1.000000e+00 : f32
    %258 = vector.broadcast %cst_99 : f32 to vector<8x128xf32>
    %259 = arith.addf %258, %257 : vector<8x128xf32>
    %260 = arith.divf %258, %259 : vector<8x128xf32>
    %261 = vector.extract_strided_slice %250 {offsets = [0, 128], sizes = [8, 128], strides = [1, 1]} : vector<8x384xf32> to vector<8x128xf32>
    %262 = vector.extract_strided_slice %252 {offsets = [0, 128], sizes = [8, 128], strides = [1, 1]} : vector<8x256xf32> to vector<8x128xf32>
    %263 = arith.addf %261, %262 : vector<8x128xf32>
    %264 = arith.negf %263 : vector<8x128xf32>
    %265 = math.exp %264 : vector<8x128xf32>
    %cst_100 = arith.constant 1.000000e+00 : f32
    %266 = vector.broadcast %cst_100 : f32 to vector<8x128xf32>
    %267 = arith.addf %266, %265 : vector<8x128xf32>
    %268 = arith.divf %266, %267 : vector<8x128xf32>
    %269 = vector.extract_strided_slice %250 {offsets = [0, 256], sizes = [8, 128], strides = [1, 1]} : vector<8x384xf32> to vector<8x128xf32>
    %270 = arith.mulf %268, %247 : vector<8x128xf32>
    %c0_101 = arith.constant 0 : index
    %c0_102 = arith.constant 0 : index
    %271 = vector.load %arg5[%c0_101, %c0_102] : memref<128x128xf32, #tpu.memory_space<vmem>>, vector<128x128xf32>
    %cst_103 = arith.constant dense<0.000000e+00> : vector<8x128xf32>
    %272 = tpu.matmul %270, %271, %cst_103 {dimension_numbers = #tpu.dot_dimension_numbers<[1], [0], [0], [1], [0, 0, 1, 1], [], []>, precision = #tpu.contract_precision<fp32>} : vector<8x128xf32>, vector<128x128xf32>, vector<8x128xf32> -> vector<8x128xf32>
    %273 = arith.addf %269, %272 : vector<8x128xf32>
    %274 = math.tanh %273 : vector<8x128xf32>
    %cst_104 = arith.constant 1.000000e+00 : f32
    %275 = vector.broadcast %cst_104 : f32 to vector<8x128xf32>
    %276 = arith.subf %275, %260 : vector<8x128xf32>
    %277 = arith.mulf %276, %247 : vector<8x128xf32>
    %278 = arith.mulf %260, %274 : vector<8x128xf32>
    %279 = arith.addf %277, %278 : vector<8x128xf32>
    %280 = arith.index_cast %c6_i32 : i32 to index
    %c0_105 = arith.constant 0 : index
    %c0_106 = arith.constant 0 : index
    %281 = vector.load %arg6[%280, %c0_105, %c0_106] : memref<7x8x128xf32, #tpu.memory_space<vmem>>, vector<1x8x128xf32>
    %282 = vector.shape_cast %281 : vector<1x8x128xf32> to vector<8x128xf32>
    %283 = vector.shape_cast %279 : vector<8x128xf32> to vector<1x8x128xf32>
    tpu.vector_store %arg6[%280, %c0_105, %c0_106], %283 {strides = array<i32>} : memref<7x8x128xf32, #tpu.memory_space<vmem>>, vector<1x8x128xf32>,
    %c7_i32 = arith.constant 7 : i32
    %c0_107 = arith.constant 0 : index
    %c0_108 = arith.constant 0 : index
    %284 = vector.load %arg7[%c0_107, %c0_108] : memref<8x128xf32, #tpu.memory_space<vmem>>, vector<8x128xf32>
    tpu.vector_store %arg7[%c0_107, %c0_108], %279 {strides = array<i32>} : memref<8x128xf32, #tpu.memory_space<vmem>>, vector<8x128xf32>,
    return
  }
  func.func @transform_0(%arg0: i32, %arg1: i32) -> (i32, i32, i32) {
    %c0_i32 = arith.constant 0 : i32
    %c0_i32_0 = arith.constant 0 : i32
    return %arg1, %arg0, %c0_i32 : i32, i32, i32
  }
  func.func @transform_1(%arg0: i32, %arg1: i32) -> (i32, i32, i32) {
    %c0_i32 = arith.constant 0 : i32
    %c0_i32_0 = arith.constant 0 : i32
    return %arg1, %arg0, %c0_i32 : i32, i32, i32
  }
  func.func @transform_2(%arg0: i32, %arg1: i32) -> (i32, i32) {
    %c0_i32 = arith.constant 0 : i32
    %c0_i32_0 = arith.constant 0 : i32
    %c0_i32_1 = arith.constant 0 : i32
    return %c0_i32, %c0_i32_0 : i32, i32
  }
  func.func @transform_3(%arg0: i32, %arg1: i32) -> (i32, i32) {
    %c0_i32 = arith.constant 0 : i32
    %c0_i32_0 = arith.constant 0 : i32
    %c0_i32_1 = arith.constant 0 : i32
    return %c0_i32, %c0_i32_0 : i32, i32
  }
  func.func @transform_4(%arg0: i32, %arg1: i32) -> (i32, i32, i32) {
    %c0_i32 = arith.constant 0 : i32
    %c0_i32_0 = arith.constant 0 : i32
    return %arg1, %arg0, %c0_i32 : i32, i32, i32
  }
}

</mosaic_0001>

<llo_original>
// kernel: tpu_custom_call.1
$region0: #{tpu_custom_call.1}
  #allocation0 [shape = 'u32[]', space=smem, size = 0x4, offset = 0x4, fixed_abs, tag = 'smem constant byte address 0x4 - core index']
  #allocation1 [shape = 'u32[144,128]{1,0:T(1,128)}', space=vmem, size = 0x12000, scoped, tag = 'internal scratch']
  #allocation2 [shape = 'f32[8,128]{1,0:T(8,128)}', space=vmem, size = 0x1000, scoped, tag = 'scratch operand']
  %s0 = inlined_call_operand.hbm [shape: f32[7,8,384], index: 0, kind: input, shape index: {}]
  %s1 = inlined_call_operand.hbm [shape: f32[7,8,128], index: 1, kind: input, shape index: {}]
  %s2 = inlined_call_operand.hbm [shape: f32[128,256], index: 2, kind: input, shape index: {}]
  %s3 = inlined_call_operand.hbm [shape: f32[128,128], index: 3, kind: input, shape index: {}]
  %s4 = inlined_call_operand.hbm [shape: f32[7,8,128], index: 4, kind: output, shape index: {}]
  %s5 = sld [smem:[#allocation0]]
  $region46: #{tpu_custom_call.1} parent=0
    _
  %s7 = ssub.s32 1, %s5
  %s8 = scalar_select 0, %s7, %s5
  $region1: #{tpu_custom_call.1} parent=0
    #allocation3 [shape = 'u8[86016]{0}', space=vmem, size = 0x15000, scoped, tag = 'input window, operand 0, single buffered']
    #allocation4 [shape = 's32[1]{0}', space=sflag, size = 0x4, scoped, tag = 'scoped memory for tpu_custom_call.1']
    #allocation5 [shape = 's32[1]{0}', space=sflag, size = 0x4, scoped, tag = 'scoped memory for tpu_custom_call.1']
    #allocation6 [shape = 'u8[28672]{0}', space=vmem, size = 0x7000, scoped, tag = 'input window, operand 1, single buffered']
    #allocation7 [shape = 's32[1]{0}', space=sflag, size = 0x4, scoped, tag = 'scoped memory for tpu_custom_call.1']
    #allocation8 [shape = 'u8[131072]{0}', space=vmem, size = 0x20000, scoped, tag = 'input window, operand 2, single buffered']
    #allocation9 [shape = 'u8[65536]{0}', space=vmem, size = 0x10000, scoped, tag = 'input window, operand 3, single buffered']
    #allocation10 [shape = 's32[1]{0}', space=sflag, size = 0x4, scoped, tag = 'scoped memory for tpu_custom_call.1']
    #allocation11 [shape = 'u8[28672]{0}', space=vmem, size = 0x7000, scoped, tag = 'output window, operand 0, single buffered']
    %9 = vsyncpa [#allocation4], 0
    %10 = vsyncpa [#allocation7], 0
    %11 = vsyncpa [#allocation10], 0
    %12 = vsyncpa [#allocation5], 0
    // Predicated region
    $region2: #{tpu_custom_call.1} parent=1 // pred_check
      _
    $region3: #{tpu_custom_call.1} parent=1 // pred_check_branch
      %14 = sbr.rel (0) target = $region5
    $region4: #{tpu_custom_call.1} parent=1 // pred_region
      %s16 = ssub.s32 2688, 2688
      %17 = vsyncadd [#allocation4], %s16
      %s18 = sshll.u32 [#allocation3], 4
      %s19 = int_to_ptr.vmem [resolvable:$true] %s18
      %24 = dma.hbm_to_vmem [thread:$0]  %s0, 2688, %s19, [#allocation4], 384, 384, 24
    $region5: #{tpu_custom_call.1} parent=1 // pred_fallthru
      _
    // Predicated region
    $region6: #{tpu_custom_call.1} parent=1 // pred_check
      _
    $region7: #{tpu_custom_call.1} parent=1 // pred_check_branch
      %26 = sbr.rel (0) target = $region9
    $region8: #{tpu_custom_call.1} parent=1 // pred_region
      %s28 = ssub.s32 896, 896
      %29 = vsyncadd [#allocation7], %s28
      %s30 = sshll.u32 [#allocation6], 4
      %s31 = int_to_ptr.vmem [resolvable:$true] %s30
      %36 = dma.hbm_to_vmem [thread:$0]  %s1, 896, %s31, [#allocation7], 128, 128, 8
    $region9: #{tpu_custom_call.1} parent=1 // pred_fallthru
      _
    // Predicated region
    $region10: #{tpu_custom_call.1} parent=1 // pred_check
      _
    $region11: #{tpu_custom_call.1} parent=1 // pred_check_branch
      %38 = sbr.rel (0) target = $region13
    $region12: #{tpu_custom_call.1} parent=1 // pred_region
      %s40 = ssub.s32 4096, 4096
      %41 = vsyncadd [#allocation7], %s40
      %s42 = sshll.u32 [#allocation8], 4
      %s43 = int_to_ptr.vmem [resolvable:$true] %s42
      %48 = dma.hbm_to_vmem [thread:$0]  %s2, 4096, %s43, [#allocation7], 256, 256, 16
    $region13: #{tpu_custom_call.1} parent=1 // pred_fallthru
      _
    // Predicated region
    $region14: #{tpu_custom_call.1} parent=1 // pred_check
      _
    $region15: #{tpu_custom_call.1} parent=1 // pred_check_branch
      %50 = sbr.rel (0) target = $region17
    $region16: #{tpu_custom_call.1} parent=1 // pred_region
      %s52 = ssub.s32 2048, 2048
      %53 = vsyncadd [#allocation10], %s52
      %s54 = sshll.u32 [#allocation9], 4
      %s55 = int_to_ptr.vmem [resolvable:$true] %s54
      %60 = dma.hbm_to_vmem [thread:$0]  %s3, 2048, %s55, [#allocation10], 128, 128, 8
    $region17: #{tpu_custom_call.1} parent=1 // pred_fallthru
      _
    // Predicated region
    $region18: #{tpu_custom_call.1} parent=1 // pred_check
      _
    $region19: #{tpu_custom_call.1} parent=1 // pred_check_branch
      %62 = sbr.rel (0) target = $region21
    $region20: #{tpu_custom_call.1} parent=1 // pred_region
      %63 = dma.done [#allocation4], 2688
    $region21: #{tpu_custom_call.1} parent=1 // pred_fallthru
      _
    // Predicated region
    $region22: #{tpu_custom_call.1} parent=1 // pred_check
      _
    $region23: #{tpu_custom_call.1} parent=1 // pred_check_branch
      %65 = sbr.rel (0) target = $region25
    $region24: #{tpu_custom_call.1} parent=1 // pred_region
      %66 = dma.done [#allocation7], 896
    $region25: #{tpu_custom_call.1} parent=1 // pred_fallthru
      _
    // Predicated region
    $region26: #{tpu_custom_call.1} parent=1 // pred_check
      _
    $region27: #{tpu_custom_call.1} parent=1 // pred_check_branch
      %68 = sbr.rel (0) target = $region29
    $region28: #{tpu_custom_call.1} parent=1 // pred_region
      %69 = dma.done [#allocation7], 4096
    $region29: #{tpu_custom_call.1} parent=1 // pred_fallthru
      _
    // Predicated region
    $region30: #{tpu_custom_call.1} parent=1 // pred_check
      _
    $region31: #{tpu_custom_call.1} parent=1 // pred_check_branch
      %71 = sbr.rel (0) target = $region33
    $region32: #{tpu_custom_call.1} parent=1 // pred_region
      %72 = dma.done [#allocation10], 2048
    $region33: #{tpu_custom_call.1} parent=1 // pred_fallthru
      _
    %p73 = scmp.eq.s32.totalorder 0, 0
    // Predicated region
    $region34: #{tpu_custom_call.1} parent=1 // pred_check
      %p74 = pneg %p73
    $region35: #{tpu_custom_call.1} parent=1 // pred_check_branch
      %76 = sbr.rel (%p74) target = $region37
    $region36: #{tpu_custom_call.1} parent=1 // pred_region
      %77 = vst [vmem:[#allocation2] sm:$0xff] 0.0
    $region37: #{tpu_custom_call.1} parent=1 // pred_fallthru
      _
    %v78 = vld [vmem:[#allocation2] sm:$0xff]
    %v79 = vld [vmem:[#allocation6] sm:$0xff]
    %v80 = vmul.f32 %v79, %v78
    %v81 = vld [vmem:[#allocation3] sm:$0xff]
    %v82 = vld [vmem:[#allocation3 + $0x8] sm:$0xff]
    %v83 = vld [vmem:[#allocation3 + $0x10] sm:$0xff]
    %v84 = vld [vmem:[#allocation8] sm:$0xff]
    %v85 = vld [vmem:[#allocation8 + $0x8] sm:$0xff]
    %v86 = vld [vmem:[#allocation8 + $0x10] sm:$0xff]
    %v87 = vld [vmem:[#allocation8 + $0x18] sm:$0xff]
    %v88 = vld [vmem:[#allocation8 + $0x20] sm:$0xff]
    %v89 = vld [vmem:[#allocation8 + $0x28] sm:$0xff]
    %v90 = vld [vmem:[#allocation8 + $0x30] sm:$0xff]
    %v91 = vld [vmem:[#allocation8 + $0x38] sm:$0xff]
    %v92 = vld [vmem:[#allocation8 + $0x40] sm:$0xff]
    %v93 = vld [vmem:[#allocation8 + $0x48] sm:$0xff]
    %v94 = vld [vmem:[#allocation8 + $0x50] sm:$0xff]
    %v95 = vld [vmem:[#allocation8 + $0x58] sm:$0xff]
    %v96 = vld [vmem:[#allocation8 + $0x60] sm:$0xff]
    %v97 = vld [vmem:[#allocation8 + $0x68] sm:$0xff]
    %v98 = vld [vmem:[#allocation8 + $0x70] sm:$0xff]
    %v99 = vld [vmem:[#allocation8 + $0x78] sm:$0xff]
    %v100 = vld [vmem:[#allocation8 + $0x80] sm:$0xff]
    %v101 = vld [vmem:[#allocation8 + $0x88] sm:$0xff]
    %v102 = vld [vmem:[#allocation8 + $0x90] sm:$0xff]
    %v103 = vld [vmem:[#allocation8 + $0x98] sm:$0xff]
    %v104 = vld [vmem:[#allocation8 + $0xa0] sm:$0xff]
    %v105 = vld [vmem:[#allocation8 + $0xa8] sm:$0xff]
    %v106 = vld [vmem:[#allocation8 + $0xb0] sm:$0xff]
    %v107 = vld [vmem:[#allocation8 + $0xb8] sm:$0xff]
    %v108 = vld [vmem:[#allocation8 + $0xc0] sm:$0xff]
    %v109 = vld [vmem:[#allocation8 + $0xc8] sm:$0xff]
    %v110 = vld [vmem:[#allocation8 + $0xd0] sm:$0xff]
    %v111 = vld [vmem:[#allocation8 + $0xd8] sm:$0xff]
    %v112 = vld [vmem:[#allocation8 + $0xe0] sm:$0xff]
    %v113 = vld [vmem:[#allocation8 + $0xe8] sm:$0xff]
    %v114 = vld [vmem:[#allocation8 + $0xf0] sm:$0xff]
    %v115 = vld [vmem:[#allocation8 + $0xf8] sm:$0xff]
    %v116 = vand.u32 %v85, 4294901760
    %117 = vmatprep.subr.mxu0 %v116
    %v118 = vand.u32 %v84, 4294901760
    %119 = vmatpush1.msra.mxu0 %v118
    %v120 = vand.u32 %v87, 4294901760
    %121 = vmatprep.subr.mxu0 %v120
    %v122 = vand.u32 %v86, 4294901760
    %123 = vmatpush1.msra.mxu0 %v122
    %v124 = vand.u32 %v89, 4294901760
    %125 = vmatprep.subr.mxu0 %v124
    %v126 = vand.u32 %v88, 4294901760
    %127 = vmatpush1.msra.mxu0 %v126
    %v128 = vand.u32 %v91, 4294901760
    %129 = vmatprep.subr.mxu0 %v128
    %v130 = vand.u32 %v90, 4294901760
    %131 = vmatpush1.msra.mxu0 %v130
    %v132 = vand.u32 %v93, 4294901760
    %133 = vmatprep.subr.mxu0 %v132
    %v134 = vand.u32 %v92, 4294901760
    %135 = vmatpush1.msra.mxu0 %v134
    %v136 = vand.u32 %v95, 4294901760
    %137 = vmatprep.subr.mxu0 %v136
    %v138 = vand.u32 %v94, 4294901760
    %139 = vmatpush1.msra.mxu0 %v138
    %v140 = vand.u32 %v97, 4294901760
    %141 = vmatprep.subr.mxu0 %v140
    %v142 = vand.u32 %v96, 4294901760
    %143 = vmatpush1.msra.mxu0 %v142
    %v144 = vand.u32 %v99, 4294901760
    %145 = vmatprep.subr.mxu0 %v144
    %v146 = vand.u32 %v98, 4294901760
    %147 = vmatpush1.msra.mxu0 %v146
    %v148 = vand.u32 %v101, 4294901760
    %149 = vmatprep.subr.mxu0 %v148
    %v150 = vand.u32 %v100, 4294901760
    %151 = vmatpush1.msra.mxu0 %v150
    %v152 = vand.u32 %v103, 4294901760
    %153 = vmatprep.subr.mxu0 %v152
    %v154 = vand.u32 %v102, 4294901760
    %155 = vmatpush1.msra.mxu0 %v154
    %v156 = vand.u32 %v105, 4294901760
    %157 = vmatprep.subr.mxu0 %v156
    %v158 = vand.u32 %v104, 4294901760
    %159 = vmatpush1.msra.mxu0 %v158
    %v160 = vand.u32 %v107, 4294901760
    %161 = vmatprep.subr.mxu0 %v160
    %v162 = vand.u32 %v106, 4294901760
    %163 = vmatpush1.msra.mxu0 %v162
    %v164 = vand.u32 %v109, 4294901760
    %165 = vmatprep.subr.mxu0 %v164
    %v166 = vand.u32 %v108, 4294901760
    %167 = vmatpush1.msra.mxu0 %v166
    %v168 = vand.u32 %v111, 4294901760
    %169 = vmatprep.subr.mxu0 %v168
    %v170 = vand.u32 %v110, 4294901760
    %171 = vmatpush1.msra.mxu0 %v170
    %v172 = vand.u32 %v113, 4294901760
    %173 = vmatprep.subr.mxu0 %v172
    %v174 = vand.u32 %v112, 4294901760
    %175 = vmatpush1.msra.mxu0 %v174
    %v176 = vand.u32 %v115, 4294901760
    %177 = vmatprep.subr.mxu0 %v176
    %v178 = vand.u32 %v114, 4294901760
    %179 = vmatpush1.msra.mxu0 %v178
    %180 = vmatprep.subr.mxu0 0.0
    %181 = vmatpush1.msra.mxu0 0.0
    %182 = vmatprep.subr.mxu0 0.0
    %183 = vmatpush1.msra.mxu0 0.0
    %184 = vmatprep.subr.mxu0 0.0
    %185 = vmatpush1.msra.mxu0 0.0
    %186 = vmatprep.subr.mxu0 0.0
    %187 = vmatpush1.msra.mxu0 0.0
    %188 = vmatprep.subr.mxu0 0.0
    %189 = vmatpush1.msra.mxu0 0.0
    %190 = vmatprep.subr.mxu0 0.0
    %191 = vmatpush1.msra.mxu0 0.0
    %192 = vmatprep.subr.mxu0 0.0
    %193 = vmatpush1.msra.mxu0 0.0
    %194 = vmatprep.subr.mxu0 0.0
    %195 = vmatpush1.msra.mxu0 0.0
    %196 = vmatprep.subr.mxu0 0.0
    %197 = vmatpush1.msra.mxu0 0.0
    %198 = vmatprep.subr.mxu0 0.0
    %199 = vmatpush1.msra.mxu0 0.0
    %200 = vmatprep.subr.mxu0 0.0
    %201 = vmatpush1.msra.mxu0 0.0
    %202 = vmatprep.subr.mxu0 0.0
    %203 = vmatpush1.msra.mxu0 0.0
    %204 = vmatprep.subr.mxu0 0.0
    %205 = vmatpush1.msra.mxu0 0.0
    %206 = vmatprep.subr.mxu0 0.0
    %207 = vmatpush1.msra.mxu0 0.0
    %208 = vmatprep.subr.mxu0 0.0
    %209 = vmatpush1.msra.mxu0 0.0
    %210 = vmatprep.subr.mxu0 0.0
    %211 = vmatpush1.msra.mxu0 0.0
    %212 = vmatprep.mubr.f32.mxu0 0.0
    %v213 = vand.u32 %v80, 4294901760
    %v214 = vsub.f32 %v80, %v213
    %v215 = vand.u32 %v214, 4294901760
    %v216 = vsub.f32 %v214, %v215
    %v217 = vand.u32 %v216, 4294901760
    %218 = vmatmul.mubr.f32.gmra.mrb[0].mxu0 %v217
    %v219 = vpop.f32.mrb[0].mxu0
    %v220 = vadd.f32 0.0, %v219
    %v221 = vpop.f32.mrb[0].mxu0
    %v222 = vadd.f32 0.0, %v221
    %223 = vdwg.mxu0
    %v224 = vand.u32 %v85, 4294901760
    %v225 = vsub.f32 %v85, %v224
    %v226 = vand.u32 %v225, 4294901760
    %v227 = vsub.f32 %v225, %v226
    %v228 = vand.u32 %v227, 4294901760
    %229 = vmatprep.subr.mxu0 %v228
    %v230 = vand.u32 %v84, 4294901760
    %v231 = vsub.f32 %v84, %v230
    %v232 = vand.u32 %v231, 4294901760
    %v233 = vsub.f32 %v231, %v232
    %v234 = vand.u32 %v233, 4294901760
    %235 = vmatpush1.msra.mxu0 %v234
    %v236 = vand.u32 %v87, 4294901760
    %v237 = vsub.f32 %v87, %v236
    %v238 = vand.u32 %v237, 4294901760
    %v239 = vsub.f32 %v237, %v238
    %v240 = vand.u32 %v239, 4294901760
    %241 = vmatprep.subr.mxu0 %v240
    %v242 = vand.u32 %v86, 4294901760
    %v243 = vsub.f32 %v86, %v242
    %v244 = vand.u32 %v243, 4294901760
    %v245 = vsub.f32 %v243, %v244
    %v246 = vand.u32 %v245, 4294901760
    %247 = vmatpush1.msra.mxu0 %v246
    %v248 = vand.u32 %v89, 4294901760
    %v249 = vsub.f32 %v89, %v248
    %v250 = vand.u32 %v249, 4294901760
    %v251 = vsub.f32 %v249, %v250
    %v252 = vand.u32 %v251, 4294901760
    %253 = vmatprep.subr.mxu0 %v252
    %v254 = vand.u32 %v88, 4294901760
    %v255 = vsub.f32 %v88, %v254
    %v256 = vand.u32 %v255, 4294901760
    %v257 = vsub.f32 %v255, %v256
    %v258 = vand.u32 %v257, 4294901760
    %259 = vmatpush1.msra.mxu0 %v258
    %v260 = vand.u32 %v91, 4294901760
    %v261 = vsub.f32 %v91, %v260
    %v262 = vand.u32 %v261, 4294901760
    %v263 = vsub.f32 %v261, %v262
    %v264 = vand.u32 %v263, 4294901760
    %265 = vmatprep.subr.mxu0 %v264
    %v266 = vand.u32 %v90, 4294901760
    %v267 = vsub.f32 %v90, %v266
    %v268 = vand.u32 %v267, 4294901760
    %v269 = vsub.f32 %v267, %v268
    %v270 = vand.u32 %v269, 4294901760
    %271 = vmatpush1.msra.mxu0 %v270
    %v272 = vand.u32 %v93, 4294901760
    %v273 = vsub.f32 %v93, %v272
    %v274 = vand.u32 %v273, 4294901760
    %v275 = vsub.f32 %v273, %v274
    %v276 = vand.u32 %v275, 4294901760
    %277 = vmatprep.subr.mxu0 %v276
    %v278 = vand.u32 %v92, 4294901760
    %v279 = vsub.f32 %v92, %v278
    %v280 = vand.u32 %v279, 4294901760
    %v281 = vsub.f32 %v279, %v280
    %v282 = vand.u32 %v281, 4294901760
    %283 = vmatpush1.msra.mxu0 %v282
    %v284 = vand.u32 %v95, 4294901760
    %v285 = vsub.f32 %v95, %v284
    %v286 = vand.u32 %v285, 4294901760
    %v287 = vsub.f32 %v285, %v286
    %v288 = vand.u32 %v287, 4294901760
    %289 = vmatprep.subr.mxu0 %v288
    %v290 = vand.u32 %v94, 4294901760
    %v291 = vsub.f32 %v94, %v290
    %v292 = vand.u32 %v291, 4294901760
    %v293 = vsub.f32 %v291, %v292
    %v294 = vand.u32 %v293, 4294901760
    %295 = vmatpush1.msra.mxu0 %v294
    %v296 = vand.u32 %v97, 4294901760
    %v297 = vsub.f32 %v97, %v296
    %v298 = vand.u32 %v297, 4294901760
    %v299 = vsub.f32 %v297, %v298
    %v300 = vand.u32 %v299, 4294901760
    %301 = vmatprep.subr.mxu0 %v300
    %v302 = vand.u32 %v96, 4294901760
    %v303 = vsub.f32 %v96, %v302
    %v304 = vand.u32 %v303, 4294901760
    %v305 = vsub.f32 %v303, %v304
    %v306 = vand.u32 %v305, 4294901760
    %307 = vmatpush1.msra.mxu0 %v306
    %v308 = vand.u32 %v99, 4294901760
    %v309 = vsub.f32 %v99, %v308
    %v310 = vand.u32 %v309, 4294901760
    %v311 = vsub.f32 %v309, %v310
    %v312 = vand.u32 %v311, 4294901760
    %313 = vmatprep.subr.mxu0 %v312
    %v314 = vand.u32 %v98, 4294901760
    %v315 = vsub.f32 %v98, %v314
    %v316 = vand.u32 %v315, 4294901760
    %v317 = vsub.f32 %v315, %v316
    %v318 = vand.u32 %v317, 4294901760
    %319 = vmatpush1.msra.mxu0 %v318
    %v320 = vand.u32 %v101, 4294901760
    %v321 = vsub.f32 %v101, %v320
    %v322 = vand.u32 %v321, 4294901760
    %v323 = vsub.f32 %v321, %v322
    %v324 = vand.u32 %v323, 4294901760
    %325 = vmatprep.subr.mxu0 %v324
    %v326 = vand.u32 %v100, 4294901760
    %v327 = vsub.f32 %v100, %v326
    %v328 = vand.u32 %v327, 4294901760
    %v329 = vsub.f32 %v327, %v328
    %v330 = vand.u32 %v329, 4294901760
    %331 = vmatpush1.msra.mxu0 %v330
    %v332 = vand.u32 %v103, 4294901760
    %v333 = vsub.f32 %v103, %v332
    %v334 = vand.u32 %v333, 4294901760
    %v335 = vsub.f32 %v333, %v334
    %v336 = vand.u32 %v335, 4294901760
    %337 = vmatprep.subr.mxu0 %v336
    %v338 = vand.u32 %v102, 4294901760
    %v339 = vsub.f32 %v102, %v338
    %v340 = vand.u32 %v339, 4294901760
    %v341 = vsub.f32 %v339, %v340
    %v342 = vand.u32 %v341, 4294901760
    %343 = vmatpush1.msra.mxu0 %v342
    %v344 = vand.u32 %v105, 4294901760
    %v345 = vsub.f32 %v105, %v344
    %v346 = vand.u32 %v345, 4294901760
    %v347 = vsub.f32 %v345, %v346
    %v348 = vand.u32 %v347, 4294901760
    %349 = vmatprep.subr.mxu0 %v348
    %v350 = vand.u32 %v104, 4294901760
    %v351 = vsub.f32 %v104, %v350
    %v352 = vand.u32 %v351, 4294901760
    %v353 = vsub.f32 %v351, %v352
    %v354 = vand.u32 %v353, 4294901760
    %355 = vmatpush1.msra.mxu0 %v354
    %v356 = vand.u32 %v107, 4294901760
    %v357 = vsub.f32 %v107, %v356
    %v358 = vand.u32 %v357, 4294901760
    %v359 = vsub.f32 %v357, %v358
    %v360 = vand.u32 %v359, 4294901760
    %361 = vmatprep.subr.mxu0 %v360
    %v362 = vand.u32 %v106, 4294901760
    %v363 = vsub.f32 %v106, %v362
    %v364 = vand.u32 %v363, 4294901760
    %v365 = vsub.f32 %v363, %v364
    %v366 = vand.u32 %v365, 4294901760
    %367 = vmatpush1.msra.mxu0 %v366
    %v368 = vand.u32 %v109, 4294901760
    %v369 = vsub.f32 %v109, %v368
    %v370 = vand.u32 %v369, 4294901760
    %v371 = vsub.f32 %v369, %v370
    %v372 = vand.u32 %v371, 4294901760
    %373 = vmatprep.subr.mxu0 %v372
    %v374 = vand.u32 %v108, 4294901760
    %v375 = vsub.f32 %v108, %v374
    %v376 = vand.u32 %v375, 4294901760
    %v377 = vsub.f32 %v375, %v376
    %v378 = vand.u32 %v377, 4294901760
    %379 = vmatpush1.msra.mxu0 %v378
    %v380 = vand.u32 %v111, 4294901760
    %v381 = vsub.f32 %v111, %v380
    %v382 = vand.u32 %v381, 4294901760
    %v383 = vsub.f32 %v381, %v382
    %v384 = vand.u32 %v383, 4294901760
    %385 = vmatprep.subr.mxu0 %v384
    %v386 = vand.u32 %v110, 4294901760
    %v387 = vsub.f32 %v110, %v386
    %v388 = vand.u32 %v387, 4294901760
    %v389 = vsub.f32 %v387, %v388
    %v390 = vand.u32 %v389, 4294901760
    %391 = vmatpush1.msra.mxu0 %v390
    %v392 = vand.u32 %v113, 4294901760
    %v393 = vsub.f32 %v113, %v392
    %v394 = vand.u32 %v393, 4294901760
    %v395 = vsub.f32 %v393, %v394
    %v396 = vand.u32 %v395, 4294901760
    %397 = vmatprep.subr.mxu0 %v396
    %v398 = vand.u32 %v112, 4294901760
    %v399 = vsub.f32 %v112, %v398
    %v400 = vand.u32 %v399, 4294901760
    %v401 = vsub.f32 %v399, %v400
    %v402 = vand.u32 %v401, 4294901760
    %403 = vmatpush1.msra.mxu0 %v402
    %v404 = vand.u32 %v115, 4294901760
    %v405 = vsub.f32 %v115, %v404
    %v406 = vand.u32 %v405, 4294901760
    %v407 = vsub.f32 %v405, %v406
    %v408 = vand.u32 %v407, 4294901760
    %409 = vmatprep.subr.mxu0 %v408
    %v410 = vand.u32 %v114, 4294901760
    %v411 = vsub.f32 %v114, %v410
    %v412 = vand.u32 %v411, 4294901760
    %v413 = vsub.f32 %v411, %v412
    %v414 = vand.u32 %v413, 4294901760
    %415 = vmatpush1.msra.mxu0 %v414
    %416 = vmatprep.subr.mxu0 0.0
    %417 = vmatpush1.msra.mxu0 0.0
    %418 = vmatprep.subr.mxu0 0.0
    %419 = vmatpush1.msra.mxu0 0.0
    %420 = vmatprep.subr.mxu0 0.0
    %421 = vmatpush1.msra.mxu0 0.0
    %422 = vmatprep.subr.mxu0 0.0
    %423 = vmatpush1.msra.mxu0 0.0
    %424 = vmatprep.subr.mxu0 0.0
    %425 = vmatpush1.msra.mxu0 0.0
    %426 = vmatprep.subr.mxu0 0.0
    %427 = vmatpush1.msra.mxu0 0.0
    %428 = vmatprep.subr.mxu0 0.0
    %429 = vmatpush1.msra.mxu0 0.0
    %430 = vmatprep.subr.mxu0 0.0
    %431 = vmatpush1.msra.mxu0 0.0
    %432 = vmatprep.subr.mxu0 0.0
    %433 = vmatpush1.msra.mxu0 0.0
    %434 = vmatprep.subr.mxu0 0.0
    %435 = vmatpush1.msra.mxu0 0.0
    %436 = vmatprep.subr.mxu0 0.0
    %437 = vmatpush1.msra.mxu0 0.0
    %438 = vmatprep.subr.mxu0 0.0
    %439 = vmatpush1.msra.mxu0 0.0
    %440 = vmatprep.subr.mxu0 0.0
    %441 = vmatpush1.msra.mxu0 0.0
    %442 = vmatprep.subr.mxu0 0.0
    %443 = vmatpush1.msra.mxu0 0.0
    %444 = vmatprep.subr.mxu0 0.0
    %445 = vmatpush1.msra.mxu0 0.0
    %446 = vmatprep.subr.mxu0 0.0
    %447 = vmatpush1.msra.mxu0 0.0
    %448 = vmatprep.mubr.f32.mxu0 0.0
    %v449 = vand.u32 %v80, 4294901760
    %450 = vmatmul.mubr.f32.gmra.mrb[0].mxu0 %v449
    %v451 = vpop.f32.mrb[0].mxu0
    %v452 = vadd.f32 %v220, %v451
    %v453 = vpop.f32.mrb[0].mxu0
    %v454 = vadd.f32 %v222, %v453
    %455 = vdwg.mxu0
    %v456 = vand.u32 %v85, 4294901760
    %v457 = vsub.f32 %v85, %v456
    %458 = vmatprep.subr.mxu0 %v457
    %v459 = vand.u32 %v84, 4294901760
    %v460 = vsub.f32 %v84, %v459
    %461 = vmatpush1.msra.mxu0 %v460
    %v462 = vand.u32 %v87, 4294901760
    %v463 = vsub.f32 %v87, %v462
    %464 = vmatprep.subr.mxu0 %v463
    %v465 = vand.u32 %v86, 4294901760
    %v466 = vsub.f32 %v86, %v465
    %467 = vmatpush1.msra.mxu0 %v466
    %v468 = vand.u32 %v89, 4294901760
    %v469 = vsub.f32 %v89, %v468
    %470 = vmatprep.subr.mxu0 %v469
    %v471 = vand.u32 %v88, 4294901760
    %v472 = vsub.f32 %v88, %v471
    %473 = vmatpush1.msra.mxu0 %v472
    %v474 = vand.u32 %v91, 4294901760
    %v475 = vsub.f32 %v91, %v474
    %476 = vmatprep.subr.mxu0 %v475
    %v477 = vand.u32 %v90, 4294901760
    %v478 = vsub.f32 %v90, %v477
    %479 = vmatpush1.msra.mxu0 %v478
    %v480 = vand.u32 %v93, 4294901760
    %v481 = vsub.f32 %v93, %v480
    %482 = vmatprep.subr.mxu0 %v481
    %v483 = vand.u32 %v92, 4294901760
    %v484 = vsub.f32 %v92, %v483
    %485 = vmatpush1.msra.mxu0 %v484
    %v486 = vand.u32 %v95, 4294901760
    %v487 = vsub.f32 %v95, %v486
    %488 = vmatprep.subr.mxu0 %v487
    %v489 = vand.u32 %v94, 4294901760
    %v490 = vsub.f32 %v94, %v489
    %491 = vmatpush1.msra.mxu0 %v490
    %v492 = vand.u32 %v97, 4294901760
    %v493 = vsub.f32 %v97, %v492
    %494 = vmatprep.subr.mxu0 %v493
    %v495 = vand.u32 %v96, 4294901760
    %v496 = vsub.f32 %v96, %v495
    %497 = vmatpush1.msra.mxu0 %v496
    %v498 = vand.u32 %v99, 4294901760
    %v499 = vsub.f32 %v99, %v498
    %500 = vmatprep.subr.mxu0 %v499
    %v501 = vand.u32 %v98, 4294901760
    %v502 = vsub.f32 %v98, %v501
    %503 = vmatpush1.msra.mxu0 %v502
    %v504 = vand.u32 %v101, 4294901760
    %v505 = vsub.f32 %v101, %v504
    %506 = vmatprep.subr.mxu0 %v505
    %v507 = vand.u32 %v100, 4294901760
    %v508 = vsub.f32 %v100, %v507
    %509 = vmatpush1.msra.mxu0 %v508
    %v510 = vand.u32 %v103, 4294901760
    %v511 = vsub.f32 %v103, %v510
    %512 = vmatprep.subr.mxu0 %v511
    %v513 = vand.u32 %v102, 4294901760
    %v514 = vsub.f32 %v102, %v513
    %515 = vmatpush1.msra.mxu0 %v514
    %v516 = vand.u32 %v105, 4294901760
    %v517 = vsub.f32 %v105, %v516
    %518 = vmatprep.subr.mxu0 %v517
    %v519 = vand.u32 %v104, 4294901760
    %v520 = vsub.f32 %v104, %v519
    %521 = vmatpush1.msra.mxu0 %v520
    %v522 = vand.u32 %v107, 4294901760
    %v523 = vsub.f32 %v107, %v522
    %524 = vmatprep.subr.mxu0 %v523
    %v525 = vand.u32 %v106, 4294901760
    %v526 = vsub.f32 %v106, %v525
    %527 = vmatpush1.msra.mxu0 %v526
    %v528 = vand.u32 %v109, 4294901760
    %v529 = vsub.f32 %v109, %v528
    %530 = vmatprep.subr.mxu0 %v529
    %v531 = vand.u32 %v108, 4294901760
    %v532 = vsub.f32 %v108, %v531
    %533 = vmatpush1.msra.mxu0 %v532
    %v534 = vand.u32 %v111, 4294901760
    %v535 = vsub.f32 %v111, %v534
    %536 = vmatprep.subr.mxu0 %v535
    %v537 = vand.u32 %v110, 4294901760
    %v538 = vsub.f32 %v110, %v537
    %539 = vmatpush1.msra.mxu0 %v538
    %v540 = vand.u32 %v113, 4294901760
    %v541 = vsub.f32 %v113, %v540
    %542 = vmatprep.subr.mxu0 %v541
    %v543 = vand.u32 %v112, 4294901760
    %v544 = vsub.f32 %v112, %v543
    %545 = vmatpush1.msra.mxu0 %v544
    %v546 = vand.u32 %v115, 4294901760
    %v547 = vsub.f32 %v115, %v546
    %548 = vmatprep.subr.mxu0 %v547
    %v549 = vand.u32 %v114, 4294901760
    %v550 = vsub.f32 %v114, %v549
    %551 = vmatpush1.msra.mxu0 %v550
    %552 = vmatprep.subr.mxu0 0.0
    %553 = vmatpush1.msra.mxu0 0.0
    %554 = vmatprep.subr.mxu0 0.0
    %555 = vmatpush1.msra.mxu0 0.0
    %556 = vmatprep.subr.mxu0 0.0
    %557 = vmatpush1.msra.mxu0 0.0
    %558 = vmatprep.subr.mxu0 0.0
    %559 = vmatpush1.msra.mxu0 0.0
    %560 = vmatprep.subr.mxu0 0.0
    %561 = vmatpush1.msra.mxu0 0.0
    %562 = vmatprep.subr.mxu0 0.0
    %563 = vmatpush1.msra.mxu0 0.0
    %564 = vmatprep.subr.mxu0 0.0
    %565 = vmatpush1.msra.mxu0 0.0
    %566 = vmatprep.subr.mxu0 0.0
    %567 = vmatpush1.msra.mxu0 0.0
    %568 = vmatprep.subr.mxu0 0.0
    %569 = vmatpush1.msra.mxu0 0.0
    %570 = vmatprep.subr.mxu0 0.0
    %571 = vmatpush1.msra.mxu0 0.0
    %572 = vmatprep.subr.mxu0 0.0
    %573 = vmatpush1.msra.mxu0 0.0
    %574 = vmatprep.subr.mxu0 0.0
    %575 = vmatpush1.msra.mxu0 0.0
    %576 = vmatprep.subr.mxu0 0.0
    %577 = vmatpush1.msra.mxu0 0.0
    %578 = vmatprep.subr.mxu0 0.0
    %579 = vmatpush1.msra.mxu0 0.0
    %580 = vmatprep.subr.mxu0 0.0
    %581 = vmatpush1.msra.mxu0 0.0
    %582 = vmatprep.subr.mxu0 0.0
    %583 = vmatpush1.msra.mxu0 0.0
    %584 = vmatprep.mubr.f32.mxu0 0.0
    %v585 = vand.u32 %v80, 4294901760
    %v586 = vsub.f32 %v80, %v585
    %587 = vmatmul.mubr.f32.gmra.mrb[0].mxu0 %v586
    %v588 = vpop.f32.mrb[0].mxu0
    %v589 = vadd.f32 %v452, %v588
    %v590 = vpop.f32.mrb[0].mxu0
    %v591 = vadd.f32 %v454, %v590
    %592 = vdwg.mxu0
    %v593 = vand.u32 %v85, 4294901760
    %594 = vmatprep.subr.mxu0 %v593
    %v595 = vand.u32 %v84, 4294901760
    %596 = vmatpush1.msra.mxu0 %v595
    %v597 = vand.u32 %v87, 4294901760
    %598 = vmatprep.subr.mxu0 %v597
    %v599 = vand.u32 %v86, 4294901760
    %600 = vmatpush1.msra.mxu0 %v599
    %v601 = vand.u32 %v89, 4294901760
    %602 = vmatprep.subr.mxu0 %v601
    %v603 = vand.u32 %v88, 4294901760
    %604 = vmatpush1.msra.mxu0 %v603
    %v605 = vand.u32 %v91, 4294901760
    %606 = vmatprep.subr.mxu0 %v605
    %v607 = vand.u32 %v90, 4294901760
    %608 = vmatpush1.msra.mxu0 %v607
    %v609 = vand.u32 %v93, 4294901760
    %610 = vmatprep.subr.mxu0 %v609
    %v611 = vand.u32 %v92, 4294901760
    %612 = vmatpush1.msra.mxu0 %v611
    %v613 = vand.u32 %v95, 4294901760
    %614 = vmatprep.subr.mxu0 %v613
    %v615 = vand.u32 %v94, 4294901760
    %616 = vmatpush1.msra.mxu0 %v615
    %v617 = vand.u32 %v97, 4294901760
    %618 = vmatprep.subr.mxu0 %v617
    %v619 = vand.u32 %v96, 4294901760
    %620 = vmatpush1.msra.mxu0 %v619
    %v621 = vand.u32 %v99, 4294901760
    %622 = vmatprep.subr.mxu0 %v621
    %v623 = vand.u32 %v98, 4294901760
    %624 = vmatpush1.msra.mxu0 %v623
    %v625 = vand.u32 %v101, 4294901760
    %626 = vmatprep.subr.mxu0 %v625
    %v627 = vand.u32 %v100, 4294901760
    %628 = vmatpush1.msra.mxu0 %v627
    %v629 = vand.u32 %v103, 4294901760
    %630 = vmatprep.subr.mxu0 %v629
    %v631 = vand.u32 %v102, 4294901760
    %632 = vmatpush1.msra.mxu0 %v631
    %v633 = vand.u32 %v105, 4294901760
    %634 = vmatprep.subr.mxu0 %v633
    %v635 = vand.u32 %v104, 4294901760
    %636 = vmatpush1.msra.mxu0 %v635
    %v637 = vand.u32 %v107, 4294901760
    %638 = vmatprep.subr.mxu0 %v637
    %v639 = vand.u32 %v106, 4294901760
    %640 = vmatpush1.msra.mxu0 %v639
    %v641 = vand.u32 %v109, 4294901760
    %642 = vmatprep.subr.mxu0 %v641
    %v643 = vand.u32 %v108, 4294901760
    %644 = vmatpush1.msra.mxu0 %v643
    %v645 = vand.u32 %v111, 4294901760
    %646 = vmatprep.subr.mxu0 %v645
    %v647 = vand.u32 %v110, 4294901760
    %648 = vmatpush1.msra.mxu0 %v647
    %v649 = vand.u32 %v113, 4294901760
    %650 = vmatprep.subr.mxu0 %v649
    %v651 = vand.u32 %v112, 4294901760
    %652 = vmatpush1.msra.mxu0 %v651
    %v653 = vand.u32 %v115, 4294901760
    %654 = vmatprep.subr.mxu0 %v653
    %v655 = vand.u32 %v114, 4294901760
    %656 = vmatpush1.msra.mxu0 %v655
    %657 = vmatprep.subr.mxu0 0.0
    %658 = vmatpush1.msra.mxu0 0.0
    %659 = vmatprep.subr.mxu0 0.0
    %660 = vmatpush1.msra.mxu0 0.0
    %661 = vmatprep.subr.mxu0 0.0
    %662 = vmatpush1.msra.mxu0 0.0
    %663 = vmatprep.subr.mxu0 0.0
    %664 = vmatpush1.msra.mxu0 0.0
    %665 = vmatprep.subr.mxu0 0.0
    %666 = vmatpush1.msra.mxu0 0.0
    %667 = vmatprep.subr.mxu0 0.0
    %668 = vmatpush1.msra.mxu0 0.0
    %669 = vmatprep.subr.mxu0 0.0
    %670 = vmatpush1.msra.mxu0 0.0
    %671 = vmatprep.subr.mxu0 0.0
    %672 = vmatpush1.msra.mxu0 0.0
    %673 = vmatprep.subr.mxu0 0.0
    %674 = vmatpush1.msra.mxu0 0.0
    %675 = vmatprep.subr.mxu0 0.0
    %676 = vmatpush1.msra.mxu0 0.0
    %677 = vmatprep.subr.mxu0 0.0
    %678 = vmatpush1.msra.mxu0 0.0
    %679 = vmatprep.subr.mxu0 0.0
    %680 = vmatpush1.msra.mxu0 0.0
    %681 = vmatprep.subr.mxu0 0.0
    %682 = vmatpush1.msra.mxu0 0.0
    %683 = vmatprep.subr.mxu0 0.0
    %684 = vmatpush1.msra.mxu0 0.0
    %685 = vmatprep.subr.mxu0 0.0
    %686 = vmatpush1.msra.mxu0 0.0
    %687 = vmatprep.subr.mxu0 0.0
    %688 = vmatpush1.msra.mxu0 0.0
    %689 = vmatprep.mubr.f32.mxu0 0.0
    %v690 = vand.u32 %v80, 4294901760
    %v691 = vsub.f32 %v80, %v690
    %v692 = vand.u32 %v691, 4294901760
    %693 = vmatmul.mubr.f32.gmra.mrb[0].mxu0 %v692
    %v694 = vpop.f32.mrb[0].mxu0
    %v695 = vadd.f32 %v589, %v694
    %v696 = vpop.f32.mrb[0].mxu0
    %v697 = vadd.f32 %v591, %v696
    %698 = vdwg.mxu0
    %v699 = vand.u32 %v85, 4294901760
    %v700 = vsub.f32 %v85, %v699
    %v701 = vand.u32 %v700, 4294901760
    %702 = vmatprep.subr.mxu0 %v701
    %v703 = vand.u32 %v84, 4294901760
    %v704 = vsub.f32 %v84, %v703
    %v705 = vand.u32 %v704, 4294901760
    %706 = vmatpush1.msra.mxu0 %v705
    %v707 = vand.u32 %v87, 4294901760
    %v708 = vsub.f32 %v87, %v707
    %v709 = vand.u32 %v708, 4294901760
    %710 = vmatprep.subr.mxu0 %v709
    %v711 = vand.u32 %v86, 4294901760
    %v712 = vsub.f32 %v86, %v711
    %v713 = vand.u32 %v712, 4294901760
    %714 = vmatpush1.msra.mxu0 %v713
    %v715 = vand.u32 %v89, 4294901760
    %v716 = vsub.f32 %v89, %v715
    %v717 = vand.u32 %v716, 4294901760
    %718 = vmatprep.subr.mxu0 %v717
    %v719 = vand.u32 %v88, 4294901760
    %v720 = vsub.f32 %v88, %v719
    %v721 = vand.u32 %v720, 4294901760
    %722 = vmatpush1.msra.mxu0 %v721
    %v723 = vand.u32 %v91, 4294901760
    %v724 = vsub.f32 %v91, %v723
    %v725 = vand.u32 %v724, 4294901760
    %726 = vmatprep.subr.mxu0 %v725
    %v727 = vand.u32 %v90, 4294901760
    %v728 = vsub.f32 %v90, %v727
    %v729 = vand.u32 %v728, 4294901760
    %730 = vmatpush1.msra.mxu0 %v729
    %v731 = vand.u32 %v93, 4294901760
    %v732 = vsub.f32 %v93, %v731
    %v733 = vand.u32 %v732, 4294901760
    %734 = vmatprep.subr.mxu0 %v733
    %v735 = vand.u32 %v92, 4294901760
    %v736 = vsub.f32 %v92, %v735
    %v737 = vand.u32 %v736, 4294901760
    %738 = vmatpush1.msra.mxu0 %v737
    %v739 = vand.u32 %v95, 4294901760
    %v740 = vsub.f32 %v95, %v739
    %v741 = vand.u32 %v740, 4294901760
    %742 = vmatprep.subr.mxu0 %v741
    %v743 = vand.u32 %v94, 4294901760
    %v744 = vsub.f32 %v94, %v743
    %v745 = vand.u32 %v744, 4294901760
    %746 = vmatpush1.msra.mxu0 %v745
    %v747 = vand.u32 %v97, 4294901760
    %v748 = vsub.f32 %v97, %v747
    %v749 = vand.u32 %v748, 4294901760
    %750 = vmatprep.subr.mxu0 %v749
    %v751 = vand.u32 %v96, 4294901760
    %v752 = vsub.f32 %v96, %v751
    %v753 = vand.u32 %v752, 4294901760
    %754 = vmatpush1.msra.mxu0 %v753
    %v755 = vand.u32 %v99, 4294901760
    %v756 = vsub.f32 %v99, %v755
    %v757 = vand.u32 %v756, 4294901760
    %758 = vmatprep.subr.mxu0 %v757
    %v759 = vand.u32 %v98, 4294901760
    %v760 = vsub.f32 %v98, %v759
    %v761 = vand.u32 %v760, 4294901760
    %762 = vmatpush1.msra.mxu0 %v761
    %v763 = vand.u32 %v101, 4294901760
    %v764 = vsub.f32 %v101, %v763
    %v765 = vand.u32 %v764, 4294901760
    %766 = vmatprep.subr.mxu0 %v765
    %v767 = vand.u32 %v100, 4294901760
    %v768 = vsub.f32 %v100, %v767
    %v769 = vand.u32 %v768, 4294901760
    %770 = vmatpush1.msra.mxu0 %v769
    %v771 = vand.u32 %v103, 4294901760
    %v772 = vsub.f32 %v103, %v771
    %v773 = vand.u32 %v772, 4294901760
    %774 = vmatprep.subr.mxu0 %v773
    %v775 = vand.u32 %v102, 4294901760
    %v776 = vsub.f32 %v102, %v775
    %v777 = vand.u32 %v776, 4294901760
    %778 = vmatpush1.msra.mxu0 %v777
    %v779 = vand.u32 %v105, 4294901760
    %v780 = vsub.f32 %v105, %v779
    %v781 = vand.u32 %v780, 4294901760
    %782 = vmatprep.subr.mxu0 %v781
    %v783 = vand.u32 %v104, 4294901760
    %v784 = vsub.f32 %v104, %v783
    %v785 = vand.u32 %v784, 4294901760
    %786 = vmatpush1.msra.mxu0 %v785
    %v787 = vand.u32 %v107, 4294901760
    %v788 = vsub.f32 %v107, %v787
    %v789 = vand.u32 %v788, 4294901760
    %790 = vmatprep.subr.mxu0 %v789
    %v791 = vand.u32 %v106, 4294901760
    %v792 = vsub.f32 %v106, %v791
    %v793 = vand.u32 %v792, 4294901760
    %794 = vmatpush1.msra.mxu0 %v793
    %v795 = vand.u32 %v109, 4294901760
    %v796 = vsub.f32 %v109, %v795
    %v797 = vand.u32 %v796, 4294901760
    %798 = vmatprep.subr.mxu0 %v797
    %v799 = vand.u32 %v108, 4294901760
    %v800 = vsub.f32 %v108, %v799
    %v801 = vand.u32 %v800, 4294901760
    %802 = vmatpush1.msra.mxu0 %v801
    %v803 = vand.u32 %v111, 4294901760
    %v804 = vsub.f32 %v111, %v803
    %v805 = vand.u32 %v804, 4294901760
    %806 = vmatprep.subr.mxu0 %v805
    %v807 = vand.u32 %v110, 4294901760
    %v808 = vsub.f32 %v110, %v807
    %v809 = vand.u32 %v808, 4294901760
    %810 = vmatpush1.msra.mxu0 %v809
    %v811 = vand.u32 %v113, 4294901760
    %v812 = vsub.f32 %v113, %v811
    %v813 = vand.u32 %v812, 4294901760
    %814 = vmatprep.subr.mxu0 %v813
    %v815 = vand.u32 %v112, 4294901760
    %v816 = vsub.f32 %v112, %v815
    %v817 = vand.u32 %v816, 4294901760
    %818 = vmatpush1.msra.mxu0 %v817
    %v819 = vand.u32 %v115, 4294901760
    %v820 = vsub.f32 %v115, %v819
    %v821 = vand.u32 %v820, 4294901760
    %822 = vmatprep.subr.mxu0 %v821
    %v823 = vand.u32 %v114, 4294901760
    %v824 = vsub.f32 %v114, %v823
    %v825 = vand.u32 %v824, 4294901760
    %826 = vmatpush1.msra.mxu0 %v825
    %827 = vmatprep.subr.mxu0 0.0
    %828 = vmatpush1.msra.mxu0 0.0
    %829 = vmatprep.subr.mxu0 0.0
    %830 = vmatpush1.msra.mxu0 0.0
    %831 = vmatprep.subr.mxu0 0.0
    %832 = vmatpush1.msra.mxu0 0.0
    %833 = vmatprep.subr.mxu0 0.0
    %834 = vmatpush1.msra.mxu0 0.0
    %835 = vmatprep.subr.mxu0 0.0
    %836 = vmatpush1.msra.mxu0 0.0
    %837 = vmatprep.subr.mxu0 0.0
    %838 = vmatpush1.msra.mxu0 0.0
    %839 = vmatprep.subr.mxu0 0.0
    %840 = vmatpush1.msra.mxu0 0.0
    %841 = vmatprep.subr.mxu0 0.0
    %842 = vmatpush1.msra.mxu0 0.0
    %843 = vmatprep.subr.mxu0 0.0
    %844 = vmatpush1.msra.mxu0 0.0
    %845 = vmatprep.subr.mxu0 0.0
    %846 = vmatpush1.msra.mxu0 0.0
    %847 = vmatprep.subr.mxu0 0.0
    %848 = vmatpush1.msra.mxu0 0.0
    %849 = vmatprep.subr.mxu0 0.0
    %850 = vmatpush1.msra.mxu0 0.0
    %851 = vmatprep.subr.mxu0 0.0
    %852 = vmatpush1.msra.mxu0 0.0
    %853 = vmatprep.subr.mxu0 0.0
    %854 = vmatpush1.msra.mxu0 0.0
    %855 = vmatprep.subr.mxu0 0.0
    %856 = vmatpush1.msra.mxu0 0.0
    %857 = vmatprep.subr.mxu0 0.0
    %858 = vmatpush1.msra.mxu0 0.0
    %859 = vmatprep.mubr.f32.mxu0 0.0
    %v860 = vand.u32 %v80, 4294901760
    %861 = vmatmul.mubr.f32.gmra.mrb[0].mxu0 %v860
    %v862 = vpop.f32.mrb[0].mxu0
    %v863 = vadd.f32 %v695, %v862
    %v864 = vpop.f32.mrb[0].mxu0
    %v865 = vadd.f32 %v697, %v864
    %866 = vdwg.mxu0
    %v867 = vand.u32 %v85, 4294901760
    %868 = vmatprep.subr.mxu0 %v867
    %v869 = vand.u32 %v84, 4294901760
    %870 = vmatpush1.msra.mxu0 %v869
    %v871 = vand.u32 %v87, 4294901760
    %872 = vmatprep.subr.mxu0 %v871
    %v873 = vand.u32 %v86, 4294901760
    %874 = vmatpush1.msra.mxu0 %v873
    %v875 = vand.u32 %v89, 4294901760
    %876 = vmatprep.subr.mxu0 %v875
    %v877 = vand.u32 %v88, 4294901760
    %878 = vmatpush1.msra.mxu0 %v877
    %v879 = vand.u32 %v91, 4294901760
    %880 = vmatprep.subr.mxu0 %v879
    %v881 = vand.u32 %v90, 4294901760
    %882 = vmatpush1.msra.mxu0 %v881
    %v883 = vand.u32 %v93, 4294901760
    %884 = vmatprep.subr.mxu0 %v883
    %v885 = vand.u32 %v92, 4294901760
    %886 = vmatpush1.msra.mxu0 %v885
    %v887 = vand.u32 %v95, 4294901760
    %888 = vmatprep.subr.mxu0 %v887
    %v889 = vand.u32 %v94, 4294901760
    %890 = vmatpush1.msra.mxu0 %v889
    %v891 = vand.u32 %v97, 4294901760
    %892 = vmatprep.subr.mxu0 %v891
    %v893 = vand.u32 %v96, 4294901760
    %894 = vmatpush1.msra.mxu0 %v893
    %v895 = vand.u32 %v99, 4294901760
    %896 = vmatprep.subr.mxu0 %v895
    %v897 = vand.u32 %v98, 4294901760
    %898 = vmatpush1.msra.mxu0 %v897
    %v899 = vand.u32 %v101, 4294901760
    %900 = vmatprep.subr.mxu0 %v899
    %v901 = vand.u32 %v100, 4294901760
    %902 = vmatpush1.msra.mxu0 %v901
    %v903 = vand.u32 %v103, 4294901760
    %904 = vmatprep.subr.mxu0 %v903
    %v905 = vand.u32 %v102, 4294901760
    %906 = vmatpush1.msra.mxu0 %v905
    %v907 = vand.u32 %v105, 4294901760
    %908 = vmatprep.subr.mxu0 %v907
    %v909 = vand.u32 %v104, 4294901760
    %910 = vmatpush1.msra.mxu0 %v909
    %v911 = vand.u32 %v107, 4294901760
    %912 = vmatprep.subr.mxu0 %v911
    %v913 = vand.u32 %v106, 4294901760
    %914 = vmatpush1.msra.mxu0 %v913
    %v915 = vand.u32 %v109, 4294901760
    %916 = vmatprep.subr.mxu0 %v915
    %v917 = vand.u32 %v108, 4294901760
    %918 = vmatpush1.msra.mxu0 %v917
    %v919 = vand.u32 %v111, 4294901760
    %920 = vmatprep.subr.mxu0 %v919
    %v921 = vand.u32 %v110, 4294901760
    %922 = vmatpush1.msra.mxu0 %v921
    %v923 = vand.u32 %v113, 4294901760
    %924 = vmatprep.subr.mxu0 %v923
    %v925 = vand.u32 %v112, 4294901760
    %926 = vmatpush1.msra.mxu0 %v925
    %v927 = vand.u32 %v115, 4294901760
    %928 = vmatprep.subr.mxu0 %v927
    %v929 = vand.u32 %v114, 4294901760
    %930 = vmatpush1.msra.mxu0 %v929
    %931 = vmatprep.subr.mxu0 0.0
    %932 = vmatpush1.msra.mxu0 0.0
    %933 = vmatprep.subr.mxu0 0.0
    %934 = vmatpush1.msra.mxu0 0.0
    %935 = vmatprep.subr.mxu0 0.0
    %936 = vmatpush1.msra.mxu0 0.0
    %937 = vmatprep.subr.mxu0 0.0
    %938 = vmatpush1.msra.mxu0 0.0
    %939 = vmatprep.subr.mxu0 0.0
    %940 = vmatpush1.msra.mxu0 0.0
    %941 = vmatprep.subr.mxu0 0.0
    %942 = vmatpush1.msra.mxu0 0.0
    %943 = vmatprep.subr.mxu0 0.0
    %944 = vmatpush1.msra.mxu0 0.0
    %945 = vmatprep.subr.mxu0 0.0
    %946 = vmatpush1.msra.mxu0 0.0
    %947 = vmatprep.subr.mxu0 0.0
    %948 = vmatpush1.msra.mxu0 0.0
    %949 = vmatprep.subr.mxu0 0.0
    %950 = vmatpush1.msra.mxu0 0.0
    %951 = vmatprep.subr.mxu0 0.0
    %952 = vmatpush1.msra.mxu0 0.0
    %953 = vmatprep.subr.mxu0 0.0
    %954 = vmatpush1.msra.mxu0 0.0
    %955 = vmatprep.subr.mxu0 0.0
    %956 = vmatpush1.msra.mxu0 0.0
    %957 = vmatprep.subr.mxu0 0.0
    %958 = vmatpush1.msra.mxu0 0.0
    %959 = vmatprep.subr.mxu0 0.0
    %960 = vmatpush1.msra.mxu0 0.0
    %961 = vmatprep.subr.mxu0 0.0
    %962 = vmatpush1.msra.mxu0 0.0
    %963 = vmatprep.mubr.f32.mxu0 0.0
    %v964 = vand.u32 %v80, 4294901760
    %965 = vmatmul.mubr.f32.gmra.mrb[0].mxu0 %v964
    %v966 = vpop.f32.mrb[0].mxu0
    %v967 = vadd.f32 %v863, %v966
    %v968 = vpop.f32.mrb[0].mxu0
    %v969 = vadd.f32 %v865, %v968
    %970 = vdwg.mxu0
    %v971 = vadd.f32 %v81, %v967
    %v972 = vxor.u32 %v971, 2147483648
    %v973 = vmul.f32 %v972, 1.442695
    %v974 = vpow.pop %v973
    %v975 = vadd.f32 %v974, 1.0
    %v976 = vrcp.pop %v975
    %v977 = vmul.f32 1.0, %v976
    %v978 = vadd.f32 %v82, %v969
    %v979 = vxor.u32 %v978, 2147483648
    %v980 = vmul.f32 %v979, 1.442695
    %v981 = vpow.pop %v980
    %v982 = vadd.f32 %v981, 1.0
    %v983 = vrcp.pop %v982
    %v984 = vmul.f32 1.0, %v983
    %v985 = vmul.f32 %v984, %v80
    %v986 = vld [vmem:[#allocation9] sm:$0xff]
    %v987 = vld [vmem:[#allocation9 + $0x8] sm:$0xff]
    %v988 = vld [vmem:[#allocation9 + $0x10] sm:$0xff]
    %v989 = vld [vmem:[#allocation9 + $0x18] sm:$0xff]
    %v990 = vld [vmem:[#allocation9 + $0x20] sm:$0xff]
    %v991 = vld [vmem:[#allocation9 + $0x28] sm:$0xff]
    %v992 = vld [vmem:[#allocation9 + $0x30] sm:$0xff]
    %v993 = vld [vmem:[#allocation9 + $0x38] sm:$0xff]
    %v994 = vld [vmem:[#allocation9 + $0x40] sm:$0xff]
    %v995 = vld [vmem:[#allocation9 + $0x48] sm:$0xff]
    %v996 = vld [vmem:[#allocation9 + $0x50] sm:$0xff]
    %v997 = vld [vmem:[#allocation9 + $0x58] sm:$0xff]
    %v998 = vld [vmem:[#allocation9 + $0x60] sm:$0xff]
    %v999 = vld [vmem:[#allocation9 + $0x68] sm:$0xff]
    %v1000 = vld [vmem:[#allocation9 + $0x70] sm:$0xff]
    %v1001 = vld [vmem:[#allocation9 + $0x78] sm:$0xff]
    %1002 = vmatprep.subr.mxu0 0.0
    %v1003 = vand.u32 %v986, 4294901760
    %1004 = vmatpush1.msra.mxu0 %v1003
    %1005 = vmatprep.subr.mxu0 0.0
    %v1006 = vand.u32 %v987, 4294901760
    %1007 = vmatpush1.msra.mxu0 %v1006
    %1008 = vmatprep.subr.mxu0 0.0
    %v1009 = vand.u32 %v988, 4294901760
    %1010 = vmatpush1.msra.mxu0 %v1009
    %1011 = vmatprep.subr.mxu0 0.0
    %v1012 = vand.u32 %v989, 4294901760
    %1013 = vmatpush1.msra.mxu0 %v1012
    %1014 = vmatprep.subr.mxu0 0.0
    %v1015 = vand.u32 %v990, 4294901760
    %1016 = vmatpush1.msra.mxu0 %v1015
    %1017 = vmatprep.subr.mxu0 0.0
    %v1018 = vand.u32 %v991, 4294901760
    %1019 = vmatpush1.msra.mxu0 %v1018
    %1020 = vmatprep.subr.mxu0 0.0
    %v1021 = vand.u32 %v992, 4294901760
    %1022 = vmatpush1.msra.mxu0 %v1021
    %1023 = vmatprep.subr.mxu0 0.0
    %v1024 = vand.u32 %v993, 4294901760
    %1025 = vmatpush1.msra.mxu0 %v1024
    %1026 = vmatprep.subr.mxu0 0.0
    %v1027 = vand.u32 %v994, 4294901760
    %1028 = vmatpush1.msra.mxu0 %v1027
    %1029 = vmatprep.subr.mxu0 0.0
    %v1030 = vand.u32 %v995, 4294901760
    %1031 = vmatpush1.msra.mxu0 %v1030
    %1032 = vmatprep.subr.mxu0 0.0
    %v1033 = vand.u32 %v996, 4294901760
    %1034 = vmatpush1.msra.mxu0 %v1033
    %1035 = vmatprep.subr.mxu0 0.0
    %v1036 = vand.u32 %v997, 4294901760
    %1037 = vmatpush1.msra.mxu0 %v1036
    %1038 = vmatprep.subr.mxu0 0.0
    %v1039 = vand.u32 %v998, 4294901760
    %1040 = vmatpush1.msra.mxu0 %v1039
    %1041 = vmatprep.subr.mxu0 0.0
    %v1042 = vand.u32 %v999, 4294901760
    %1043 = vmatpush1.msra.mxu0 %v1042
    %1044 = vmatprep.subr.mxu0 0.0
    %v1045 = vand.u32 %v1000, 4294901760
    %1046 = vmatpush1.msra.mxu0 %v1045
    %1047 = vmatprep.subr.mxu0 0.0
    %v1048 = vand.u32 %v1001, 4294901760
    %1049 = vmatpush1.msra.mxu0 %v1048
    %1050 = vmatprep.subr.mxu0 0.0
    %1051 = vmatpush1.msra.mxu0 0.0
    %1052 = vmatprep.subr.mxu0 0.0
    %1053 = vmatpush1.msra.mxu0 0.0
    %1054 = vmatprep.subr.mxu0 0.0
    %1055 = vmatpush1.msra.mxu0 0.0
    %1056 = vmatprep.subr.mxu0 0.0
    %1057 = vmatpush1.msra.mxu0 0.0
    %1058 = vmatprep.subr.mxu0 0.0
    %1059 = vmatpush1.msra.mxu0 0.0
    %1060 = vmatprep.subr.mxu0 0.0
    %1061 = vmatpush1.msra.mxu0 0.0
    %1062 = vmatprep.subr.mxu0 0.0
    %1063 = vmatpush1.msra.mxu0 0.0
    %1064 = vmatprep.subr.mxu0 0.0
    %1065 = vmatpush1.msra.mxu0 0.0
    %1066 = vmatprep.subr.mxu0 0.0
    %1067 = vmatpush1.msra.mxu0 0.0
    %1068 = vmatprep.subr.mxu0 0.0
    %1069 = vmatpush1.msra.mxu0 0.0
    %1070 = vmatprep.subr.mxu0 0.0
    %1071 = vmatpush1.msra.mxu0 0.0
    %1072 = vmatprep.subr.mxu0 0.0
    %1073 = vmatpush1.msra.mxu0 0.0
    %1074 = vmatprep.subr.mxu0 0.0
    %1075 = vmatpush1.msra.mxu0 0.0
    %1076 = vmatprep.subr.mxu0 0.0
    %1077 = vmatpush1.msra.mxu0 0.0
    %1078 = vmatprep.subr.mxu0 0.0
    %1079 = vmatpush1.msra.mxu0 0.0
    %1080 = vmatprep.subr.mxu0 0.0
    %1081 = vmatpush1.msra.mxu0 0.0
    %1082 = vmatprep.mubr.f32.mxu0 0.0
    %v1083 = vand.u32 %v985, 4294901760
    %v1084 = vsub.f32 %v985, %v1083
    %v1085 = vand.u32 %v1084, 4294901760
    %v1086 = vsub.f32 %v1084, %v1085
    %v1087 = vand.u32 %v1086, 4294901760
    %1088 = vmatmul.mubr.f32.gmra.mrb[0].mxu0 %v1087
    %v1089 = vpop.f32.mrb[0].mxu0
    %v1090 = vadd.f32 0.0, %v1089
    %v1091 = vpop.f32.mrb[0].mxu0
    %1092 = vdwg.mxu0
    %1093 = vmatprep.subr.mxu0 0.0
    %v1094 = vand.u32 %v986, 4294901760
    %v1095 = vsub.f32 %v986, %v1094
    %v1096 = vand.u32 %v1095, 4294901760
    %v1097 = vsub.f32 %v1095, %v1096
    %v1098 = vand.u32 %v1097, 4294901760
    %1099 = vmatpush1.msra.mxu0 %v1098
    %1100 = vmatprep.subr.mxu0 0.0
    %v1101 = vand.u32 %v987, 4294901760
    %v1102 = vsub.f32 %v987, %v1101
    %v1103 = vand.u32 %v1102, 4294901760
    %v1104 = vsub.f32 %v1102, %v1103
    %v1105 = vand.u32 %v1104, 4294901760
    %1106 = vmatpush1.msra.mxu0 %v1105
    %1107 = vmatprep.subr.mxu0 0.0
    %v1108 = vand.u32 %v988, 4294901760
    %v1109 = vsub.f32 %v988, %v1108
    %v1110 = vand.u32 %v1109, 4294901760
    %v1111 = vsub.f32 %v1109, %v1110
    %v1112 = vand.u32 %v1111, 4294901760
    %1113 = vmatpush1.msra.mxu0 %v1112
    %1114 = vmatprep.subr.mxu0 0.0
    %v1115 = vand.u32 %v989, 4294901760
    %v1116 = vsub.f32 %v989, %v1115
    %v1117 = vand.u32 %v1116, 4294901760
    %v1118 = vsub.f32 %v1116, %v1117
    %v1119 = vand.u32 %v1118, 4294901760
    %1120 = vmatpush1.msra.mxu0 %v1119
    %1121 = vmatprep.subr.mxu0 0.0
    %v1122 = vand.u32 %v990, 4294901760
    %v1123 = vsub.f32 %v990, %v1122
    %v1124 = vand.u32 %v1123, 4294901760
    %v1125 = vsub.f32 %v1123, %v1124
    %v1126 = vand.u32 %v1125, 4294901760
    %1127 = vmatpush1.msra.mxu0 %v1126
    %1128 = vmatprep.subr.mxu0 0.0
    %v1129 = vand.u32 %v991, 4294901760
    %v1130 = vsub.f32 %v991, %v1129
    %v1131 = vand.u32 %v1130, 4294901760
    %v1132 = vsub.f32 %v1130, %v1131
    %v1133 = vand.u32 %v1132, 4294901760
    %1134 = vmatpush1.msra.mxu0 %v1133
    %1135 = vmatprep.subr.mxu0 0.0
    %v1136 = vand.u32 %v992, 4294901760
    %v1137 = vsub.f32 %v992, %v1136
    %v1138 = vand.u32 %v1137, 4294901760
    %v1139 = vsub.f32 %v1137, %v1138
    %v1140 = vand.u32 %v1139, 4294901760
    %1141 = vmatpush1.msra.mxu0 %v1140
    %1142 = vmatprep.subr.mxu0 0.0
    %v1143 = vand.u32 %v993, 4294901760
    %v1144 = vsub.f32 %v993, %v1143
    %v1145 = vand.u32 %v1144, 4294901760
    %v1146 = vsub.f32 %v1144, %v1145
    %v1147 = vand.u32 %v1146, 4294901760
    %1148 = vmatpush1.msra.mxu0 %v1147
    %1149 = vmatprep.subr.mxu0 0.0
    %v1150 = vand.u32 %v994, 4294901760
    %v1151 = vsub.f32 %v994, %v1150
    %v1152 = vand.u32 %v1151, 4294901760
    %v1153 = vsub.f32 %v1151, %v1152
    %v1154 = vand.u32 %v1153, 4294901760
    %1155 = vmatpush1.msra.mxu0 %v1154
    %1156 = vmatprep.subr.mxu0 0.0
    %v1157 = vand.u32 %v995, 4294901760
    %v1158 = vsub.f32 %v995, %v1157
    %v1159 = vand.u32 %v1158, 4294901760
    %v1160 = vsub.f32 %v1158, %v1159
    %v1161 = vand.u32 %v1160, 4294901760
    %1162 = vmatpush1.msra.mxu0 %v1161
    %1163 = vmatprep.subr.mxu0 0.0
    %v1164 = vand.u32 %v996, 4294901760
    %v1165 = vsub.f32 %v996, %v1164
    %v1166 = vand.u32 %v1165, 4294901760
    %v1167 = vsub.f32 %v1165, %v1166
    %v1168 = vand.u32 %v1167, 4294901760
    %1169 = vmatpush1.msra.mxu0 %v1168
    %1170 = vmatprep.subr.mxu0 0.0
    %v1171 = vand.u32 %v997, 4294901760
    %v1172 = vsub.f32 %v997, %v1171
    %v1173 = vand.u32 %v1172, 4294901760
    %v1174 = vsub.f32 %v1172, %v1173
    %v1175 = vand.u32 %v1174, 4294901760
    %1176 = vmatpush1.msra.mxu0 %v1175
    %1177 = vmatprep.subr.mxu0 0.0
    %v1178 = vand.u32 %v998, 4294901760
    %v1179 = vsub.f32 %v998, %v1178
    %v1180 = vand.u32 %v1179, 4294901760
    %v1181 = vsub.f32 %v1179, %v1180
    %v1182 = vand.u32 %v1181, 4294901760
    %1183 = vmatpush1.msra.mxu0 %v1182
    %1184 = vmatprep.subr.mxu0 0.0
    %v1185 = vand.u32 %v999, 4294901760
    %v1186 = vsub.f32 %v999, %v1185
    %v1187 = vand.u32 %v1186, 4294901760
    %v1188 = vsub.f32 %v1186, %v1187
    %v1189 = vand.u32 %v1188, 4294901760
    %1190 = vmatpush1.msra.mxu0 %v1189
    %1191 = vmatprep.subr.mxu0 0.0
    %v1192 = vand.u32 %v1000, 4294901760
    %v1193 = vsub.f32 %v1000, %v1192
    %v1194 = vand.u32 %v1193, 4294901760
    %v1195 = vsub.f32 %v1193, %v1194
    %v1196 = vand.u32 %v1195, 4294901760
    %1197 = vmatpush1.msra.mxu0 %v1196
    %1198 = vmatprep.subr.mxu0 0.0
    %v1199 = vand.u32 %v1001, 4294901760
    %v1200 = vsub.f32 %v1001, %v1199
    %v1201 = vand.u32 %v1200, 4294901760
    %v1202 = vsub.f32 %v1200, %v1201
    %v1203 = vand.u32 %v1202, 4294901760
    %1204 = vmatpush1.msra.mxu0 %v1203
    %1205 = vmatprep.subr.mxu0 0.0
    %1206 = vmatpush1.msra.mxu0 0.0
    %1207 = vmatprep.subr.mxu0 0.0
    %1208 = vmatpush1.msra.mxu0 0.0
    %1209 = vmatprep.subr.mxu0 0.0
    %1210 = vmatpush1.msra.mxu0 0.0
    %1211 = vmatprep.subr.mxu0 0.0
    %1212 = vmatpush1.msra.mxu0 0.0
    %1213 = vmatprep.subr.mxu0 0.0
    %1214 = vmatpush1.msra.mxu0 0.0
    %1215 = vmatprep.subr.mxu0 0.0
    %1216 = vmatpush1.msra.mxu0 0.0
    %1217 = vmatprep.subr.mxu0 0.0
    %1218 = vmatpush1.msra.mxu0 0.0
    %1219 = vmatprep.subr.mxu0 0.0
    %1220 = vmatpush1.msra.mxu0 0.0
    %1221 = vmatprep.subr.mxu0 0.0
    %1222 = vmatpush1.msra.mxu0 0.0
    %1223 = vmatprep.subr.mxu0 0.0
    %1224 = vmatpush1.msra.mxu0 0.0
    %1225 = vmatprep.subr.mxu0 0.0
    %1226 = vmatpush1.msra.mxu0 0.0
    %1227 = vmatprep.subr.mxu0 0.0
    %1228 = vmatpush1.msra.mxu0 0.0
    %1229 = vmatprep.subr.mxu0 0.0
    %1230 = vmatpush1.msra.mxu0 0.0
    %1231 = vmatprep.subr.mxu0 0.0
    %1232 = vmatpush1.msra.mxu0 0.0
    %1233 = vmatprep.subr.mxu0 0.0
    %1234 = vmatpush1.msra.mxu0 0.0
    %1235 = vmatprep.subr.mxu0 0.0
    %1236 = vmatpush1.msra.mxu0 0.0
    %1237 = vmatprep.mubr.f32.mxu0 0.0
    %v1238 = vand.u32 %v985, 4294901760
    %1239 = vmatmul.mubr.f32.gmra.mrb[0].mxu0 %v1238
    %v1240 = vpop.f32.mrb[0].mxu0
    %v1241 = vadd.f32 %v1090, %v1240
    %v1242 = vpop.f32.mrb[0].mxu0
    %1243 = vdwg.mxu0
    %1244 = vmatprep.subr.mxu0 0.0
    %v1245 = vand.u32 %v986, 4294901760
    %v1246 = vsub.f32 %v986, %v1245
    %1247 = vmatpush1.msra.mxu0 %v1246
    %1248 = vmatprep.subr.mxu0 0.0
    %v1249 = vand.u32 %v987, 4294901760
    %v1250 = vsub.f32 %v987, %v1249
    %1251 = vmatpush1.msra.mxu0 %v1250
    %1252 = vmatprep.subr.mxu0 0.0
    %v1253 = vand.u32 %v988, 4294901760
    %v1254 = vsub.f32 %v988, %v1253
    %1255 = vmatpush1.msra.mxu0 %v1254
    %1256 = vmatprep.subr.mxu0 0.0
    %v1257 = vand.u32 %v989, 4294901760
    %v1258 = vsub.f32 %v989, %v1257
    %1259 = vmatpush1.msra.mxu0 %v1258
    %1260 = vmatprep.subr.mxu0 0.0
    %v1261 = vand.u32 %v990, 4294901760
    %v1262 = vsub.f32 %v990, %v1261
    %1263 = vmatpush1.msra.mxu0 %v1262
    %1264 = vmatprep.subr.mxu0 0.0
    %v1265 = vand.u32 %v991, 4294901760
    %v1266 = vsub.f32 %v991, %v1265
    %1267 = vmatpush1.msra.mxu0 %v1266
    %1268 = vmatprep.subr.mxu0 0.0
    %v1269 = vand.u32 %v992, 4294901760
    %v1270 = vsub.f32 %v992, %v1269
    %1271 = vmatpush1.msra.mxu0 %v1270
    %1272 = vmatprep.subr.mxu0 0.0
    %v1273 = vand.u32 %v993, 4294901760
    %v1274 = vsub.f32 %v993, %v1273
    %1275 = vmatpush1.msra.mxu0 %v1274
    %1276 = vmatprep.subr.mxu0 0.0
    %v1277 = vand.u32 %v994, 4294901760
    %v1278 = vsub.f32 %v994, %v1277
    %1279 = vmatpush1.msra.mxu0 %v1278
    %1280 = vmatprep.subr.mxu0 0.0
    %v1281 = vand.u32 %v995, 4294901760
    %v1282 = vsub.f32 %v995, %v1281
    %1283 = vmatpush1.msra.mxu0 %v1282
    %1284 = vmatprep.subr.mxu0 0.0
    %v1285 = vand.u32 %v996, 4294901760
    %v1286 = vsub.f32 %v996, %v1285
    %1287 = vmatpush1.msra.mxu0 %v1286
    %1288 = vmatprep.subr.mxu0 0.0
    %v1289 = vand.u32 %v997, 4294901760
    %v1290 = vsub.f32 %v997, %v1289
    %1291 = vmatpush1.msra.mxu0 %v1290
    %1292 = vmatprep.subr.mxu0 0.0
    %v1293 = vand.u32 %v998, 4294901760
    %v1294 = vsub.f32 %v998, %v1293
    %1295 = vmatpush1.msra.mxu0 %v1294
    %1296 = vmatprep.subr.mxu0 0.0
    %v1297 = vand.u32 %v999, 4294901760
    %v1298 = vsub.f32 %v999, %v1297
    %1299 = vmatpush1.msra.mxu0 %v1298
    %1300 = vmatprep.subr.mxu0 0.0
    %v1301 = vand.u32 %v1000, 4294901760
    %v1302 = vsub.f32 %v1000, %v1301
    %1303 = vmatpush1.msra.mxu0 %v1302
    %1304 = vmatprep.subr.mxu0 0.0
    %v1305 = vand.u32 %v1001, 4294901760
    %v1306 = vsub.f32 %v1001, %v1305
    %1307 = vmatpush1.msra.mxu0 %v1306
    %1308 = vmatprep.subr.mxu0 0.0
    %1309 = vmatpush1.msra.mxu0 0.0
    %1310 = vmatprep.subr.mxu0 0.0
    %1311 = vmatpush1.msra.mxu0 0.0
    %1312 = vmatprep.subr.mxu0 0.0
    %1313 = vmatpush1.msra.mxu0 0.0
    %1314 = vmatprep.subr.mxu0 0.0
    %1315 = vmatpush1.msra.mxu0 0.0
    %1316 = vmatprep.subr.mxu0 0.0
    %1317 = vmatpush1.msra.mxu0 0.0
    %1318 = vmatprep.subr.mxu0 0.0
    %1319 = vmatpush1.msra.mxu0 0.0
    %1320 = vmatprep.subr.mxu0 0.0
    %1321 = vmatpush1.msra.mxu0 0.0
    %1322 = vmatprep.subr.mxu0 0.0
    %1323 = vmatpush1.msra.mxu0 0.0
    %1324 = vmatprep.subr.mxu0 0.0
    %1325 = vmatpush1.msra.mxu0 0.0
    %1326 = vmatprep.subr.mxu0 0.0
    %1327 = vmatpush1.msra.mxu0 0.0
    %1328 = vmatprep.subr.mxu0 0.0
    %1329 = vmatpush1.msra.mxu0 0.0
    %1330 = vmatprep.subr.mxu0 0.0
    %1331 = vmatpush1.msra.mxu0 0.0
    %1332 = vmatprep.subr.mxu0 0.0
    %1333 = vmatpush1.msra.mxu0 0.0
    %1334 = vmatprep.subr.mxu0 0.0
    %1335 = vmatpush1.msra.mxu0 0.0
    %1336 = vmatprep.subr.mxu0 0.0
    %1337 = vmatpush1.msra.mxu0 0.0
    %1338 = vmatprep.subr.mxu0 0.0
    %1339 = vmatpush1.msra.mxu0 0.0
    %1340 = vmatprep.mubr.f32.mxu0 0.0
    %v1341 = vand.u32 %v985, 4294901760
    %v1342 = vsub.f32 %v985, %v1341
    %1343 = vmatmul.mubr.f32.gmra.mrb[0].mxu0 %v1342
    %v1344 = vpop.f32.mrb[0].mxu0
    %v1345 = vadd.f32 %v1241, %v1344
    %v1346 = vpop.f32.mrb[0].mxu0
    %1347 = vdwg.mxu0
    %1348 = vmatprep.subr.mxu0 0.0
    %v1349 = vand.u32 %v986, 4294901760
    %1350 = vmatpush1.msra.mxu0 %v1349
    %1351 = vmatprep.subr.mxu0 0.0
    %v1352 = vand.u32 %v987, 4294901760
    %1353 = vmatpush1.msra.mxu0 %v1352
    %1354 = vmatprep.subr.mxu0 0.0
    %v1355 = vand.u32 %v988, 4294901760
    %1356 = vmatpush1.msra.mxu0 %v1355
    %1357 = vmatprep.subr.mxu0 0.0
    %v1358 = vand.u32 %v989, 4294901760
    %1359 = vmatpush1.msra.mxu0 %v1358
    %1360 = vmatprep.subr.mxu0 0.0
    %v1361 = vand.u32 %v990, 4294901760
    %1362 = vmatpush1.msra.mxu0 %v1361
    %1363 = vmatprep.subr.mxu0 0.0
    %v1364 = vand.u32 %v991, 4294901760
    %1365 = vmatpush1.msra.mxu0 %v1364
    %1366 = vmatprep.subr.mxu0 0.0
    %v1367 = vand.u32 %v992, 4294901760
    %1368 = vmatpush1.msra.mxu0 %v1367
    %1369 = vmatprep.subr.mxu0 0.0
    %v1370 = vand.u32 %v993, 4294901760
    %1371 = vmatpush1.msra.mxu0 %v1370
    %1372 = vmatprep.subr.mxu0 0.0
    %v1373 = vand.u32 %v994, 4294901760
    %1374 = vmatpush1.msra.mxu0 %v1373
    %1375 = vmatprep.subr.mxu0 0.0
    %v1376 = vand.u32 %v995, 4294901760
    %1377 = vmatpush1.msra.mxu0 %v1376
    %1378 = vmatprep.subr.mxu0 0.0
    %v1379 = vand.u32 %v996, 4294901760
    %1380 = vmatpush1.msra.mxu0 %v1379
    %1381 = vmatprep.subr.mxu0 0.0
    %v1382 = vand.u32 %v997, 4294901760
    %1383 = vmatpush1.msra.mxu0 %v1382
    %1384 = vmatprep.subr.mxu0 0.0
    %v1385 = vand.u32 %v998, 4294901760
    %1386 = vmatpush1.msra.mxu0 %v1385
    %1387 = vmatprep.subr.mxu0 0.0
    %v1388 = vand.u32 %v999, 4294901760
    %1389 = vmatpush1.msra.mxu0 %v1388
    %1390 = vmatprep.subr.mxu0 0.0
    %v1391 = vand.u32 %v1000, 4294901760
    %1392 = vmatpush1.msra.mxu0 %v1391
    %1393 = vmatprep.subr.mxu0 0.0
    %v1394 = vand.u32 %v1001, 4294901760
    %1395 = vmatpush1.msra.mxu0 %v1394
    %1396 = vmatprep.subr.mxu0 0.0
    %1397 = vmatpush1.msra.mxu0 0.0
    %1398 = vmatprep.subr.mxu0 0.0
    %1399 = vmatpush1.msra.mxu0 0.0
    %1400 = vmatprep.subr.mxu0 0.0
    %1401 = vmatpush1.msra.mxu0 0.0
    %1402 = vmatprep.subr.mxu0 0.0
    %1403 = vmatpush1.msra.mxu0 0.0
    %1404 = vmatprep.subr.mxu0 0.0
    %1405 = vmatpush1.msra.mxu0 0.0
    %1406 = vmatprep.subr.mxu0 0.0
    %1407 = vmatpush1.msra.mxu0 0.0
    %1408 = vmatprep.subr.mxu0 0.0
    %1409 = vmatpush1.msra.mxu0 0.0
    %1410 = vmatprep.subr.mxu0 0.0
    %1411 = vmatpush1.msra.mxu0 0.0
    %1412 = vmatprep.subr.mxu0 0.0
    %1413 = vmatpush1.msra.mxu0 0.0
    %1414 = vmatprep.subr.mxu0 0.0
    %1415 = vmatpush1.msra.mxu0 0.0
    %1416 = vmatprep.subr.mxu0 0.0
    %1417 = vmatpush1.msra.mxu0 0.0
    %1418 = vmatprep.subr.mxu0 0.0
    %1419 = vmatpush1.msra.mxu0 0.0
    %1420 = vmatprep.subr.mxu0 0.0
    %1421 = vmatpush1.msra.mxu0 0.0
    %1422 = vmatprep.subr.mxu0 0.0
    %1423 = vmatpush1.msra.mxu0 0.0
    %1424 = vmatprep.subr.mxu0 0.0
    %1425 = vmatpush1.msra.mxu0 0.0
    %1426 = vmatprep.subr.mxu0 0.0
    %1427 = vmatpush1.msra.mxu0 0.0
    %1428 = vmatprep.mubr.f32.mxu0 0.0
    %v1429 = vand.u32 %v985, 4294901760
    %v1430 = vsub.f32 %v985, %v1429
    %v1431 = vand.u32 %v1430, 4294901760
    %1432 = vmatmul.mubr.f32.gmra.mrb[0].mxu0 %v1431
    %v1433 = vpop.f32.mrb[0].mxu0
    %v1434 = vadd.f32 %v1345, %v1433
    %v1435 = vpop.f32.mrb[0].mxu0
    %1436 = vdwg.mxu0
    %1437 = vmatprep.subr.mxu0 0.0
    %v1438 = vand.u32 %v986, 4294901760
    %v1439 = vsub.f32 %v986, %v1438
    %v1440 = vand.u32 %v1439, 4294901760
    %1441 = vmatpush1.msra.mxu0 %v1440
    %1442 = vmatprep.subr.mxu0 0.0
    %v1443 = vand.u32 %v987, 4294901760
    %v1444 = vsub.f32 %v987, %v1443
    %v1445 = vand.u32 %v1444, 4294901760
    %1446 = vmatpush1.msra.mxu0 %v1445
    %1447 = vmatprep.subr.mxu0 0.0
    %v1448 = vand.u32 %v988, 4294901760
    %v1449 = vsub.f32 %v988, %v1448
    %v1450 = vand.u32 %v1449, 4294901760
    %1451 = vmatpush1.msra.mxu0 %v1450
    %1452 = vmatprep.subr.mxu0 0.0
    %v1453 = vand.u32 %v989, 4294901760
    %v1454 = vsub.f32 %v989, %v1453
    %v1455 = vand.u32 %v1454, 4294901760
    %1456 = vmatpush1.msra.mxu0 %v1455
    %1457 = vmatprep.subr.mxu0 0.0
    %v1458 = vand.u32 %v990, 4294901760
    %v1459 = vsub.f32 %v990, %v1458
    %v1460 = vand.u32 %v1459, 4294901760
    %1461 = vmatpush1.msra.mxu0 %v1460
    %1462 = vmatprep.subr.mxu0 0.0
    %v1463 = vand.u32 %v991, 4294901760
    %v1464 = vsub.f32 %v991, %v1463
    %v1465 = vand.u32 %v1464, 4294901760
    %1466 = vmatpush1.msra.mxu0 %v1465
    %1467 = vmatprep.subr.mxu0 0.0
    %v1468 = vand.u32 %v992, 4294901760
    %v1469 = vsub.f32 %v992, %v1468
    %v1470 = vand.u32 %v1469, 4294901760
    %1471 = vmatpush1.msra.mxu0 %v1470
    %1472 = vmatprep.subr.mxu0 0.0
    %v1473 = vand.u32 %v993, 4294901760
    %v1474 = vsub.f32 %v993, %v1473
    %v1475 = vand.u32 %v1474, 4294901760
    %1476 = vmatpush1.msra.mxu0 %v1475
    %1477 = vmatprep.subr.mxu0 0.0
    %v1478 = vand.u32 %v994, 4294901760
    %v1479 = vsub.f32 %v994, %v1478
    %v1480 = vand.u32 %v1479, 4294901760
    %1481 = vmatpush1.msra.mxu0 %v1480
    %1482 = vmatprep.subr.mxu0 0.0
    %v1483 = vand.u32 %v995, 4294901760
    %v1484 = vsub.f32 %v995, %v1483
    %v1485 = vand.u32 %v1484, 4294901760
    %1486 = vmatpush1.msra.mxu0 %v1485
    %1487 = vmatprep.subr.mxu0 0.0
    %v1488 = vand.u32 %v996, 4294901760
    %v1489 = vsub.f32 %v996, %v1488
    %v1490 = vand.u32 %v1489, 4294901760
    %1491 = vmatpush1.msra.mxu0 %v1490
    %1492 = vmatprep.subr.mxu0 0.0
    %v1493 = vand.u32 %v997, 4294901760
    %v1494 = vsub.f32 %v997, %v1493
    %v1495 = vand.u32 %v1494, 4294901760
    %1496 = vmatpush1.msra.mxu0 %v1495
    %1497 = vmatprep.subr.mxu0 0.0
    %v1498 = vand.u32 %v998, 4294901760
    %v1499 = vsub.f32 %v998, %v1498
    %v1500 = vand.u32 %v1499, 4294901760
    %1501 = vmatpush1.msra.mxu0 %v1500
    %1502 = vmatprep.subr.mxu0 0.0
    %v1503 = vand.u32 %v999, 4294901760
    %v1504 = vsub.f32 %v999, %v1503
    %v1505 = vand.u32 %v1504, 4294901760
    %1506 = vmatpush1.msra.mxu0 %v1505
    %1507 = vmatprep.subr.mxu0 0.0
    %v1508 = vand.u32 %v1000, 4294901760
    %v1509 = vsub.f32 %v1000, %v1508
    %v1510 = vand.u32 %v1509, 4294901760
    %1511 = vmatpush1.msra.mxu0 %v1510
    %1512 = vmatprep.subr.mxu0 0.0
    %v1513 = vand.u32 %v1001, 4294901760
    %v1514 = vsub.f32 %v1001, %v1513
    %v1515 = vand.u32 %v1514, 4294901760
    %1516 = vmatpush1.msra.mxu0 %v1515
    %1517 = vmatprep.subr.mxu0 0.0
    %1518 = vmatpush1.msra.mxu0 0.0
    %1519 = vmatprep.subr.mxu0 0.0
    %1520 = vmatpush1.msra.mxu0 0.0
    %1521 = vmatprep.subr.mxu0 0.0
    %1522 = vmatpush1.msra.mxu0 0.0
    %1523 = vmatprep.subr.mxu0 0.0
    %1524 = vmatpush1.msra.mxu0 0.0
    %1525 = vmatprep.subr.mxu0 0.0
    %1526 = vmatpush1.msra.mxu0 0.0
    %1527 = vmatprep.subr.mxu0 0.0
    %1528 = vmatpush1.msra.mxu0 0.0
    %1529 = vmatprep.subr.mxu0 0.0
    %1530 = vmatpush1.msra.mxu0 0.0
    %1531 = vmatprep.subr.mxu0 0.0
    %1532 = vmatpush1.msra.mxu0 0.0
    %1533 = vmatprep.subr.mxu0 0.0
    %1534 = vmatpush1.msra.mxu0 0.0
    %1535 = vmatprep.subr.mxu0 0.0
    %1536 = vmatpush1.msra.mxu0 0.0
    %1537 = vmatprep.subr.mxu0 0.0
    %1538 = vmatpush1.msra.mxu0 0.0
    %1539 = vmatprep.subr.mxu0 0.0
    %1540 = vmatpush1.msra.mxu0 0.0
    %1541 = vmatprep.subr.mxu0 0.0
    %1542 = vmatpush1.msra.mxu0 0.0
    %1543 = vmatprep.subr.mxu0 0.0
    %1544 = vmatpush1.msra.mxu0 0.0
    %1545 = vmatprep.subr.mxu0 0.0
    %1546 = vmatpush1.msra.mxu0 0.0
    %1547 = vmatprep.subr.mxu0 0.0
    %1548 = vmatpush1.msra.mxu0 0.0
    %1549 = vmatprep.mubr.f32.mxu0 0.0
    %v1550 = vand.u32 %v985, 4294901760
    %1551 = vmatmul.mubr.f32.gmra.mrb[0].mxu0 %v1550
    %v1552 = vpop.f32.mrb[0].mxu0
    %v1553 = vadd.f32 %v1434, %v1552
    %v1554 = vpop.f32.mrb[0].mxu0
    %1555 = vdwg.mxu0
    %1556 = vmatprep.subr.mxu0 0.0
    %v1557 = vand.u32 %v986, 4294901760
    %1558 = vmatpush1.msra.mxu0 %v1557
    %1559 = vmatprep.subr.mxu0 0.0
    %v1560 = vand.u32 %v987, 4294901760
    %1561 = vmatpush1.msra.mxu0 %v1560
    %1562 = vmatprep.subr.mxu0 0.0
    %v1563 = vand.u32 %v988, 4294901760
    %1564 = vmatpush1.msra.mxu0 %v1563
    %1565 = vmatprep.subr.mxu0 0.0
    %v1566 = vand.u32 %v989, 4294901760
    %1567 = vmatpush1.msra.mxu0 %v1566
    %1568 = vmatprep.subr.mxu0 0.0
    %v1569 = vand.u32 %v990, 4294901760
    %1570 = vmatpush1.msra.mxu0 %v1569
    %1571 = vmatprep.subr.mxu0 0.0
    %v1572 = vand.u32 %v991, 4294901760
    %1573 = vmatpush1.msra.mxu0 %v1572
    %1574 = vmatprep.subr.mxu0 0.0
    %v1575 = vand.u32 %v992, 4294901760
    %1576 = vmatpush1.msra.mxu0 %v1575
    %1577 = vmatprep.subr.mxu0 0.0
    %v1578 = vand.u32 %v993, 4294901760
    %1579 = vmatpush1.msra.mxu0 %v1578
    %1580 = vmatprep.subr.mxu0 0.0
    %v1581 = vand.u32 %v994, 4294901760
    %1582 = vmatpush1.msra.mxu0 %v1581
    %1583 = vmatprep.subr.mxu0 0.0
    %v1584 = vand.u32 %v995, 4294901760
    %1585 = vmatpush1.msra.mxu0 %v1584
    %1586 = vmatprep.subr.mxu0 0.0
    %v1587 = vand.u32 %v996, 4294901760
    %1588 = vmatpush1.msra.mxu0 %v1587
    %1589 = vmatprep.subr.mxu0 0.0
    %v1590 = vand.u32 %v997, 4294901760
    %1591 = vmatpush1.msra.mxu0 %v1590
    %1592 = vmatprep.subr.mxu0 0.0
    %v1593 = vand.u32 %v998, 4294901760
    %1594 = vmatpush1.msra.mxu0 %v1593
    %1595 = vmatprep.subr.mxu0 0.0
    %v1596 = vand.u32 %v999, 4294901760
    %1597 = vmatpush1.msra.mxu0 %v1596
    %1598 = vmatprep.subr.mxu0 0.0
    %v1599 = vand.u32 %v1000, 4294901760
    %1600 = vmatpush1.msra.mxu0 %v1599
    %1601 = vmatprep.subr.mxu0 0.0
    %v1602 = vand.u32 %v1001, 4294901760
    %1603 = vmatpush1.msra.mxu0 %v1602
    %1604 = vmatprep.subr.mxu0 0.0
    %1605 = vmatpush1.msra.mxu0 0.0
    %1606 = vmatprep.subr.mxu0 0.0
    %1607 = vmatpush1.msra.mxu0 0.0
    %1608 = vmatprep.subr.mxu0 0.0
    %1609 = vmatpush1.msra.mxu0 0.0
    %1610 = vmatprep.subr.mxu0 0.0
    %1611 = vmatpush1.msra.mxu0 0.0
    %1612 = vmatprep.subr.mxu0 0.0
    %1613 = vmatpush1.msra.mxu0 0.0
    %1614 = vmatprep.subr.mxu0 0.0
    %1615 = vmatpush1.msra.mxu0 0.0
    %1616 = vmatprep.subr.mxu0 0.0
    %1617 = vmatpush1.msra.mxu0 0.0
    %1618 = vmatprep.subr.mxu0 0.0
    %1619 = vmatpush1.msra.mxu0 0.0
    %1620 = vmatprep.subr.mxu0 0.0
    %1621 = vmatpush1.msra.mxu0 0.0
    %1622 = vmatprep.subr.mxu0 0.0
    %1623 = vmatpush1.msra.mxu0 0.0
    %1624 = vmatprep.subr.mxu0 0.0
    %1625 = vmatpush1.msra.mxu0 0.0
    %1626 = vmatprep.subr.mxu0 0.0
    %1627 = vmatpush1.msra.mxu0 0.0
    %1628 = vmatprep.subr.mxu0 0.0
    %1629 = vmatpush1.msra.mxu0 0.0
    %1630 = vmatprep.subr.mxu0 0.0
    %1631 = vmatpush1.msra.mxu0 0.0
    %1632 = vmatprep.subr.mxu0 0.0
    %1633 = vmatpush1.msra.mxu0 0.0
    %1634 = vmatprep.subr.mxu0 0.0
    %1635 = vmatpush1.msra.mxu0 0.0
    %1636 = vmatprep.mubr.f32.mxu0 0.0
    %v1637 = vand.u32 %v985, 4294901760
    %1638 = vmatmul.mubr.f32.gmra.mrb[0].mxu0 %v1637
    %v1639 = vpop.f32.mrb[0].mxu0
    %v1640 = vadd.f32 %v1553, %v1639
    %v1641 = vpop.f32.mrb[0].mxu0
    %1642 = vdwg.mxu0
    %v1643 = vadd.f32 %v83, %v1640
    %v1644 = vtanh.pop %v1643
    %v1645 = vsub.f32 1.0, %v977
    %v1646 = vmul.f32 %v1645, %v80
    %v1647 = vmul.f32 %v977, %v1644
    %v1648 = vadd.f32 %v1646, %v1647
    %1649 = vst [vmem:[#allocation11] sm:$0xff] %v1648
    %s1650 = scalar_lea.vmem [#allocation6], 8
    %v1651 = vld [vmem:[%s1650] sm:$0xff]
    %v1652 = vmul.f32 %v1651, %v1648
    %s1653 = scalar_lea.vmem [#allocation3], 24
    %v1654 = vld [vmem:[%s1653] sm:$0xff]
    %v1655 = vld [vmem:[%s1653 + $0x8] sm:$0xff]
    %v1656 = vld [vmem:[%s1653 + $0x10] sm:$0xff]
    %v1657 = vld [vmem:[#allocation8] sm:$0xff]
    %v1658 = vld [vmem:[#allocation8 + $0x8] sm:$0xff]
    %v1659 = vld [vmem:[#allocation8 + $0x10] sm:$0xff]
    %v1660 = vld [vmem:[#allocation8 + $0x18] sm:$0xff]
    %v1661 = vld [vmem:[#allocation8 + $0x20] sm:$0xff]
    %v1662 = vld [vmem:[#allocation8 + $0x28] sm:$0xff]
    %v1663 = vld [vmem:[#allocation8 + $0x30] sm:$0xff]
    %v1664 = vld [vmem:[#allocation8 + $0x38] sm:$0xff]
    %v1665 = vld [vmem:[#allocation8 + $0x40] sm:$0xff]
    %v1666 = vld [vmem:[#allocation8 + $0x48] sm:$0xff]
    %v1667 = vld [vmem:[#allocation8 + $0x50] sm:$0xff]
    %v1668 = vld [vmem:[#allocation8 + $0x58] sm:$0xff]
    %v1669 = vld [vmem:[#allocation8 + $0x60] sm:$0xff]
    %v1670 = vld [vmem:[#allocation8 + $0x68] sm:$0xff]
    %v1671 = vld [vmem:[#allocation8 + $0x70] sm:$0xff]
    %v1672 = vld [vmem:[#allocation8 + $0x78] sm:$0xff]
    %v1673 = vld [vmem:[#allocation8 + $0x80] sm:$0xff]
    %v1674 = vld [vmem:[#allocation8 + $0x88] sm:$0xff]
    %v1675 = vld [vmem:[#allocation8 + $0x90] sm:$0xff]
    %v1676 = vld [vmem:[#allocation8 + $0x98] sm:$0xff]
    %v1677 = vld [vmem:[#allocation8 + $0xa0] sm:$0xff]
    %v1678 = vld [vmem:[#allocation8 + $0xa8] sm:$0xff]
    %v1679 = vld [vmem:[#allocation8 + $0xb0] sm:$0xff]
    %v1680 = vld [vmem:[#allocation8 + $0xb8] sm:$0xff]
    %v1681 = vld [vmem:[#allocation8 + $0xc0] sm:$0xff]
    %v1682 = vld [vmem:[#allocation8 + $0xc8] sm:$0xff]
    %v1683 = vld [vmem:[#allocation8 + $0xd0] sm:$0xff]
    %v1684 = vld [vmem:[#allocation8 + $0xd8] sm:$0xff]
    %v1685 = vld [vmem:[#allocation8 + $0xe0] sm:$0xff]
    %v1686 = vld [vmem:[#allocation8 + $0xe8] sm:$0xff]
    %v1687 = vld [vmem:[#allocation8 + $0xf0] sm:$0xff]
    %v1688 = vld [vmem:[#allocation8 + $0xf8] sm:$0xff]
    %v1689 = vand.u32 %v1658, 4294901760
    %1690 = vmatprep.subr.mxu0 %v1689
    %v1691 = vand.u32 %v1657, 4294901760
    %1692 = vmatpush1.msra.mxu0 %v1691
    %v1693 = vand.u32 %v1660, 4294901760
    %1694 = vmatprep.subr.mxu0 %v1693
    %v1695 = vand.u32 %v1659, 4294901760
    %1696 = vmatpush1.msra.mxu0 %v1695
    %v1697 = vand.u32 %v1662, 4294901760
    %1698 = vmatprep.subr.mxu0 %v1697
    %v1699 = vand.u32 %v1661, 4294901760
    %1700 = vmatpush1.msra.mxu0 %v1699
    %v1701 = vand.u32 %v1664, 4294901760
    %1702 = vmatprep.subr.mxu0 %v1701
    %v1703 = vand.u32 %v1663, 4294901760
    %1704 = vmatpush1.msra.mxu0 %v1703
    %v1705 = vand.u32 %v1666, 4294901760
    %1706 = vmatprep.subr.mxu0 %v1705
    %v1707 = vand.u32 %v1665, 4294901760
    %1708 = vmatpush1.msra.mxu0 %v1707
    %v1709 = vand.u32 %v1668, 4294901760
    %1710 = vmatprep.subr.mxu0 %v1709
    %v1711 = vand.u32 %v1667, 4294901760
    %1712 = vmatpush1.msra.mxu0 %v1711
    %v1713 = vand.u32 %v1670, 4294901760
    %1714 = vmatprep.subr.mxu0 %v1713
    %v1715 = vand.u32 %v1669, 4294901760
    %1716 = vmatpush1.msra.mxu0 %v1715
    %v1717 = vand.u32 %v1672, 4294901760
    %1718 = vmatprep.subr.mxu0 %v1717
    %v1719 = vand.u32 %v1671, 4294901760
    %1720 = vmatpush1.msra.mxu0 %v1719
    %v1721 = vand.u32 %v1674, 4294901760
    %1722 = vmatprep.subr.mxu0 %v1721
    %v1723 = vand.u32 %v1673, 4294901760
    %1724 = vmatpush1.msra.mxu0 %v1723
    %v1725 = vand.u32 %v1676, 4294901760
    %1726 = vmatprep.subr.mxu0 %v1725
    %v1727 = vand.u32 %v1675, 4294901760
    %1728 = vmatpush1.msra.mxu0 %v1727
    %v1729 = vand.u32 %v1678, 4294901760
    %1730 = vmatprep.subr.mxu0 %v1729
    %v1731 = vand.u32 %v1677, 4294901760
    %1732 = vmatpush1.msra.mxu0 %v1731
    %v1733 = vand.u32 %v1680, 4294901760
    %1734 = vmatprep.subr.mxu0 %v1733
    %v1735 = vand.u32 %v1679, 4294901760
    %1736 = vmatpush1.msra.mxu0 %v1735
    %v1737 = vand.u32 %v1682, 4294901760
    %1738 = vmatprep.subr.mxu0 %v1737
    %v1739 = vand.u32 %v1681, 4294901760
    %1740 = vmatpush1.msra.mxu0 %v1739
    %v1741 = vand.u32 %v1684, 4294901760
    %1742 = vmatprep.subr.mxu0 %v1741
    %v1743 = vand.u32 %v1683, 4294901760
    %1744 = vmatpush1.msra.mxu0 %v1743
    %v1745 = vand.u32 %v1686, 4294901760
    %1746 = vmatprep.subr.mxu0 %v1745
    %v1747 = vand.u32 %v1685, 4294901760
    %1748 = vmatpush1.msra.mxu0 %v1747
    %v1749 = vand.u32 %v1688, 4294901760
    %1750 = vmatprep.subr.mxu0 %v1749
    %v1751 = vand.u32 %v1687, 4294901760
    %1752 = vmatpush1.msra.mxu0 %v1751
    %1753 = vmatprep.subr.mxu0 0.0
    %1754 = vmatpush1.msra.mxu0 0.0
    %1755 = vmatprep.subr.mxu0 0.0
    %1756 = vmatpush1.msra.mxu0 0.0
    %1757 = vmatprep.subr.mxu0 0.0
    %1758 = vmatpush1.msra.mxu0 0.0
    %1759 = vmatprep.subr.mxu0 0.0
    %1760 = vmatpush1.msra.mxu0 0.0
    %1761 = vmatprep.subr.mxu0 0.0
    %1762 = vmatpush1.msra.mxu0 0.0
    %1763 = vmatprep.subr.mxu0 0.0
    %1764 = vmatpush1.msra.mxu0 0.0
    %1765 = vmatprep.subr.mxu0 0.0
    %1766 = vmatpush1.msra.mxu0 0.0
    %1767 = vmatprep.subr.mxu0 0.0
    %1768 = vmatpush1.msra.mxu0 0.0
    %1769 = vmatprep.subr.mxu0 0.0
    %1770 = vmatpush1.msra.mxu0 0.0
    %1771 = vmatprep.subr.mxu0 0.0
    %1772 = vmatpush1.msra.mxu0 0.0
    %1773 = vmatprep.subr.mxu0 0.0
    %1774 = vmatpush1.msra.mxu0 0.0
    %1775 = vmatprep.subr.mxu0 0.0
    %1776 = vmatpush1.msra.mxu0 0.0
    %1777 = vmatprep.subr.mxu0 0.0
    %1778 = vmatpush1.msra.mxu0 0.0
    %1779 = vmatprep.subr.mxu0 0.0
    %1780 = vmatpush1.msra.mxu0 0.0
    %1781 = vmatprep.subr.mxu0 0.0
    %1782 = vmatpush1.msra.mxu0 0.0
    %1783 = vmatprep.subr.mxu0 0.0
    %1784 = vmatpush1.msra.mxu0 0.0
    %1785 = vmatprep.mubr.f32.mxu0 0.0
    %v1786 = vand.u32 %v1652, 4294901760
    %v1787 = vsub.f32 %v1652, %v1786
    %v1788 = vand.u32 %v1787, 4294901760
    %v1789 = vsub.f32 %v1787, %v1788
    %v1790 = vand.u32 %v1789, 4294901760
    %1791 = vmatmul.mubr.f32.gmra.mrb[0].mxu0 %v1790
    %v1792 = vpop.f32.mrb[0].mxu0
    %v1793 = vadd.f32 0.0, %v1792
    %v1794 = vpop.f32.mrb[0].mxu0
    %v1795 = vadd.f32 0.0, %v1794
    %1796 = vdwg.mxu0
    %v1797 = vand.u32 %v1658, 4294901760
    %v1798 = vsub.f32 %v1658, %v1797
    %v1799 = vand.u32 %v1798, 4294901760
    %v1800 = vsub.f32 %v1798, %v1799
    %v1801 = vand.u32 %v1800, 4294901760
    %1802 = vmatprep.subr.mxu0 %v1801
    %v1803 = vand.u32 %v1657, 4294901760
    %v1804 = vsub.f32 %v1657, %v1803
    %v1805 = vand.u32 %v1804, 4294901760
    %v1806 = vsub.f32 %v1804, %v1805
    %v1807 = vand.u32 %v1806, 4294901760
    %1808 = vmatpush1.msra.mxu0 %v1807
    %v1809 = vand.u32 %v1660, 4294901760
    %v1810 = vsub.f32 %v1660, %v1809
    %v1811 = vand.u32 %v1810, 4294901760
    %v1812 = vsub.f32 %v1810, %v1811
    %v1813 = vand.u32 %v1812, 4294901760
    %1814 = vmatprep.subr.mxu0 %v1813
    %v1815 = vand.u32 %v1659, 4294901760
    %v1816 = vsub.f32 %v1659, %v1815
    %v1817 = vand.u32 %v1816, 4294901760
    %v1818 = vsub.f32 %v1816, %v1817
    %v1819 = vand.u32 %v1818, 4294901760
    %1820 = vmatpush1.msra.mxu0 %v1819
    %v1821 = vand.u32 %v1662, 4294901760
    %v1822 = vsub.f32 %v1662, %v1821
    %v1823 = vand.u32 %v1822, 4294901760
    %v1824 = vsub.f32 %v1822, %v1823
    %v1825 = vand.u32 %v1824, 4294901760
    %1826 = vmatprep.subr.mxu0 %v1825
    %v1827 = vand.u32 %v1661, 4294901760
    %v1828 = vsub.f32 %v1661, %v1827
    %v1829 = vand.u32 %v1828, 4294901760
    %v1830 = vsub.f32 %v1828, %v1829
    %v1831 = vand.u32 %v1830, 4294901760
    %1832 = vmatpush1.msra.mxu0 %v1831
    %v1833 = vand.u32 %v1664, 4294901760
    %v1834 = vsub.f32 %v1664, %v1833
    %v1835 = vand.u32 %v1834, 4294901760
    %v1836 = vsub.f32 %v1834, %v1835
    %v1837 = vand.u32 %v1836, 4294901760
    %1838 = vmatprep.subr.mxu0 %v1837
    %v1839 = vand.u32 %v1663, 4294901760
    %v1840 = vsub.f32 %v1663, %v1839
    %v1841 = vand.u32 %v1840, 4294901760
    %v1842 = vsub.f32 %v1840, %v1841
    %v1843 = vand.u32 %v1842, 4294901760
    %1844 = vmatpush1.msra.mxu0 %v1843
    %v1845 = vand.u32 %v1666, 4294901760
    %v1846 = vsub.f32 %v1666, %v1845
    %v1847 = vand.u32 %v1846, 4294901760
    %v1848 = vsub.f32 %v1846, %v1847
    %v1849 = vand.u32 %v1848, 4294901760
    %1850 = vmatprep.subr.mxu0 %v1849
    %v1851 = vand.u32 %v1665, 4294901760
    %v1852 = vsub.f32 %v1665, %v1851
    %v1853 = vand.u32 %v1852, 4294901760
    %v1854 = vsub.f32 %v1852, %v1853
    %v1855 = vand.u32 %v1854, 4294901760
    %1856 = vmatpush1.msra.mxu0 %v1855
    %v1857 = vand.u32 %v1668, 4294901760
    %v1858 = vsub.f32 %v1668, %v1857
    %v1859 = vand.u32 %v1858, 4294901760
    %v1860 = vsub.f32 %v1858, %v1859
    %v1861 = vand.u32 %v1860, 4294901760
    %1862 = vmatprep.subr.mxu0 %v1861
    %v1863 = vand.u32 %v1667, 4294901760
    %v1864 = vsub.f32 %v1667, %v1863
    %v1865 = vand.u32 %v1864, 4294901760
    %v1866 = vsub.f32 %v1864, %v1865
    %v1867 = vand.u32 %v1866, 4294901760
    %1868 = vmatpush1.msra.mxu0 %v1867
    %v1869 = vand.u32 %v1670, 4294901760
    %v1870 = vsub.f32 %v1670, %v1869
    %v1871 = vand.u32 %v1870, 4294901760
    %v1872 = vsub.f32 %v1870, %v1871
    %v1873 = vand.u32 %v1872, 4294901760
    %1874 = vmatprep.subr.mxu0 %v1873
    %v1875 = vand.u32 %v1669, 4294901760
    %v1876 = vsub.f32 %v1669, %v1875
    %v1877 = vand.u32 %v1876, 4294901760
    %v1878 = vsub.f32 %v1876, %v1877
    %v1879 = vand.u32 %v1878, 4294901760
    %1880 = vmatpush1.msra.mxu0 %v1879
    %v1881 = vand.u32 %v1672, 4294901760
    %v1882 = vsub.f32 %v1672, %v1881
    %v1883 = vand.u32 %v1882, 4294901760
    %v1884 = vsub.f32 %v1882, %v1883
    %v1885 = vand.u32 %v1884, 4294901760
    %1886 = vmatprep.subr.mxu0 %v1885
    %v1887 = vand.u32 %v1671, 4294901760
    %v1888 = vsub.f32 %v1671, %v1887
    %v1889 = vand.u32 %v1888, 4294901760
    %v1890 = vsub.f32 %v1888, %v1889
    %v1891 = vand.u32 %v1890, 4294901760
    %1892 = vmatpush1.msra.mxu0 %v1891
    %v1893 = vand.u32 %v1674, 4294901760
    %v1894 = vsub.f32 %v1674, %v1893
    %v1895 = vand.u32 %v1894, 4294901760
    %v1896 = vsub.f32 %v1894, %v1895
    %v1897 = vand.u32 %v1896, 4294901760
    %1898 = vmatprep.subr.mxu0 %v1897
    %v1899 = vand.u32 %v1673, 4294901760
    %v1900 = vsub.f32 %v1673, %v1899
    %v1901 = vand.u32 %v1900, 4294901760
    %v1902 = vsub.f32 %v1900, %v1901
    %v1903 = vand.u32 %v1902, 4294901760
    %1904 = vmatpush1.msra.mxu0 %v1903
    %v1905 = vand.u32 %v1676, 4294901760
    %v1906 = vsub.f32 %v1676, %v1905
    %v1907 = vand.u32 %v1906, 4294901760
    %v1908 = vsub.f32 %v1906, %v1907
    %v1909 = vand.u32 %v1908, 4294901760
    %1910 = vmatprep.subr.mxu0 %v1909
    %v1911 = vand.u32 %v1675, 4294901760
    %v1912 = vsub.f32 %v1675, %v1911
    %v1913 = vand.u32 %v1912, 4294901760
    %v1914 = vsub.f32 %v1912, %v1913
    %v1915 = vand.u32 %v1914, 4294901760
    %1916 = vmatpush1.msra.mxu0 %v1915
    %v1917 = vand.u32 %v1678, 4294901760
    %v1918 = vsub.f32 %v1678, %v1917
    %v1919 = vand.u32 %v1918, 4294901760
    %v1920 = vsub.f32 %v1918, %v1919
    %v1921 = vand.u32 %v1920, 4294901760
    %1922 = vmatprep.subr.mxu0 %v1921
    %v1923 = vand.u32 %v1677, 4294901760
    %v1924 = vsub.f32 %v1677, %v1923
    %v1925 = vand.u32 %v1924, 4294901760
    %v1926 = vsub.f32 %v1924, %v1925
    %v1927 = vand.u32 %v1926, 4294901760
    %1928 = vmatpush1.msra.mxu0 %v1927
    %v1929 = vand.u32 %v1680, 4294901760
    %v1930 = vsub.f32 %v1680, %v1929
    %v1931 = vand.u32 %v1930, 4294901760
    %v1932 = vsub.f32 %v1930, %v1931
    %v1933 = vand.u32 %v1932, 4294901760
    %1934 = vmatprep.subr.mxu0 %v1933
    %v1935 = vand.u32 %v1679, 4294901760
    %v1936 = vsub.f32 %v1679, %v1935
    %v1937 = vand.u32 %v1936, 4294901760
    %v1938 = vsub.f32 %v1936, %v1937
    %v1939 = vand.u32 %v1938, 4294901760
    %1940 = vmatpush1.msra.mxu0 %v1939
    %v1941 = vand.u32 %v1682, 4294901760
    %v1942 = vsub.f32 %v1682, %v1941
    %v1943 = vand.u32 %v1942, 4294901760
    %v1944 = vsub.f32 %v1942, %v1943
    %v1945 = vand.u32 %v1944, 4294901760
    %1946 = vmatprep.subr.mxu0 %v1945
    %v1947 = vand.u32 %v1681, 4294901760
    %v1948 = vsub.f32 %v1681, %v1947
    %v1949 = vand.u32 %v1948, 4294901760
    %v1950 = vsub.f32 %v1948, %v1949
    %v1951 = vand.u32 %v1950, 4294901760
    %1952 = vmatpush1.msra.mxu0 %v1951
    %v1953 = vand.u32 %v1684, 4294901760
    %v1954 = vsub.f32 %v1684, %v1953
    %v1955 = vand.u32 %v1954, 4294901760
    %v1956 = vsub.f32 %v1954, %v1955
    %v1957 = vand.u32 %v1956, 4294901760
    %1958 = vmatprep.subr.mxu0 %v1957
    %v1959 = vand.u32 %v1683, 4294901760
    %v1960 = vsub.f32 %v1683, %v1959
    %v1961 = vand.u32 %v1960, 4294901760
    %v1962 = vsub.f32 %v1960, %v1961
    %v1963 = vand.u32 %v1962, 4294901760
    %1964 = vmatpush1.msra.mxu0 %v1963
    %v1965 = vand.u32 %v1686, 4294901760
    %v1966 = vsub.f32 %v1686, %v1965
    %v1967 = vand.u32 %v1966, 4294901760
    %v1968 = vsub.f32 %v1966, %v1967
    %v1969 = vand.u32 %v1968, 4294901760
    %1970 = vmatprep.subr.mxu0 %v1969
    %v1971 = vand.u32 %v1685, 4294901760
    %v1972 = vsub.f32 %v1685, %v1971
    %v1973 = vand.u32 %v1972, 4294901760
    %v1974 = vsub.f32 %v1972, %v1973
    %v1975 = vand.u32 %v1974, 4294901760
    %1976 = vmatpush1.msra.mxu0 %v1975
    %v1977 = vand.u32 %v1688, 4294901760
    %v1978 = vsub.f32 %v1688, %v1977
    %v1979 = vand.u32 %v1978, 4294901760
    %v1980 = vsub.f32 %v1978, %v1979
    %v1981 = vand.u32 %v1980, 4294901760
    %1982 = vmatprep.subr.mxu0 %v1981
    %v1983 = vand.u32 %v1687, 4294901760
    %v1984 = vsub.f32 %v1687, %v1983
    %v1985 = vand.u32 %v1984, 4294901760
    %v1986 = vsub.f32 %v1984, %v1985
    %v1987 = vand.u32 %v1986, 4294901760
    %1988 = vmatpush1.msra.mxu0 %v1987
    %1989 = vmatprep.subr.mxu0 0.0
    %1990 = vmatpush1.msra.mxu0 0.0
    %1991 = vmatprep.subr.mxu0 0.0
    %1992 = vmatpush1.msra.mxu0 0.0
    %1993 = vmatprep.subr.mxu0 0.0
    %1994 = vmatpush1.msra.mxu0 0.0
    %1995 = vmatprep.subr.mxu0 0.0
    %1996 = vmatpush1.msra.mxu0 0.0
    %1997 = vmatprep.subr.mxu0 0.0
    %1998 = vmatpush1.msra.mxu0 0.0
    %1999 = vmatprep.subr.mxu0 0.0
    %2000 = vmatpush1.msra.mxu0 0.0
    %2001 = vmatprep.subr.mxu0 0.0
    %2002 = vmatpush1.msra.mxu0 0.0
    %2003 = vmatprep.subr.mxu0 0.0
    %2004 = vmatpush1.msra.mxu0 0.0
    %2005 = vmatprep.subr.mxu0 0.0
    %2006 = vmatpush1.msra.mxu0 0.0
    %2007 = vmatprep.subr.mxu0 0.0
    %2008 = vmatpush1.msra.mxu0 0.0
    %2009 = vmatprep.subr.mxu0 0.0
    %2010 = vmatpush1.msra.mxu0 0.0
    %2011 = vmatprep.subr.mxu0 0.0
    %2012 = vmatpush1.msra.mxu0 0.0
    %2013 = vmatprep.subr.mxu0 0.0
    %2014 = vmatpush1.msra.mxu0 0.0
    %2015 = vmatprep.subr.mxu0 0.0
    %2016 = vmatpush1.msra.mxu0 0.0
    %2017 = vmatprep.subr.mxu0 0.0
    %2018 = vmatpush1.msra.mxu0 0.0
    %2019 = vmatprep.subr.mxu0 0.0
    %2020 = vmatpush1.msra.mxu0 0.0
    %2021 = vmatprep.mubr.f32.mxu0 0.0
    %v2022 = vand.u32 %v1652, 4294901760
    %2023 = vmatmul.mubr.f32.gmra.mrb[0].mxu0 %v2022
    %v2024 = vpop.f32.mrb[0].mxu0
    %v2025 = vadd.f32 %v1793, %v2024
    %v2026 = vpop.f32.mrb[0].mxu0
    %v2027 = vadd.f32 %v1795, %v2026
    %2028 = vdwg.mxu0
    %v2029 = vand.u32 %v1658, 4294901760
    %v2030 = vsub.f32 %v1658, %v2029
    %2031 = vmatprep.subr.mxu0 %v2030
    %v2032 = vand.u32 %v1657, 4294901760
    %v2033 = vsub.f32 %v1657, %v2032
    %2034 = vmatpush1.msra.mxu0 %v2033
    %v2035 = vand.u32 %v1660, 4294901760
    %v2036 = vsub.f32 %v1660, %v2035
    %2037 = vmatprep.subr.mxu0 %v2036
    %v2038 = vand.u32 %v1659, 4294901760
    %v2039 = vsub.f32 %v1659, %v2038
    %2040 = vmatpush1.msra.mxu0 %v2039
    %v2041 = vand.u32 %v1662, 4294901760
    %v2042 = vsub.f32 %v1662, %v2041
    %2043 = vmatprep.subr.mxu0 %v2042
    %v2044 = vand.u32 %v1661, 4294901760
    %v2045 = vsub.f32 %v1661, %v2044
    %2046 = vmatpush1.msra.mxu0 %v2045
    %v2047 = vand.u32 %v1664, 4294901760
    %v2048 = vsub.f32 %v1664, %v2047
    %2049 = vmatprep.subr.mxu0 %v2048
    %v2050 = vand.u32 %v1663, 4294901760
    %v2051 = vsub.f32 %v1663, %v2050
    %2052 = vmatpush1.msra.mxu0 %v2051
    %v2053 = vand.u32 %v1666, 4294901760
    %v2054 = vsub.f32 %v1666, %v2053
    %2055 = vmatprep.subr.mxu0 %v2054
    %v2056 = vand.u32 %v1665, 4294901760
    %v2057 = vsub.f32 %v1665, %v2056
    %2058 = vmatpush1.msra.mxu0 %v2057
    %v2059 = vand.u32 %v1668, 4294901760
    %v2060 = vsub.f32 %v1668, %v2059
    %2061 = vmatprep.subr.mxu0 %v2060
    %v2062 = vand.u32 %v1667, 4294901760
    %v2063 = vsub.f32 %v1667, %v2062
    %2064 = vmatpush1.msra.mxu0 %v2063
    %v2065 = vand.u32 %v1670, 4294901760
    %v2066 = vsub.f32 %v1670, %v2065
    %2067 = vmatprep.subr.mxu0 %v2066
    %v2068 = vand.u32 %v1669, 4294901760
    %v2069 = vsub.f32 %v1669, %v2068
    %2070 = vmatpush1.msra.mxu0 %v2069
    %v2071 = vand.u32 %v1672, 4294901760
    %v2072 = vsub.f32 %v1672, %v2071
    %2073 = vmatprep.subr.mxu0 %v2072
    %v2074 = vand.u32 %v1671, 4294901760
    %v2075 = vsub.f32 %v1671, %v2074
    %2076 = vmatpush1.msra.mxu0 %v2075
    %v2077 = vand.u32 %v1674, 4294901760
    %v2078 = vsub.f32 %v1674, %v2077
    %2079 = vmatprep.subr.mxu0 %v2078
    %v2080 = vand.u32 %v1673, 4294901760
    %v2081 = vsub.f32 %v1673, %v2080
    %2082 = vmatpush1.msra.mxu0 %v2081
    %v2083 = vand.u32 %v1676, 4294901760
    %v2084 = vsub.f32 %v1676, %v2083
    %2085 = vmatprep.subr.mxu0 %v2084
    %v2086 = vand.u32 %v1675, 4294901760
    %v2087 = vsub.f32 %v1675, %v2086
    %2088 = vmatpush1.msra.mxu0 %v2087
    %v2089 = vand.u32 %v1678, 4294901760
    %v2090 = vsub.f32 %v1678, %v2089
    %2091 = vmatprep.subr.mxu0 %v2090
    %v2092 = vand.u32 %v1677, 4294901760
    %v2093 = vsub.f32 %v1677, %v2092
    %2094 = vmatpush1.msra.mxu0 %v2093
    %v2095 = vand.u32 %v1680, 4294901760
    %v2096 = vsub.f32 %v1680, %v2095
    %2097 = vmatprep.subr.mxu0 %v2096
    %v2098 = vand.u32 %v1679, 4294901760
    %v2099 = vsub.f32 %v1679, %v2098
    %2100 = vmatpush1.msra.mxu0 %v2099
    %v2101 = vand.u32 %v1682, 4294901760
    %v2102 = vsub.f32 %v1682, %v2101
    %2103 = vmatprep.subr.mxu0 %v2102
    %v2104 = vand.u32 %v1681, 4294901760
    %v2105 = vsub.f32 %v1681, %v2104
    %2106 = vmatpush1.msra.mxu0 %v2105
    %v2107 = vand.u32 %v1684, 4294901760
    %v2108 = vsub.f32 %v1684, %v2107
    %2109 = vmatprep.subr.mxu0 %v2108
    %v2110 = vand.u32 %v1683, 4294901760
    %v2111 = vsub.f32 %v1683, %v2110
    %2112 = vmatpush1.msra.mxu0 %v2111
    %v2113 = vand.u32 %v1686, 4294901760
    %v2114 = vsub.f32 %v1686, %v2113
    %2115 = vmatprep.subr.mxu0 %v2114
    %v2116 = vand.u32 %v1685, 4294901760
    %v2117 = vsub.f32 %v1685, %v2116
    %2118 = vmatpush1.msra.mxu0 %v2117
    %v2119 = vand.u32 %v1688, 4294901760
    %v2120 = vsub.f32 %v1688, %v2119
    %2121 = vmatprep.subr.mxu0 %v2120
    %v2122 = vand.u32 %v1687, 4294901760
    %v2123 = vsub.f32 %v1687, %v2122
    %2124 = vmatpush1.msra.mxu0 %v2123
    %2125 = vmatprep.subr.mxu0 0.0
    %2126 = vmatpush1.msra.mxu0 0.0
    %2127 = vmatprep.subr.mxu0 0.0
    %2128 = vmatpush1.msra.mxu0 0.0
    %2129 = vmatprep.subr.mxu0 0.0
    %2130 = vmatpush1.msra.mxu0 0.0
    %2131 = vmatprep.subr.mxu0 0.0
    %2132 = vmatpush1.msra.mxu0 0.0
    %2133 = vmatprep.subr.mxu0 0.0
    %2134 = vmatpush1.msra.mxu0 0.0
    %2135 = vmatprep.subr.mxu0 0.0
    %2136 = vmatpush1.msra.mxu0 0.0
    %2137 = vmatprep.subr.mxu0 0.0
    %2138 = vmatpush1.msra.mxu0 0.0
    %2139 = vmatprep.subr.mxu0 0.0
    %2140 = vmatpush1.msra.mxu0 0.0
    %2141 = vmatprep.subr.mxu0 0.0
    %2142 = vmatpush1.msra.mxu0 0.0
    %2143 = vmatprep.subr.mxu0 0.0
    %2144 = vmatpush1.msra.mxu0 0.0
    %2145 = vmatprep.subr.mxu0 0.0
    %2146 = vmatpush1.msra.mxu0 0.0
    %2147 = vmatprep.subr.mxu0 0.0
    %2148 = vmatpush1.msra.mxu0 0.0
    %2149 = vmatprep.subr.mxu0 0.0
    %2150 = vmatpush1.msra.mxu0 0.0
    %2151 = vmatprep.subr.mxu0 0.0
    %2152 = vmatpush1.msra.mxu0 0.0
    %2153 = vmatprep.subr.mxu0 0.0
    %2154 = vmatpush1.msra.mxu0 0.0
    %2155 = vmatprep.subr.mxu0 0.0
    %2156 = vmatpush1.msra.mxu0 0.0
    %2157 = vmatprep.mubr.f32.mxu0 0.0
    %v2158 = vand.u32 %v1652, 4294901760
    %v2159 = vsub.f32 %v1652, %v2158
    %2160 = vmatmul.mubr.f32.gmra.mrb[0].mxu0 %v2159
    %v2161 = vpop.f32.mrb[0].mxu0
    %v2162 = vadd.f32 %v2025, %v2161
    %v2163 = vpop.f32.mrb[0].mxu0
    %v2164 = vadd.f32 %v2027, %v2163
    %2165 = vdwg.mxu0
    %v2166 = vand.u32 %v1658, 4294901760
    %2167 = vmatprep.subr.mxu0 %v2166
    %v2168 = vand.u32 %v1657, 4294901760
    %2169 = vmatpush1.msra.mxu0 %v2168
    %v2170 = vand.u32 %v1660, 4294901760
    %2171 = vmatprep.subr.mxu0 %v2170
    %v2172 = vand.u32 %v1659, 4294901760
    %2173 = vmatpush1.msra.mxu0 %v2172
    %v2174 = vand.u32 %v1662, 4294901760
    %2175 = vmatprep.subr.mxu0 %v2174
    %v2176 = vand.u32 %v1661, 4294901760
    %2177 = vmatpush1.msra.mxu0 %v2176
    %v2178 = vand.u32 %v1664, 4294901760
    %2179 = vmatprep.subr.mxu0 %v2178
    %v2180 = vand.u32 %v1663, 4294901760
    %2181 = vmatpush1.msra.mxu0 %v2180
    %v2182 = vand.u32 %v1666, 4294901760
    %2183 = vmatprep.subr.mxu0 %v2182
    %v2184 = vand.u32 %v1665, 4294901760
    %2185 = vmatpush1.msra.mxu0 %v2184
    %v2186 = vand.u32 %v1668, 4294901760
    %2187 = vmatprep.subr.mxu0 %v2186
    %v2188 = vand.u32 %v1667, 4294901760
    %2189 = vmatpush1.msra.mxu0 %v2188
    %v2190 = vand.u32 %v1670, 4294901760
    %2191 = vmatprep.subr.mxu0 %v2190
    %v2192 = vand.u32 %v1669, 4294901760
    %2193 = vmatpush1.msra.mxu0 %v2192
    %v2194 = vand.u32 %v1672, 4294901760
    %2195 = vmatprep.subr.mxu0 %v2194
    %v2196 = vand.u32 %v1671, 4294901760
    %2197 = vmatpush1.msra.mxu0 %v2196
    %v2198 = vand.u32 %v1674, 4294901760
    %2199 = vmatprep.subr.mxu0 %v2198
    %v2200 = vand.u32 %v1673, 4294901760
    %2201 = vmatpush1.msra.mxu0 %v2200
    %v2202 = vand.u32 %v1676, 4294901760
    %2203 = vmatprep.subr.mxu0 %v2202
    %v2204 = vand.u32 %v1675, 4294901760
    %2205 = vmatpush1.msra.mxu0 %v2204
    %v2206 = vand.u32 %v1678, 4294901760
    %2207 = vmatprep.subr.mxu0 %v2206
    %v2208 = vand.u32 %v1677, 4294901760
    %2209 = vmatpush1.msra.mxu0 %v2208
    %v2210 = vand.u32 %v1680, 4294901760
    %2211 = vmatprep.subr.mxu0 %v2210
    %v2212 = vand.u32 %v1679, 4294901760
    %2213 = vmatpush1.msra.mxu0 %v2212
    %v2214 = vand.u32 %v1682, 4294901760
    %2215 = vmatprep.subr.mxu0 %v2214
    %v2216 = vand.u32 %v1681, 4294901760
    %2217 = vmatpush1.msra.mxu0 %v2216
    %v2218 = vand.u32 %v1684, 4294901760
    %2219 = vmatprep.subr.mxu0 %v2218
    %v2220 = vand.u32 %v1683, 4294901760
    %2221 = vmatpush1.msra.mxu0 %v2220
    %v2222 = vand.u32 %v1686, 4294901760
    %2223 = vmatprep.subr.mxu0 %v2222
    %v2224 = vand.u32 %v1685, 4294901760
    %2225 = vmatpush1.msra.mxu0 %v2224
    %v2226 = vand.u32 %v1688, 4294901760
    %2227 = vmatprep.subr.mxu0 %v2226
    %v2228 = vand.u32 %v1687, 4294901760
    %2229 = vmatpush1.msra.mxu0 %v2228
    %2230 = vmatprep.subr.mxu0 0.0
    %2231 = vmatpush1.msra.mxu0 0.0
    %2232 = vmatprep.subr.mxu0 0.0
    %2233 = vmatpush1.msra.mxu0 0.0
    %2234 = vmatprep.subr.mxu0 0.0
    %2235 = vmatpush1.msra.mxu0 0.0
    %2236 = vmatprep.subr.mxu0 0.0
    %2237 = vmatpush1.msra.mxu0 0.0
    %2238 = vmatprep.subr.mxu0 0.0
    %2239 = vmatpush1.msra.mxu0 0.0
    %2240 = vmatprep.subr.mxu0 0.0
    %2241 = vmatpush1.msra.mxu0 0.0
    %2242 = vmatprep.subr.mxu0 0.0
    %2243 = vmatpush1.msra.mxu0 0.0
    %2244 = vmatprep.subr.mxu0 0.0
    %2245 = vmatpush1.msra.mxu0 0.0
    %2246 = vmatprep.subr.mxu0 0.0
    %2247 = vmatpush1.msra.mxu0 0.0
    %2248 = vmatprep.subr.mxu0 0.0
    %2249 = vmatpush1.msra.mxu0 0.0
    %2250 = vmatprep.subr.mxu0 0.0
    %2251 = vmatpush1.msra.mxu0 0.0
    %2252 = vmatprep.subr.mxu0 0.0
    %2253 = vmatpush1.msra.mxu0 0.0
    %2254 = vmatprep.subr.mxu0 0.0
    %2255 = vmatpush1.msra.mxu0 0.0
    %2256 = vmatprep.subr.mxu0 0.0
    %2257 = vmatpush1.msra.mxu0 0.0
    %2258 = vmatprep.subr.mxu0 0.0
    %2259 = vmatpush1.msra.mxu0 0.0
    %2260 = vmatprep.subr.mxu0 0.0
    %2261 = vmatpush1.msra.mxu0 0.0
    %2262 = vmatprep.mubr.f32.mxu0 0.0
    %v2263 = vand.u32 %v1652, 4294901760
    %v2264 = vsub.f32 %v1652, %v2263
    %v2265 = vand.u32 %v2264, 4294901760
    %2266 = vmatmul.mubr.f32.gmra.mrb[0].mxu0 %v2265
    %v2267 = vpop.f32.mrb[0].mxu0
    %v2268 = vadd.f32 %v2162, %v2267
    %v2269 = vpop.f32.mrb[0].mxu0
    %v2270 = vadd.f32 %v2164, %v2269
    %2271 = vdwg.mxu0
    %v2272 = vand.u32 %v1658, 4294901760
    %v2273 = vsub.f32 %v1658, %v2272
    %v2274 = vand.u32 %v2273, 4294901760
    %2275 = vmatprep.subr.mxu0 %v2274
    %v2276 = vand.u32 %v1657, 4294901760
    %v2277 = vsub.f32 %v1657, %v2276
    %v2278 = vand.u32 %v2277, 4294901760
    %2279 = vmatpush1.msra.mxu0 %v2278
    %v2280 = vand.u32 %v1660, 4294901760
    %v2281 = vsub.f32 %v1660, %v2280
    %v2282 = vand.u32 %v2281, 4294901760
    %2283 = vmatprep.subr.mxu0 %v2282
    %v2284 = vand.u32 %v1659, 4294901760
    %v2285 = vsub.f32 %v1659, %v2284
    %v2286 = vand.u32 %v2285, 4294901760
    %2287 = vmatpush1.msra.mxu0 %v2286
    %v2288 = vand.u32 %v1662, 4294901760
    %v2289 = vsub.f32 %v1662, %v2288
    %v2290 = vand.u32 %v2289, 4294901760
    %2291 = vmatprep.subr.mxu0 %v2290
    %v2292 = vand.u32 %v1661, 4294901760
    %v2293 = vsub.f32 %v1661, %v2292
    %v2294 = vand.u32 %v2293, 4294901760
    %2295 = vmatpush1.msra.mxu0 %v2294
    %v2296 = vand.u32 %v1664, 4294901760
    %v2297 = vsub.f32 %v1664, %v2296
    %v2298 = vand.u32 %v2297, 4294901760
    %2299 = vmatprep.subr.mxu0 %v2298
    %v2300 = vand.u32 %v1663, 4294901760
    %v2301 = vsub.f32 %v1663, %v2300
    %v2302 = vand.u32 %v2301, 4294901760
    %2303 = vmatpush1.msra.mxu0 %v2302
    %v2304 = vand.u32 %v1666, 4294901760
    %v2305 = vsub.f32 %v1666, %v2304
    %v2306 = vand.u32 %v2305, 4294901760
    %2307 = vmatprep.subr.mxu0 %v2306
    %v2308 = vand.u32 %v1665, 4294901760
    %v2309 = vsub.f32 %v1665, %v2308
    %v2310 = vand.u32 %v2309, 4294901760
    %2311 = vmatpush1.msra.mxu0 %v2310
    %v2312 = vand.u32 %v1668, 4294901760
    %v2313 = vsub.f32 %v1668, %v2312
    %v2314 = vand.u32 %v2313, 4294901760
    %2315 = vmatprep.subr.mxu0 %v2314
    %v2316 = vand.u32 %v1667, 4294901760
    %v2317 = vsub.f32 %v1667, %v2316
    %v2318 = vand.u32 %v2317, 4294901760
    %2319 = vmatpush1.msra.mxu0 %v2318
    %v2320 = vand.u32 %v1670, 4294901760
    %v2321 = vsub.f32 %v1670, %v2320
    %v2322 = vand.u32 %v2321, 4294901760
    %2323 = vmatprep.subr.mxu0 %v2322
    %v2324 = vand.u32 %v1669, 4294901760
    %v2325 = vsub.f32 %v1669, %v2324
    %v2326 = vand.u32 %v2325, 4294901760
    %2327 = vmatpush1.msra.mxu0 %v2326
    %v2328 = vand.u32 %v1672, 4294901760
    %v2329 = vsub.f32 %v1672, %v2328
    %v2330 = vand.u32 %v2329, 4294901760
    %2331 = vmatprep.subr.mxu0 %v2330
    %v2332 = vand.u32 %v1671, 4294901760
    %v2333 = vsub.f32 %v1671, %v2332
    %v2334 = vand.u32 %v2333, 4294901760
    %2335 = vmatpush1.msra.mxu0 %v2334
    %v2336 = vand.u32 %v1674, 4294901760
    %v2337 = vsub.f32 %v1674, %v2336
    %v2338 = vand.u32 %v2337, 4294901760
    %2339 = vmatprep.subr.mxu0 %v2338
    %v2340 = vand.u32 %v1673, 4294901760
    %v2341 = vsub.f32 %v1673, %v2340
    %v2342 = vand.u32 %v2341, 4294901760
    %2343 = vmatpush1.msra.mxu0 %v2342
    %v2344 = vand.u32 %v1676, 4294901760
    %v2345 = vsub.f32 %v1676, %v2344
    %v2346 = vand.u32 %v2345, 4294901760
    %2347 = vmatprep.subr.mxu0 %v2346
    %v2348 = vand.u32 %v1675, 4294901760
    %v2349 = vsub.f32 %v1675, %v2348
    %v2350 = vand.u32 %v2349, 4294901760
    %2351 = vmatpush1.msra.mxu0 %v2350
    %v2352 = vand.u32 %v1678, 4294901760
    %v2353 = vsub.f32 %v1678, %v2352
    %v2354 = vand.u32 %v2353, 4294901760
    %2355 = vmatprep.subr.mxu0 %v2354
    %v2356 = vand.u32 %v1677, 4294901760
    %v2357 = vsub.f32 %v1677, %v2356
    %v2358 = vand.u32 %v2357, 4294901760
    %2359 = vmatpush1.msra.mxu0 %v2358
    %v2360 = vand.u32 %v1680, 4294901760
    %v2361 = vsub.f32 %v1680, %v2360
    %v2362 = vand.u32 %v2361, 4294901760
    %2363 = vmatprep.subr.mxu0 %v2362
    %v2364 = vand.u32 %v1679, 4294901760
    %v2365 = vsub.f32 %v1679, %v2364
    %v2366 = vand.u32 %v2365, 4294901760
    %2367 = vmatpush1.msra.mxu0 %v2366
    %v2368 = vand.u32 %v1682, 4294901760
    %v2369 = vsub.f32 %v1682, %v2368
    %v2370 = vand.u32 %v2369, 4294901760
    %2371 = vmatprep.subr.mxu0 %v2370
    %v2372 = vand.u32 %v1681, 4294901760
    %v2373 = vsub.f32 %v1681, %v2372
    %v2374 = vand.u32 %v2373, 4294901760
    %2375 = vmatpush1.msra.mxu0 %v2374
    %v2376 = vand.u32 %v1684, 4294901760
    %v2377 = vsub.f32 %v1684, %v2376
    %v2378 = vand.u32 %v2377, 4294901760
    %2379 = vmatprep.subr.mxu0 %v2378
    %v2380 = vand.u32 %v1683, 4294901760
    %v2381 = vsub.f32 %v1683, %v2380
    %v2382 = vand.u32 %v2381, 4294901760
    %2383 = vmatpush1.msra.mxu0 %v2382
    %v2384 = vand.u32 %v1686, 4294901760
    %v2385 = vsub.f32 %v1686, %v2384
    %v2386 = vand.u32 %v2385, 4294901760
    %2387 = vmatprep.subr.mxu0 %v2386
    %v2388 = vand.u32 %v1685, 4294901760
    %v2389 = vsub.f32 %v1685, %v2388
    %v2390 = vand.u32 %v2389, 4294901760
    %2391 = vmatpush1.msra.mxu0 %v2390
    %v2392 = vand.u32 %v1688, 4294901760
    %v2393 = vsub.f32 %v1688, %v2392
    %v2394 = vand.u32 %v2393, 4294901760
    %2395 = vmatprep.subr.mxu0 %v2394
    %v2396 = vand.u32 %v1687, 4294901760
    %v2397 = vsub.f32 %v1687, %v2396
    %v2398 = vand.u32 %v2397, 4294901760
    %2399 = vmatpush1.msra.mxu0 %v2398
    %2400 = vmatprep.subr.mxu0 0.0
    %2401 = vmatpush1.msra.mxu0 0.0
    %2402 = vmatprep.subr.mxu0 0.0
    %2403 = vmatpush1.msra.mxu0 0.0
    %2404 = vmatprep.subr.mxu0 0.0
    %2405 = vmatpush1.msra.mxu0 0.0
    %2406 = vmatprep.subr.mxu0 0.0
    %2407 = vmatpush1.msra.mxu0 0.0
    %2408 = vmatprep.subr.mxu0 0.0
    %2409 = vmatpush1.msra.mxu0 0.0
    %2410 = vmatprep.subr.mxu0 0.0
    %2411 = vmatpush1.msra.mxu0 0.0
    %2412 = vmatprep.subr.mxu0 0.0
    %2413 = vmatpush1.msra.mxu0 0.0
    %2414 = vmatprep.subr.mxu0 0.0
    %2415 = vmatpush1.msra.mxu0 0.0
    %2416 = vmatprep.subr.mxu0 0.0
    %2417 = vmatpush1.msra.mxu0 0.0
    %2418 = vmatprep.subr.mxu0 0.0
    %2419 = vmatpush1.msra.mxu0 0.0
    %2420 = vmatprep.subr.mxu0 0.0
    %2421 = vmatpush1.msra.mxu0 0.0
    %2422 = vmatprep.subr.mxu0 0.0
    %2423 = vmatpush1.msra.mxu0 0.0
    %2424 = vmatprep.subr.mxu0 0.0
    %2425 = vmatpush1.msra.mxu0 0.0
    %2426 = vmatprep.subr.mxu0 0.0
    %2427 = vmatpush1.msra.mxu0 0.0
    %2428 = vmatprep.subr.mxu0 0.0
    %2429 = vmatpush1.msra.mxu0 0.0
    %2430 = vmatprep.subr.mxu0 0.0
    %2431 = vmatpush1.msra.mxu0 0.0
    %2432 = vmatprep.mubr.f32.mxu0 0.0
    %v2433 = vand.u32 %v1652, 4294901760
    %2434 = vmatmul.mubr.f32.gmra.mrb[0].mxu0 %v2433
    %v2435 = vpop.f32.mrb[0].mxu0
    %v2436 = vadd.f32 %v2268, %v2435
    %v2437 = vpop.f32.mrb[0].mxu0
    %v2438 = vadd.f32 %v2270, %v2437
    %2439 = vdwg.mxu0
    %v2440 = vand.u32 %v1658, 4294901760
    %2441 = vmatprep.subr.mxu0 %v2440
    %v2442 = vand.u32 %v1657, 4294901760
    %2443 = vmatpush1.msra.mxu0 %v2442
    %v2444 = vand.u32 %v1660, 4294901760
    %2445 = vmatprep.subr.mxu0 %v2444
    %v2446 = vand.u32 %v1659, 4294901760
    %2447 = vmatpush1.msra.mxu0 %v2446
    %v2448 = vand.u32 %v1662, 4294901760
    %2449 = vmatprep.subr.mxu0 %v2448
    %v2450 = vand.u32 %v1661, 4294901760
    %2451 = vmatpush1.msra.mxu0 %v2450
    %v2452 = vand.u32 %v1664, 4294901760
    %2453 = vmatprep.subr.mxu0 %v2452
    %v2454 = vand.u32 %v1663, 4294901760
    %2455 = vmatpush1.msra.mxu0 %v2454
    %v2456 = vand.u32 %v1666, 4294901760
    %2457 = vmatprep.subr.mxu0 %v2456
    %v2458 = vand.u32 %v1665, 4294901760
    %2459 = vmatpush1.msra.mxu0 %v2458
    %v2460 = vand.u32 %v1668, 4294901760
    %2461 = vmatprep.subr.mxu0 %v2460
    %v2462 = vand.u32 %v1667, 4294901760
    %2463 = vmatpush1.msra.mxu0 %v2462
    %v2464 = vand.u32 %v1670, 4294901760
    %2465 = vmatprep.subr.mxu0 %v2464
    %v2466 = vand.u32 %v1669, 4294901760
    %2467 = vmatpush1.msra.mxu0 %v2466
    %v2468 = vand.u32 %v1672, 4294901760
    %2469 = vmatprep.subr.mxu0 %v2468
    %v2470 = vand.u32 %v1671, 4294901760
    %2471 = vmatpush1.msra.mxu0 %v2470
    %v2472 = vand.u32 %v1674, 4294901760
    %2473 = vmatprep.subr.mxu0 %v2472
    %v2474 = vand.u32 %v1673, 4294901760
    %2475 = vmatpush1.msra.mxu0 %v2474
    %v2476 = vand.u32 %v1676, 4294901760
    %2477 = vmatprep.subr.mxu0 %v2476
    %v2478 = vand.u32 %v1675, 4294901760
    %2479 = vmatpush1.msra.mxu0 %v2478
    %v2480 = vand.u32 %v1678, 4294901760
    %2481 = vmatprep.subr.mxu0 %v2480
    %v2482 = vand.u32 %v1677, 4294901760
    %2483 = vmatpush1.msra.mxu0 %v2482
    %v2484 = vand.u32 %v1680, 4294901760
    %2485 = vmatprep.subr.mxu0 %v2484
    %v2486 = vand.u32 %v1679, 4294901760
    %2487 = vmatpush1.msra.mxu0 %v2486
    %v2488 = vand.u32 %v1682, 4294901760
    %2489 = vmatprep.subr.mxu0 %v2488
    %v2490 = vand.u32 %v1681, 4294901760
    %2491 = vmatpush1.msra.mxu0 %v2490
    %v2492 = vand.u32 %v1684, 4294901760
    %2493 = vmatprep.subr.mxu0 %v2492
    %v2494 = vand.u32 %v1683, 4294901760
    %2495 = vmatpush1.msra.mxu0 %v2494
    %v2496 = vand.u32 %v1686, 4294901760
    %2497 = vmatprep.subr.mxu0 %v2496
    %v2498 = vand.u32 %v1685, 4294901760
    %2499 = vmatpush1.msra.mxu0 %v2498
    %v2500 = vand.u32 %v1688, 4294901760
    %2501 = vmatprep.subr.mxu0 %v2500
    %v2502 = vand.u32 %v1687, 4294901760
    %2503 = vmatpush1.msra.mxu0 %v2502
    %2504 = vmatprep.subr.mxu0 0.0
    %2505 = vmatpush1.msra.mxu0 0.0
    %2506 = vmatprep.subr.mxu0 0.0
    %2507 = vmatpush1.msra.mxu0 0.0
    %2508 = vmatprep.subr.mxu0 0.0
    %2509 = vmatpush1.msra.mxu0 0.0
    %2510 = vmatprep.subr.mxu0 0.0
    %2511 = vmatpush1.msra.mxu0 0.0
    %2512 = vmatprep.subr.mxu0 0.0
    %2513 = vmatpush1.msra.mxu0 0.0
    %2514 = vmatprep.subr.mxu0 0.0
    %2515 = vmatpush1.msra.mxu0 0.0
    %2516 = vmatprep.subr.mxu0 0.0
    %2517 = vmatpush1.msra.mxu0 0.0
    %2518 = vmatprep.subr.mxu0 0.0
    %2519 = vmatpush1.msra.mxu0 0.0
    %2520 = vmatprep.subr.mxu0 0.0
    %2521 = vmatpush1.msra.mxu0 0.0
    %2522 = vmatprep.subr.mxu0 0.0
    %2523 = vmatpush1.msra.mxu0 0.0
    %2524 = vmatprep.subr.mxu0 0.0
    %2525 = vmatpush1.msra.mxu0 0.0
    %2526 = vmatprep.subr.mxu0 0.0
    %2527 = vmatpush1.msra.mxu0 0.0
    %2528 = vmatprep.subr.mxu0 0.0
    %2529 = vmatpush1.msra.mxu0 0.0
    %2530 = vmatprep.subr.mxu0 0.0
    %2531 = vmatpush1.msra.mxu0 0.0
    %2532 = vmatprep.subr.mxu0 0.0
    %2533 = vmatpush1.msra.mxu0 0.0
    %2534 = vmatprep.subr.mxu0 0.0
    %2535 = vmatpush1.msra.mxu0 0.0
    %2536 = vmatprep.mubr.f32.mxu0 0.0
    %v2537 = vand.u32 %v1652, 4294901760
    %2538 = vmatmul.mubr.f32.gmra.mrb[0].mxu0 %v2537
    %v2539 = vpop.f32.mrb[0].mxu0
    %v2540 = vadd.f32 %v2436, %v2539
    %v2541 = vpop.f32.mrb[0].mxu0
    %v2542 = vadd.f32 %v2438, %v2541
    %2543 = vdwg.mxu0
    %v2544 = vadd.f32 %v1654, %v2540
    %v2545 = vxor.u32 %v2544, 2147483648
    %v2546 = vmul.f32 %v2545, 1.442695
    %v2547 = vpow.pop %v2546
    %v2548 = vadd.f32 %v2547, 1.0
    %v2549 = vrcp.pop %v2548
    %v2550 = vmul.f32 1.0, %v2549
    %v2551 = vadd.f32 %v1655, %v2542
    %v2552 = vxor.u32 %v2551, 2147483648
    %v2553 = vmul.f32 %v2552, 1.442695
    %v2554 = vpow.pop %v2553
    %v2555 = vadd.f32 %v2554, 1.0
    %v2556 = vrcp.pop %v2555
    %v2557 = vmul.f32 1.0, %v2556
    %v2558 = vmul.f32 %v2557, %v1652
    %v2559 = vld [vmem:[#allocation9] sm:$0xff]
    %v2560 = vld [vmem:[#allocation9 + $0x8] sm:$0xff]
    %v2561 = vld [vmem:[#allocation9 + $0x10] sm:$0xff]
    %v2562 = vld [vmem:[#allocation9 + $0x18] sm:$0xff]
    %v2563 = vld [vmem:[#allocation9 + $0x20] sm:$0xff]
    %v2564 = vld [vmem:[#allocation9 + $0x28] sm:$0xff]
    %v2565 = vld [vmem:[#allocation9 + $0x30] sm:$0xff]
    %v2566 = vld [vmem:[#allocation9 + $0x38] sm:$0xff]
    %v2567 = vld [vmem:[#allocation9 + $0x40] sm:$0xff]
    %v2568 = vld [vmem:[#allocation9 + $0x48] sm:$0xff]
    %v2569 = vld [vmem:[#allocation9 + $0x50] sm:$0xff]
    %v2570 = vld [vmem:[#allocation9 + $0x58] sm:$0xff]
    %v2571 = vld [vmem:[#allocation9 + $0x60] sm:$0xff]
    %v2572 = vld [vmem:[#allocation9 + $0x68] sm:$0xff]
    %v2573 = vld [vmem:[#allocation9 + $0x70] sm:$0xff]
    %v2574 = vld [vmem:[#allocation9 + $0x78] sm:$0xff]
    %2575 = vmatprep.subr.mxu0 0.0
    %v2576 = vand.u32 %v2559, 4294901760
    %2577 = vmatpush1.msra.mxu0 %v2576
    %2578 = vmatprep.subr.mxu0 0.0
    %v2579 = vand.u32 %v2560, 4294901760
    %2580 = vmatpush1.msra.mxu0 %v2579
    %2581 = vmatprep.subr.mxu0 0.0
    %v2582 = vand.u32 %v2561, 4294901760
    %2583 = vmatpush1.msra.mxu0 %v2582
    %2584 = vmatprep.subr.mxu0 0.0
    %v2585 = vand.u32 %v2562, 4294901760
    %2586 = vmatpush1.msra.mxu0 %v2585
    %2587 = vmatprep.subr.mxu0 0.0
    %v2588 = vand.u32 %v2563, 4294901760
    %2589 = vmatpush1.msra.mxu0 %v2588
    %2590 = vmatprep.subr.mxu0 0.0
    %v2591 = vand.u32 %v2564, 4294901760
    %2592 = vmatpush1.msra.mxu0 %v2591
    %2593 = vmatprep.subr.mxu0 0.0
    %v2594 = vand.u32 %v2565, 4294901760
    %2595 = vmatpush1.msra.mxu0 %v2594
    %2596 = vmatprep.subr.mxu0 0.0
    %v2597 = vand.u32 %v2566, 4294901760
    %2598 = vmatpush1.msra.mxu0 %v2597
    %2599 = vmatprep.subr.mxu0 0.0
    %v2600 = vand.u32 %v2567, 4294901760
    %2601 = vmatpush1.msra.mxu0 %v2600
    %2602 = vmatprep.subr.mxu0 0.0
    %v2603 = vand.u32 %v2568, 4294901760
    %2604 = vmatpush1.msra.mxu0 %v2603
    %2605 = vmatprep.subr.mxu0 0.0
    %v2606 = vand.u32 %v2569, 4294901760
    %2607 = vmatpush1.msra.mxu0 %v2606
    %2608 = vmatprep.subr.mxu0 0.0
    %v2609 = vand.u32 %v2570, 4294901760
    %2610 = vmatpush1.msra.mxu0 %v2609
    %2611 = vmatprep.subr.mxu0 0.0
    %v2612 = vand.u32 %v2571, 4294901760
    %2613 = vmatpush1.msra.mxu0 %v2612
    %2614 = vmatprep.subr.mxu0 0.0
    %v2615 = vand.u32 %v2572, 4294901760
    %2616 = vmatpush1.msra.mxu0 %v2615
    %2617 = vmatprep.subr.mxu0 0.0
    %v2618 = vand.u32 %v2573, 4294901760
    %2619 = vmatpush1.msra.mxu0 %v2618
    %2620 = vmatprep.subr.mxu0 0.0
    %v2621 = vand.u32 %v2574, 4294901760
    %2622 = vmatpush1.msra.mxu0 %v2621
    %2623 = vmatprep.subr.mxu0 0.0
    %2624 = vmatpush1.msra.mxu0 0.0
    %2625 = vmatprep.subr.mxu0 0.0
    %2626 = vmatpush1.msra.mxu0 0.0
    %2627 = vmatprep.subr.mxu0 0.0
    %2628 = vmatpush1.msra.mxu0 0.0
    %2629 = vmatprep.subr.mxu0 0.0
    %2630 = vmatpush1.msra.mxu0 0.0
    %2631 = vmatprep.subr.mxu0 0.0
    %2632 = vmatpush1.msra.mxu0 0.0
    %2633 = vmatprep.subr.mxu0 0.0
    %2634 = vmatpush1.msra.mxu0 0.0
    %2635 = vmatprep.subr.mxu0 0.0
    %2636 = vmatpush1.msra.mxu0 0.0
    %2637 = vmatprep.subr.mxu0 0.0
    %2638 = vmatpush1.msra.mxu0 0.0
    %2639 = vmatprep.subr.mxu0 0.0
    %2640 = vmatpush1.msra.mxu0 0.0
    %2641 = vmatprep.subr.mxu0 0.0
    %2642 = vmatpush1.msra.mxu0 0.0
    %2643 = vmatprep.subr.mxu0 0.0
    %2644 = vmatpush1.msra.mxu0 0.0
    %2645 = vmatprep.subr.mxu0 0.0
    %2646 = vmatpush1.msra.mxu0 0.0
    %2647 = vmatprep.subr.mxu0 0.0
    %2648 = vmatpush1.msra.mxu0 0.0
    %2649 = vmatprep.subr.mxu0 0.0
    %2650 = vmatpush1.msra.mxu0 0.0
    %2651 = vmatprep.subr.mxu0 0.0
    %2652 = vmatpush1.msra.mxu0 0.0
    %2653 = vmatprep.subr.mxu0 0.0
    %2654 = vmatpush1.msra.mxu0 0.0
    %2655 = vmatprep.mubr.f32.mxu0 0.0
    %v2656 = vand.u32 %v2558, 4294901760
    %v2657 = vsub.f32 %v2558, %v2656
    %v2658 = vand.u32 %v2657, 4294901760
    %v2659 = vsub.f32 %v2657, %v2658
    %v2660 = vand.u32 %v2659, 4294901760
    %2661 = vmatmul.mubr.f32.gmra.mrb[0].mxu0 %v2660
    %v2662 = vpop.f32.mrb[0].mxu0
    %v2663 = vadd.f32 0.0, %v2662
    %v2664 = vpop.f32.mrb[0].mxu0
    %2665 = vdwg.mxu0
    %2666 = vmatprep.subr.mxu0 0.0
    %v2667 = vand.u32 %v2559, 4294901760
    %v2668 = vsub.f32 %v2559, %v2667
    %v2669 = vand.u32 %v2668, 4294901760
    %v2670 = vsub.f32 %v2668, %v2669
    %v2671 = vand.u32 %v2670, 4294901760
    %2672 = vmatpush1.msra.mxu0 %v2671
    %2673 = vmatprep.subr.mxu0 0.0
    %v2674 = vand.u32 %v2560, 4294901760
    %v2675 = vsub.f32 %v2560, %v2674
    %v2676 = vand.u32 %v2675, 4294901760
    %v2677 = vsub.f32 %v2675, %v2676
    %v2678 = vand.u32 %v2677, 4294901760
    %2679 = vmatpush1.msra.mxu0 %v2678
    %2680 = vmatprep.subr.mxu0 0.0
    %v2681 = vand.u32 %v2561, 4294901760
    %v2682 = vsub.f32 %v2561, %v2681
    %v2683 = vand.u32 %v2682, 4294901760
    %v2684 = vsub.f32 %v2682, %v2683
    %v2685 = vand.u32 %v2684, 4294901760
    %2686 = vmatpush1.msra.mxu0 %v2685
    %2687 = vmatprep.subr.mxu0 0.0
    %v2688 = vand.u32 %v2562, 4294901760
    %v2689 = vsub.f32 %v2562, %v2688
    %v2690 = vand.u32 %v2689, 4294901760
    %v2691 = vsub.f32 %v2689, %v2690
    %v2692 = vand.u32 %v2691, 4294901760
    %2693 = vmatpush1.msra.mxu0 %v2692
    %2694 = vmatprep.subr.mxu0 0.0
    %v2695 = vand.u32 %v2563, 4294901760
    %v2696 = vsub.f32 %v2563, %v2695
    %v2697 = vand.u32 %v2696, 4294901760
    %v2698 = vsub.f32 %v2696, %v2697
    %v2699 = vand.u32 %v2698, 4294901760
    %2700 = vmatpush1.msra.mxu0 %v2699
    %2701 = vmatprep.subr.mxu0 0.0
    %v2702 = vand.u32 %v2564, 4294901760
    %v2703 = vsub.f32 %v2564, %v2702
    %v2704 = vand.u32 %v2703, 4294901760
    %v2705 = vsub.f32 %v2703, %v2704
    %v2706 = vand.u32 %v2705, 4294901760
    %2707 = vmatpush1.msra.mxu0 %v2706
    %2708 = vmatprep.subr.mxu0 0.0
    %v2709 = vand.u32 %v2565, 4294901760
    %v2710 = vsub.f32 %v2565, %v2709
    %v2711 = vand.u32 %v2710, 4294901760
    %v2712 = vsub.f32 %v2710, %v2711
    %v2713 = vand.u32 %v2712, 4294901760
    %2714 = vmatpush1.msra.mxu0 %v2713
    %2715 = vmatprep.subr.mxu0 0.0
    %v2716 = vand.u32 %v2566, 4294901760
    %v2717 = vsub.f32 %v2566, %v2716
    %v2718 = vand.u32 %v2717, 4294901760
    %v2719 = vsub.f32 %v2717, %v2718
    %v2720 = vand.u32 %v2719, 4294901760
    %2721 = vmatpush1.msra.mxu0 %v2720
    %2722 = vmatprep.subr.mxu0 0.0
    %v2723 = vand.u32 %v2567, 4294901760
    %v2724 = vsub.f32 %v2567, %v2723
    %v2725 = vand.u32 %v2724, 4294901760
    %v2726 = vsub.f32 %v2724, %v2725
    %v2727 = vand.u32 %v2726, 4294901760
    %2728 = vmatpush1.msra.mxu0 %v2727
    %2729 = vmatprep.subr.mxu0 0.0
    %v2730 = vand.u32 %v2568, 4294901760
    %v2731 = vsub.f32 %v2568, %v2730
    %v2732 = vand.u32 %v2731, 4294901760
    %v2733 = vsub.f32 %v2731, %v2732
    %v2734 = vand.u32 %v2733, 4294901760
    %2735 = vmatpush1.msra.mxu0 %v2734
    %2736 = vmatprep.subr.mxu0 0.0
    %v2737 = vand.u32 %v2569, 4294901760
    %v2738 = vsub.f32 %v2569, %v2737
    %v2739 = vand.u32 %v2738, 4294901760
    %v2740 = vsub.f32 %v2738, %v2739
    %v2741 = vand.u32 %v2740, 4294901760
    %2742 = vmatpush1.msra.mxu0 %v2741
    %2743 = vmatprep.subr.mxu0 0.0
    %v2744 = vand.u32 %v2570, 4294901760
    %v2745 = vsub.f32 %v2570, %v2744
    %v2746 = vand.u32 %v2745, 4294901760
    %v2747 = vsub.f32 %v2745, %v2746
    %v2748 = vand.u32 %v2747, 4294901760
    %2749 = vmatpush1.msra.mxu0 %v2748
    %2750 = vmatprep.subr.mxu0 0.0
    %v2751 = vand.u32 %v2571, 4294901760
    %v2752 = vsub.f32 %v2571, %v2751
    %v2753 = vand.u32 %v2752, 4294901760
    %v2754 = vsub.f32 %v2752, %v2753
    %v2755 = vand.u32 %v2754, 4294901760
    %2756 = vmatpush1.msra.mxu0 %v2755
    %2757 = vmatprep.subr.mxu0 0.0
    %v2758 = vand.u32 %v2572, 4294901760
    %v2759 = vsub.f32 %v2572, %v2758
    %v2760 = vand.u32 %v2759, 4294901760
    %v2761 = vsub.f32 %v2759, %v2760
    %v2762 = vand.u32 %v2761, 4294901760
    %2763 = vmatpush1.msra.mxu0 %v2762
    %2764 = vmatprep.subr.mxu0 0.0
    %v2765 = vand.u32 %v2573, 4294901760
    %v2766 = vsub.f32 %v2573, %v2765
    %v2767 = vand.u32 %v2766, 4294901760
    %v2768 = vsub.f32 %v2766, %v2767
    %v2769 = vand.u32 %v2768, 4294901760
    %2770 = vmatpush1.msra.mxu0 %v2769
    %2771 = vmatprep.subr.mxu0 0.0
    %v2772 = vand.u32 %v2574, 4294901760
    %v2773 = vsub.f32 %v2574, %v2772
    %v2774 = vand.u32 %v2773, 4294901760
    %v2775 = vsub.f32 %v2773, %v2774
    %v2776 = vand.u32 %v2775, 4294901760
    %2777 = vmatpush1.msra.mxu0 %v2776
    %2778 = vmatprep.subr.mxu0 0.0
    %2779 = vmatpush1.msra.mxu0 0.0
    %2780 = vmatprep.subr.mxu0 0.0
    %2781 = vmatpush1.msra.mxu0 0.0
    %2782 = vmatprep.subr.mxu0 0.0
    %2783 = vmatpush1.msra.mxu0 0.0
    %2784 = vmatprep.subr.mxu0 0.0
    %2785 = vmatpush1.msra.mxu0 0.0
    %2786 = vmatprep.subr.mxu0 0.0
    %2787 = vmatpush1.msra.mxu0 0.0
    %2788 = vmatprep.subr.mxu0 0.0
    %2789 = vmatpush1.msra.mxu0 0.0
    %2790 = vmatprep.subr.mxu0 0.0
    %2791 = vmatpush1.msra.mxu0 0.0
    %2792 = vmatprep.subr.mxu0 0.0
    %2793 = vmatpush1.msra.mxu0 0.0
    %2794 = vmatprep.subr.mxu0 0.0
    %2795 = vmatpush1.msra.mxu0 0.0
    %2796 = vmatprep.subr.mxu0 0.0
    %2797 = vmatpush1.msra.mxu0 0.0
    %2798 = vmatprep.subr.mxu0 0.0
    %2799 = vmatpush1.msra.mxu0 0.0
    %2800 = vmatprep.subr.mxu0 0.0
    %2801 = vmatpush1.msra.mxu0 0.0
    %2802 = vmatprep.subr.mxu0 0.0
    %2803 = vmatpush1.msra.mxu0 0.0
    %2804 = vmatprep.subr.mxu0 0.0
    %2805 = vmatpush1.msra.mxu0 0.0
    %2806 = vmatprep.subr.mxu0 0.0
    %2807 = vmatpush1.msra.mxu0 0.0
    %2808 = vmatprep.subr.mxu0 0.0
    %2809 = vmatpush1.msra.mxu0 0.0
    %2810 = vmatprep.mubr.f32.mxu0 0.0
    %v2811 = vand.u32 %v2558, 4294901760
    %2812 = vmatmul.mubr.f32.gmra.mrb[0].mxu0 %v2811
    %v2813 = vpop.f32.mrb[0].mxu0
    %v2814 = vadd.f32 %v2663, %v2813
    %v2815 = vpop.f32.mrb[0].mxu0
    %2816 = vdwg.mxu0
    %2817 = vmatprep.subr.mxu0 0.0
    %v2818 = vand.u32 %v2559, 4294901760
    %v2819 = vsub.f32 %v2559, %v2818
    %2820 = vmatpush1.msra.mxu0 %v2819
    %2821 = vmatprep.subr.mxu0 0.0
    %v2822 = vand.u32 %v2560, 4294901760
    %v2823 = vsub.f32 %v2560, %v2822
    %2824 = vmatpush1.msra.mxu0 %v2823
    %2825 = vmatprep.subr.mxu0 0.0
    %v2826 = vand.u32 %v2561, 4294901760
    %v2827 = vsub.f32 %v2561, %v2826
    %2828 = vmatpush1.msra.mxu0 %v2827
    %2829 = vmatprep.subr.mxu0 0.0
    %v2830 = vand.u32 %v2562, 4294901760
    %v2831 = vsub.f32 %v2562, %v2830
    %2832 = vmatpush1.msra.mxu0 %v2831
    %2833 = vmatprep.subr.mxu0 0.0
    %v2834 = vand.u32 %v2563, 4294901760
    %v2835 = vsub.f32 %v2563, %v2834
    %2836 = vmatpush1.msra.mxu0 %v2835
    %2837 = vmatprep.subr.mxu0 0.0
    %v2838 = vand.u32 %v2564, 4294901760
    %v2839 = vsub.f32 %v2564, %v2838
    %2840 = vmatpush1.msra.mxu0 %v2839
    %2841 = vmatprep.subr.mxu0 0.0
    %v2842 = vand.u32 %v2565, 4294901760
    %v2843 = vsub.f32 %v2565, %v2842
    %2844 = vmatpush1.msra.mxu0 %v2843
    %2845 = vmatprep.subr.mxu0 0.0
    %v2846 = vand.u32 %v2566, 4294901760
    %v2847 = vsub.f32 %v2566, %v2846
    %2848 = vmatpush1.msra.mxu0 %v2847
    %2849 = vmatprep.subr.mxu0 0.0
    %v2850 = vand.u32 %v2567, 4294901760
    %v2851 = vsub.f32 %v2567, %v2850
    %2852 = vmatpush1.msra.mxu0 %v2851
    %2853 = vmatprep.subr.mxu0 0.0
    %v2854 = vand.u32 %v2568, 4294901760
    %v2855 = vsub.f32 %v2568, %v2854
    %2856 = vmatpush1.msra.mxu0 %v2855
    %2857 = vmatprep.subr.mxu0 0.0
    %v2858 = vand.u32 %v2569, 4294901760
    %v2859 = vsub.f32 %v2569, %v2858
    %2860 = vmatpush1.msra.mxu0 %v2859
    %2861 = vmatprep.subr.mxu0 0.0
    %v2862 = vand.u32 %v2570, 4294901760
    %v2863 = vsub.f32 %v2570, %v2862
    %2864 = vmatpush1.msra.mxu0 %v2863
    %2865 = vmatprep.subr.mxu0 0.0
    %v2866 = vand.u32 %v2571, 4294901760
    %v2867 = vsub.f32 %v2571, %v2866
    %2868 = vmatpush1.msra.mxu0 %v2867
    %2869 = vmatprep.subr.mxu0 0.0
    %v2870 = vand.u32 %v2572, 4294901760
    %v2871 = vsub.f32 %v2572, %v2870
    %2872 = vmatpush1.msra.mxu0 %v2871
    %2873 = vmatprep.subr.mxu0 0.0
    %v2874 = vand.u32 %v2573, 4294901760
    %v2875 = vsub.f32 %v2573, %v2874
    %2876 = vmatpush1.msra.mxu0 %v2875
    %2877 = vmatprep.subr.mxu0 0.0
    %v2878 = vand.u32 %v2574, 4294901760
    %v2879 = vsub.f32 %v2574, %v2878
    %2880 = vmatpush1.msra.mxu0 %v2879
    %2881 = vmatprep.subr.mxu0 0.0
    %2882 = vmatpush1.msra.mxu0 0.0
    %2883 = vmatprep.subr.mxu0 0.0
    %2884 = vmatpush1.msra.mxu0 0.0
    %2885 = vmatprep.subr.mxu0 0.0
    %2886 = vmatpush1.msra.mxu0 0.0
    %2887 = vmatprep.subr.mxu0 0.0
    %2888 = vmatpush1.msra.mxu0 0.0
    %2889 = vmatprep.subr.mxu0 0.0
    %2890 = vmatpush1.msra.mxu0 0.0
    %2891 = vmatprep.subr.mxu0 0.0
    %2892 = vmatpush1.msra.mxu0 0.0
    %2893 = vmatprep.subr.mxu0 0.0
    %2894 = vmatpush1.msra.mxu0 0.0
    %2895 = vmatprep.subr.mxu0 0.0
    %2896 = vmatpush1.msra.mxu0 0.0
    %2897 = vmatprep.subr.mxu0 0.0
    %2898 = vmatpush1.msra.mxu0 0.0
    %2899 = vmatprep.subr.mxu0 0.0
    %2900 = vmatpush1.msra.mxu0 0.0
    %2901 = vmatprep.subr.mxu0 0.0
    %2902 = vmatpush1.msra.mxu0 0.0
    %2903 = vmatprep.subr.mxu0 0.0
    %2904 = vmatpush1.msra.mxu0 0.0
    %2905 = vmatprep.subr.mxu0 0.0
    %2906 = vmatpush1.msra.mxu0 0.0
    %2907 = vmatprep.subr.mxu0 0.0
    %2908 = vmatpush1.msra.mxu0 0.0
    %2909 = vmatprep.subr.mxu0 0.0
    %2910 = vmatpush1.msra.mxu0 0.0
    %2911 = vmatprep.subr.mxu0 0.0
    %2912 = vmatpush1.msra.mxu0 0.0
    %2913 = vmatprep.mubr.f32.mxu0 0.0
    %v2914 = vand.u32 %v2558, 4294901760
    %v2915 = vsub.f32 %v2558, %v2914
    %2916 = vmatmul.mubr.f32.gmra.mrb[0].mxu0 %v2915
    %v2917 = vpop.f32.mrb[0].mxu0
    %v2918 = vadd.f32 %v2814, %v2917
    %v2919 = vpop.f32.mrb[0].mxu0
    %2920 = vdwg.mxu0
    %2921 = vmatprep.subr.mxu0 0.0
    %v2922 = vand.u32 %v2559, 4294901760
    %2923 = vmatpush1.msra.mxu0 %v2922
    %2924 = vmatprep.subr.mxu0 0.0
    %v2925 = vand.u32 %v2560, 4294901760
    %2926 = vmatpush1.msra.mxu0 %v2925
    %2927 = vmatprep.subr.mxu0 0.0
    %v2928 = vand.u32 %v2561, 4294901760
    %2929 = vmatpush1.msra.mxu0 %v2928
    %2930 = vmatprep.subr.mxu0 0.0
    %v2931 = vand.u32 %v2562, 4294901760
    %2932 = vmatpush1.msra.mxu0 %v2931
    %2933 = vmatprep.subr.mxu0 0.0
    %v2934 = vand.u32 %v2563, 4294901760
    %2935 = vmatpush1.msra.mxu0 %v2934
    %2936 = vmatprep.subr.mxu0 0.0
    %v2937 = vand.u32 %v2564, 4294901760
    %2938 = vmatpush1.msra.mxu0 %v2937
    %2939 = vmatprep.subr.mxu0 0.0
    %v2940 = vand.u32 %v2565, 4294901760
    %2941 = vmatpush1.msra.mxu0 %v2940
    %2942 = vmatprep.subr.mxu0 0.0
    %v2943 = vand.u32 %v2566, 4294901760
    %2944 = vmatpush1.msra.mxu0 %v2943
    %2945 = vmatprep.subr.mxu0 0.0
    %v2946 = vand.u32 %v2567, 4294901760
    %2947 = vmatpush1.msra.mxu0 %v2946
    %2948 = vmatprep.subr.mxu0 0.0
    %v2949 = vand.u32 %v2568, 4294901760
    %2950 = vmatpush1.msra.mxu0 %v2949
    %2951 = vmatprep.subr.mxu0 0.0
    %v2952 = vand.u32 %v2569, 4294901760
    %2953 = vmatpush1.msra.mxu0 %v2952
    %2954 = vmatprep.subr.mxu0 0.0
    %v2955 = vand.u32 %v2570, 4294901760
    %2956 = vmatpush1.msra.mxu0 %v2955
    %2957 = vmatprep.subr.mxu0 0.0
    %v2958 = vand.u32 %v2571, 4294901760
    %2959 = vmatpush1.msra.mxu0 %v2958
    %2960 = vmatprep.subr.mxu0 0.0
    %v2961 = vand.u32 %v2572, 4294901760
    %2962 = vmatpush1.msra.mxu0 %v2961
    %2963 = vmatprep.subr.mxu0 0.0
    %v2964 = vand.u32 %v2573, 4294901760
    %2965 = vmatpush1.msra.mxu0 %v2964
    %2966 = vmatprep.subr.mxu0 0.0
    %v2967 = vand.u32 %v2574, 4294901760
    %2968 = vmatpush1.msra.mxu0 %v2967
    %2969 = vmatprep.subr.mxu0 0.0
    %2970 = vmatpush1.msra.mxu0 0.0
    %2971 = vmatprep.subr.mxu0 0.0
    %2972 = vmatpush1.msra.mxu0 0.0
    %2973 = vmatprep.subr.mxu0 0.0
    %2974 = vmatpush1.msra.mxu0 0.0
    %2975 = vmatprep.subr.mxu0 0.0
    %2976 = vmatpush1.msra.mxu0 0.0
    %2977 = vmatprep.subr.mxu0 0.0
    %2978 = vmatpush1.msra.mxu0 0.0
    %2979 = vmatprep.subr.mxu0 0.0
    %2980 = vmatpush1.msra.mxu0 0.0
    %2981 = vmatprep.subr.mxu0 0.0
    %2982 = vmatpush1.msra.mxu0 0.0
    %2983 = vmatprep.subr.mxu0 0.0
    %2984 = vmatpush1.msra.mxu0 0.0
    %2985 = vmatprep.subr.mxu0 0.0
    %2986 = vmatpush1.msra.mxu0 0.0
    %2987 = vmatprep.subr.mxu0 0.0
    %2988 = vmatpush1.msra.mxu0 0.0
    %2989 = vmatprep.subr.mxu0 0.0
    %2990 = vmatpush1.msra.mxu0 0.0
    %2991 = vmatprep.subr.mxu0 0.0
    %2992 = vmatpush1.msra.mxu0 0.0
    %2993 = vmatprep.subr.mxu0 0.0
    %2994 = vmatpush1.msra.mxu0 0.0
    %2995 = vmatprep.subr.mxu0 0.0
    %2996 = vmatpush1.msra.mxu0 0.0
    %2997 = vmatprep.subr.mxu0 0.0
    %2998 = vmatpush1.msra.mxu0 0.0
    %2999 = vmatprep.subr.mxu0 0.0
    %3000 = vmatpush1.msra.mxu0 0.0
    %3001 = vmatprep.mubr.f32.mxu0 0.0
    %v3002 = vand.u32 %v2558, 4294901760
    %v3003 = vsub.f32 %v2558, %v3002
    %v3004 = vand.u32 %v3003, 4294901760
    %3005 = vmatmul.mubr.f32.gmra.mrb[0].mxu0 %v3004
    %v3006 = vpop.f32.mrb[0].mxu0
    %v3007 = vadd.f32 %v2918, %v3006
    %v3008 = vpop.f32.mrb[0].mxu0
    %3009 = vdwg.mxu0
    %3010 = vmatprep.subr.mxu0 0.0
    %v3011 = vand.u32 %v2559, 4294901760
    %v3012 = vsub.f32 %v2559, %v3011
    %v3013 = vand.u32 %v3012, 4294901760
    %3014 = vmatpush1.msra.mxu0 %v3013
    %3015 = vmatprep.subr.mxu0 0.0
    %v3016 = vand.u32 %v2560, 4294901760
    %v3017 = vsub.f32 %v2560, %v3016
    %v3018 = vand.u32 %v3017, 4294901760
    %3019 = vmatpush1.msra.mxu0 %v3018
    %3020 = vmatprep.subr.mxu0 0.0
    %v3021 = vand.u32 %v2561, 4294901760
    %v3022 = vsub.f32 %v2561, %v3021
    %v3023 = vand.u32 %v3022, 4294901760
    %3024 = vmatpush1.msra.mxu0 %v3023
    %3025 = vmatprep.subr.mxu0 0.0
    %v3026 = vand.u32 %v2562, 4294901760
    %v3027 = vsub.f32 %v2562, %v3026
    %v3028 = vand.u32 %v3027, 4294901760
    %3029 = vmatpush1.msra.mxu0 %v3028
    %3030 = vmatprep.subr.mxu0 0.0
    %v3031 = vand.u32 %v2563, 4294901760
    %v3032 = vsub.f32 %v2563, %v3031
    %v3033 = vand.u32 %v3032, 4294901760
    %3034 = vmatpush1.msra.mxu0 %v3033
    %3035 = vmatprep.subr.mxu0 0.0
    %v3036 = vand.u32 %v2564, 4294901760
    %v3037 = vsub.f32 %v2564, %v3036
    %v3038 = vand.u32 %v3037, 4294901760
    %3039 = vmatpush1.msra.mxu0 %v3038
    %3040 = vmatprep.subr.mxu0 0.0
    %v3041 = vand.u32 %v2565, 4294901760
    %v3042 = vsub.f32 %v2565, %v3041
    %v3043 = vand.u32 %v3042, 4294901760
    %3044 = vmatpush1.msra.mxu0 %v3043
    %3045 = vmatprep.subr.mxu0 0.0
    %v3046 = vand.u32 %v2566, 4294901760
    %v3047 = vsub.f32 %v2566, %v3046
    %v3048 = vand.u32 %v3047, 4294901760
    %3049 = vmatpush1.msra.mxu0 %v3048
    %3050 = vmatprep.subr.mxu0 0.0
    %v3051 = vand.u32 %v2567, 4294901760
    %v3052 = vsub.f32 %v2567, %v3051
    %v3053 = vand.u32 %v3052, 4294901760
    %3054 = vmatpush1.msra.mxu0 %v3053
    %3055 = vmatprep.subr.mxu0 0.0
    %v3056 = vand.u32 %v2568, 4294901760
    %v3057 = vsub.f32 %v2568, %v3056
    %v3058 = vand.u32 %v3057, 4294901760
    %3059 = vmatpush1.msra.mxu0 %v3058
    %3060 = vmatprep.subr.mxu0 0.0
    %v3061 = vand.u32 %v2569, 4294901760
    %v3062 = vsub.f32 %v2569, %v3061
    %v3063 = vand.u32 %v3062, 4294901760
    %3064 = vmatpush1.msra.mxu0 %v3063
    %3065 = vmatprep.subr.mxu0 0.0
    %v3066 = vand.u32 %v2570, 4294901760
    %v3067 = vsub.f32 %v2570, %v3066
    %v3068 = vand.u32 %v3067, 4294901760
    %3069 = vmatpush1.msra.mxu0 %v3068
    %3070 = vmatprep.subr.mxu0 0.0
    %v3071 = vand.u32 %v2571, 4294901760
    %v3072 = vsub.f32 %v2571, %v3071
    %v3073 = vand.u32 %v3072, 4294901760
    %3074 = vmatpush1.msra.mxu0 %v3073
    %3075 = vmatprep.subr.mxu0 0.0
    %v3076 = vand.u32 %v2572, 4294901760
    %v3077 = vsub.f32 %v2572, %v3076
    %v3078 = vand.u32 %v3077, 4294901760
    %3079 = vmatpush1.msra.mxu0 %v3078
    %3080 = vmatprep.subr.mxu0 0.0
    %v3081 = vand.u32 %v2573, 4294901760
    %v3082 = vsub.f32 %v2573, %v3081
    %v3083 = vand.u32 %v3082, 4294901760
    %3084 = vmatpush1.msra.mxu0 %v3083
    %3085 = vmatprep.subr.mxu0 0.0
    %v3086 = vand.u32 %v2574, 4294901760
    %v3087 = vsub.f32 %v2574, %v3086
    %v3088 = vand.u32 %v3087, 4294901760
    %3089 = vmatpush1.msra.mxu0 %v3088
    %3090 = vmatprep.subr.mxu0 0.0
    %3091 = vmatpush1.msra.mxu0 0.0
    %3092 = vmatprep.subr.mxu0 0.0
    %3093 = vmatpush1.msra.mxu0 0.0
    %3094 = vmatprep.subr.mxu0 0.0
    %3095 = vmatpush1.msra.mxu0 0.0
    %3096 = vmatprep.subr.mxu0 0.0
    %3097 = vmatpush1.msra.mxu0 0.0
    %3098 = vmatprep.subr.mxu0 0.0
    %3099 = vmatpush1.msra.mxu0 0.0
    %3100 = vmatprep.subr.mxu0 0.0
    %3101 = vmatpush1.msra.mxu0 0.0
    %3102 = vmatprep.subr.mxu0 0.0
    %3103 = vmatpush1.msra.mxu0 0.0
    %3104 = vmatprep.subr.mxu0 0.0
    %3105 = vmatpush1.msra.mxu0 0.0
    %3106 = vmatprep.subr.mxu0 0.0
    %3107 = vmatpush1.msra.mxu0 0.0
    %3108 = vmatprep.subr.mxu0 0.0
    %3109 = vmatpush1.msra.mxu0 0.0
    %3110 = vmatprep.subr.mxu0 0.0
    %3111 = vmatpush1.msra.mxu0 0.0
    %3112 = vmatprep.subr.mxu0 0.0
    %3113 = vmatpush1.msra.mxu0 0.0
    %3114 = vmatprep.subr.mxu0 0.0
    %3115 = vmatpush1.msra.mxu0 0.0
    %3116 = vmatprep.subr.mxu0 0.0
    %3117 = vmatpush1.msra.mxu0 0.0
    %3118 = vmatprep.subr.mxu0 0.0
    %3119 = vmatpush1.msra.mxu0 0.0
    %3120 = vmatprep.subr.mxu0 0.0
    %3121 = vmatpush1.msra.mxu0 0.0
    %3122 = vmatprep.mubr.f32.mxu0 0.0
    %v3123 = vand.u32 %v2558, 4294901760
    %3124 = vmatmul.mubr.f32.gmra.mrb[0].mxu0 %v3123
    %v3125 = vpop.f32.mrb[0].mxu0
    %v3126 = vadd.f32 %v3007, %v3125
    %v3127 = vpop.f32.mrb[0].mxu0
    %3128 = vdwg.mxu0
    %3129 = vmatprep.subr.mxu0 0.0
    %v3130 = vand.u32 %v2559, 4294901760
    %3131 = vmatpush1.msra.mxu0 %v3130
    %3132 = vmatprep.subr.mxu0 0.0
    %v3133 = vand.u32 %v2560, 4294901760
    %3134 = vmatpush1.msra.mxu0 %v3133
    %3135 = vmatprep.subr.mxu0 0.0
    %v3136 = vand.u32 %v2561, 4294901760
    %3137 = vmatpush1.msra.mxu0 %v3136
    %3138 = vmatprep.subr.mxu0 0.0
    %v3139 = vand.u32 %v2562, 4294901760
    %3140 = vmatpush1.msra.mxu0 %v3139
    %3141 = vmatprep.subr.mxu0 0.0
    %v3142 = vand.u32 %v2563, 4294901760
    %3143 = vmatpush1.msra.mxu0 %v3142
    %3144 = vmatprep.subr.mxu0 0.0
    %v3145 = vand.u32 %v2564, 4294901760
    %3146 = vmatpush1.msra.mxu0 %v3145
    %3147 = vmatprep.subr.mxu0 0.0
    %v3148 = vand.u32 %v2565, 4294901760
    %3149 = vmatpush1.msra.mxu0 %v3148
    %3150 = vmatprep.subr.mxu0 0.0
    %v3151 = vand.u32 %v2566, 4294901760
    %3152 = vmatpush1.msra.mxu0 %v3151
    %3153 = vmatprep.subr.mxu0 0.0
    %v3154 = vand.u32 %v2567, 4294901760
    %3155 = vmatpush1.msra.mxu0 %v3154
    %3156 = vmatprep.subr.mxu0 0.0
    %v3157 = vand.u32 %v2568, 4294901760
    %3158 = vmatpush1.msra.mxu0 %v3157
    %3159 = vmatprep.subr.mxu0 0.0
    %v3160 = vand.u32 %v2569, 4294901760
    %3161 = vmatpush1.msra.mxu0 %v3160
    %3162 = vmatprep.subr.mxu0 0.0
    %v3163 = vand.u32 %v2570, 4294901760
    %3164 = vmatpush1.msra.mxu0 %v3163
    %3165 = vmatprep.subr.mxu0 0.0
    %v3166 = vand.u32 %v2571, 4294901760
    %3167 = vmatpush1.msra.mxu0 %v3166
    %3168 = vmatprep.subr.mxu0 0.0
    %v3169 = vand.u32 %v2572, 4294901760
    %3170 = vmatpush1.msra.mxu0 %v3169
    %3171 = vmatprep.subr.mxu0 0.0
    %v3172 = vand.u32 %v2573, 4294901760
    %3173 = vmatpush1.msra.mxu0 %v3172
    %3174 = vmatprep.subr.mxu0 0.0
    %v3175 = vand.u32 %v2574, 4294901760
    %3176 = vmatpush1.msra.mxu0 %v3175
    %3177 = vmatprep.subr.mxu0 0.0
    %3178 = vmatpush1.msra.mxu0 0.0
    %3179 = vmatprep.subr.mxu0 0.0
    %3180 = vmatpush1.msra.mxu0 0.0
    %3181 = vmatprep.subr.mxu0 0.0
    %3182 = vmatpush1.msra.mxu0 0.0
    %3183 = vmatprep.subr.mxu0 0.0
    %3184 = vmatpush1.msra.mxu0 0.0
    %3185 = vmatprep.subr.mxu0 0.0
    %3186 = vmatpush1.msra.mxu0 0.0
    %3187 = vmatprep.subr.mxu0 0.0
    %3188 = vmatpush1.msra.mxu0 0.0
    %3189 = vmatprep.subr.mxu0 0.0
    %3190 = vmatpush1.msra.mxu0 0.0
    %3191 = vmatprep.subr.mxu0 0.0
    %3192 = vmatpush1.msra.mxu0 0.0
    %3193 = vmatprep.subr.mxu0 0.0
    %3194 = vmatpush1.msra.mxu0 0.0
    %3195 = vmatprep.subr.mxu0 0.0
    %3196 = vmatpush1.msra.mxu0 0.0
    %3197 = vmatprep.subr.mxu0 0.0
    %3198 = vmatpush1.msra.mxu0 0.0
    %3199 = vmatprep.subr.mxu0 0.0
    %3200 = vmatpush1.msra.mxu0 0.0
    %3201 = vmatprep.subr.mxu0 0.0
    %3202 = vmatpush1.msra.mxu0 0.0
    %3203 = vmatprep.subr.mxu0 0.0
    %3204 = vmatpush1.msra.mxu0 0.0
    %3205 = vmatprep.subr.mxu0 0.0
    %3206 = vmatpush1.msra.mxu0 0.0
    %3207 = vmatprep.subr.mxu0 0.0
    %3208 = vmatpush1.msra.mxu0 0.0
    %3209 = vmatprep.mubr.f32.mxu0 0.0
    %v3210 = vand.u32 %v2558, 4294901760
    %3211 = vmatmul.mubr.f32.gmra.mrb[0].mxu0 %v3210
    %v3212 = vpop.f32.mrb[0].mxu0
    %v3213 = vadd.f32 %v3126, %v3212
    %v3214 = vpop.f32.mrb[0].mxu0
    %3215 = vdwg.mxu0
    %v3216 = vadd.f32 %v1656, %v3213
    %v3217 = vtanh.pop %v3216
    %v3218 = vsub.f32 1.0, %v2550
    %v3219 = vmul.f32 %v3218, %v1652
    %v3220 = vmul.f32 %v2550, %v3217
    %v3221 = vadd.f32 %v3219, %v3220
    %s3222 = scalar_lea.vmem [#allocation11], 8
    %3223 = vst [vmem:[%s3222] sm:$0xff] %v3221
    %s3224 = scalar_lea.vmem [#allocation6], 16
    %v3225 = vld [vmem:[%s3224] sm:$0xff]
    %v3226 = vmul.f32 %v3225, %v3221
    %s3227 = scalar_lea.vmem [#allocation3], 48
    %v3228 = vld [vmem:[%s3227] sm:$0xff]
    %v3229 = vld [vmem:[%s3227 + $0x8] sm:$0xff]
    %v3230 = vld [vmem:[%s3227 + $0x10] sm:$0xff]
    %v3231 = vld [vmem:[#allocation8] sm:$0xff]
    %v3232 = vld [vmem:[#allocation8 + $0x8] sm:$0xff]
    %v3233 = vld [vmem:[#allocation8 + $0x10] sm:$0xff]
    %v3234 = vld [vmem:[#allocation8 + $0x18] sm:$0xff]
    %v3235 = vld [vmem:[#allocation8 + $0x20] sm:$0xff]
    %v3236 = vld [vmem:[#allocation8 + $0x28] sm:$0xff]
    %v3237 = vld [vmem:[#allocation8 + $0x30] sm:$0xff]
    %v3238 = vld [vmem:[#allocation8 + $0x38] sm:$0xff]
    %v3239 = vld [vmem:[#allocation8 + $0x40] sm:$0xff]
    %v3240 = vld [vmem:[#allocation8 + $0x48] sm:$0xff]
    %v3241 = vld [vmem:[#allocation8 + $0x50] sm:$0xff]
    %v3242 = vld [vmem:[#allocation8 + $0x58] sm:$0xff]
    %v3243 = vld [vmem:[#allocation8 + $0x60] sm:$0xff]
    %v3244 = vld [vmem:[#allocation8 + $0x68] sm:$0xff]
    %v3245 = vld [vmem:[#allocation8 + $0x70] sm:$0xff]
    %v3246 = vld [vmem:[#allocation8 + $0x78] sm:$0xff]
    %v3247 = vld [vmem:[#allocation8 + $0x80] sm:$0xff]
    %v3248 = vld [vmem:[#allocation8 + $0x88] sm:$0xff]
    %v3249 = vld [vmem:[#allocation8 + $0x90] sm:$0xff]
    %v3250 = vld [vmem:[#allocation8 + $0x98] sm:$0xff]
    %v3251 = vld [vmem:[#allocation8 + $0xa0] sm:$0xff]
    %v3252 = vld [vmem:[#allocation8 + $0xa8] sm:$0xff]
    %v3253 = vld [vmem:[#allocation8 + $0xb0] sm:$0xff]
    %v3254 = vld [vmem:[#allocation8 + $0xb8] sm:$0xff]
    %v3255 = vld [vmem:[#allocation8 + $0xc0] sm:$0xff]
    %v3256 = vld [vmem:[#allocation8 + $0xc8] sm:$0xff]
    %v3257 = vld [vmem:[#allocation8 + $0xd0] sm:$0xff]
    %v3258 = vld [vmem:[#allocation8 + $0xd8] sm:$0xff]
    %v3259 = vld [vmem:[#allocation8 + $0xe0] sm:$0xff]
    %v3260 = vld [vmem:[#allocation8 + $0xe8] sm:$0xff]
    %v3261 = vld [vmem:[#allocation8 + $0xf0] sm:$0xff]
    %v3262 = vld [vmem:[#allocation8 + $0xf8] sm:$0xff]
    %v3263 = vand.u32 %v3232, 4294901760
    %3264 = vmatprep.subr.mxu0 %v3263
    %v3265 = vand.u32 %v3231, 4294901760
    %3266 = vmatpush1.msra.mxu0 %v3265
    %v3267 = vand.u32 %v3234, 4294901760
    %3268 = vmatprep.subr.mxu0 %v3267
    %v3269 = vand.u32 %v3233, 4294901760
    %3270 = vmatpush1.msra.mxu0 %v3269
    %v3271 = vand.u32 %v3236, 4294901760
    %3272 = vmatprep.subr.mxu0 %v3271
    %v3273 = vand.u32 %v3235, 4294901760
    %3274 = vmatpush1.msra.mxu0 %v3273
    %v3275 = vand.u32 %v3238, 4294901760
    %3276 = vmatprep.subr.mxu0 %v3275
    %v3277 = vand.u32 %v3237, 4294901760
    %3278 = vmatpush1.msra.mxu0 %v3277
    %v3279 = vand.u32 %v3240, 4294901760
    %3280 = vmatprep.subr.mxu0 %v3279
    %v3281 = vand.u32 %v3239, 4294901760
    %3282 = vmatpush1.msra.mxu0 %v3281
    %v3283 = vand.u32 %v3242, 4294901760
    %3284 = vmatprep.subr.mxu0 %v3283
    %v3285 = vand.u32 %v3241, 4294901760
    %3286 = vmatpush1.msra.mxu0 %v3285
    %v3287 = vand.u32 %v3244, 4294901760
    %3288 = vmatprep.subr.mxu0 %v3287
    %v3289 = vand.u32 %v3243, 4294901760
    %3290 = vmatpush1.msra.mxu0 %v3289
    %v3291 = vand.u32 %v3246, 4294901760
    %3292 = vmatprep.subr.mxu0 %v3291
    %v3293 = vand.u32 %v3245, 4294901760
    %3294 = vmatpush1.msra.mxu0 %v3293
    %v3295 = vand.u32 %v3248, 4294901760
    %3296 = vmatprep.subr.mxu0 %v3295
    %v3297 = vand.u32 %v3247, 4294901760
    %3298 = vmatpush1.msra.mxu0 %v3297
    %v3299 = vand.u32 %v3250, 4294901760
    %3300 = vmatprep.subr.mxu0 %v3299
    %v3301 = vand.u32 %v3249, 4294901760
    %3302 = vmatpush1.msra.mxu0 %v3301
    %v3303 = vand.u32 %v3252, 4294901760
    %3304 = vmatprep.subr.mxu0 %v3303
    %v3305 = vand.u32 %v3251, 4294901760
    %3306 = vmatpush1.msra.mxu0 %v3305
    %v3307 = vand.u32 %v3254, 4294901760
    %3308 = vmatprep.subr.mxu0 %v3307
    %v3309 = vand.u32 %v3253, 4294901760
    %3310 = vmatpush1.msra.mxu0 %v3309
    %v3311 = vand.u32 %v3256, 4294901760
    %3312 = vmatprep.subr.mxu0 %v3311
    %v3313 = vand.u32 %v3255, 4294901760
    %3314 = vmatpush1.msra.mxu0 %v3313
    %v3315 = vand.u32 %v3258, 4294901760
    %3316 = vmatprep.subr.mxu0 %v3315
    %v3317 = vand.u32 %v3257, 4294901760
    %3318 = vmatpush1.msra.mxu0 %v3317
    %v3319 = vand.u32 %v3260, 4294901760
    %3320 = vmatprep.subr.mxu0 %v3319
    %v3321 = vand.u32 %v3259, 4294901760
    %3322 = vmatpush1.msra.mxu0 %v3321
    %v3323 = vand.u32 %v3262, 4294901760
    %3324 = vmatprep.subr.mxu0 %v3323
    %v3325 = vand.u32 %v3261, 4294901760
    %3326 = vmatpush1.msra.mxu0 %v3325
    %3327 = vmatprep.subr.mxu0 0.0
    %3328 = vmatpush1.msra.mxu0 0.0
    %3329 = vmatprep.subr.mxu0 0.0
    %3330 = vmatpush1.msra.mxu0 0.0
    %3331 = vmatprep.subr.mxu0 0.0
    %3332 = vmatpush1.msra.mxu0 0.0
    %3333 = vmatprep.subr.mxu0 0.0
    %3334 = vmatpush1.msra.mxu0 0.0
    %3335 = vmatprep.subr.mxu0 0.0
    %3336 = vmatpush1.msra.mxu0 0.0
    %3337 = vmatprep.subr.mxu0 0.0
    %3338 = vmatpush1.msra.mxu0 0.0
    %3339 = vmatprep.subr.mxu0 0.0
    %3340 = vmatpush1.msra.mxu0 0.0
    %3341 = vmatprep.subr.mxu0 0.0
    %3342 = vmatpush1.msra.mxu0 0.0
    %3343 = vmatprep.subr.mxu0 0.0
    %3344 = vmatpush1.msra.mxu0 0.0
    %3345 = vmatprep.subr.mxu0 0.0
    %3346 = vmatpush1.msra.mxu0 0.0
    %3347 = vmatprep.subr.mxu0 0.0
    %3348 = vmatpush1.msra.mxu0 0.0
    %3349 = vmatprep.subr.mxu0 0.0
    %3350 = vmatpush1.msra.mxu0 0.0
    %3351 = vmatprep.subr.mxu0 0.0
    %3352 = vmatpush1.msra.mxu0 0.0
    %3353 = vmatprep.subr.mxu0 0.0
    %3354 = vmatpush1.msra.mxu0 0.0
    %3355 = vmatprep.subr.mxu0 0.0
    %3356 = vmatpush1.msra.mxu0 0.0
    %3357 = vmatprep.subr.mxu0 0.0
    %3358 = vmatpush1.msra.mxu0 0.0
    %3359 = vmatprep.mubr.f32.mxu0 0.0
    %v3360 = vand.u32 %v3226, 4294901760
    %v3361 = vsub.f32 %v3226, %v3360
    %v3362 = vand.u32 %v3361, 4294901760
    %v3363 = vsub.f32 %v3361, %v3362
    %v3364 = vand.u32 %v3363, 4294901760
    %3365 = vmatmul.mubr.f32.gmra.mrb[0].mxu0 %v3364
    %v3366 = vpop.f32.mrb[0].mxu0
    %v3367 = vadd.f32 0.0, %v3366
    %v3368 = vpop.f32.mrb[0].mxu0
    %v3369 = vadd.f32 0.0, %v3368
    %3370 = vdwg.mxu0
    %v3371 = vand.u32 %v3232, 4294901760
    %v3372 = vsub.f32 %v3232, %v3371
    %v3373 = vand.u32 %v3372, 4294901760
    %v3374 = vsub.f32 %v3372, %v3373
    %v3375 = vand.u32 %v3374, 4294901760
    %3376 = vmatprep.subr.mxu0 %v3375
    %v3377 = vand.u32 %v3231, 4294901760
    %v3378 = vsub.f32 %v3231, %v3377
    %v3379 = vand.u32 %v3378, 4294901760
    %v3380 = vsub.f32 %v3378, %v3379
    %v3381 = vand.u32 %v3380, 4294901760
    %3382 = vmatpush1.msra.mxu0 %v3381
    %v3383 = vand.u32 %v3234, 4294901760
    %v3384 = vsub.f32 %v3234, %v3383
    %v3385 = vand.u32 %v3384, 4294901760
    %v3386 = vsub.f32 %v3384, %v3385
    %v3387 = vand.u32 %v3386, 4294901760
    %3388 = vmatprep.subr.mxu0 %v3387
    %v3389 = vand.u32 %v3233, 4294901760
    %v3390 = vsub.f32 %v3233, %v3389
    %v3391 = vand.u32 %v3390, 4294901760
    %v3392 = vsub.f32 %v3390, %v3391
    %v3393 = vand.u32 %v3392, 4294901760
    %3394 = vmatpush1.msra.mxu0 %v3393
    %v3395 = vand.u32 %v3236, 4294901760
    %v3396 = vsub.f32 %v3236, %v3395
    %v3397 = vand.u32 %v3396, 4294901760
    %v3398 = vsub.f32 %v3396, %v3397
    %v3399 = vand.u32 %v3398, 4294901760
    %3400 = vmatprep.subr.mxu0 %v3399
    %v3401 = vand.u32 %v3235, 4294901760
    %v3402 = vsub.f32 %v3235, %v3401
    %v3403 = vand.u32 %v3402, 4294901760
    %v3404 = vsub.f32 %v3402, %v3403
    %v3405 = vand.u32 %v3404, 4294901760
    %3406 = vmatpush1.msra.mxu0 %v3405
    %v3407 = vand.u32 %v3238, 4294901760
    %v3408 = vsub.f32 %v3238, %v3407
    %v3409 = vand.u32 %v3408, 4294901760
    %v3410 = vsub.f32 %v3408, %v3409
    %v3411 = vand.u32 %v3410, 4294901760
    %3412 = vmatprep.subr.mxu0 %v3411
    %v3413 = vand.u32 %v3237, 4294901760
    %v3414 = vsub.f32 %v3237, %v3413
    %v3415 = vand.u32 %v3414, 4294901760
    %v3416 = vsub.f32 %v3414, %v3415
    %v3417 = vand.u32 %v3416, 4294901760
    %3418 = vmatpush1.msra.mxu0 %v3417
    %v3419 = vand.u32 %v3240, 4294901760
    %v3420 = vsub.f32 %v3240, %v3419
    %v3421 = vand.u32 %v3420, 4294901760
    %v3422 = vsub.f32 %v3420, %v3421
    %v3423 = vand.u32 %v3422, 4294901760
    %3424 = vmatprep.subr.mxu0 %v3423
    %v3425 = vand.u32 %v3239, 4294901760
    %v3426 = vsub.f32 %v3239, %v3425
    %v3427 = vand.u32 %v3426, 4294901760
    %v3428 = vsub.f32 %v3426, %v3427
    %v3429 = vand.u32 %v3428, 4294901760
    %3430 = vmatpush1.msra.mxu0 %v3429
    %v3431 = vand.u32 %v3242, 4294901760
    %v3432 = vsub.f32 %v3242, %v3431
    %v3433 = vand.u32 %v3432, 4294901760
    %v3434 = vsub.f32 %v3432, %v3433
    %v3435 = vand.u32 %v3434, 4294901760
    %3436 = vmatprep.subr.mxu0 %v3435
    %v3437 = vand.u32 %v3241, 4294901760
    %v3438 = vsub.f32 %v3241, %v3437
    %v3439 = vand.u32 %v3438, 4294901760
    %v3440 = vsub.f32 %v3438, %v3439
    %v3441 = vand.u32 %v3440, 4294901760
    %3442 = vmatpush1.msra.mxu0 %v3441
    %v3443 = vand.u32 %v3244, 4294901760
    %v3444 = vsub.f32 %v3244, %v3443
    %v3445 = vand.u32 %v3444, 4294901760
    %v3446 = vsub.f32 %v3444, %v3445
    %v3447 = vand.u32 %v3446, 4294901760
    %3448 = vmatprep.subr.mxu0 %v3447
    %v3449 = vand.u32 %v3243, 4294901760
    %v3450 = vsub.f32 %v3243, %v3449
    %v3451 = vand.u32 %v3450, 4294901760
    %v3452 = vsub.f32 %v3450, %v3451
    %v3453 = vand.u32 %v3452, 4294901760
    %3454 = vmatpush1.msra.mxu0 %v3453
    %v3455 = vand.u32 %v3246, 4294901760
    %v3456 = vsub.f32 %v3246, %v3455
    %v3457 = vand.u32 %v3456, 4294901760
    %v3458 = vsub.f32 %v3456, %v3457
    %v3459 = vand.u32 %v3458, 4294901760
    %3460 = vmatprep.subr.mxu0 %v3459
    %v3461 = vand.u32 %v3245, 4294901760
    %v3462 = vsub.f32 %v3245, %v3461
    %v3463 = vand.u32 %v3462, 4294901760
    %v3464 = vsub.f32 %v3462, %v3463
    %v3465 = vand.u32 %v3464, 4294901760
    %3466 = vmatpush1.msra.mxu0 %v3465
    %v3467 = vand.u32 %v3248, 4294901760
    %v3468 = vsub.f32 %v3248, %v3467
    %v3469 = vand.u32 %v3468, 4294901760
    %v3470 = vsub.f32 %v3468, %v3469
    %v3471 = vand.u32 %v3470, 4294901760
    %3472 = vmatprep.subr.mxu0 %v3471
    %v3473 = vand.u32 %v3247, 4294901760
    %v3474 = vsub.f32 %v3247, %v3473
    %v3475 = vand.u32 %v3474, 4294901760
    %v3476 = vsub.f32 %v3474, %v3475
    %v3477 = vand.u32 %v3476, 4294901760
    %3478 = vmatpush1.msra.mxu0 %v3477
    %v3479 = vand.u32 %v3250, 4294901760
    %v3480 = vsub.f32 %v3250, %v3479
    %v3481 = vand.u32 %v3480, 4294901760
    %v3482 = vsub.f32 %v3480, %v3481
    %v3483 = vand.u32 %v3482, 4294901760
    %3484 = vmatprep.subr.mxu0 %v3483
    %v3485 = vand.u32 %v3249, 4294901760
    %v3486 = vsub.f32 %v3249, %v3485
    %v3487 = vand.u32 %v3486, 4294901760
    %v3488 = vsub.f32 %v3486, %v3487
    %v3489 = vand.u32 %v3488, 4294901760
    %3490 = vmatpush1.msra.mxu0 %v3489
    %v3491 = vand.u32 %v3252, 4294901760
    %v3492 = vsub.f32 %v3252, %v3491
    %v3493 = vand.u32 %v3492, 4294901760
    %v3494 = vsub.f32 %v3492, %v3493
    %v3495 = vand.u32 %v3494, 4294901760
    %3496 = vmatprep.subr.mxu0 %v3495
    %v3497 = vand.u32 %v3251, 4294901760
    %v3498 = vsub.f32 %v3251, %v3497
    %v3499 = vand.u32 %v3498, 4294901760
    %v3500 = vsub.f32 %v3498, %v3499
    %v3501 = vand.u32 %v3500, 4294901760
    %3502 = vmatpush1.msra.mxu0 %v3501
    %v3503 = vand.u32 %v3254, 4294901760
    %v3504 = vsub.f32 %v3254, %v3503
    %v3505 = vand.u32 %v3504, 4294901760
    %v3506 = vsub.f32 %v3504, %v3505
    %v3507 = vand.u32 %v3506, 4294901760
    %3508 = vmatprep.subr.mxu0 %v3507
    %v3509 = vand.u32 %v3253, 4294901760
    %v3510 = vsub.f32 %v3253, %v3509
    %v3511 = vand.u32 %v3510, 4294901760
    %v3512 = vsub.f32 %v3510, %v3511
    %v3513 = vand.u32 %v3512, 4294901760
    %3514 = vmatpush1.msra.mxu0 %v3513
    %v3515 = vand.u32 %v3256, 4294901760
    %v3516 = vsub.f32 %v3256, %v3515
    %v3517 = vand.u32 %v3516, 4294901760
    %v3518 = vsub.f32 %v3516, %v3517
    %v3519 = vand.u32 %v3518, 4294901760
    %3520 = vmatprep.subr.mxu0 %v3519
    %v3521 = vand.u32 %v3255, 4294901760
    %v3522 = vsub.f32 %v3255, %v3521
    %v3523 = vand.u32 %v3522, 4294901760
    %v3524 = vsub.f32 %v3522, %v3523
    %v3525 = vand.u32 %v3524, 4294901760
    %3526 = vmatpush1.msra.mxu0 %v3525
    %v3527 = vand.u32 %v3258, 4294901760
    %v3528 = vsub.f32 %v3258, %v3527
    %v3529 = vand.u32 %v3528, 4294901760
    %v3530 = vsub.f32 %v3528, %v3529
    %v3531 = vand.u32 %v3530, 4294901760
    %3532 = vmatprep.subr.mxu0 %v3531
    %v3533 = vand.u32 %v3257, 4294901760
    %v3534 = vsub.f32 %v3257, %v3533
    %v3535 = vand.u32 %v3534, 4294901760
    %v3536 = vsub.f32 %v3534, %v3535
    %v3537 = vand.u32 %v3536, 4294901760
    %3538 = vmatpush1.msra.mxu0 %v3537
    %v3539 = vand.u32 %v3260, 4294901760
    %v3540 = vsub.f32 %v3260, %v3539
    %v3541 = vand.u32 %v3540, 4294901760
    %v3542 = vsub.f32 %v3540, %v3541
    %v3543 = vand.u32 %v3542, 4294901760
    %3544 = vmatprep.subr.mxu0 %v3543
    %v3545 = vand.u32 %v3259, 4294901760
    %v3546 = vsub.f32 %v3259, %v3545
    %v3547 = vand.u32 %v3546, 4294901760
    %v3548 = vsub.f32 %v3546, %v3547
    %v3549 = vand.u32 %v3548, 4294901760
    %3550 = vmatpush1.msra.mxu0 %v3549
    %v3551 = vand.u32 %v3262, 4294901760
    %v3552 = vsub.f32 %v3262, %v3551
    %v3553 = vand.u32 %v3552, 4294901760
    %v3554 = vsub.f32 %v3552, %v3553
    %v3555 = vand.u32 %v3554, 4294901760
    %3556 = vmatprep.subr.mxu0 %v3555
    %v3557 = vand.u32 %v3261, 4294901760
    %v3558 = vsub.f32 %v3261, %v3557
    %v3559 = vand.u32 %v3558, 4294901760
    %v3560 = vsub.f32 %v3558, %v3559
    %v3561 = vand.u32 %v3560, 4294901760
    %3562 = vmatpush1.msra.mxu0 %v3561
    %3563 = vmatprep.subr.mxu0 0.0
    %3564 = vmatpush1.msra.mxu0 0.0
    %3565 = vmatprep.subr.mxu0 0.0
    %3566 = vmatpush1.msra.mxu0 0.0
    %3567 = vmatprep.subr.mxu0 0.0
    %3568 = vmatpush1.msra.mxu0 0.0
    %3569 = vmatprep.subr.mxu0 0.0
    %3570 = vmatpush1.msra.mxu0 0.0
    %3571 = vmatprep.subr.mxu0 0.0
    %3572 = vmatpush1.msra.mxu0 0.0
    %3573 = vmatprep.subr.mxu0 0.0
    %3574 = vmatpush1.msra.mxu0 0.0
    %3575 = vmatprep.subr.mxu0 0.0
    %3576 = vmatpush1.msra.mxu0 0.0
    %3577 = vmatprep.subr.mxu0 0.0
    %3578 = vmatpush1.msra.mxu0 0.0
    %3579 = vmatprep.subr.mxu0 0.0
    %3580 = vmatpush1.msra.mxu0 0.0
    %3581 = vmatprep.subr.mxu0 0.0
    %3582 = vmatpush1.msra.mxu0 0.0
    %3583 = vmatprep.subr.mxu0 0.0
    %3584 = vmatpush1.msra.mxu0 0.0
    %3585 = vmatprep.subr.mxu0 0.0
    %3586 = vmatpush1.msra.mxu0 0.0
    %3587 = vmatprep.subr.mxu0 0.0
    %3588 = vmatpush1.msra.mxu0 0.0
    %3589 = vmatprep.subr.mxu0 0.0
    %3590 = vmatpush1.msra.mxu0 0.0
    %3591 = vmatprep.subr.mxu0 0.0
    %3592 = vmatpush1.msra.mxu0 0.0
    %3593 = vmatprep.subr.mxu0 0.0
    %3594 = vmatpush1.msra.mxu0 0.0
    %3595 = vmatprep.mubr.f32.mxu0 0.0
    %v3596 = vand.u32 %v3226, 4294901760
    %3597 = vmatmul.mubr.f32.gmra.mrb[0].mxu0 %v3596
    %v3598 = vpop.f32.mrb[0].mxu0
    %v3599 = vadd.f32 %v3367, %v3598
    %v3600 = vpop.f32.mrb[0].mxu0
    %v3601 = vadd.f32 %v3369, %v3600
    %3602 = vdwg.mxu0
    %v3603 = vand.u32 %v3232, 4294901760
    %v3604 = vsub.f32 %v3232, %v3603
    %3605 = vmatprep.subr.mxu0 %v3604
    %v3606 = vand.u32 %v3231, 4294901760
    %v3607 = vsub.f32 %v3231, %v3606
    %3608 = vmatpush1.msra.mxu0 %v3607
    %v3609 = vand.u32 %v3234, 4294901760
    %v3610 = vsub.f32 %v3234, %v3609
    %3611 = vmatprep.subr.mxu0 %v3610
    %v3612 = vand.u32 %v3233, 4294901760
    %v3613 = vsub.f32 %v3233, %v3612
    %3614 = vmatpush1.msra.mxu0 %v3613
    %v3615 = vand.u32 %v3236, 4294901760
    %v3616 = vsub.f32 %v3236, %v3615
    %3617 = vmatprep.subr.mxu0 %v3616
    %v3618 = vand.u32 %v3235, 4294901760
    %v3619 = vsub.f32 %v3235, %v3618
    %3620 = vmatpush1.msra.mxu0 %v3619
    %v3621 = vand.u32 %v3238, 4294901760
    %v3622 = vsub.f32 %v3238, %v3621
    %3623 = vmatprep.subr.mxu0 %v3622
    %v3624 = vand.u32 %v3237, 4294901760
    %v3625 = vsub.f32 %v3237, %v3624
    %3626 = vmatpush1.msra.mxu0 %v3625
    %v3627 = vand.u32 %v3240, 4294901760
    %v3628 = vsub.f32 %v3240, %v3627
    %3629 = vmatprep.subr.mxu0 %v3628
    %v3630 = vand.u32 %v3239, 4294901760
    %v3631 = vsub.f32 %v3239, %v3630
    %3632 = vmatpush1.msra.mxu0 %v3631
    %v3633 = vand.u32 %v3242, 4294901760
    %v3634 = vsub.f32 %v3242, %v3633
    %3635 = vmatprep.subr.mxu0 %v3634
    %v3636 = vand.u32 %v3241, 4294901760
    %v3637 = vsub.f32 %v3241, %v3636
    %3638 = vmatpush1.msra.mxu0 %v3637
    %v3639 = vand.u32 %v3244, 4294901760
    %v3640 = vsub.f32 %v3244, %v3639
    %3641 = vmatprep.subr.mxu0 %v3640
    %v3642 = vand.u32 %v3243, 4294901760
    %v3643 = vsub.f32 %v3243, %v3642
    %3644 = vmatpush1.msra.mxu0 %v3643
    %v3645 = vand.u32 %v3246, 4294901760
    %v3646 = vsub.f32 %v3246, %v3645
    %3647 = vmatprep.subr.mxu0 %v3646
    %v3648 = vand.u32 %v3245, 4294901760
    %v3649 = vsub.f32 %v3245, %v3648
    %3650 = vmatpush1.msra.mxu0 %v3649
    %v3651 = vand.u32 %v3248, 4294901760
    %v3652 = vsub.f32 %v3248, %v3651
    %3653 = vmatprep.subr.mxu0 %v3652
    %v3654 = vand.u32 %v3247, 4294901760
    %v3655 = vsub.f32 %v3247, %v3654
    %3656 = vmatpush1.msra.mxu0 %v3655
    %v3657 = vand.u32 %v3250, 4294901760
    %v3658 = vsub.f32 %v3250, %v3657
    %3659 = vmatprep.subr.mxu0 %v3658
    %v3660 = vand.u32 %v3249, 4294901760
    %v3661 = vsub.f32 %v3249, %v3660
    %3662 = vmatpush1.msra.mxu0 %v3661
    %v3663 = vand.u32 %v3252, 4294901760
    %v3664 = vsub.f32 %v3252, %v3663
    %3665 = vmatprep.subr.mxu0 %v3664
    %v3666 = vand.u32 %v3251, 4294901760
    %v3667 = vsub.f32 %v3251, %v3666
    %3668 = vmatpush1.msra.mxu0 %v3667
    %v3669 = vand.u32 %v3254, 4294901760
    %v3670 = vsub.f32 %v3254, %v3669
    %3671 = vmatprep.subr.mxu0 %v3670
    %v3672 = vand.u32 %v3253, 4294901760
    %v3673 = vsub.f32 %v3253, %v3672
    %3674 = vmatpush1.msra.mxu0 %v3673
    %v3675 = vand.u32 %v3256, 4294901760
    %v3676 = vsub.f32 %v3256, %v3675
    %3677 = vmatprep.subr.mxu0 %v3676
    %v3678 = vand.u32 %v3255, 4294901760
    %v3679 = vsub.f32 %v3255, %v3678
    %3680 = vmatpush1.msra.mxu0 %v3679
    %v3681 = vand.u32 %v3258, 4294901760
    %v3682 = vsub.f32 %v3258, %v3681
    %3683 = vmatprep.subr.mxu0 %v3682
    %v3684 = vand.u32 %v3257, 4294901760
    %v3685 = vsub.f32 %v3257, %v3684
    %3686 = vmatpush1.msra.mxu0 %v3685
    %v3687 = vand.u32 %v3260, 4294901760
    %v3688 = vsub.f32 %v3260, %v3687
    %3689 = vmatprep.subr.mxu0 %v3688
    %v3690 = vand.u32 %v3259, 4294901760
    %v3691 = vsub.f32 %v3259, %v3690
    %3692 = vmatpush1.msra.mxu0 %v3691
    %v3693 = vand.u32 %v3262, 4294901760
    %v3694 = vsub.f32 %v3262, %v3693
    %3695 = vmatprep.subr.mxu0 %v3694
    %v3696 = vand.u32 %v3261, 4294901760
    %v3697 = vsub.f32 %v3261, %v3696
    %3698 = vmatpush1.msra.mxu0 %v3697
    %3699 = vmatprep.subr.mxu0 0.0
    %3700 = vmatpush1.msra.mxu0 0.0
    %3701 = vmatprep.subr.mxu0 0.0
    %3702 = vmatpush1.msra.mxu0 0.0
    %3703 = vmatprep.subr.mxu0 0.0
    %3704 = vmatpush1.msra.mxu0 0.0
    %3705 = vmatprep.subr.mxu0 0.0
    %3706 = vmatpush1.msra.mxu0 0.0
    %3707 = vmatprep.subr.mxu0 0.0
    %3708 = vmatpush1.msra.mxu0 0.0
    %3709 = vmatprep.subr.mxu0 0.0
    %3710 = vmatpush1.msra.mxu0 0.0
    %3711 = vmatprep.subr.mxu0 0.0
    %3712 = vmatpush1.msra.mxu0 0.0
    %3713 = vmatprep.subr.mxu0 0.0
    %3714 = vmatpush1.msra.mxu0 0.0
    %3715 = vmatprep.subr.mxu0 0.0
    %3716 = vmatpush1.msra.mxu0 0.0
    %3717 = vmatprep.subr.mxu0 0.0
    %3718 = vmatpush1.msra.mxu0 0.0
    %3719 = vmatprep.subr.mxu0 0.0
    %3720 = vmatpush1.msra.mxu0 0.0
    %3721 = vmatprep.subr.mxu0 0.0
    %3722 = vmatpush1.msra.mxu0 0.0
    %3723 = vmatprep.subr.mxu0 0.0
    %3724 = vmatpush1.msra.mxu0 0.0
    %3725 = vmatprep.subr.mxu0 0.0
    %3726 = vmatpush1.msra.mxu0 0.0
    %3727 = vmatprep.subr.mxu0 0.0
    %3728 = vmatpush1.msra.mxu0 0.0
    %3729 = vmatprep.subr.mxu0 0.0
    %3730 = vmatpush1.msra.mxu0 0.0
    %3731 = vmatprep.mubr.f32.mxu0 0.0
    %v3732 = vand.u32 %v3226, 4294901760
    %v3733 = vsub.f32 %v3226, %v3732
    %3734 = vmatmul.mubr.f32.gmra.mrb[0].mxu0 %v3733
    %v3735 = vpop.f32.mrb[0].mxu0
    %v3736 = vadd.f32 %v3599, %v3735
    %v3737 = vpop.f32.mrb[0].mxu0
    %v3738 = vadd.f32 %v3601, %v3737
    %3739 = vdwg.mxu0
    %v3740 = vand.u32 %v3232, 4294901760
    %3741 = vmatprep.subr.mxu0 %v3740
    %v3742 = vand.u32 %v3231, 4294901760
    %3743 = vmatpush1.msra.mxu0 %v3742
    %v3744 = vand.u32 %v3234, 4294901760
    %3745 = vmatprep.subr.mxu0 %v3744
    %v3746 = vand.u32 %v3233, 4294901760
    %3747 = vmatpush1.msra.mxu0 %v3746
    %v3748 = vand.u32 %v3236, 4294901760
    %3749 = vmatprep.subr.mxu0 %v3748
    %v3750 = vand.u32 %v3235, 4294901760
    %3751 = vmatpush1.msra.mxu0 %v3750
    %v3752 = vand.u32 %v3238, 4294901760
    %3753 = vmatprep.subr.mxu0 %v3752
    %v3754 = vand.u32 %v3237, 4294901760
    %3755 = vmatpush1.msra.mxu0 %v3754
    %v3756 = vand.u32 %v3240, 4294901760
    %3757 = vmatprep.subr.mxu0 %v3756
    %v3758 = vand.u32 %v3239, 4294901760
    %3759 = vmatpush1.msra.mxu0 %v3758
    %v3760 = vand.u32 %v3242, 4294901760
    %3761 = vmatprep.subr.mxu0 %v3760
    %v3762 = vand.u32 %v3241, 4294901760
    %3763 = vmatpush1.msra.mxu0 %v3762
    %v3764 = vand.u32 %v3244, 4294901760
    %3765 = vmatprep.subr.mxu0 %v3764
    %v3766 = vand.u32 %v3243, 4294901760
    %3767 = vmatpush1.msra.mxu0 %v3766
    %v3768 = vand.u32 %v3246, 4294901760
    %3769 = vmatprep.subr.mxu0 %v3768
    %v3770 = vand.u32 %v3245, 4294901760
    %3771 = vmatpush1.msra.mxu0 %v3770
    %v3772 = vand.u32 %v3248, 4294901760
    %3773 = vmatprep.subr.mxu0 %v3772
    %v3774 = vand.u32 %v3247, 4294901760
    %3775 = vmatpush1.msra.mxu0 %v3774
    %v3776 = vand.u32 %v3250, 4294901760
    %3777 = vmatprep.subr.mxu0 %v3776
    %v3778 = vand.u32 %v3249, 4294901760
    %3779 = vmatpush1.msra.mxu0 %v3778
    %v3780 = vand.u32 %v3252, 4294901760
    %3781 = vmatprep.subr.mxu0 %v3780
    %v3782 = vand.u32 %v3251, 4294901760
    %3783 = vmatpush1.msra.mxu0 %v3782
    %v3784 = vand.u32 %v3254, 4294901760
    %3785 = vmatprep.subr.mxu0 %v3784
    %v3786 = vand.u32 %v3253, 4294901760
    %3787 = vmatpush1.msra.mxu0 %v3786
    %v3788 = vand.u32 %v3256, 4294901760
    %3789 = vmatprep.subr.mxu0 %v3788
    %v3790 = vand.u32 %v3255, 4294901760
    %3791 = vmatpush1.msra.mxu0 %v3790
    %v3792 = vand.u32 %v3258, 4294901760
    %3793 = vmatprep.subr.mxu0 %v3792
    %v3794 = vand.u32 %v3257, 4294901760
    %3795 = vmatpush1.msra.mxu0 %v3794
    %v3796 = vand.u32 %v3260, 4294901760
    %3797 = vmatprep.subr.mxu0 %v3796
    %v3798 = vand.u32 %v3259, 4294901760
    %3799 = vmatpush1.msra.mxu0 %v3798
    %v3800 = vand.u32 %v3262, 4294901760
    %3801 = vmatprep.subr.mxu0 %v3800
    %v3802 = vand.u32 %v3261, 4294901760
    %3803 = vmatpush1.msra.mxu0 %v3802
    %3804 = vmatprep.subr.mxu0 0.0
    %3805 = vmatpush1.msra.mxu0 0.0
    %3806 = vmatprep.subr.mxu0 0.0
    %3807 = vmatpush1.msra.mxu0 0.0
    %3808 = vmatprep.subr.mxu0 0.0
    %3809 = vmatpush1.msra.mxu0 0.0
    %3810 = vmatprep.subr.mxu0 0.0
    %3811 = vmatpush1.msra.mxu0 0.0
    %3812 = vmatprep.subr.mxu0 0.0
    %3813 = vmatpush1.msra.mxu0 0.0
    %3814 = vmatprep.subr.mxu0 0.0
    %3815 = vmatpush1.msra.mxu0 0.0
    %3816 = vmatprep.subr.mxu0 0.0
    %3817 = vmatpush1.msra.mxu0 0.0
    %3818 = vmatprep.subr.mxu0 0.0
    %3819 = vmatpush1.msra.mxu0 0.0
    %3820 = vmatprep.subr.mxu0 0.0
    %3821 = vmatpush1.msra.mxu0 0.0
    %3822 = vmatprep.subr.mxu0 0.0
    %3823 = vmatpush1.msra.mxu0 0.0
    %3824 = vmatprep.subr.mxu0 0.0
    %3825 = vmatpush1.msra.mxu0 0.0
    %3826 = vmatprep.subr.mxu0 0.0
    %3827 = vmatpush1.msra.mxu0 0.0
    %3828 = vmatprep.subr.mxu0 0.0
    %3829 = vmatpush1.msra.mxu0 0.0
    %3830 = vmatprep.subr.mxu0 0.0
    %3831 = vmatpush1.msra.mxu0 0.0
    %3832 = vmatprep.subr.mxu0 0.0
    %3833 = vmatpush1.msra.mxu0 0.0
    %3834 = vmatprep.subr.mxu0 0.0
    %3835 = vmatpush1.msra.mxu0 0.0
    %3836 = vmatprep.mubr.f32.mxu0 0.0
    %v3837 = vand.u32 %v3226, 4294901760
    %v3838 = vsub.f32 %v3226, %v3837
    %v3839 = vand.u32 %v3838, 4294901760
    %3840 = vmatmul.mubr.f32.gmra.mrb[0].mxu0 %v3839
    %v3841 = vpop.f32.mrb[0].mxu0
    %v3842 = vadd.f32 %v3736, %v3841
    %v3843 = vpop.f32.mrb[0].mxu0
    %v3844 = vadd.f32 %v3738, %v3843
    %3845 = vdwg.mxu0
    %v3846 = vand.u32 %v3232, 4294901760
    %v3847 = vsub.f32 %v3232, %v3846
    %v3848 = vand.u32 %v3847, 4294901760
    %3849 = vmatprep.subr.mxu0 %v3848
    %v3850 = vand.u32 %v3231, 4294901760
    %v3851 = vsub.f32 %v3231, %v3850
    %v3852 = vand.u32 %v3851, 4294901760
    %3853 = vmatpush1.msra.mxu0 %v3852
    %v3854 = vand.u32 %v3234, 4294901760
    %v3855 = vsub.f32 %v3234, %v3854
    %v3856 = vand.u32 %v3855, 4294901760
    %3857 = vmatprep.subr.mxu0 %v3856
    %v3858 = vand.u32 %v3233, 4294901760
    %v3859 = vsub.f32 %v3233, %v3858
    %v3860 = vand.u32 %v3859, 4294901760
    %3861 = vmatpush1.msra.mxu0 %v3860
    %v3862 = vand.u32 %v3236, 4294901760
    %v3863 = vsub.f32 %v3236, %v3862
    %v3864 = vand.u32 %v3863, 4294901760
    %3865 = vmatprep.subr.mxu0 %v3864
    %v3866 = vand.u32 %v3235, 4294901760
    %v3867 = vsub.f32 %v3235, %v3866
    %v3868 = vand.u32 %v3867, 4294901760
    %3869 = vmatpush1.msra.mxu0 %v3868
    %v3870 = vand.u32 %v3238, 4294901760
    %v3871 = vsub.f32 %v3238, %v3870
    %v3872 = vand.u32 %v3871, 4294901760
    %3873 = vmatprep.subr.mxu0 %v3872
    %v3874 = vand.u32 %v3237, 4294901760
    %v3875 = vsub.f32 %v3237, %v3874
    %v3876 = vand.u32 %v3875, 4294901760
    %3877 = vmatpush1.msra.mxu0 %v3876
    %v3878 = vand.u32 %v3240, 4294901760
    %v3879 = vsub.f32 %v3240, %v3878
    %v3880 = vand.u32 %v3879, 4294901760
    %3881 = vmatprep.subr.mxu0 %v3880
    %v3882 = vand.u32 %v3239, 4294901760
    %v3883 = vsub.f32 %v3239, %v3882
    %v3884 = vand.u32 %v3883, 4294901760
    %3885 = vmatpush1.msra.mxu0 %v3884
    %v3886 = vand.u32 %v3242, 4294901760
    %v3887 = vsub.f32 %v3242, %v3886
    %v3888 = vand.u32 %v3887, 4294901760
    %3889 = vmatprep.subr.mxu0 %v3888
    %v3890 = vand.u32 %v3241, 4294901760
    %v3891 = vsub.f32 %v3241, %v3890
    %v3892 = vand.u32 %v3891, 4294901760
    %3893 = vmatpush1.msra.mxu0 %v3892
    %v3894 = vand.u32 %v3244, 4294901760
    %v3895 = vsub.f32 %v3244, %v3894
    %v3896 = vand.u32 %v3895, 4294901760
    %3897 = vmatprep.subr.mxu0 %v3896
    %v3898 = vand.u32 %v3243, 4294901760
    %v3899 = vsub.f32 %v3243, %v3898
    %v3900 = vand.u32 %v3899, 4294901760
    %3901 = vmatpush1.msra.mxu0 %v3900
    %v3902 = vand.u32 %v3246, 4294901760
    %v3903 = vsub.f32 %v3246, %v3902
    %v3904 = vand.u32 %v3903, 4294901760
    %3905 = vmatprep.subr.mxu0 %v3904
    %v3906 = vand.u32 %v3245, 4294901760
    %v3907 = vsub.f32 %v3245, %v3906
    %v3908 = vand.u32 %v3907, 4294901760
    %3909 = vmatpush1.msra.mxu0 %v3908
    %v3910 = vand.u32 %v3248, 4294901760
    %v3911 = vsub.f32 %v3248, %v3910
    %v3912 = vand.u32 %v3911, 4294901760
    %3913 = vmatprep.subr.mxu0 %v3912
    %v3914 = vand.u32 %v3247, 4294901760
    %v3915 = vsub.f32 %v3247, %v3914
    %v3916 = vand.u32 %v3915, 4294901760
    %3917 = vmatpush1.msra.mxu0 %v3916
    %v3918 = vand.u32 %v3250, 4294901760
    %v3919 = vsub.f32 %v3250, %v3918
    %v3920 = vand.u32 %v3919, 4294901760
    %3921 = vmatprep.subr.mxu0 %v3920
    %v3922 = vand.u32 %v3249, 4294901760
    %v3923 = vsub.f32 %v3249, %v3922
    %v3924 = vand.u32 %v3923, 4294901760
    %3925 = vmatpush1.msra.mxu0 %v3924
    %v3926 = vand.u32 %v3252, 4294901760
    %v3927 = vsub.f32 %v3252, %v3926
    %v3928 = vand.u32 %v3927, 4294901760
    %3929 = vmatprep.subr.mxu0 %v3928
    %v3930 = vand.u32 %v3251, 4294901760
    %v3931 = vsub.f32 %v3251, %v3930
    %v3932 = vand.u32 %v3931, 4294901760
    %3933 = vmatpush1.msra.mxu0 %v3932
    %v3934 = vand.u32 %v3254, 4294901760
    %v3935 = vsub.f32 %v3254, %v3934
    %v3936 = vand.u32 %v3935, 4294901760
    %3937 = vmatprep.subr.mxu0 %v3936
    %v3938 = vand.u32 %v3253, 4294901760
    %v3939 = vsub.f32 %v3253, %v3938
    %v3940 = vand.u32 %v3939, 4294901760
    %3941 = vmatpush1.msra.mxu0 %v3940
    %v3942 = vand.u32 %v3256, 4294901760
    %v3943 = vsub.f32 %v3256, %v3942
    %v3944 = vand.u32 %v3943, 4294901760
    %3945 = vmatprep.subr.mxu0 %v3944
    %v3946 = vand.u32 %v3255, 4294901760
    %v3947 = vsub.f32 %v3255, %v3946
    %v3948 = vand.u32 %v3947, 4294901760
    %3949 = vmatpush1.msra.mxu0 %v3948
    %v3950 = vand.u32 %v3258, 4294901760
    %v3951 = vsub.f32 %v3258, %v3950
    %v3952 = vand.u32 %v3951, 4294901760
    %3953 = vmatprep.subr.mxu0 %v3952
    %v3954 = vand.u32 %v3257, 4294901760
    %v3955 = vsub.f32 %v3257, %v3954
    %v3956 = vand.u32 %v3955, 4294901760
    %3957 = vmatpush1.msra.mxu0 %v3956
    %v3958 = vand.u32 %v3260, 4294901760
    %v3959 = vsub.f32 %v3260, %v3958
    %v3960 = vand.u32 %v3959, 4294901760
    %3961 = vmatprep.subr.mxu0 %v3960
    %v3962 = vand.u32 %v3259, 4294901760
    %v3963 = vsub.f32 %v3259, %v3962
    %v3964 = vand.u32 %v3963, 4294901760
    %3965 = vmatpush1.msra.mxu0 %v3964
    %v3966 = vand.u32 %v3262, 4294901760
    %v3967 = vsub.f32 %v3262, %v3966
    %v3968 = vand.u32 %v3967, 4294901760
    %3969 = vmatprep.subr.mxu0 %v3968
    %v3970 = vand.u32 %v3261, 4294901760
    %v3971 = vsub.f32 %v3261, %v3970
    %v3972 = vand.u32 %v3971, 4294901760
    %3973 = vmatpush1.msra.mxu0 %v3972
    %3974 = vmatprep.subr.mxu0 0.0
    %3975 = vmatpush1.msra.mxu0 0.0
    %3976 = vmatprep.subr.mxu0 0.0
    %3977 = vmatpush1.msra.mxu0 0.0
    %3978 = vmatprep.subr.mxu0 0.0
    %3979 = vmatpush1.msra.mxu0 0.0
    %3980 = vmatprep.subr.mxu0 0.0
    %3981 = vmatpush1.msra.mxu0 0.0
    %3982 = vmatprep.subr.mxu0 0.0
    %3983 = vmatpush1.msra.mxu0 0.0
    %3984 = vmatprep.subr.mxu0 0.0
    %3985 = vmatpush1.msra.mxu0 0.0
    %3986 = vmatprep.subr.mxu0 0.0
    %3987 = vmatpush1.msra.mxu0 0.0
    %3988 = vmatprep.subr.mxu0 0.0
    %3989 = vmatpush1.msra.mxu0 0.0
    %3990 = vmatprep.subr.mxu0 0.0
    %3991 = vmatpush1.msra.mxu0 0.0
    %3992 = vmatprep.subr.mxu0 0.0
    %3993 = vmatpush1.msra.mxu0 0.0
    %3994 = vmatprep.subr.mxu0 0.0
    %3995 = vmatpush1.msra.mxu0 0.0
    %3996 = vmatprep.subr.mxu0 0.0
    %3997 = vmatpush1.msra.mxu0 0.0
    %3998 = vmatprep.subr.mxu0 0.0
    %3999 = vmatpush1.msra.mxu0 0.0
    %4000 = vmatprep.subr.mxu0 0.0
    %4001 = vmatpush1.msra.mxu0 0.0
    %4002 = vmatprep.subr.mxu0 0.0
    %4003 = vmatpush1.msra.mxu0 0.0
    %4004 = vmatprep.subr.mxu0 0.0
    %4005 = vmatpush1.msra.mxu0 0.0
    %4006 = vmatprep.mubr.f32.mxu0 0.0
    %v4007 = vand.u32 %v3226, 4294901760
    %4008 = vmatmul.mubr.f32.gmra.mrb[0].mxu0 %v4007
    %v4009 = vpop.f32.mrb[0].mxu0
    %v4010 = vadd.f32 %v3842, %v4009
    %v4011 = vpop.f32.mrb[0].mxu0
    %v4012 = vadd.f32 %v3844, %v4011
    %4013 = vdwg.mxu0
    %v4014 = vand.u32 %v3232, 4294901760
    %4015 = vmatprep.subr.mxu0 %v4014
    %v4016 = vand.u32 %v3231, 4294901760
    %4017 = vmatpush1.msra.mxu0 %v4016
    %v4018 = vand.u32 %v3234, 4294901760
    %4019 = vmatprep.subr.mxu0 %v4018
    %v4020 = vand.u32 %v3233, 4294901760
    %4021 = vmatpush1.msra.mxu0 %v4020
    %v4022 = vand.u32 %v3236, 4294901760
    %4023 = vmatprep.subr.mxu0 %v4022
    %v4024 = vand.u32 %v3235, 4294901760
    %4025 = vmatpush1.msra.mxu0 %v4024
    %v4026 = vand.u32 %v3238, 4294901760
    %4027 = vmatprep.subr.mxu0 %v4026
    %v4028 = vand.u32 %v3237, 4294901760
    %4029 = vmatpush1.msra.mxu0 %v4028
    %v4030 = vand.u32 %v3240, 4294901760
    %4031 = vmatprep.subr.mxu0 %v4030
    %v4032 = vand.u32 %v3239, 4294901760
    %4033 = vmatpush1.msra.mxu0 %v4032
    %v4034 = vand.u32 %v3242, 4294901760
    %4035 = vmatprep.subr.mxu0 %v4034
    %v4036 = vand.u32 %v3241, 4294901760
    %4037 = vmatpush1.msra.mxu0 %v4036
    %v4038 = vand.u32 %v3244, 4294901760
    %4039 = vmatprep.subr.mxu0 %v4038
    %v4040 = vand.u32 %v3243, 4294901760
    %4041 = vmatpush1.msra.mxu0 %v4040
    %v4042 = vand.u32 %v3246, 4294901760
    %4043 = vmatprep.subr.mxu0 %v4042
    %v4044 = vand.u32 %v3245, 4294901760
    %4045 = vmatpush1.msra.mxu0 %v4044
    %v4046 = vand.u32 %v3248, 4294901760
    %4047 = vmatprep.subr.mxu0 %v4046
    %v4048 = vand.u32 %v3247, 4294901760
    %4049 = vmatpush1.msra.mxu0 %v4048
    %v4050 = vand.u32 %v3250, 4294901760
    %4051 = vmatprep.subr.mxu0 %v4050
    %v4052 = vand.u32 %v3249, 4294901760
    %4053 = vmatpush1.msra.mxu0 %v4052
    %v4054 = vand.u32 %v3252, 4294901760
    %4055 = vmatprep.subr.mxu0 %v4054
    %v4056 = vand.u32 %v3251, 4294901760
    %4057 = vmatpush1.msra.mxu0 %v4056
    %v4058 = vand.u32 %v3254, 4294901760
    %4059 = vmatprep.subr.mxu0 %v4058
    %v4060 = vand.u32 %v3253, 4294901760
    %4061 = vmatpush1.msra.mxu0 %v4060
    %v4062 = vand.u32 %v3256, 4294901760
    %4063 = vmatprep.subr.mxu0 %v4062
    %v4064 = vand.u32 %v3255, 4294901760
    %4065 = vmatpush1.msra.mxu0 %v4064
    %v4066 = vand.u32 %v3258, 4294901760
    %4067 = vmatprep.subr.mxu0 %v4066
    %v4068 = vand.u32 %v3257, 4294901760
    %4069 = vmatpush1.msra.mxu0 %v4068
    %v4070 = vand.u32 %v3260, 4294901760
    %4071 = vmatprep.subr.mxu0 %v4070
    %v4072 = vand.u32 %v3259, 4294901760
    %4073 = vmatpush1.msra.mxu0 %v4072
    %v4074 = vand.u32 %v3262, 4294901760
    %4075 = vmatprep.subr.mxu0 %v4074
    %v4076 = vand.u32 %v3261, 4294901760
    %4077 = vmatpush1.msra.mxu0 %v4076
    %4078 = vmatprep.subr.mxu0 0.0
    %4079 = vmatpush1.msra.mxu0 0.0
    %4080 = vmatprep.subr.mxu0 0.0
    %4081 = vmatpush1.msra.mxu0 0.0
    %4082 = vmatprep.subr.mxu0 0.0
    %4083 = vmatpush1.msra.mxu0 0.0
    %4084 = vmatprep.subr.mxu0 0.0
    %4085 = vmatpush1.msra.mxu0 0.0
    %4086 = vmatprep.subr.mxu0 0.0
    %4087 = vmatpush1.msra.mxu0 0.0
    %4088 = vmatprep.subr.mxu0 0.0
    %4089 = vmatpush1.msra.mxu0 0.0
    %4090 = vmatprep.subr.mxu0 0.0
    %4091 = vmatpush1.msra.mxu0 0.0
    %4092 = vmatprep.subr.mxu0 0.0
    %4093 = vmatpush1.msra.mxu0 0.0
    %4094 = vmatprep.subr.mxu0 0.0
    %4095 = vmatpush1.msra.mxu0 0.0
    %4096 = vmatprep.subr.mxu0 0.0
    %4097 = vmatpush1.msra.mxu0 0.0
    %4098 = vmatprep.subr.mxu0 0.0
    %4099 = vmatpush1.msra.mxu0 0.0
    %4100 = vmatprep.subr.mxu0 0.0
    %4101 = vmatpush1.msra.mxu0 0.0
    %4102 = vmatprep.subr.mxu0 0.0
    %4103 = vmatpush1.msra.mxu0 0.0
    %4104 = vmatprep.subr.mxu0 0.0
    %4105 = vmatpush1.msra.mxu0 0.0
    %4106 = vmatprep.subr.mxu0 0.0
    %4107 = vmatpush1.msra.mxu0 0.0
    %4108 = vmatprep.subr.mxu0 0.0
    %4109 = vmatpush1.msra.mxu0 0.0
    %4110 = vmatprep.mubr.f32.mxu0 0.0
    %v4111 = vand.u32 %v3226, 4294901760
    %4112 = vmatmul.mubr.f32.gmra.mrb[0].mxu0 %v4111
    %v4113 = vpop.f32.mrb[0].mxu0
    %v4114 = vadd.f32 %v4010, %v4113
    %v4115 = vpop.f32.mrb[0].mxu0
    %v4116 = vadd.f32 %v4012, %v4115
    %4117 = vdwg.mxu0
    %v4118 = vadd.f32 %v3228, %v4114
    %v4119 = vxor.u32 %v4118, 2147483648
    %v4120 = vmul.f32 %v4119, 1.442695
    %v4121 = vpow.pop %v4120
    %v4122 = vadd.f32 %v4121, 1.0
    %v4123 = vrcp.pop %v4122
    %v4124 = vmul.f32 1.0, %v4123
    %v4125 = vadd.f32 %v3229, %v4116
    %v4126 = vxor.u32 %v4125, 2147483648
    %v4127 = vmul.f32 %v4126, 1.442695
    %v4128 = vpow.pop %v4127
    %v4129 = vadd.f32 %v4128, 1.0
    %v4130 = vrcp.pop %v4129
    %v4131 = vmul.f32 1.0, %v4130
    %v4132 = vmul.f32 %v4131, %v3226
    %v4133 = vld [vmem:[#allocation9] sm:$0xff]
    %v4134 = vld [vmem:[#allocation9 + $0x8] sm:$0xff]
    %v4135 = vld [vmem:[#allocation9 + $0x10] sm:$0xff]
    %v4136 = vld [vmem:[#allocation9 + $0x18] sm:$0xff]
    %v4137 = vld [vmem:[#allocation9 + $0x20] sm:$0xff]
    %v4138 = vld [vmem:[#allocation9 + $0x28] sm:$0xff]
    %v4139 = vld [vmem:[#allocation9 + $0x30] sm:$0xff]
    %v4140 = vld [vmem:[#allocation9 + $0x38] sm:$0xff]
    %v4141 = vld [vmem:[#allocation9 + $0x40] sm:$0xff]
    %v4142 = vld [vmem:[#allocation9 + $0x48] sm:$0xff]
    %v4143 = vld [vmem:[#allocation9 + $0x50] sm:$0xff]
    %v4144 = vld [vmem:[#allocation9 + $0x58] sm:$0xff]
    %v4145 = vld [vmem:[#allocation9 + $0x60] sm:$0xff]
    %v4146 = vld [vmem:[#allocation9 + $0x68] sm:$0xff]
    %v4147 = vld [vmem:[#allocation9 + $0x70] sm:$0xff]
    %v4148 = vld [vmem:[#allocation9 + $0x78] sm:$0xff]
    %4149 = vmatprep.subr.mxu0 0.0
    %v4150 = vand.u32 %v4133, 4294901760
    %4151 = vmatpush1.msra.mxu0 %v4150
    %4152 = vmatprep.subr.mxu0 0.0
    %v4153 = vand.u32 %v4134, 4294901760
    %4154 = vmatpush1.msra.mxu0 %v4153
    %4155 = vmatprep.subr.mxu0 0.0
    %v4156 = vand.u32 %v4135, 4294901760
    %4157 = vmatpush1.msra.mxu0 %v4156
    %4158 = vmatprep.subr.mxu0 0.0
    %v4159 = vand.u32 %v4136, 4294901760
    %4160 = vmatpush1.msra.mxu0 %v4159
    %4161 = vmatprep.subr.mxu0 0.0
    %v4162 = vand.u32 %v4137, 4294901760
    %4163 = vmatpush1.msra.mxu0 %v4162
    %4164 = vmatprep.subr.mxu0 0.0
    %v4165 = vand.u32 %v4138, 4294901760
    %4166 = vmatpush1.msra.mxu0 %v4165
    %4167 = vmatprep.subr.mxu0 0.0
    %v4168 = vand.u32 %v4139, 4294901760
    %4169 = vmatpush1.msra.mxu0 %v4168
    %4170 = vmatprep.subr.mxu0 0.0
    %v4171 = vand.u32 %v4140, 4294901760
    %4172 = vmatpush1.msra.mxu0 %v4171
    %4173 = vmatprep.subr.mxu0 0.0
    %v4174 = vand.u32 %v4141, 4294901760
    %4175 = vmatpush1.msra.mxu0 %v4174
    %4176 = vmatprep.subr.mxu0 0.0
    %v4177 = vand.u32 %v4142, 4294901760
    %4178 = vmatpush1.msra.mxu0 %v4177
    %4179 = vmatprep.subr.mxu0 0.0
    %v4180 = vand.u32 %v4143, 4294901760
    %4181 = vmatpush1.msra.mxu0 %v4180
    %4182 = vmatprep.subr.mxu0 0.0
    %v4183 = vand.u32 %v4144, 4294901760
    %4184 = vmatpush1.msra.mxu0 %v4183
    %4185 = vmatprep.subr.mxu0 0.0
    %v4186 = vand.u32 %v4145, 4294901760
    %4187 = vmatpush1.msra.mxu0 %v4186
    %4188 = vmatprep.subr.mxu0 0.0
    %v4189 = vand.u32 %v4146, 4294901760
    %4190 = vmatpush1.msra.mxu0 %v4189
    %4191 = vmatprep.subr.mxu0 0.0
    %v4192 = vand.u32 %v4147, 4294901760
    %4193 = vmatpush1.msra.mxu0 %v4192
    %4194 = vmatprep.subr.mxu0 0.0
    %v4195 = vand.u32 %v4148, 4294901760
    %4196 = vmatpush1.msra.mxu0 %v4195
    %4197 = vmatprep.subr.mxu0 0.0
    %4198 = vmatpush1.msra.mxu0 0.0
    %4199 = vmatprep.subr.mxu0 0.0
    %4200 = vmatpush1.msra.mxu0 0.0
    %4201 = vmatprep.subr.mxu0 0.0
    %4202 = vmatpush1.msra.mxu0 0.0
    %4203 = vmatprep.subr.mxu0 0.0
    %4204 = vmatpush1.msra.mxu0 0.0
    %4205 = vmatprep.subr.mxu0 0.0
    %4206 = vmatpush1.msra.mxu0 0.0
    %4207 = vmatprep.subr.mxu0 0.0
    %4208 = vmatpush1.msra.mxu0 0.0
    %4209 = vmatprep.subr.mxu0 0.0
    %4210 = vmatpush1.msra.mxu0 0.0
    %4211 = vmatprep.subr.mxu0 0.0
    %4212 = vmatpush1.msra.mxu0 0.0
    %4213 = vmatprep.subr.mxu0 0.0
    %4214 = vmatpush1.msra.mxu0 0.0
    %4215 = vmatprep.subr.mxu0 0.0
    %4216 = vmatpush1.msra.mxu0 0.0
    %4217 = vmatprep.subr.mxu0 0.0
    %4218 = vmatpush1.msra.mxu0 0.0
    %4219 = vmatprep.subr.mxu0 0.0
    %4220 = vmatpush1.msra.mxu0 0.0
    %4221 = vmatprep.subr.mxu0 0.0
    %4222 = vmatpush1.msra.mxu0 0.0
    %4223 = vmatprep.subr.mxu0 0.0
    %4224 = vmatpush1.msra.mxu0 0.0
    %4225 = vmatprep.subr.mxu0 0.0
    %4226 = vmatpush1.msra.mxu0 0.0
    %4227 = vmatprep.subr.mxu0 0.0
    %4228 = vmatpush1.msra.mxu0 0.0
    %4229 = vmatprep.mubr.f32.mxu0 0.0
    %v4230 = vand.u32 %v4132, 4294901760
    %v4231 = vsub.f32 %v4132, %v4230
    %v4232 = vand.u32 %v4231, 4294901760
    %v4233 = vsub.f32 %v4231, %v4232
    %v4234 = vand.u32 %v4233, 4294901760
    %4235 = vmatmul.mubr.f32.gmra.mrb[0].mxu0 %v4234
    %v4236 = vpop.f32.mrb[0].mxu0
    %v4237 = vadd.f32 0.0, %v4236
    %v4238 = vpop.f32.mrb[0].mxu0
    %4239 = vdwg.mxu0
    %4240 = vmatprep.subr.mxu0 0.0
    %v4241 = vand.u32 %v4133, 4294901760
    %v4242 = vsub.f32 %v4133, %v4241
    %v4243 = vand.u32 %v4242, 4294901760
    %v4244 = vsub.f32 %v4242, %v4243
    %v4245 = vand.u32 %v4244, 4294901760
    %4246 = vmatpush1.msra.mxu0 %v4245
    %4247 = vmatprep.subr.mxu0 0.0
    %v4248 = vand.u32 %v4134, 4294901760
    %v4249 = vsub.f32 %v4134, %v4248
    %v4250 = vand.u32 %v4249, 4294901760
    %v4251 = vsub.f32 %v4249, %v4250
    %v4252 = vand.u32 %v4251, 4294901760
    %4253 = vmatpush1.msra.mxu0 %v4252
    %4254 = vmatprep.subr.mxu0 0.0
    %v4255 = vand.u32 %v4135, 4294901760
    %v4256 = vsub.f32 %v4135, %v4255
    %v4257 = vand.u32 %v4256, 4294901760
    %v4258 = vsub.f32 %v4256, %v4257
    %v4259 = vand.u32 %v4258, 4294901760
    %4260 = vmatpush1.msra.mxu0 %v4259
    %4261 = vmatprep.subr.mxu0 0.0
    %v4262 = vand.u32 %v4136, 4294901760
    %v4263 = vsub.f32 %v4136, %v4262
    %v4264 = vand.u32 %v4263, 4294901760
    %v4265 = vsub.f32 %v4263, %v4264
    %v4266 = vand.u32 %v4265, 4294901760
    %4267 = vmatpush1.msra.mxu0 %v4266
    %4268 = vmatprep.subr.mxu0 0.0
    %v4269 = vand.u32 %v4137, 4294901760
    %v4270 = vsub.f32 %v4137, %v4269
    %v4271 = vand.u32 %v4270, 4294901760
    %v4272 = vsub.f32 %v4270, %v4271
    %v4273 = vand.u32 %v4272, 4294901760
    %4274 = vmatpush1.msra.mxu0 %v4273
    %4275 = vmatprep.subr.mxu0 0.0
    %v4276 = vand.u32 %v4138, 4294901760
    %v4277 = vsub.f32 %v4138, %v4276
    %v4278 = vand.u32 %v4277, 4294901760
    %v4279 = vsub.f32 %v4277, %v4278
    %v4280 = vand.u32 %v4279, 4294901760
    %4281 = vmatpush1.msra.mxu0 %v4280
    %4282 = vmatprep.subr.mxu0 0.0
    %v4283 = vand.u32 %v4139, 4294901760
    %v4284 = vsub.f32 %v4139, %v4283
    %v4285 = vand.u32 %v4284, 4294901760
    %v4286 = vsub.f32 %v4284, %v4285
    %v4287 = vand.u32 %v4286, 4294901760
    %4288 = vmatpush1.msra.mxu0 %v4287
    %4289 = vmatprep.subr.mxu0 0.0
    %v4290 = vand.u32 %v4140, 4294901760
    %v4291 = vsub.f32 %v4140, %v4290
    %v4292 = vand.u32 %v4291, 4294901760
    %v4293 = vsub.f32 %v4291, %v4292
    %v4294 = vand.u32 %v4293, 4294901760
    %4295 = vmatpush1.msra.mxu0 %v4294
    %4296 = vmatprep.subr.mxu0 0.0
    %v4297 = vand.u32 %v4141, 4294901760
    %v4298 = vsub.f32 %v4141, %v4297
    %v4299 = vand.u32 %v4298, 4294901760
    %v4300 = vsub.f32 %v4298, %v4299
    %v4301 = vand.u32 %v4300, 4294901760
    %4302 = vmatpush1.msra.mxu0 %v4301
    %4303 = vmatprep.subr.mxu0 0.0
    %v4304 = vand.u32 %v4142, 4294901760
    %v4305 = vsub.f32 %v4142, %v4304
    %v4306 = vand.u32 %v4305, 4294901760
    %v4307 = vsub.f32 %v4305, %v4306
    %v4308 = vand.u32 %v4307, 4294901760
    %4309 = vmatpush1.msra.mxu0 %v4308
    %4310 = vmatprep.subr.mxu0 0.0
    %v4311 = vand.u32 %v4143, 4294901760
    %v4312 = vsub.f32 %v4143, %v4311
    %v4313 = vand.u32 %v4312, 4294901760
    %v4314 = vsub.f32 %v4312, %v4313
    %v4315 = vand.u32 %v4314, 4294901760
    %4316 = vmatpush1.msra.mxu0 %v4315
    %4317 = vmatprep.subr.mxu0 0.0
    %v4318 = vand.u32 %v4144, 4294901760
    %v4319 = vsub.f32 %v4144, %v4318
    %v4320 = vand.u32 %v4319, 4294901760
    %v4321 = vsub.f32 %v4319, %v4320
    %v4322 = vand.u32 %v4321, 4294901760
    %4323 = vmatpush1.msra.mxu0 %v4322
    %4324 = vmatprep.subr.mxu0 0.0
    %v4325 = vand.u32 %v4145, 4294901760
    %v4326 = vsub.f32 %v4145, %v4325
    %v4327 = vand.u32 %v4326, 4294901760
    %v4328 = vsub.f32 %v4326, %v4327
    %v4329 = vand.u32 %v4328, 4294901760
    %4330 = vmatpush1.msra.mxu0 %v4329
    %4331 = vmatprep.subr.mxu0 0.0
    %v4332 = vand.u32 %v4146, 4294901760
    %v4333 = vsub.f32 %v4146, %v4332
    %v4334 = vand.u32 %v4333, 4294901760
    %v4335 = vsub.f32 %v4333, %v4334
    %v4336 = vand.u32 %v4335, 4294901760
    %4337 = vmatpush1.msra.mxu0 %v4336
    %4338 = vmatprep.subr.mxu0 0.0
    %v4339 = vand.u32 %v4147, 4294901760
    %v4340 = vsub.f32 %v4147, %v4339
    %v4341 = vand.u32 %v4340, 4294901760
    %v4342 = vsub.f32 %v4340, %v4341
    %v4343 = vand.u32 %v4342, 4294901760
    %4344 = vmatpush1.msra.mxu0 %v4343
    %4345 = vmatprep.subr.mxu0 0.0
    %v4346 = vand.u32 %v4148, 4294901760
    %v4347 = vsub.f32 %v4148, %v4346
    %v4348 = vand.u32 %v4347, 4294901760
    %v4349 = vsub.f32 %v4347, %v4348
    %v4350 = vand.u32 %v4349, 4294901760
    %4351 = vmatpush1.msra.mxu0 %v4350
    %4352 = vmatprep.subr.mxu0 0.0
    %4353 = vmatpush1.msra.mxu0 0.0
    %4354 = vmatprep.subr.mxu0 0.0
    %4355 = vmatpush1.msra.mxu0 0.0
    %4356 = vmatprep.subr.mxu0 0.0
    %4357 = vmatpush1.msra.mxu0 0.0
    %4358 = vmatprep.subr.mxu0 0.0
    %4359 = vmatpush1.msra.mxu0 0.0
    %4360 = vmatprep.subr.mxu0 0.0
    %4361 = vmatpush1.msra.mxu0 0.0
    %4362 = vmatprep.subr.mxu0 0.0
    %4363 = vmatpush1.msra.mxu0 0.0
    %4364 = vmatprep.subr.mxu0 0.0
    %4365 = vmatpush1.msra.mxu0 0.0
    %4366 = vmatprep.subr.mxu0 0.0
    %4367 = vmatpush1.msra.mxu0 0.0
    %4368 = vmatprep.subr.mxu0 0.0
    %4369 = vmatpush1.msra.mxu0 0.0
    %4370 = vmatprep.subr.mxu0 0.0
    %4371 = vmatpush1.msra.mxu0 0.0
    %4372 = vmatprep.subr.mxu0 0.0
    %4373 = vmatpush1.msra.mxu0 0.0
    %4374 = vmatprep.subr.mxu0 0.0
    %4375 = vmatpush1.msra.mxu0 0.0
    %4376 = vmatprep.subr.mxu0 0.0
    %4377 = vmatpush1.msra.mxu0 0.0
    %4378 = vmatprep.subr.mxu0 0.0
    %4379 = vmatpush1.msra.mxu0 0.0
    %4380 = vmatprep.subr.mxu0 0.0
    %4381 = vmatpush1.msra.mxu0 0.0
    %4382 = vmatprep.subr.mxu0 0.0
    %4383 = vmatpush1.msra.mxu0 0.0
    %4384 = vmatprep.mubr.f32.mxu0 0.0
    %v4385 = vand.u32 %v4132, 4294901760
    %4386 = vmatmul.mubr.f32.gmra.mrb[0].mxu0 %v4385
    %v4387 = vpop.f32.mrb[0].mxu0
    %v4388 = vadd.f32 %v4237, %v4387
    %v4389 = vpop.f32.mrb[0].mxu0
    %4390 = vdwg.mxu0
    %4391 = vmatprep.subr.mxu0 0.0
    %v4392 = vand.u32 %v4133, 4294901760
    %v4393 = vsub.f32 %v4133, %v4392
    %4394 = vmatpush1.msra.mxu0 %v4393
    %4395 = vmatprep.subr.mxu0 0.0
    %v4396 = vand.u32 %v4134, 4294901760
    %v4397 = vsub.f32 %v4134, %v4396
    %4398 = vmatpush1.msra.mxu0 %v4397
    %4399 = vmatprep.subr.mxu0 0.0
    %v4400 = vand.u32 %v4135, 4294901760
    %v4401 = vsub.f32 %v4135, %v4400
    %4402 = vmatpush1.msra.mxu0 %v4401
    %4403 = vmatprep.subr.mxu0 0.0
    %v4404 = vand.u32 %v4136, 4294901760
    %v4405 = vsub.f32 %v4136, %v4404
    %4406 = vmatpush1.msra.mxu0 %v4405
    %4407 = vmatprep.subr.mxu0 0.0
    %v4408 = vand.u32 %v4137, 4294901760
    %v4409 = vsub.f32 %v4137, %v4408
    %4410 = vmatpush1.msra.mxu0 %v4409
    %4411 = vmatprep.subr.mxu0 0.0
    %v4412 = vand.u32 %v4138, 4294901760
    %v4413 = vsub.f32 %v4138, %v4412
    %4414 = vmatpush1.msra.mxu0 %v4413
    %4415 = vmatprep.subr.mxu0 0.0
    %v4416 = vand.u32 %v4139, 4294901760
    %v4417 = vsub.f32 %v4139, %v4416
    %4418 = vmatpush1.msra.mxu0 %v4417
    %4419 = vmatprep.subr.mxu0 0.0
    %v4420 = vand.u32 %v4140, 4294901760
    %v4421 = vsub.f32 %v4140, %v4420
    %4422 = vmatpush1.msra.mxu0 %v4421
    %4423 = vmatprep.subr.mxu0 0.0
    %v4424 = vand.u32 %v4141, 4294901760
    %v4425 = vsub.f32 %v4141, %v4424
    %4426 = vmatpush1.msra.mxu0 %v4425
    %4427 = vmatprep.subr.mxu0 0.0
    %v4428 = vand.u32 %v4142, 4294901760
    %v4429 = vsub.f32 %v4142, %v4428
    %4430 = vmatpush1.msra.mxu0 %v4429
    %4431 = vmatprep.subr.mxu0 0.0
    %v4432 = vand.u32 %v4143, 4294901760
    %v4433 = vsub.f32 %v4143, %v4432
    %4434 = vmatpush1.msra.mxu0 %v4433
    %4435 = vmatprep.subr.mxu0 0.0
    %v4436 = vand.u32 %v4144, 4294901760
    %v4437 = vsub.f32 %v4144, %v4436
    %4438 = vmatpush1.msra.mxu0 %v4437
    %4439 = vmatprep.subr.mxu0 0.0
    %v4440 = vand.u32 %v4145, 4294901760
    %v4441 = vsub.f32 %v4145, %v4440
    %4442 = vmatpush1.msra.mxu0 %v4441
    %4443 = vmatprep.subr.mxu0 0.0
    %v4444 = vand.u32 %v4146, 4294901760
    %v4445 = vsub.f32 %v4146, %v4444
    %4446 = vmatpush1.msra.mxu0 %v4445
    %4447 = vmatprep.subr.mxu0 0.0
    %v4448 = vand.u32 %v4147, 4294901760
    %v4449 = vsub.f32 %v4147, %v4448
    %4450 = vmatpush1.msra.mxu0 %v4449
    %4451 = vmatprep.subr.mxu0 0.0
    %v4452 = vand.u32 %v4148, 4294901760
    %v4453 = vsub.f32 %v4148, %v4452
    %4454 = vmatpush1.msra.mxu0 %v4453
    %4455 = vmatprep.subr.mxu0 0.0
    %4456 = vmatpush1.msra.mxu0 0.0
    %4457 = vmatprep.subr.mxu0 0.0
    %4458 = vmatpush1.msra.mxu0 0.0
    %4459 = vmatprep.subr.mxu0 0.0
    %4460 = vmatpush1.msra.mxu0 0.0
    %4461 = vmatprep.subr.mxu0 0.0
    %4462 = vmatpush1.msra.mxu0 0.0
    %4463 = vmatprep.subr.mxu0 0.0
    %4464 = vmatpush1.msra.mxu0 0.0
    %4465 = vmatprep.subr.mxu0 0.0
    %4466 = vmatpush1.msra.mxu0 0.0
    %4467 = vmatprep.subr.mxu0 0.0
    %4468 = vmatpush1.msra.mxu0 0.0
    %4469 = vmatprep.subr.mxu0 0.0
    %4470 = vmatpush1.msra.mxu0 0.0
    %4471 = vmatprep.subr.mxu0 0.0
    %4472 = vmatpush1.msra.mxu0 0.0
    %4473 = vmatprep.subr.mxu0 0.0
    %4474 = vmatpush1.msra.mxu0 0.0
    %4475 = vmatprep.subr.mxu0 0.0
    %4476 = vmatpush1.msra.mxu0 0.0
    %4477 = vmatprep.subr.mxu0 0.0
    %4478 = vmatpush1.msra.mxu0 0.0
    %4479 = vmatprep.subr.mxu0 0.0
    %4480 = vmatpush1.msra.mxu0 0.0
    %4481 = vmatprep.subr.mxu0 0.0
    %4482 = vmatpush1.msra.mxu0 0.0
    %4483 = vmatprep.subr.mxu0 0.0
    %4484 = vmatpush1.msra.mxu0 0.0
    %4485 = vmatprep.subr.mxu0 0.0
    %4486 = vmatpush1.msra.mxu0 0.0
    %4487 = vmatprep.mubr.f32.mxu0 0.0
    %v4488 = vand.u32 %v4132, 4294901760
    %v4489 = vsub.f32 %v4132, %v4488
    %4490 = vmatmul.mubr.f32.gmra.mrb[0].mxu0 %v4489
    %v4491 = vpop.f32.mrb[0].mxu0
    %v4492 = vadd.f32 %v4388, %v4491
    %v4493 = vpop.f32.mrb[0].mxu0
    %4494 = vdwg.mxu0
    %4495 = vmatprep.subr.mxu0 0.0
    %v4496 = vand.u32 %v4133, 4294901760
    %4497 = vmatpush1.msra.mxu0 %v4496
    %4498 = vmatprep.subr.mxu0 0.0
    %v4499 = vand.u32 %v4134, 4294901760
    %4500 = vmatpush1.msra.mxu0 %v4499
    %4501 = vmatprep.subr.mxu0 0.0
    %v4502 = vand.u32 %v4135, 4294901760
    %4503 = vmatpush1.msra.mxu0 %v4502
    %4504 = vmatprep.subr.mxu0 0.0
    %v4505 = vand.u32 %v4136, 4294901760
    %4506 = vmatpush1.msra.mxu0 %v4505
    %4507 = vmatprep.subr.mxu0 0.0
    %v4508 = vand.u32 %v4137, 4294901760
    %4509 = vmatpush1.msra.mxu0 %v4508
    %4510 = vmatprep.subr.mxu0 0.0
    %v4511 = vand.u32 %v4138, 4294901760
    %4512 = vmatpush1.msra.mxu0 %v4511
    %4513 = vmatprep.subr.mxu0 0.0
    %v4514 = vand.u32 %v4139, 4294901760
    %4515 = vmatpush1.msra.mxu0 %v4514
    %4516 = vmatprep.subr.mxu0 0.0
    %v4517 = vand.u32 %v4140, 4294901760
    %4518 = vmatpush1.msra.mxu0 %v4517
    %4519 = vmatprep.subr.mxu0 0.0
    %v4520 = vand.u32 %v4141, 4294901760
    %4521 = vmatpush1.msra.mxu0 %v4520
    %4522 = vmatprep.subr.mxu0 0.0
    %v4523 = vand.u32 %v4142, 4294901760
    %4524 = vmatpush1.msra.mxu0 %v4523
    %4525 = vmatprep.subr.mxu0 0.0
    %v4526 = vand.u32 %v4143, 4294901760
    %4527 = vmatpush1.msra.mxu0 %v4526
    %4528 = vmatprep.subr.mxu0 0.0
    %v4529 = vand.u32 %v4144, 4294901760
    %4530 = vmatpush1.msra.mxu0 %v4529
    %4531 = vmatprep.subr.mxu0 0.0
    %v4532 = vand.u32 %v4145, 4294901760
    %4533 = vmatpush1.msra.mxu0 %v4532
    %4534 = vmatprep.subr.mxu0 0.0
    %v4535 = vand.u32 %v4146, 4294901760
    %4536 = vmatpush1.msra.mxu0 %v4535
    %4537 = vmatprep.subr.mxu0 0.0
    %v4538 = vand.u32 %v4147, 4294901760
    %4539 = vmatpush1.msra.mxu0 %v4538
    %4540 = vmatprep.subr.mxu0 0.0
    %v4541 = vand.u32 %v4148, 4294901760
    %4542 = vmatpush1.msra.mxu0 %v4541
    %4543 = vmatprep.subr.mxu0 0.0
    %4544 = vmatpush1.msra.mxu0 0.0
    %4545 = vmatprep.subr.mxu0 0.0
    %4546 = vmatpush1.msra.mxu0 0.0
    %4547 = vmatprep.subr.mxu0 0.0
    %4548 = vmatpush1.msra.mxu0 0.0
    %4549 = vmatprep.subr.mxu0 0.0
    %4550 = vmatpush1.msra.mxu0 0.0
    %4551 = vmatprep.subr.mxu0 0.0
    %4552 = vmatpush1.msra.mxu0 0.0
    %4553 = vmatprep.subr.mxu0 0.0
    %4554 = vmatpush1.msra.mxu0 0.0
    %4555 = vmatprep.subr.mxu0 0.0
    %4556 = vmatpush1.msra.mxu0 0.0
    %4557 = vmatprep.subr.mxu0 0.0
    %4558 = vmatpush1.msra.mxu0 0.0
    %4559 = vmatprep.subr.mxu0 0.0
    %4560 = vmatpush1.msra.mxu0 0.0
    %4561 = vmatprep.subr.mxu0 0.0
    %4562 = vmatpush1.msra.mxu0 0.0
    %4563 = vmatprep.subr.mxu0 0.0
    %4564 = vmatpush1.msra.mxu0 0.0
    %4565 = vmatprep.subr.mxu0 0.0
    %4566 = vmatpush1.msra.mxu0 0.0
    %4567 = vmatprep.subr.mxu0 0.0
    %4568 = vmatpush1.msra.mxu0 0.0
    %4569 = vmatprep.subr.mxu0 0.0
    %4570 = vmatpush1.msra.mxu0 0.0
    %4571 = vmatprep.subr.mxu0 0.0
    %4572 = vmatpush1.msra.mxu0 0.0
    %4573 = vmatprep.subr.mxu0 0.0
    %4574 = vmatpush1.msra.mxu0 0.0
    %4575 = vmatprep.mubr.f32.mxu0 0.0
    %v4576 = vand.u32 %v4132, 4294901760
    %v4577 = vsub.f32 %v4132, %v4576
    %v4578 = vand.u32 %v4577, 4294901760
    %4579 = vmatmul.mubr.f32.gmra.mrb[0].mxu0 %v4578
    %v4580 = vpop.f32.mrb[0].mxu0
    %v4581 = vadd.f32 %v4492, %v4580
    %v4582 = vpop.f32.mrb[0].mxu0
    %4583 = vdwg.mxu0
    %4584 = vmatprep.subr.mxu0 0.0
    %v4585 = vand.u32 %v4133, 4294901760
    %v4586 = vsub.f32 %v4133, %v4585
    %v4587 = vand.u32 %v4586, 4294901760
    %4588 = vmatpush1.msra.mxu0 %v4587
    %4589 = vmatprep.subr.mxu0 0.0
    %v4590 = vand.u32 %v4134, 4294901760
    %v4591 = vsub.f32 %v4134, %v4590
    %v4592 = vand.u32 %v4591, 4294901760
    %4593 = vmatpush1.msra.mxu0 %v4592
    %4594 = vmatprep.subr.mxu0 0.0
    %v4595 = vand.u32 %v4135, 4294901760
    %v4596 = vsub.f32 %v4135, %v4595
    %v4597 = vand.u32 %v4596, 4294901760
    %4598 = vmatpush1.msra.mxu0 %v4597
    %4599 = vmatprep.subr.mxu0 0.0
    %v4600 = vand.u32 %v4136, 4294901760
    %v4601 = vsub.f32 %v4136, %v4600
    %v4602 = vand.u32 %v4601, 4294901760
    %4603 = vmatpush1.msra.mxu0 %v4602
    %4604 = vmatprep.subr.mxu0 0.0
    %v4605 = vand.u32 %v4137, 4294901760
    %v4606 = vsub.f32 %v4137, %v4605
    %v4607 = vand.u32 %v4606, 4294901760
    %4608 = vmatpush1.msra.mxu0 %v4607
    %4609 = vmatprep.subr.mxu0 0.0
    %v4610 = vand.u32 %v4138, 4294901760
    %v4611 = vsub.f32 %v4138, %v4610
    %v4612 = vand.u32 %v4611, 4294901760
    %4613 = vmatpush1.msra.mxu0 %v4612
    %4614 = vmatprep.subr.mxu0 0.0
    %v4615 = vand.u32 %v4139, 4294901760
    %v4616 = vsub.f32 %v4139, %v4615
    %v4617 = vand.u32 %v4616, 4294901760
    %4618 = vmatpush1.msra.mxu0 %v4617
    %4619 = vmatprep.subr.mxu0 0.0
    %v4620 = vand.u32 %v4140, 4294901760
    %v4621 = vsub.f32 %v4140, %v4620
    %v4622 = vand.u32 %v4621, 4294901760
    %4623 = vmatpush1.msra.mxu0 %v4622
    %4624 = vmatprep.subr.mxu0 0.0
    %v4625 = vand.u32 %v4141, 4294901760
    %v4626 = vsub.f32 %v4141, %v4625
    %v4627 = vand.u32 %v4626, 4294901760
    %4628 = vmatpush1.msra.mxu0 %v4627
    %4629 = vmatprep.subr.mxu0 0.0
    %v4630 = vand.u32 %v4142, 4294901760
    %v4631 = vsub.f32 %v4142, %v4630
    %v4632 = vand.u32 %v4631, 4294901760
    %4633 = vmatpush1.msra.mxu0 %v4632
    %4634 = vmatprep.subr.mxu0 0.0
    %v4635 = vand.u32 %v4143, 4294901760
    %v4636 = vsub.f32 %v4143, %v4635
    %v4637 = vand.u32 %v4636, 4294901760
    %4638 = vmatpush1.msra.mxu0 %v4637
    %4639 = vmatprep.subr.mxu0 0.0
    %v4640 = vand.u32 %v4144, 4294901760
    %v4641 = vsub.f32 %v4144, %v4640
    %v4642 = vand.u32 %v4641, 4294901760
    %4643 = vmatpush1.msra.mxu0 %v4642
    %4644 = vmatprep.subr.mxu0 0.0
    %v4645 = vand.u32 %v4145, 4294901760
    %v4646 = vsub.f32 %v4145, %v4645
    %v4647 = vand.u32 %v4646, 4294901760
    %4648 = vmatpush1.msra.mxu0 %v4647
    %4649 = vmatprep.subr.mxu0 0.0
    %v4650 = vand.u32 %v4146, 4294901760
    %v4651 = vsub.f32 %v4146, %v4650
    %v4652 = vand.u32 %v4651, 4294901760
    %4653 = vmatpush1.msra.mxu0 %v4652
    %4654 = vmatprep.subr.mxu0 0.0
    %v4655 = vand.u32 %v4147, 4294901760
    %v4656 = vsub.f32 %v4147, %v4655
    %v4657 = vand.u32 %v4656, 4294901760
    %4658 = vmatpush1.msra.mxu0 %v4657
    %4659 = vmatprep.subr.mxu0 0.0
    %v4660 = vand.u32 %v4148, 4294901760
    %v4661 = vsub.f32 %v4148, %v4660
    %v4662 = vand.u32 %v4661, 4294901760
    %4663 = vmatpush1.msra.mxu0 %v4662
    %4664 = vmatprep.subr.mxu0 0.0
    %4665 = vmatpush1.msra.mxu0 0.0
    %4666 = vmatprep.subr.mxu0 0.0
    %4667 = vmatpush1.msra.mxu0 0.0
    %4668 = vmatprep.subr.mxu0 0.0
    %4669 = vmatpush1.msra.mxu0 0.0
    %4670 = vmatprep.subr.mxu0 0.0
    %4671 = vmatpush1.msra.mxu0 0.0
    %4672 = vmatprep.subr.mxu0 0.0
    %4673 = vmatpush1.msra.mxu0 0.0
    %4674 = vmatprep.subr.mxu0 0.0
    %4675 = vmatpush1.msra.mxu0 0.0
    %4676 = vmatprep.subr.mxu0 0.0
    %4677 = vmatpush1.msra.mxu0 0.0
    %4678 = vmatprep.subr.mxu0 0.0
    %4679 = vmatpush1.msra.mxu0 0.0
    %4680 = vmatprep.subr.mxu0 0.0
    %4681 = vmatpush1.msra.mxu0 0.0
    %4682 = vmatprep.subr.mxu0 0.0
    %4683 = vmatpush1.msra.mxu0 0.0
    %4684 = vmatprep.subr.mxu0 0.0
    %4685 = vmatpush1.msra.mxu0 0.0
    %4686 = vmatprep.subr.mxu0 0.0
    %4687 = vmatpush1.msra.mxu0 0.0
    %4688 = vmatprep.subr.mxu0 0.0
    %4689 = vmatpush1.msra.mxu0 0.0
    %4690 = vmatprep.subr.mxu0 0.0
    %4691 = vmatpush1.msra.mxu0 0.0
    %4692 = vmatprep.subr.mxu0 0.0
    %4693 = vmatpush1.msra.mxu0 0.0
    %4694 = vmatprep.subr.mxu0 0.0
    %4695 = vmatpush1.msra.mxu0 0.0
    %4696 = vmatprep.mubr.f32.mxu0 0.0
    %v4697 = vand.u32 %v4132, 4294901760
    %4698 = vmatmul.mubr.f32.gmra.mrb[0].mxu0 %v4697
    %v4699 = vpop.f32.mrb[0].mxu0
    %v4700 = vadd.f32 %v4581, %v4699
    %v4701 = vpop.f32.mrb[0].mxu0
    %4702 = vdwg.mxu0
    %4703 = vmatprep.subr.mxu0 0.0
    %v4704 = vand.u32 %v4133, 4294901760
    %4705 = vmatpush1.msra.mxu0 %v4704
    %4706 = vmatprep.subr.mxu0 0.0
    %v4707 = vand.u32 %v4134, 4294901760
    %4708 = vmatpush1.msra.mxu0 %v4707
    %4709 = vmatprep.subr.mxu0 0.0
    %v4710 = vand.u32 %v4135, 4294901760
    %4711 = vmatpush1.msra.mxu0 %v4710
    %4712 = vmatprep.subr.mxu0 0.0
    %v4713 = vand.u32 %v4136, 4294901760
    %4714 = vmatpush1.msra.mxu0 %v4713
    %4715 = vmatprep.subr.mxu0 0.0
    %v4716 = vand.u32 %v4137, 4294901760
    %4717 = vmatpush1.msra.mxu0 %v4716
    %4718 = vmatprep.subr.mxu0 0.0
    %v4719 = vand.u32 %v4138, 4294901760
    %4720 = vmatpush1.msra.mxu0 %v4719
    %4721 = vmatprep.subr.mxu0 0.0
    %v4722 = vand.u32 %v4139, 4294901760
    %4723 = vmatpush1.msra.mxu0 %v4722
    %4724 = vmatprep.subr.mxu0 0.0
    %v4725 = vand.u32 %v4140, 4294901760
    %4726 = vmatpush1.msra.mxu0 %v4725
    %4727 = vmatprep.subr.mxu0 0.0
    %v4728 = vand.u32 %v4141, 4294901760
    %4729 = vmatpush1.msra.mxu0 %v4728
    %4730 = vmatprep.subr.mxu0 0.0
    %v4731 = vand.u32 %v4142, 4294901760
    %4732 = vmatpush1.msra.mxu0 %v4731
    %4733 = vmatprep.subr.mxu0 0.0
    %v4734 = vand.u32 %v4143, 4294901760
    %4735 = vmatpush1.msra.mxu0 %v4734
    %4736 = vmatprep.subr.mxu0 0.0
    %v4737 = vand.u32 %v4144, 4294901760
    %4738 = vmatpush1.msra.mxu0 %v4737
    %4739 = vmatprep.subr.mxu0 0.0
    %v4740 = vand.u32 %v4145, 4294901760
    %4741 = vmatpush1.msra.mxu0 %v4740
    %4742 = vmatprep.subr.mxu0 0.0
    %v4743 = vand.u32 %v4146, 4294901760
    %4744 = vmatpush1.msra.mxu0 %v4743
    %4745 = vmatprep.subr.mxu0 0.0
    %v4746 = vand.u32 %v4147, 4294901760
    %4747 = vmatpush1.msra.mxu0 %v4746
    %4748 = vmatprep.subr.mxu0 0.0
    %v4749 = vand.u32 %v4148, 4294901760
    %4750 = vmatpush1.msra.mxu0 %v4749
    %4751 = vmatprep.subr.mxu0 0.0
    %4752 = vmatpush1.msra.mxu0 0.0
    %4753 = vmatprep.subr.mxu0 0.0
    %4754 = vmatpush1.msra.mxu0 0.0
    %4755 = vmatprep.subr.mxu0 0.0
    %4756 = vmatpush1.msra.mxu0 0.0
    %4757 = vmatprep.subr.mxu0 0.0
    %4758 = vmatpush1.msra.mxu0 0.0
    %4759 = vmatprep.subr.mxu0 0.0
    %4760 = vmatpush1.msra.mxu0 0.0
    %4761 = vmatprep.subr.mxu0 0.0
    %4762 = vmatpush1.msra.mxu0 0.0
    %4763 = vmatprep.subr.mxu0 0.0
    %4764 = vmatpush1.msra.mxu0 0.0
    %4765 = vmatprep.subr.mxu0 0.0
    %4766 = vmatpush1.msra.mxu0 0.0
    %4767 = vmatprep.subr.mxu0 0.0
    %4768 = vmatpush1.msra.mxu0 0.0
    %4769 = vmatprep.subr.mxu0 0.0
    %4770 = vmatpush1.msra.mxu0 0.0
    %4771 = vmatprep.subr.mxu0 0.0
    %4772 = vmatpush1.msra.mxu0 0.0
    %4773 = vmatprep.subr.mxu0 0.0
    %4774 = vmatpush1.msra.mxu0 0.0
    %4775 = vmatprep.subr.mxu0 0.0
    %4776 = vmatpush1.msra.mxu0 0.0
    %4777 = vmatprep.subr.mxu0 0.0
    %4778 = vmatpush1.msra.mxu0 0.0
    %4779 = vmatprep.subr.mxu0 0.0
    %4780 = vmatpush1.msra.mxu0 0.0
    %4781 = vmatprep.subr.mxu0 0.0
    %4782 = vmatpush1.msra.mxu0 0.0
    %4783 = vmatprep.mubr.f32.mxu0 0.0
    %v4784 = vand.u32 %v4132, 4294901760
    %4785 = vmatmul.mubr.f32.gmra.mrb[0].mxu0 %v4784
    %v4786 = vpop.f32.mrb[0].mxu0
    %v4787 = vadd.f32 %v4700, %v4786
    %v4788 = vpop.f32.mrb[0].mxu0
    %4789 = vdwg.mxu0
    %v4790 = vadd.f32 %v3230, %v4787
    %v4791 = vtanh.pop %v4790
    %v4792 = vsub.f32 1.0, %v4124
    %v4793 = vmul.f32 %v4792, %v3226
    %v4794 = vmul.f32 %v4124, %v4791
    %v4795 = vadd.f32 %v4793, %v4794
    %s4796 = scalar_lea.vmem [#allocation11], 16
    %4797 = vst [vmem:[%s4796] sm:$0xff] %v4795
    %s4798 = scalar_lea.vmem [#allocation6], 24
    %v4799 = vld [vmem:[%s4798] sm:$0xff]
    %v4800 = vmul.f32 %v4799, %v4795
    %s4801 = scalar_lea.vmem [#allocation3], 72
    %v4802 = vld [vmem:[%s4801] sm:$0xff]
    %v4803 = vld [vmem:[%s4801 + $0x8] sm:$0xff]
    %v4804 = vld [vmem:[%s4801 + $0x10] sm:$0xff]
    %v4805 = vld [vmem:[#allocation8] sm:$0xff]
    %v4806 = vld [vmem:[#allocation8 + $0x8] sm:$0xff]
    %v4807 = vld [vmem:[#allocation8 + $0x10] sm:$0xff]
    %v4808 = vld [vmem:[#allocation8 + $0x18] sm:$0xff]
    %v4809 = vld [vmem:[#allocation8 + $0x20] sm:$0xff]
    %v4810 = vld [vmem:[#allocation8 + $0x28] sm:$0xff]
    %v4811 = vld [vmem:[#allocation8 + $0x30] sm:$0xff]
    %v4812 = vld [vmem:[#allocation8 + $0x38] sm:$0xff]
    %v4813 = vld [vmem:[#allocation8 + $0x40] sm:$0xff]
    %v4814 = vld [vmem:[#allocation8 + $0x48] sm:$0xff]
    %v4815 = vld [vmem:[#allocation8 + $0x50] sm:$0xff]
    %v4816 = vld [vmem:[#allocation8 + $0x58] sm:$0xff]
    %v4817 = vld [vmem:[#allocation8 + $0x60] sm:$0xff]
    %v4818 = vld [vmem:[#allocation8 + $0x68] sm:$0xff]
    %v4819 = vld [vmem:[#allocation8 + $0x70] sm:$0xff]
    %v4820 = vld [vmem:[#allocation8 + $0x78] sm:$0xff]
    %v4821 = vld [vmem:[#allocation8 + $0x80] sm:$0xff]
    %v4822 = vld [vmem:[#allocation8 + $0x88] sm:$0xff]
    %v4823 = vld [vmem:[#allocation8 + $0x90] sm:$0xff]
    %v4824 = vld [vmem:[#allocation8 + $0x98] sm:$0xff]
    %v4825 = vld [vmem:[#allocation8 + $0xa0] sm:$0xff]
    %v4826 = vld [vmem:[#allocation8 + $0xa8] sm:$0xff]
    %v4827 = vld [vmem:[#allocation8 + $0xb0] sm:$0xff]
    %v4828 = vld [vmem:[#allocation8 + $0xb8] sm:$0xff]
    %v4829 = vld [vmem:[#allocation8 + $0xc0] sm:$0xff]
    %v4830 = vld [vmem:[#allocation8 + $0xc8] sm:$0xff]
    %v4831 = vld [vmem:[#allocation8 + $0xd0] sm:$0xff]
    %v4832 = vld [vmem:[#allocation8 + $0xd8] sm:$0xff]
    %v4833 = vld [vmem:[#allocation8 + $0xe0] sm:$0xff]
    %v4834 = vld [vmem:[#allocation8 + $0xe8] sm:$0xff]
    %v4835 = vld [vmem:[#allocation8 + $0xf0] sm:$0xff]
    %v4836 = vld [vmem:[#allocation8 + $0xf8] sm:$0xff]
    %v4837 = vand.u32 %v4806, 4294901760
    %4838 = vmatprep.subr.mxu0 %v4837
    %v4839 = vand.u32 %v4805, 4294901760
    %4840 = vmatpush1.msra.mxu0 %v4839
    %v4841 = vand.u32 %v4808, 4294901760
    %4842 = vmatprep.subr.mxu0 %v4841
    %v4843 = vand.u32 %v4807, 4294901760
    %4844 = vmatpush1.msra.mxu0 %v4843
    %v4845 = vand.u32 %v4810, 4294901760
    %4846 = vmatprep.subr.mxu0 %v4845
    %v4847 = vand.u32 %v4809, 4294901760
    %4848 = vmatpush1.msra.mxu0 %v4847
    %v4849 = vand.u32 %v4812, 4294901760
    %4850 = vmatprep.subr.mxu0 %v4849
    %v4851 = vand.u32 %v4811, 4294901760
    %4852 = vmatpush1.msra.mxu0 %v4851
    %v4853 = vand.u32 %v4814, 4294901760
    %4854 = vmatprep.subr.mxu0 %v4853
    %v4855 = vand.u32 %v4813, 4294901760
    %4856 = vmatpush1.msra.mxu0 %v4855
    %v4857 = vand.u32 %v4816, 4294901760
    %4858 = vmatprep.subr.mxu0 %v4857
    %v4859 = vand.u32 %v4815, 4294901760
    %4860 = vmatpush1.msra.mxu0 %v4859
    %v4861 = vand.u32 %v4818, 4294901760
    %4862 = vmatprep.subr.mxu0 %v4861
    %v4863 = vand.u32 %v4817, 4294901760
    %4864 = vmatpush1.msra.mxu0 %v4863
    %v4865 = vand.u32 %v4820, 4294901760
    %4866 = vmatprep.subr.mxu0 %v4865
    %v4867 = vand.u32 %v4819, 4294901760
    %4868 = vmatpush1.msra.mxu0 %v4867
    %v4869 = vand.u32 %v4822, 4294901760
    %4870 = vmatprep.subr.mxu0 %v4869
    %v4871 = vand.u32 %v4821, 4294901760
    %4872 = vmatpush1.msra.mxu0 %v4871
    %v4873 = vand.u32 %v4824, 4294901760
    %4874 = vmatprep.subr.mxu0 %v4873
    %v4875 = vand.u32 %v4823, 4294901760
    %4876 = vmatpush1.msra.mxu0 %v4875
    %v4877 = vand.u32 %v4826, 4294901760
    %4878 = vmatprep.subr.mxu0 %v4877
    %v4879 = vand.u32 %v4825, 4294901760
    %4880 = vmatpush1.msra.mxu0 %v4879
    %v4881 = vand.u32 %v4828, 4294901760
    %4882 = vmatprep.subr.mxu0 %v4881
    %v4883 = vand.u32 %v4827, 4294901760
    %4884 = vmatpush1.msra.mxu0 %v4883
    %v4885 = vand.u32 %v4830, 4294901760
    %4886 = vmatprep.subr.mxu0 %v4885
    %v4887 = vand.u32 %v4829, 4294901760
    %4888 = vmatpush1.msra.mxu0 %v4887
    %v4889 = vand.u32 %v4832, 4294901760
    %4890 = vmatprep.subr.mxu0 %v4889
    %v4891 = vand.u32 %v4831, 4294901760
    %4892 = vmatpush1.msra.mxu0 %v4891
    %v4893 = vand.u32 %v4834, 4294901760
    %4894 = vmatprep.subr.mxu0 %v4893
    %v4895 = vand.u32 %v4833, 4294901760
    %4896 = vmatpush1.msra.mxu0 %v4895
    %v4897 = vand.u32 %v4836, 4294901760
    %4898 = vmatprep.subr.mxu0 %v4897
    %v4899 = vand.u32 %v4835, 4294901760
    %4900 = vmatpush1.msra.mxu0 %v4899
    %4901 = vmatprep.subr.mxu0 0.0
    %4902 = vmatpush1.msra.mxu0 0.0
    %4903 = vmatprep.subr.mxu0 0.0
    %4904 = vmatpush1.msra.mxu0 0.0
    %4905 = vmatprep.subr.mxu0 0.0
    %4906 = vmatpush1.msra.mxu0 0.0
    %4907 = vmatprep.subr.mxu0 0.0
    %4908 = vmatpush1.msra.mxu0 0.0
    %4909 = vmatprep.subr.mxu0 0.0
    %4910 = vmatpush1.msra.mxu0 0.0
    %4911 = vmatprep.subr.mxu0 0.0
    %4912 = vmatpush1.msra.mxu0 0.0
    %4913 = vmatprep.subr.mxu0 0.0
    %4914 = vmatpush1.msra.mxu0 0.0
    %4915 = vmatprep.subr.mxu0 0.0
    %4916 = vmatpush1.msra.mxu0 0.0
    %4917 = vmatprep.subr.mxu0 0.0
    %4918 = vmatpush1.msra.mxu0 0.0
    %4919 = vmatprep.subr.mxu0 0.0
    %4920 = vmatpush1.msra.mxu0 0.0
    %4921 = vmatprep.subr.mxu0 0.0
    %4922 = vmatpush1.msra.mxu0 0.0
    %4923 = vmatprep.subr.mxu0 0.0
    %4924 = vmatpush1.msra.mxu0 0.0
    %4925 = vmatprep.subr.mxu0 0.0
    %4926 = vmatpush1.msra.mxu0 0.0
    %4927 = vmatprep.subr.mxu0 0.0
    %4928 = vmatpush1.msra.mxu0 0.0
    %4929 = vmatprep.subr.mxu0 0.0
    %4930 = vmatpush1.msra.mxu0 0.0
    %4931 = vmatprep.subr.mxu0 0.0
    %4932 = vmatpush1.msra.mxu0 0.0
    %4933 = vmatprep.mubr.f32.mxu0 0.0
    %v4934 = vand.u32 %v4800, 4294901760
    %v4935 = vsub.f32 %v4800, %v4934
    %v4936 = vand.u32 %v4935, 4294901760
    %v4937 = vsub.f32 %v4935, %v4936
    %v4938 = vand.u32 %v4937, 4294901760
    %4939 = vmatmul.mubr.f32.gmra.mrb[0].mxu0 %v4938
    %v4940 = vpop.f32.mrb[0].mxu0
    %v4941 = vadd.f32 0.0, %v4940
    %v4942 = vpop.f32.mrb[0].mxu0
    %v4943 = vadd.f32 0.0, %v4942
    %4944 = vdwg.mxu0
    %v4945 = vand.u32 %v4806, 4294901760
    %v4946 = vsub.f32 %v4806, %v4945
    %v4947 = vand.u32 %v4946, 4294901760
    %v4948 = vsub.f32 %v4946, %v4947
    %v4949 = vand.u32 %v4948, 4294901760
    %4950 = vmatprep.subr.mxu0 %v4949
    %v4951 = vand.u32 %v4805, 4294901760
    %v4952 = vsub.f32 %v4805, %v4951
    %v4953 = vand.u32 %v4952, 4294901760
    %v4954 = vsub.f32 %v4952, %v4953
    %v4955 = vand.u32 %v4954, 4294901760
    %4956 = vmatpush1.msra.mxu0 %v4955
    %v4957 = vand.u32 %v4808, 4294901760
    %v4958 = vsub.f32 %v4808, %v4957
    %v4959 = vand.u32 %v4958, 4294901760
    %v4960 = vsub.f32 %v4958, %v4959
    %v4961 = vand.u32 %v4960, 4294901760
    %4962 = vmatprep.subr.mxu0 %v4961
    %v4963 = vand.u32 %v4807, 4294901760
    %v4964 = vsub.f32 %v4807, %v4963
    %v4965 = vand.u32 %v4964, 4294901760
    %v4966 = vsub.f32 %v4964, %v4965
    %v4967 = vand.u32 %v4966, 4294901760
    %4968 = vmatpush1.msra.mxu0 %v4967
    %v4969 = vand.u32 %v4810, 4294901760
    %v4970 = vsub.f32 %v4810, %v4969
    %v4971 = vand.u32 %v4970, 4294901760
    %v4972 = vsub.f32 %v4970, %v4971
    %v4973 = vand.u32 %v4972, 4294901760
    %4974 = vmatprep.subr.mxu0 %v4973
    %v4975 = vand.u32 %v4809, 4294901760
    %v4976 = vsub.f32 %v4809, %v4975
    %v4977 = vand.u32 %v4976, 4294901760
    %v4978 = vsub.f32 %v4976, %v4977
    %v4979 = vand.u32 %v4978, 4294901760
    %4980 = vmatpush1.msra.mxu0 %v4979
    %v4981 = vand.u32 %v4812, 4294901760
    %v4982 = vsub.f32 %v4812, %v4981
    %v4983 = vand.u32 %v4982, 4294901760
    %v4984 = vsub.f32 %v4982, %v4983
    %v4985 = vand.u32 %v4984, 4294901760
    %4986 = vmatprep.subr.mxu0 %v4985
    %v4987 = vand.u32 %v4811, 4294901760
    %v4988 = vsub.f32 %v4811, %v4987
    %v4989 = vand.u32 %v4988, 4294901760
    %v4990 = vsub.f32 %v4988, %v4989
    %v4991 = vand.u32 %v4990, 4294901760
    %4992 = vmatpush1.msra.mxu0 %v4991
    %v4993 = vand.u32 %v4814, 4294901760
    %v4994 = vsub.f32 %v4814, %v4993
    %v4995 = vand.u32 %v4994, 4294901760
    %v4996 = vsub.f32 %v4994, %v4995
    %v4997 = vand.u32 %v4996, 4294901760
    %4998 = vmatprep.subr.mxu0 %v4997
    %v4999 = vand.u32 %v4813, 4294901760
    %v5000 = vsub.f32 %v4813, %v4999
    %v5001 = vand.u32 %v5000, 4294901760
    %v5002 = vsub.f32 %v5000, %v5001
    %v5003 = vand.u32 %v5002, 4294901760
    %5004 = vmatpush1.msra.mxu0 %v5003
    %v5005 = vand.u32 %v4816, 4294901760
    %v5006 = vsub.f32 %v4816, %v5005
    %v5007 = vand.u32 %v5006, 4294901760
    %v5008 = vsub.f32 %v5006, %v5007
    %v5009 = vand.u32 %v5008, 4294901760
    %5010 = vmatprep.subr.mxu0 %v5009
    %v5011 = vand.u32 %v4815, 4294901760
    %v5012 = vsub.f32 %v4815, %v5011
    %v5013 = vand.u32 %v5012, 4294901760
    %v5014 = vsub.f32 %v5012, %v5013
    %v5015 = vand.u32 %v5014, 4294901760
    %5016 = vmatpush1.msra.mxu0 %v5015
    %v5017 = vand.u32 %v4818, 4294901760
    %v5018 = vsub.f32 %v4818, %v5017
    %v5019 = vand.u32 %v5018, 4294901760
    %v5020 = vsub.f32 %v5018, %v5019
    %v5021 = vand.u32 %v5020, 4294901760
    %5022 = vmatprep.subr.mxu0 %v5021
    %v5023 = vand.u32 %v4817, 4294901760
    %v5024 = vsub.f32 %v4817, %v5023
    %v5025 = vand.u32 %v5024, 4294901760
    %v5026 = vsub.f32 %v5024, %v5025
    %v5027 = vand.u32 %v5026, 4294901760
    %5028 = vmatpush1.msra.mxu0 %v5027
    %v5029 = vand.u32 %v4820, 4294901760
    %v5030 = vsub.f32 %v4820, %v5029
    %v5031 = vand.u32 %v5030, 4294901760
    %v5032 = vsub.f32 %v5030, %v5031
    %v5033 = vand.u32 %v5032, 4294901760
    %5034 = vmatprep.subr.mxu0 %v5033
    %v5035 = vand.u32 %v4819, 4294901760
    %v5036 = vsub.f32 %v4819, %v5035
    %v5037 = vand.u32 %v5036, 4294901760
    %v5038 = vsub.f32 %v5036, %v5037
    %v5039 = vand.u32 %v5038, 4294901760
    %5040 = vmatpush1.msra.mxu0 %v5039
    %v5041 = vand.u32 %v4822, 4294901760
    %v5042 = vsub.f32 %v4822, %v5041
    %v5043 = vand.u32 %v5042, 4294901760
    %v5044 = vsub.f32 %v5042, %v5043
    %v5045 = vand.u32 %v5044, 4294901760
    %5046 = vmatprep.subr.mxu0 %v5045
    %v5047 = vand.u32 %v4821, 4294901760
    %v5048 = vsub.f32 %v4821, %v5047
    %v5049 = vand.u32 %v5048, 4294901760
    %v5050 = vsub.f32 %v5048, %v5049
    %v5051 = vand.u32 %v5050, 4294901760
    %5052 = vmatpush1.msra.mxu0 %v5051
    %v5053 = vand.u32 %v4824, 4294901760
    %v5054 = vsub.f32 %v4824, %v5053
    %v5055 = vand.u32 %v5054, 4294901760
    %v5056 = vsub.f32 %v5054, %v5055
    %v5057 = vand.u32 %v5056, 4294901760
    %5058 = vmatprep.subr.mxu0 %v5057
    %v5059 = vand.u32 %v4823, 4294901760
    %v5060 = vsub.f32 %v4823, %v5059
    %v5061 = vand.u32 %v5060, 4294901760
    %v5062 = vsub.f32 %v5060, %v5061
    %v5063 = vand.u32 %v5062, 4294901760
    %5064 = vmatpush1.msra.mxu0 %v5063
    %v5065 = vand.u32 %v4826, 4294901760
    %v5066 = vsub.f32 %v4826, %v5065
    %v5067 = vand.u32 %v5066, 4294901760
    %v5068 = vsub.f32 %v5066, %v5067
    %v5069 = vand.u32 %v5068, 4294901760
    %5070 = vmatprep.subr.mxu0 %v5069
    %v5071 = vand.u32 %v4825, 4294901760
    %v5072 = vsub.f32 %v4825, %v5071
    %v5073 = vand.u32 %v5072, 4294901760
    %v5074 = vsub.f32 %v5072, %v5073
    %v5075 = vand.u32 %v5074, 4294901760
    %5076 = vmatpush1.msra.mxu0 %v5075
    %v5077 = vand.u32 %v4828, 4294901760
    %v5078 = vsub.f32 %v4828, %v5077
    %v5079 = vand.u32 %v5078, 4294901760
    %v5080 = vsub.f32 %v5078, %v5079
    %v5081 = vand.u32 %v5080, 4294901760
    %5082 = vmatprep.subr.mxu0 %v5081
    %v5083 = vand.u32 %v4827, 4294901760
    %v5084 = vsub.f32 %v4827, %v5083
    %v5085 = vand.u32 %v5084, 4294901760
    %v5086 = vsub.f32 %v5084, %v5085
    %v5087 = vand.u32 %v5086, 4294901760
    %5088 = vmatpush1.msra.mxu0 %v5087
    %v5089 = vand.u32 %v4830, 4294901760
    %v5090 = vsub.f32 %v4830, %v5089
    %v5091 = vand.u32 %v5090, 4294901760
    %v5092 = vsub.f32 %v5090, %v5091
    %v5093 = vand.u32 %v5092, 4294901760
    %5094 = vmatprep.subr.mxu0 %v5093
    %v5095 = vand.u32 %v4829, 4294901760
    %v5096 = vsub.f32 %v4829, %v5095
    %v5097 = vand.u32 %v5096, 4294901760
    %v5098 = vsub.f32 %v5096, %v5097
    %v5099 = vand.u32 %v5098, 4294901760
    %5100 = vmatpush1.msra.mxu0 %v5099
    %v5101 = vand.u32 %v4832, 4294901760
    %v5102 = vsub.f32 %v4832, %v5101
    %v5103 = vand.u32 %v5102, 4294901760
    %v5104 = vsub.f32 %v5102, %v5103
    %v5105 = vand.u32 %v5104, 4294901760
    %5106 = vmatprep.subr.mxu0 %v5105
    %v5107 = vand.u32 %v4831, 4294901760
    %v5108 = vsub.f32 %v4831, %v5107
    %v5109 = vand.u32 %v5108, 4294901760
    %v5110 = vsub.f32 %v5108, %v5109
    %v5111 = vand.u32 %v5110, 4294901760
    %5112 = vmatpush1.msra.mxu0 %v5111
    %v5113 = vand.u32 %v4834, 4294901760
    %v5114 = vsub.f32 %v4834, %v5113
    %v5115 = vand.u32 %v5114, 4294901760
    %v5116 = vsub.f32 %v5114, %v5115
    %v5117 = vand.u32 %v5116, 4294901760
    %5118 = vmatprep.subr.mxu0 %v5117
    %v5119 = vand.u32 %v4833, 4294901760
    %v5120 = vsub.f32 %v4833, %v5119
    %v5121 = vand.u32 %v5120, 4294901760
    %v5122 = vsub.f32 %v5120, %v5121
    %v5123 = vand.u32 %v5122, 4294901760
    %5124 = vmatpush1.msra.mxu0 %v5123
    %v5125 = vand.u32 %v4836, 4294901760
    %v5126 = vsub.f32 %v4836, %v5125
    %v5127 = vand.u32 %v5126, 4294901760
    %v5128 = vsub.f32 %v5126, %v5127
    %v5129 = vand.u32 %v5128, 4294901760
    %5130 = vmatprep.subr.mxu0 %v5129
    %v5131 = vand.u32 %v4835, 4294901760
    %v5132 = vsub.f32 %v4835, %v5131
    %v5133 = vand.u32 %v5132, 4294901760
    %v5134 = vsub.f32 %v5132, %v5133
    %v5135 = vand.u32 %v5134, 4294901760
    %5136 = vmatpush1.msra.mxu0 %v5135
    %5137 = vmatprep.subr.mxu0 0.0
    %5138 = vmatpush1.msra.mxu0 0.0
    %5139 = vmatprep.subr.mxu0 0.0
    %5140 = vmatpush1.msra.mxu0 0.0
    %5141 = vmatprep.subr.mxu0 0.0
    %5142 = vmatpush1.msra.mxu0 0.0
    %5143 = vmatprep.subr.mxu0 0.0
    %5144 = vmatpush1.msra.mxu0 0.0
    %5145 = vmatprep.subr.mxu0 0.0
    %5146 = vmatpush1.msra.mxu0 0.0
    %5147 = vmatprep.subr.mxu0 0.0
    %5148 = vmatpush1.msra.mxu0 0.0
    %5149 = vmatprep.subr.mxu0 0.0
    %5150 = vmatpush1.msra.mxu0 0.0
    %5151 = vmatprep.subr.mxu0 0.0
    %5152 = vmatpush1.msra.mxu0 0.0
    %5153 = vmatprep.subr.mxu0 0.0
    %5154 = vmatpush1.msra.mxu0 0.0
    %5155 = vmatprep.subr.mxu0 0.0
    %5156 = vmatpush1.msra.mxu0 0.0
    %5157 = vmatprep.subr.mxu0 0.0
    %5158 = vmatpush1.msra.mxu0 0.0
    %5159 = vmatprep.subr.mxu0 0.0
    %5160 = vmatpush1.msra.mxu0 0.0
    %5161 = vmatprep.subr.mxu0 0.0
    %5162 = vmatpush1.msra.mxu0 0.0
    %5163 = vmatprep.subr.mxu0 0.0
    %5164 = vmatpush1.msra.mxu0 0.0
    %5165 = vmatprep.subr.mxu0 0.0
    %5166 = vmatpush1.msra.mxu0 0.0
    %5167 = vmatprep.subr.mxu0 0.0
    %5168 = vmatpush1.msra.mxu0 0.0
    %5169 = vmatprep.mubr.f32.mxu0 0.0
    %v5170 = vand.u32 %v4800, 4294901760
    %5171 = vmatmul.mubr.f32.gmra.mrb[0].mxu0 %v5170
    %v5172 = vpop.f32.mrb[0].mxu0
    %v5173 = vadd.f32 %v4941, %v5172
    %v5174 = vpop.f32.mrb[0].mxu0
    %v5175 = vadd.f32 %v4943, %v5174
    %5176 = vdwg.mxu0
    %v5177 = vand.u32 %v4806, 4294901760
    %v5178 = vsub.f32 %v4806, %v5177
    %5179 = vmatprep.subr.mxu0 %v5178
    %v5180 = vand.u32 %v4805, 4294901760
    %v5181 = vsub.f32 %v4805, %v5180
    %5182 = vmatpush1.msra.mxu0 %v5181
    %v5183 = vand.u32 %v4808, 4294901760
    %v5184 = vsub.f32 %v4808, %v5183
    %5185 = vmatprep.subr.mxu0 %v5184
    %v5186 = vand.u32 %v4807, 4294901760
    %v5187 = vsub.f32 %v4807, %v5186
    %5188 = vmatpush1.msra.mxu0 %v5187
    %v5189 = vand.u32 %v4810, 4294901760
    %v5190 = vsub.f32 %v4810, %v5189
    %5191 = vmatprep.subr.mxu0 %v5190
    %v5192 = vand.u32 %v4809, 4294901760
    %v5193 = vsub.f32 %v4809, %v5192
    %5194 = vmatpush1.msra.mxu0 %v5193
    %v5195 = vand.u32 %v4812, 4294901760
    %v5196 = vsub.f32 %v4812, %v5195
    %5197 = vmatprep.subr.mxu0 %v5196
    %v5198 = vand.u32 %v4811, 4294901760
    %v5199 = vsub.f32 %v4811, %v5198
    %5200 = vmatpush1.msra.mxu0 %v5199
    %v5201 = vand.u32 %v4814, 4294901760
    %v5202 = vsub.f32 %v4814, %v5201
    %5203 = vmatprep.subr.mxu0 %v5202
    %v5204 = vand.u32 %v4813, 4294901760
    %v5205 = vsub.f32 %v4813, %v5204
    %5206 = vmatpush1.msra.mxu0 %v5205
    %v5207 = vand.u32 %v4816, 4294901760
    %v5208 = vsub.f32 %v4816, %v5207
    %5209 = vmatprep.subr.mxu0 %v5208
    %v5210 = vand.u32 %v4815, 4294901760
    %v5211 = vsub.f32 %v4815, %v5210
    %5212 = vmatpush1.msra.mxu0 %v5211
    %v5213 = vand.u32 %v4818, 4294901760
    %v5214 = vsub.f32 %v4818, %v5213
    %5215 = vmatprep.subr.mxu0 %v5214
    %v5216 = vand.u32 %v4817, 4294901760
    %v5217 = vsub.f32 %v4817, %v5216
    %5218 = vmatpush1.msra.mxu0 %v5217
    %v5219 = vand.u32 %v4820, 4294901760
    %v5220 = vsub.f32 %v4820, %v5219
    %5221 = vmatprep.subr.mxu0 %v5220
    %v5222 = vand.u32 %v4819, 4294901760
    %v5223 = vsub.f32 %v4819, %v5222
    %5224 = vmatpush1.msra.mxu0 %v5223
    %v5225 = vand.u32 %v4822, 4294901760
    %v5226 = vsub.f32 %v4822, %v5225
    %5227 = vmatprep.subr.mxu0 %v5226
    %v5228 = vand.u32 %v4821, 4294901760
    %v5229 = vsub.f32 %v4821, %v5228
    %5230 = vmatpush1.msra.mxu0 %v5229
    %v5231 = vand.u32 %v4824, 4294901760
    %v5232 = vsub.f32 %v4824, %v5231
    %5233 = vmatprep.subr.mxu0 %v5232
    %v5234 = vand.u32 %v4823, 4294901760
    %v5235 = vsub.f32 %v4823, %v5234
    %5236 = vmatpush1.msra.mxu0 %v5235
    %v5237 = vand.u32 %v4826, 4294901760
    %v5238 = vsub.f32 %v4826, %v5237
    %5239 = vmatprep.subr.mxu0 %v5238
    %v5240 = vand.u32 %v4825, 4294901760
    %v5241 = vsub.f32 %v4825, %v5240
    %5242 = vmatpush1.msra.mxu0 %v5241
    %v5243 = vand.u32 %v4828, 4294901760
    %v5244 = vsub.f32 %v4828, %v5243
    %5245 = vmatprep.subr.mxu0 %v5244
    %v5246 = vand.u32 %v4827, 4294901760
    %v5247 = vsub.f32 %v4827, %v5246
    %5248 = vmatpush1.msra.mxu0 %v5247
    %v5249 = vand.u32 %v4830, 4294901760
    %v5250 = vsub.f32 %v4830, %v5249
    %5251 = vmatprep.subr.mxu0 %v5250
    %v5252 = vand.u32 %v4829, 4294901760
    %v5253 = vsub.f32 %v4829, %v5252
    %5254 = vmatpush1.msra.mxu0 %v5253
    %v5255 = vand.u32 %v4832, 4294901760
    %v5256 = vsub.f32 %v4832, %v5255
    %5257 = vmatprep.subr.mxu0 %v5256
    %v5258 = vand.u32 %v4831, 4294901760
    %v5259 = vsub.f32 %v4831, %v5258
    %5260 = vmatpush1.msra.mxu0 %v5259
    %v5261 = vand.u32 %v4834, 4294901760
    %v5262 = vsub.f32 %v4834, %v5261
    %5263 = vmatprep.subr.mxu0 %v5262
    %v5264 = vand.u32 %v4833, 4294901760
    %v5265 = vsub.f32 %v4833, %v5264
    %5266 = vmatpush1.msra.mxu0 %v5265
    %v5267 = vand.u32 %v4836, 4294901760
    %v5268 = vsub.f32 %v4836, %v5267
    %5269 = vmatprep.subr.mxu0 %v5268
    %v5270 = vand.u32 %v4835, 4294901760
    %v5271 = vsub.f32 %v4835, %v5270
    %5272 = vmatpush1.msra.mxu0 %v5271
    %5273 = vmatprep.subr.mxu0 0.0
    %5274 = vmatpush1.msra.mxu0 0.0
    %5275 = vmatprep.subr.mxu0 0.0
    %5276 = vmatpush1.msra.mxu0 0.0
    %5277 = vmatprep.subr.mxu0 0.0
    %5278 = vmatpush1.msra.mxu0 0.0
    %5279 = vmatprep.subr.mxu0 0.0
    %5280 = vmatpush1.msra.mxu0 0.0
    %5281 = vmatprep.subr.mxu0 0.0
    %5282 = vmatpush1.msra.mxu0 0.0
    %5283 = vmatprep.subr.mxu0 0.0
    %5284 = vmatpush1.msra.mxu0 0.0
    %5285 = vmatprep.subr.mxu0 0.0
    %5286 = vmatpush1.msra.mxu0 0.0
    %5287 = vmatprep.subr.mxu0 0.0
    %5288 = vmatpush1.msra.mxu0 0.0
    %5289 = vmatprep.subr.mxu0 0.0
    %5290 = vmatpush1.msra.mxu0 0.0
    %5291 = vmatprep.subr.mxu0 0.0
    %5292 = vmatpush1.msra.mxu0 0.0
    %5293 = vmatprep.subr.mxu0 0.0
    %5294 = vmatpush1.msra.mxu0 0.0
    %5295 = vmatprep.subr.mxu0 0.0
    %5296 = vmatpush1.msra.mxu0 0.0
    %5297 = vmatprep.subr.mxu0 0.0
    %5298 = vmatpush1.msra.mxu0 0.0
    %5299 = vmatprep.subr.mxu0 0.0
    %5300 = vmatpush1.msra.mxu0 0.0
    %5301 = vmatprep.subr.mxu0 0.0
    %5302 = vmatpush1.msra.mxu0 0.0
    %5303 = vmatprep.subr.mxu0 0.0
    %5304 = vmatpush1.msra.mxu0 0.0
    %5305 = vmatprep.mubr.f32.mxu0 0.0
    %v5306 = vand.u32 %v4800, 4294901760
    %v5307 = vsub.f32 %v4800, %v5306
    %5308 = vmatmul.mubr.f32.gmra.mrb[0].mxu0 %v5307
    %v5309 = vpop.f32.mrb[0].mxu0
    %v5310 = vadd.f32 %v5173, %v5309
    %v5311 = vpop.f32.mrb[0].mxu0
    %v5312 = vadd.f32 %v5175, %v5311
    %5313 = vdwg.mxu0
    %v5314 = vand.u32 %v4806, 4294901760
    %5315 = vmatprep.subr.mxu0 %v5314
    %v5316 = vand.u32 %v4805, 4294901760
    %5317 = vmatpush1.msra.mxu0 %v5316
    %v5318 = vand.u32 %v4808, 4294901760
    %5319 = vmatprep.subr.mxu0 %v5318
    %v5320 = vand.u32 %v4807, 4294901760
    %5321 = vmatpush1.msra.mxu0 %v5320
    %v5322 = vand.u32 %v4810, 4294901760
    %5323 = vmatprep.subr.mxu0 %v5322
    %v5324 = vand.u32 %v4809, 4294901760
    %5325 = vmatpush1.msra.mxu0 %v5324
    %v5326 = vand.u32 %v4812, 4294901760
    %5327 = vmatprep.subr.mxu0 %v5326
    %v5328 = vand.u32 %v4811, 4294901760
    %5329 = vmatpush1.msra.mxu0 %v5328
    %v5330 = vand.u32 %v4814, 4294901760
    %5331 = vmatprep.subr.mxu0 %v5330
    %v5332 = vand.u32 %v4813, 4294901760
    %5333 = vmatpush1.msra.mxu0 %v5332
    %v5334 = vand.u32 %v4816, 4294901760
    %5335 = vmatprep.subr.mxu0 %v5334
    %v5336 = vand.u32 %v4815, 4294901760
    %5337 = vmatpush1.msra.mxu0 %v5336
    %v5338 = vand.u32 %v4818, 4294901760
    %5339 = vmatprep.subr.mxu0 %v5338
    %v5340 = vand.u32 %v4817, 4294901760
    %5341 = vmatpush1.msra.mxu0 %v5340
    %v5342 = vand.u32 %v4820, 4294901760
    %5343 = vmatprep.subr.mxu0 %v5342
    %v5344 = vand.u32 %v4819, 4294901760
    %5345 = vmatpush1.msra.mxu0 %v5344
    %v5346 = vand.u32 %v4822, 4294901760
    %5347 = vmatprep.subr.mxu0 %v5346
    %v5348 = vand.u32 %v4821, 4294901760
    %5349 = vmatpush1.msra.mxu0 %v5348
    %v5350 = vand.u32 %v4824, 4294901760
    %5351 = vmatprep.subr.mxu0 %v5350
    %v5352 = vand.u32 %v4823, 4294901760
    %5353 = vmatpush1.msra.mxu0 %v5352
    %v5354 = vand.u32 %v4826, 4294901760
    %5355 = vmatprep.subr.mxu0 %v5354
    %v5356 = vand.u32 %v4825, 4294901760
    %5357 = vmatpush1.msra.mxu0 %v5356
    %v5358 = vand.u32 %v4828, 4294901760
    %5359 = vmatprep.subr.mxu0 %v5358
    %v5360 = vand.u32 %v4827, 4294901760
    %5361 = vmatpush1.msra.mxu0 %v5360
    %v5362 = vand.u32 %v4830, 4294901760
    %5363 = vmatprep.subr.mxu0 %v5362
    %v5364 = vand.u32 %v4829, 4294901760
    %5365 = vmatpush1.msra.mxu0 %v5364
    %v5366 = vand.u32 %v4832, 4294901760
    %5367 = vmatprep.subr.mxu0 %v5366
    %v5368 = vand.u32 %v4831, 4294901760
    %5369 = vmatpush1.msra.mxu0 %v5368
    %v5370 = vand.u32 %v4834, 4294901760
    %5371 = vmatprep.subr.mxu0 %v5370
    %v5372 = vand.u32 %v4833, 4294901760
    %5373 = vmatpush1.msra.mxu0 %v5372
    %v5374 = vand.u32 %v4836, 4294901760
    %5375 = vmatprep.subr.mxu0 %v5374
    %v5376 = vand.u32 %v4835, 4294901760
    %5377 = vmatpush1.msra.mxu0 %v5376
    %5378 = vmatprep.subr.mxu0 0.0
    %5379 = vmatpush1.msra.mxu0 0.0
    %5380 = vmatprep.subr.mxu0 0.0
    %5381 = vmatpush1.msra.mxu0 0.0
    %5382 = vmatprep.subr.mxu0 0.0
    %5383 = vmatpush1.msra.mxu0 0.0
    %5384 = vmatprep.subr.mxu0 0.0
    %5385 = vmatpush1.msra.mxu0 0.0
    %5386 = vmatprep.subr.mxu0 0.0
    %5387 = vmatpush1.msra.mxu0 0.0
    %5388 = vmatprep.subr.mxu0 0.0
    %5389 = vmatpush1.msra.mxu0 0.0
    %5390 = vmatprep.subr.mxu0 0.0
    %5391 = vmatpush1.msra.mxu0 0.0
    %5392 = vmatprep.subr.mxu0 0.0
    %5393 = vmatpush1.msra.mxu0 0.0
    %5394 = vmatprep.subr.mxu0 0.0
    %5395 = vmatpush1.msra.mxu0 0.0
    %5396 = vmatprep.subr.mxu0 0.0
    %5397 = vmatpush1.msra.mxu0 0.0
    %5398 = vmatprep.subr.mxu0 0.0
    %5399 = vmatpush1.msra.mxu0 0.0
    %5400 = vmatprep.subr.mxu0 0.0
    %5401 = vmatpush1.msra.mxu0 0.0
    %5402 = vmatprep.subr.mxu0 0.0
    %5403 = vmatpush1.msra.mxu0 0.0
    %5404 = vmatprep.subr.mxu0 0.0
    %5405 = vmatpush1.msra.mxu0 0.0
    %5406 = vmatprep.subr.mxu0 0.0
    %5407 = vmatpush1.msra.mxu0 0.0
    %5408 = vmatprep.subr.mxu0 0.0
    %5409 = vmatpush1.msra.mxu0 0.0
    %5410 = vmatprep.mubr.f32.mxu0 0.0
    %v5411 = vand.u32 %v4800, 4294901760
    %v5412 = vsub.f32 %v4800, %v5411
    %v5413 = vand.u32 %v5412, 4294901760
    %5414 = vmatmul.mubr.f32.gmra.mrb[0].mxu0 %v5413
    %v5415 = vpop.f32.mrb[0].mxu0
    %v5416 = vadd.f32 %v5310, %v5415
    %v5417 = vpop.f32.mrb[0].mxu0
    %v5418 = vadd.f32 %v5312, %v5417
    %5419 = vdwg.mxu0
    %v5420 = vand.u32 %v4806, 4294901760
    %v5421 = vsub.f32 %v4806, %v5420
    %v5422 = vand.u32 %v5421, 4294901760
    %5423 = vmatprep.subr.mxu0 %v5422
    %v5424 = vand.u32 %v4805, 4294901760
    %v5425 = vsub.f32 %v4805, %v5424
    %v5426 = vand.u32 %v5425, 4294901760
    %5427 = vmatpush1.msra.mxu0 %v5426
    %v5428 = vand.u32 %v4808, 4294901760
    %v5429 = vsub.f32 %v4808, %v5428
    %v5430 = vand.u32 %v5429, 4294901760
    %5431 = vmatprep.subr.mxu0 %v5430
    %v5432 = vand.u32 %v4807, 4294901760
    %v5433 = vsub.f32 %v4807, %v5432
    %v5434 = vand.u32 %v5433, 4294901760
    %5435 = vmatpush1.msra.mxu0 %v5434
    %v5436 = vand.u32 %v4810, 4294901760
    %v5437 = vsub.f32 %v4810, %v5436
    %v5438 = vand.u32 %v5437, 4294901760
    %5439 = vmatprep.subr.mxu0 %v5438
    %v5440 = vand.u32 %v4809, 4294901760
    %v5441 = vsub.f32 %v4809, %v5440
    %v5442 = vand.u32 %v5441, 4294901760
    %5443 = vmatpush1.msra.mxu0 %v5442
    %v5444 = vand.u32 %v4812, 4294901760
    %v5445 = vsub.f32 %v4812, %v5444
    %v5446 = vand.u32 %v5445, 4294901760
    %5447 = vmatprep.subr.mxu0 %v5446
    %v5448 = vand.u32 %v4811, 4294901760
    %v5449 = vsub.f32 %v4811, %v5448
    %v5450 = vand.u32 %v5449, 4294901760
    %5451 = vmatpush1.msra.mxu0 %v5450
    %v5452 = vand.u32 %v4814, 4294901760
    %v5453 = vsub.f32 %v4814, %v5452
    %v5454 = vand.u32 %v5453, 4294901760
    %5455 = vmatprep.subr.mxu0 %v5454
    %v5456 = vand.u32 %v4813, 4294901760
    %v5457 = vsub.f32 %v4813, %v5456
    %v5458 = vand.u32 %v5457, 4294901760
    %5459 = vmatpush1.msra.mxu0 %v5458
    %v5460 = vand.u32 %v4816, 4294901760
    %v5461 = vsub.f32 %v4816, %v5460
    %v5462 = vand.u32 %v5461, 4294901760
    %5463 = vmatprep.subr.mxu0 %v5462
    %v5464 = vand.u32 %v4815, 4294901760
    %v5465 = vsub.f32 %v4815, %v5464
    %v5466 = vand.u32 %v5465, 4294901760
    %5467 = vmatpush1.msra.mxu0 %v5466
    %v5468 = vand.u32 %v4818, 4294901760
    %v5469 = vsub.f32 %v4818, %v5468
    %v5470 = vand.u32 %v5469, 4294901760
    %5471 = vmatprep.subr.mxu0 %v5470
    %v5472 = vand.u32 %v4817, 4294901760
    %v5473 = vsub.f32 %v4817, %v5472
    %v5474 = vand.u32 %v5473, 4294901760
    %5475 = vmatpush1.msra.mxu0 %v5474
    %v5476 = vand.u32 %v4820, 4294901760
    %v5477 = vsub.f32 %v4820, %v5476
    %v5478 = vand.u32 %v5477, 4294901760
    %5479 = vmatprep.subr.mxu0 %v5478
    %v5480 = vand.u32 %v4819, 4294901760
    %v5481 = vsub.f32 %v4819, %v5480
    %v5482 = vand.u32 %v5481, 4294901760
    %5483 = vmatpush1.msra.mxu0 %v5482
    %v5484 = vand.u32 %v4822, 4294901760
    %v5485 = vsub.f32 %v4822, %v5484
    %v5486 = vand.u32 %v5485, 4294901760
    %5487 = vmatprep.subr.mxu0 %v5486
    %v5488 = vand.u32 %v4821, 4294901760
    %v5489 = vsub.f32 %v4821, %v5488
    %v5490 = vand.u32 %v5489, 4294901760
    %5491 = vmatpush1.msra.mxu0 %v5490
    %v5492 = vand.u32 %v4824, 4294901760
    %v5493 = vsub.f32 %v4824, %v5492
    %v5494 = vand.u32 %v5493, 4294901760
    %5495 = vmatprep.subr.mxu0 %v5494
    %v5496 = vand.u32 %v4823, 4294901760
    %v5497 = vsub.f32 %v4823, %v5496
    %v5498 = vand.u32 %v5497, 4294901760
    %5499 = vmatpush1.msra.mxu0 %v5498
    %v5500 = vand.u32 %v4826, 4294901760
    %v5501 = vsub.f32 %v4826, %v5500
    %v5502 = vand.u32 %v5501, 4294901760
    %5503 = vmatprep.subr.mxu0 %v5502
    %v5504 = vand.u32 %v4825, 4294901760
    %v5505 = vsub.f32 %v4825, %v5504
    %v5506 = vand.u32 %v5505, 4294901760
    %5507 = vmatpush1.msra.mxu0 %v5506
    %v5508 = vand.u32 %v4828, 4294901760
    %v5509 = vsub.f32 %v4828, %v5508
    %v5510 = vand.u32 %v5509, 4294901760
    %5511 = vmatprep.subr.mxu0 %v5510
    %v5512 = vand.u32 %v4827, 4294901760
    %v5513 = vsub.f32 %v4827, %v5512
    %v5514 = vand.u32 %v5513, 4294901760
    %5515 = vmatpush1.msra.mxu0 %v5514
    %v5516 = vand.u32 %v4830, 4294901760
    %v5517 = vsub.f32 %v4830, %v5516
    %v5518 = vand.u32 %v5517, 4294901760
    %5519 = vmatprep.subr.mxu0 %v5518
    %v5520 = vand.u32 %v4829, 4294901760
    %v5521 = vsub.f32 %v4829, %v5520
    %v5522 = vand.u32 %v5521, 4294901760
    %5523 = vmatpush1.msra.mxu0 %v5522
    %v5524 = vand.u32 %v4832, 4294901760
    %v5525 = vsub.f32 %v4832, %v5524
    %v5526 = vand.u32 %v5525, 4294901760
    %5527 = vmatprep.subr.mxu0 %v5526
    %v5528 = vand.u32 %v4831, 4294901760
    %v5529 = vsub.f32 %v4831, %v5528
    %v5530 = vand.u32 %v5529, 4294901760
    %5531 = vmatpush1.msra.mxu0 %v5530
    %v5532 = vand.u32 %v4834, 4294901760
    %v5533 = vsub.f32 %v4834, %v5532
    %v5534 = vand.u32 %v5533, 4294901760
    %5535 = vmatprep.subr.mxu0 %v5534
    %v5536 = vand.u32 %v4833, 4294901760
    %v5537 = vsub.f32 %v4833, %v5536
    %v5538 = vand.u32 %v5537, 4294901760
    %5539 = vmatpush1.msra.mxu0 %v5538
    %v5540 = vand.u32 %v4836, 4294901760
    %v5541 = vsub.f32 %v4836, %v5540
    %v5542 = vand.u32 %v5541, 4294901760
    %5543 = vmatprep.subr.mxu0 %v5542
    %v5544 = vand.u32 %v4835, 4294901760
    %v5545 = vsub.f32 %v4835, %v5544
    %v5546 = vand.u32 %v5545, 4294901760
    %5547 = vmatpush1.msra.mxu0 %v5546
    %5548 = vmatprep.subr.mxu0 0.0
    %5549 = vmatpush1.msra.mxu0 0.0
    %5550 = vmatprep.subr.mxu0 0.0
    %5551 = vmatpush1.msra.mxu0 0.0
    %5552 = vmatprep.subr.mxu0 0.0
    %5553 = vmatpush1.msra.mxu0 0.0
    %5554 = vmatprep.subr.mxu0 0.0
    %5555 = vmatpush1.msra.mxu0 0.0
    %5556 = vmatprep.subr.mxu0 0.0
    %5557 = vmatpush1.msra.mxu0 0.0
    %5558 = vmatprep.subr.mxu0 0.0
    %5559 = vmatpush1.msra.mxu0 0.0
    %5560 = vmatprep.subr.mxu0 0.0
    %5561 = vmatpush1.msra.mxu0 0.0
    %5562 = vmatprep.subr.mxu0 0.0
    %5563 = vmatpush1.msra.mxu0 0.0
    %5564 = vmatprep.subr.mxu0 0.0
    %5565 = vmatpush1.msra.mxu0 0.0
    %5566 = vmatprep.subr.mxu0 0.0
    %5567 = vmatpush1.msra.mxu0 0.0
    %5568 = vmatprep.subr.mxu0 0.0
    %5569 = vmatpush1.msra.mxu0 0.0
    %5570 = vmatprep.subr.mxu0 0.0
    %5571 = vmatpush1.msra.mxu0 0.0
    %5572 = vmatprep.subr.mxu0 0.0
    %5573 = vmatpush1.msra.mxu0 0.0
    %5574 = vmatprep.subr.mxu0 0.0
    %5575 = vmatpush1.msra.mxu0 0.0
    %5576 = vmatprep.subr.mxu0 0.0
    %5577 = vmatpush1.msra.mxu0 0.0
    %5578 = vmatprep.subr.mxu0 0.0
    %5579 = vmatpush1.msra.mxu0 0.0
    %5580 = vmatprep.mubr.f32.mxu0 0.0
    %v5581 = vand.u32 %v4800, 4294901760
    %5582 = vmatmul.mubr.f32.gmra.mrb[0].mxu0 %v5581
    %v5583 = vpop.f32.mrb[0].mxu0
    %v5584 = vadd.f32 %v5416, %v5583
    %v5585 = vpop.f32.mrb[0].mxu0
    %v5586 = vadd.f32 %v5418, %v5585
    %5587 = vdwg.mxu0
    %v5588 = vand.u32 %v4806, 4294901760
    %5589 = vmatprep.subr.mxu0 %v5588
    %v5590 = vand.u32 %v4805, 4294901760
    %5591 = vmatpush1.msra.mxu0 %v5590
    %v5592 = vand.u32 %v4808, 4294901760
    %5593 = vmatprep.subr.mxu0 %v5592
    %v5594 = vand.u32 %v4807, 4294901760
    %5595 = vmatpush1.msra.mxu0 %v5594
    %v5596 = vand.u32 %v4810, 4294901760
    %5597 = vmatprep.subr.mxu0 %v5596
    %v5598 = vand.u32 %v4809, 4294901760
    %5599 = vmatpush1.msra.mxu0 %v5598
    %v5600 = vand.u32 %v4812, 4294901760
    %5601 = vmatprep.subr.mxu0 %v5600
    %v5602 = vand.u32 %v4811, 4294901760
    %5603 = vmatpush1.msra.mxu0 %v5602
    %v5604 = vand.u32 %v4814, 4294901760
    %5605 = vmatprep.subr.mxu0 %v5604
    %v5606 = vand.u32 %v4813, 4294901760
    %5607 = vmatpush1.msra.mxu0 %v5606
    %v5608 = vand.u32 %v4816, 4294901760
    %5609 = vmatprep.subr.mxu0 %v5608
    %v5610 = vand.u32 %v4815, 4294901760
    %5611 = vmatpush1.msra.mxu0 %v5610
    %v5612 = vand.u32 %v4818, 4294901760
    %5613 = vmatprep.subr.mxu0 %v5612
    %v5614 = vand.u32 %v4817, 4294901760
    %5615 = vmatpush1.msra.mxu0 %v5614
    %v5616 = vand.u32 %v4820, 4294901760
    %5617 = vmatprep.subr.mxu0 %v5616
    %v5618 = vand.u32 %v4819, 4294901760
    %5619 = vmatpush1.msra.mxu0 %v5618
    %v5620 = vand.u32 %v4822, 4294901760
    %5621 = vmatprep.subr.mxu0 %v5620
    %v5622 = vand.u32 %v4821, 4294901760
    %5623 = vmatpush1.msra.mxu0 %v5622
    %v5624 = vand.u32 %v4824, 4294901760
    %5625 = vmatprep.subr.mxu0 %v5624
    %v5626 = vand.u32 %v4823, 4294901760
    %5627 = vmatpush1.msra.mxu0 %v5626
    %v5628 = vand.u32 %v4826, 4294901760
    %5629 = vmatprep.subr.mxu0 %v5628
    %v5630 = vand.u32 %v4825, 4294901760
    %5631 = vmatpush1.msra.mxu0 %v5630
    %v5632 = vand.u32 %v4828, 4294901760
    %5633 = vmatprep.subr.mxu0 %v5632
    %v5634 = vand.u32 %v4827, 4294901760
    %5635 = vmatpush1.msra.mxu0 %v5634
    %v5636 = vand.u32 %v4830, 4294901760
    %5637 = vmatprep.subr.mxu0 %v5636
    %v5638 = vand.u32 %v4829, 4294901760
    %5639 = vmatpush1.msra.mxu0 %v5638
    %v5640 = vand.u32 %v4832, 4294901760
    %5641 = vmatprep.subr.mxu0 %v5640
    %v5642 = vand.u32 %v4831, 4294901760
    %5643 = vmatpush1.msra.mxu0 %v5642
    %v5644 = vand.u32 %v4834, 4294901760
    %5645 = vmatprep.subr.mxu0 %v5644
    %v5646 = vand.u32 %v4833, 4294901760
    %5647 = vmatpush1.msra.mxu0 %v5646
    %v5648 = vand.u32 %v4836, 4294901760
    %5649 = vmatprep.subr.mxu0 %v5648
    %v5650 = vand.u32 %v4835, 4294901760
    %5651 = vmatpush1.msra.mxu0 %v5650
    %5652 = vmatprep.subr.mxu0 0.0
    %5653 = vmatpush1.msra.mxu0 0.0
    %5654 = vmatprep.subr.mxu0 0.0
    %5655 = vmatpush1.msra.mxu0 0.0
    %5656 = vmatprep.subr.mxu0 0.0
    %5657 = vmatpush1.msra.mxu0 0.0
    %5658 = vmatprep.subr.mxu0 0.0
    %5659 = vmatpush1.msra.mxu0 0.0
    %5660 = vmatprep.subr.mxu0 0.0
    %5661 = vmatpush1.msra.mxu0 0.0
    %5662 = vmatprep.subr.mxu0 0.0
    %5663 = vmatpush1.msra.mxu0 0.0
    %5664 = vmatprep.subr.mxu0 0.0
    %5665 = vmatpush1.msra.mxu0 0.0
    %5666 = vmatprep.subr.mxu0 0.0
    %5667 = vmatpush1.msra.mxu0 0.0
    %5668 = vmatprep.subr.mxu0 0.0
    %5669 = vmatpush1.msra.mxu0 0.0
    %5670 = vmatprep.subr.mxu0 0.0
    %5671 = vmatpush1.msra.mxu0 0.0
    %5672 = vmatprep.subr.mxu0 0.0
    %5673 = vmatpush1.msra.mxu0 0.0
    %5674 = vmatprep.subr.mxu0 0.0
    %5675 = vmatpush1.msra.mxu0 0.0
    %5676 = vmatprep.subr.mxu0 0.0
    %5677 = vmatpush1.msra.mxu0 0.0
    %5678 = vmatprep.subr.mxu0 0.0
    %5679 = vmatpush1.msra.mxu0 0.0
    %5680 = vmatprep.subr.mxu0 0.0
    %5681 = vmatpush1.msra.mxu0 0.0
    %5682 = vmatprep.subr.mxu0 0.0
    %5683 = vmatpush1.msra.mxu0 0.0
    %5684 = vmatprep.mubr.f32.mxu0 0.0
    %v5685 = vand.u32 %v4800, 4294901760
    %5686 = vmatmul.mubr.f32.gmra.mrb[0].mxu0 %v5685
    %v5687 = vpop.f32.mrb[0].mxu0
    %v5688 = vadd.f32 %v5584, %v5687
    %v5689 = vpop.f32.mrb[0].mxu0
    %v5690 = vadd.f32 %v5586, %v5689
    %5691 = vdwg.mxu0
    %v5692 = vadd.f32 %v4802, %v5688
    %v5693 = vxor.u32 %v5692, 2147483648
    %v5694 = vmul.f32 %v5693, 1.442695
    %v5695 = vpow.pop %v5694
    %v5696 = vadd.f32 %v5695, 1.0
    %v5697 = vrcp.pop %v5696
    %v5698 = vmul.f32 1.0, %v5697
    %v5699 = vadd.f32 %v4803, %v5690
    %v5700 = vxor.u32 %v5699, 2147483648
    %v5701 = vmul.f32 %v5700, 1.442695
    %v5702 = vpow.pop %v5701
    %v5703 = vadd.f32 %v5702, 1.0
    %v5704 = vrcp.pop %v5703
    %v5705 = vmul.f32 1.0, %v5704
    %v5706 = vmul.f32 %v5705, %v4800
    %v5707 = vld [vmem:[#allocation9] sm:$0xff]
    %v5708 = vld [vmem:[#allocation9 + $0x8] sm:$0xff]
    %v5709 = vld [vmem:[#allocation9 + $0x10] sm:$0xff]
    %v5710 = vld [vmem:[#allocation9 + $0x18] sm:$0xff]
    %v5711 = vld [vmem:[#allocation9 + $0x20] sm:$0xff]
    %v5712 = vld [vmem:[#allocation9 + $0x28] sm:$0xff]
    %v5713 = vld [vmem:[#allocation9 + $0x30] sm:$0xff]
    %v5714 = vld [vmem:[#allocation9 + $0x38] sm:$0xff]
    %v5715 = vld [vmem:[#allocation9 + $0x40] sm:$0xff]
    %v5716 = vld [vmem:[#allocation9 + $0x48] sm:$0xff]
    %v5717 = vld [vmem:[#allocation9 + $0x50] sm:$0xff]
    %v5718 = vld [vmem:[#allocation9 + $0x58] sm:$0xff]
    %v5719 = vld [vmem:[#allocation9 + $0x60] sm:$0xff]
    %v5720 = vld [vmem:[#allocation9 + $0x68] sm:$0xff]
    %v5721 = vld [vmem:[#allocation9 + $0x70] sm:$0xff]
    %v5722 = vld [vmem:[#allocation9 + $0x78] sm:$0xff]
    %5723 = vmatprep.subr.mxu0 0.0
    %v5724 = vand.u32 %v5707, 4294901760
    %5725 = vmatpush1.msra.mxu0 %v5724
    %5726 = vmatprep.subr.mxu0 0.0
    %v5727 = vand.u32 %v5708, 4294901760
    %5728 = vmatpush1.msra.mxu0 %v5727
    %5729 = vmatprep.subr.mxu0 0.0
    %v5730 = vand.u32 %v5709, 4294901760
    %5731 = vmatpush1.msra.mxu0 %v5730
    %5732 = vmatprep.subr.mxu0 0.0
    %v5733 = vand.u32 %v5710, 4294901760
    %5734 = vmatpush1.msra.mxu0 %v5733
    %5735 = vmatprep.subr.mxu0 0.0
    %v5736 = vand.u32 %v5711, 4294901760
    %5737 = vmatpush1.msra.mxu0 %v5736
    %5738 = vmatprep.subr.mxu0 0.0
    %v5739 = vand.u32 %v5712, 4294901760
    %5740 = vmatpush1.msra.mxu0 %v5739
    %5741 = vmatprep.subr.mxu0 0.0
    %v5742 = vand.u32 %v5713, 4294901760
    %5743 = vmatpush1.msra.mxu0 %v5742
    %5744 = vmatprep.subr.mxu0 0.0
    %v5745 = vand.u32 %v5714, 4294901760
    %5746 = vmatpush1.msra.mxu0 %v5745
    %5747 = vmatprep.subr.mxu0 0.0
    %v5748 = vand.u32 %v5715, 4294901760
    %5749 = vmatpush1.msra.mxu0 %v5748
    %5750 = vmatprep.subr.mxu0 0.0
    %v5751 = vand.u32 %v5716, 4294901760
    %5752 = vmatpush1.msra.mxu0 %v5751
    %5753 = vmatprep.subr.mxu0 0.0
    %v5754 = vand.u32 %v5717, 4294901760
    %5755 = vmatpush1.msra.mxu0 %v5754
    %5756 = vmatprep.subr.mxu0 0.0
    %v5757 = vand.u32 %v5718, 4294901760
    %5758 = vmatpush1.msra.mxu0 %v5757
    %5759 = vmatprep.subr.mxu0 0.0
    %v5760 = vand.u32 %v5719, 4294901760
    %5761 = vmatpush1.msra.mxu0 %v5760
    %5762 = vmatprep.subr.mxu0 0.0
    %v5763 = vand.u32 %v5720, 4294901760
    %5764 = vmatpush1.msra.mxu0 %v5763
    %5765 = vmatprep.subr.mxu0 0.0
    %v5766 = vand.u32 %v5721, 4294901760
    %5767 = vmatpush1.msra.mxu0 %v5766
    %5768 = vmatprep.subr.mxu0 0.0
    %v5769 = vand.u32 %v5722, 4294901760
    %5770 = vmatpush1.msra.mxu0 %v5769
    %5771 = vmatprep.subr.mxu0 0.0
    %5772 = vmatpush1.msra.mxu0 0.0
    %5773 = vmatprep.subr.mxu0 0.0
    %5774 = vmatpush1.msra.mxu0 0.0
    %5775 = vmatprep.subr.mxu0 0.0
    %5776 = vmatpush1.msra.mxu0 0.0
    %5777 = vmatprep.subr.mxu0 0.0
    %5778 = vmatpush1.msra.mxu0 0.0
    %5779 = vmatprep.subr.mxu0 0.0
    %5780 = vmatpush1.msra.mxu0 0.0
    %5781 = vmatprep.subr.mxu0 0.0
    %5782 = vmatpush1.msra.mxu0 0.0
    %5783 = vmatprep.subr.mxu0 0.0
    %5784 = vmatpush1.msra.mxu0 0.0
    %5785 = vmatprep.subr.mxu0 0.0
    %5786 = vmatpush1.msra.mxu0 0.0
    %5787 = vmatprep.subr.mxu0 0.0
    %5788 = vmatpush1.msra.mxu0 0.0
    %5789 = vmatprep.subr.mxu0 0.0
    %5790 = vmatpush1.msra.mxu0 0.0
    %5791 = vmatprep.subr.mxu0 0.0
    %5792 = vmatpush1.msra.mxu0 0.0
    %5793 = vmatprep.subr.mxu0 0.0
    %5794 = vmatpush1.msra.mxu0 0.0
    %5795 = vmatprep.subr.mxu0 0.0
    %5796 = vmatpush1.msra.mxu0 0.0
    %5797 = vmatprep.subr.mxu0 0.0
    %5798 = vmatpush1.msra.mxu0 0.0
    %5799 = vmatprep.subr.mxu0 0.0
    %5800 = vmatpush1.msra.mxu0 0.0
    %5801 = vmatprep.subr.mxu0 0.0
    %5802 = vmatpush1.msra.mxu0 0.0
    %5803 = vmatprep.mubr.f32.mxu0 0.0
    %v5804 = vand.u32 %v5706, 4294901760
    %v5805 = vsub.f32 %v5706, %v5804
    %v5806 = vand.u32 %v5805, 4294901760
    %v5807 = vsub.f32 %v5805, %v5806
    %v5808 = vand.u32 %v5807, 4294901760
    %5809 = vmatmul.mubr.f32.gmra.mrb[0].mxu0 %v5808
    %v5810 = vpop.f32.mrb[0].mxu0
    %v5811 = vadd.f32 0.0, %v5810
    %v5812 = vpop.f32.mrb[0].mxu0
    %5813 = vdwg.mxu0
    %5814 = vmatprep.subr.mxu0 0.0
    %v5815 = vand.u32 %v5707, 4294901760
    %v5816 = vsub.f32 %v5707, %v5815
    %v5817 = vand.u32 %v5816, 4294901760
    %v5818 = vsub.f32 %v5816, %v5817
    %v5819 = vand.u32 %v5818, 4294901760
    %5820 = vmatpush1.msra.mxu0 %v5819
    %5821 = vmatprep.subr.mxu0 0.0
    %v5822 = vand.u32 %v5708, 4294901760
    %v5823 = vsub.f32 %v5708, %v5822
    %v5824 = vand.u32 %v5823, 4294901760
    %v5825 = vsub.f32 %v5823, %v5824
    %v5826 = vand.u32 %v5825, 4294901760
    %5827 = vmatpush1.msra.mxu0 %v5826
    %5828 = vmatprep.subr.mxu0 0.0
    %v5829 = vand.u32 %v5709, 4294901760
    %v5830 = vsub.f32 %v5709, %v5829
    %v5831 = vand.u32 %v5830, 4294901760
    %v5832 = vsub.f32 %v5830, %v5831
    %v5833 = vand.u32 %v5832, 4294901760
    %5834 = vmatpush1.msra.mxu0 %v5833
    %5835 = vmatprep.subr.mxu0 0.0
    %v5836 = vand.u32 %v5710, 4294901760
    %v5837 = vsub.f32 %v5710, %v5836
    %v5838 = vand.u32 %v5837, 4294901760
    %v5839 = vsub.f32 %v5837, %v5838
    %v5840 = vand.u32 %v5839, 4294901760
    %5841 = vmatpush1.msra.mxu0 %v5840
    %5842 = vmatprep.subr.mxu0 0.0
    %v5843 = vand.u32 %v5711, 4294901760
    %v5844 = vsub.f32 %v5711, %v5843
    %v5845 = vand.u32 %v5844, 4294901760
    %v5846 = vsub.f32 %v5844, %v5845
    %v5847 = vand.u32 %v5846, 4294901760
    %5848 = vmatpush1.msra.mxu0 %v5847
    %5849 = vmatprep.subr.mxu0 0.0
    %v5850 = vand.u32 %v5712, 4294901760
    %v5851 = vsub.f32 %v5712, %v5850
    %v5852 = vand.u32 %v5851, 4294901760
    %v5853 = vsub.f32 %v5851, %v5852
    %v5854 = vand.u32 %v5853, 4294901760
    %5855 = vmatpush1.msra.mxu0 %v5854
    %5856 = vmatprep.subr.mxu0 0.0
    %v5857 = vand.u32 %v5713, 4294901760
    %v5858 = vsub.f32 %v5713, %v5857
    %v5859 = vand.u32 %v5858, 4294901760
    %v5860 = vsub.f32 %v5858, %v5859
    %v5861 = vand.u32 %v5860, 4294901760
    %5862 = vmatpush1.msra.mxu0 %v5861
    %5863 = vmatprep.subr.mxu0 0.0
    %v5864 = vand.u32 %v5714, 4294901760
    %v5865 = vsub.f32 %v5714, %v5864
    %v5866 = vand.u32 %v5865, 4294901760
    %v5867 = vsub.f32 %v5865, %v5866
    %v5868 = vand.u32 %v5867, 4294901760
    %5869 = vmatpush1.msra.mxu0 %v5868
    %5870 = vmatprep.subr.mxu0 0.0
    %v5871 = vand.u32 %v5715, 4294901760
    %v5872 = vsub.f32 %v5715, %v5871
    %v5873 = vand.u32 %v5872, 4294901760
    %v5874 = vsub.f32 %v5872, %v5873
    %v5875 = vand.u32 %v5874, 4294901760
    %5876 = vmatpush1.msra.mxu0 %v5875
    %5877 = vmatprep.subr.mxu0 0.0
    %v5878 = vand.u32 %v5716, 4294901760
    %v5879 = vsub.f32 %v5716, %v5878
    %v5880 = vand.u32 %v5879, 4294901760
    %v5881 = vsub.f32 %v5879, %v5880
    %v5882 = vand.u32 %v5881, 4294901760
    %5883 = vmatpush1.msra.mxu0 %v5882
    %5884 = vmatprep.subr.mxu0 0.0
    %v5885 = vand.u32 %v5717, 4294901760
    %v5886 = vsub.f32 %v5717, %v5885
    %v5887 = vand.u32 %v5886, 4294901760
    %v5888 = vsub.f32 %v5886, %v5887
    %v5889 = vand.u32 %v5888, 4294901760
    %5890 = vmatpush1.msra.mxu0 %v5889
    %5891 = vmatprep.subr.mxu0 0.0
    %v5892 = vand.u32 %v5718, 4294901760
    %v5893 = vsub.f32 %v5718, %v5892
    %v5894 = vand.u32 %v5893, 4294901760
    %v5895 = vsub.f32 %v5893, %v5894
    %v5896 = vand.u32 %v5895, 4294901760
    %5897 = vmatpush1.msra.mxu0 %v5896
    %5898 = vmatprep.subr.mxu0 0.0
    %v5899 = vand.u32 %v5719, 4294901760
    %v5900 = vsub.f32 %v5719, %v5899
    %v5901 = vand.u32 %v5900, 4294901760
    %v5902 = vsub.f32 %v5900, %v5901
    %v5903 = vand.u32 %v5902, 4294901760
    %5904 = vmatpush1.msra.mxu0 %v5903
    %5905 = vmatprep.subr.mxu0 0.0
    %v5906 = vand.u32 %v5720, 4294901760
    %v5907 = vsub.f32 %v5720, %v5906
    %v5908 = vand.u32 %v5907, 4294901760
    %v5909 = vsub.f32 %v5907, %v5908
    %v5910 = vand.u32 %v5909, 4294901760
    %5911 = vmatpush1.msra.mxu0 %v5910
    %5912 = vmatprep.subr.mxu0 0.0
    %v5913 = vand.u32 %v5721, 4294901760
    %v5914 = vsub.f32 %v5721, %v5913
    %v5915 = vand.u32 %v5914, 4294901760
    %v5916 = vsub.f32 %v5914, %v5915
    %v5917 = vand.u32 %v5916, 4294901760
    %5918 = vmatpush1.msra.mxu0 %v5917
    %5919 = vmatprep.subr.mxu0 0.0
    %v5920 = vand.u32 %v5722, 4294901760
    %v5921 = vsub.f32 %v5722, %v5920
    %v5922 = vand.u32 %v5921, 4294901760
    %v5923 = vsub.f32 %v5921, %v5922
    %v5924 = vand.u32 %v5923, 4294901760
    %5925 = vmatpush1.msra.mxu0 %v5924
    %5926 = vmatprep.subr.mxu0 0.0
    %5927 = vmatpush1.msra.mxu0 0.0
    %5928 = vmatprep.subr.mxu0 0.0
    %5929 = vmatpush1.msra.mxu0 0.0
    %5930 = vmatprep.subr.mxu0 0.0
    %5931 = vmatpush1.msra.mxu0 0.0
    %5932 = vmatprep.subr.mxu0 0.0
    %5933 = vmatpush1.msra.mxu0 0.0
    %5934 = vmatprep.subr.mxu0 0.0
    %5935 = vmatpush1.msra.mxu0 0.0
    %5936 = vmatprep.subr.mxu0 0.0
    %5937 = vmatpush1.msra.mxu0 0.0
    %5938 = vmatprep.subr.mxu0 0.0
    %5939 = vmatpush1.msra.mxu0 0.0
    %5940 = vmatprep.subr.mxu0 0.0
    %5941 = vmatpush1.msra.mxu0 0.0
    %5942 = vmatprep.subr.mxu0 0.0
    %5943 = vmatpush1.msra.mxu0 0.0
    %5944 = vmatprep.subr.mxu0 0.0
    %5945 = vmatpush1.msra.mxu0 0.0
    %5946 = vmatprep.subr.mxu0 0.0
    %5947 = vmatpush1.msra.mxu0 0.0
    %5948 = vmatprep.subr.mxu0 0.0
    %5949 = vmatpush1.msra.mxu0 0.0
    %5950 = vmatprep.subr.mxu0 0.0
    %5951 = vmatpush1.msra.mxu0 0.0
    %5952 = vmatprep.subr.mxu0 0.0
    %5953 = vmatpush1.msra.mxu0 0.0
    %5954 = vmatprep.subr.mxu0 0.0
    %5955 = vmatpush1.msra.mxu0 0.0
    %5956 = vmatprep.subr.mxu0 0.0
    %5957 = vmatpush1.msra.mxu0 0.0
    %5958 = vmatprep.mubr.f32.mxu0 0.0
    %v5959 = vand.u32 %v5706, 4294901760
    %5960 = vmatmul.mubr.f32.gmra.mrb[0].mxu0 %v5959
    %v5961 = vpop.f32.mrb[0].mxu0
    %v5962 = vadd.f32 %v5811, %v5961
    %v5963 = vpop.f32.mrb[0].mxu0
    %5964 = vdwg.mxu0
    %5965 = vmatprep.subr.mxu0 0.0
    %v5966 = vand.u32 %v5707, 4294901760
    %v5967 = vsub.f32 %v5707, %v5966
    %5968 = vmatpush1.msra.mxu0 %v5967
    %5969 = vmatprep.subr.mxu0 0.0
    %v5970 = vand.u32 %v5708, 4294901760
    %v5971 = vsub.f32 %v5708, %v5970
    %5972 = vmatpush1.msra.mxu0 %v5971
    %5973 = vmatprep.subr.mxu0 0.0
    %v5974 = vand.u32 %v5709, 4294901760
    %v5975 = vsub.f32 %v5709, %v5974
    %5976 = vmatpush1.msra.mxu0 %v5975
    %5977 = vmatprep.subr.mxu0 0.0
    %v5978 = vand.u32 %v5710, 4294901760
    %v5979 = vsub.f32 %v5710, %v5978
    %5980 = vmatpush1.msra.mxu0 %v5979
    %5981 = vmatprep.subr.mxu0 0.0
    %v5982 = vand.u32 %v5711, 4294901760
    %v5983 = vsub.f32 %v5711, %v5982
    %5984 = vmatpush1.msra.mxu0 %v5983
    %5985 = vmatprep.subr.mxu0 0.0
    %v5986 = vand.u32 %v5712, 4294901760
    %v5987 = vsub.f32 %v5712, %v5986
    %5988 = vmatpush1.msra.mxu0 %v5987
    %5989 = vmatprep.subr.mxu0 0.0
    %v5990 = vand.u32 %v5713, 4294901760
    %v5991 = vsub.f32 %v5713, %v5990
    %5992 = vmatpush1.msra.mxu0 %v5991
    %5993 = vmatprep.subr.mxu0 0.0
    %v5994 = vand.u32 %v5714, 4294901760
    %v5995 = vsub.f32 %v5714, %v5994
    %5996 = vmatpush1.msra.mxu0 %v5995
    %5997 = vmatprep.subr.mxu0 0.0
    %v5998 = vand.u32 %v5715, 4294901760
    %v5999 = vsub.f32 %v5715, %v5998
    %6000 = vmatpush1.msra.mxu0 %v5999
    %6001 = vmatprep.subr.mxu0 0.0
    %v6002 = vand.u32 %v5716, 4294901760
    %v6003 = vsub.f32 %v5716, %v6002
    %6004 = vmatpush1.msra.mxu0 %v6003
    %6005 = vmatprep.subr.mxu0 0.0
    %v6006 = vand.u32 %v5717, 4294901760
    %v6007 = vsub.f32 %v5717, %v6006
    %6008 = vmatpush1.msra.mxu0 %v6007
    %6009 = vmatprep.subr.mxu0 0.0
    %v6010 = vand.u32 %v5718, 4294901760
    %v6011 = vsub.f32 %v5718, %v6010
    %6012 = vmatpush1.msra.mxu0 %v6011
    %6013 = vmatprep.subr.mxu0 0.0
    %v6014 = vand.u32 %v5719, 4294901760
    %v6015 = vsub.f32 %v5719, %v6014
    %6016 = vmatpush1.msra.mxu0 %v6015
    %6017 = vmatprep.subr.mxu0 0.0
    %v6018 = vand.u32 %v5720, 4294901760
    %v6019 = vsub.f32 %v5720, %v6018
    %6020 = vmatpush1.msra.mxu0 %v6019
    %6021 = vmatprep.subr.mxu0 0.0
    %v6022 = vand.u32 %v5721, 4294901760
    %v6023 = vsub.f32 %v5721, %v6022
    %6024 = vmatpush1.msra.mxu0 %v6023
    %6025 = vmatprep.subr.mxu0 0.0
    %v6026 = vand.u32 %v5722, 4294901760
    %v6027 = vsub.f32 %v5722, %v6026
    %6028 = vmatpush1.msra.mxu0 %v6027
    %6029 = vmatprep.subr.mxu0 0.0
    %6030 = vmatpush1.msra.mxu0 0.0
    %6031 = vmatprep.subr.mxu0 0.0
    %6032 = vmatpush1.msra.mxu0 0.0
    %6033 = vmatprep.subr.mxu0 0.0
    %6034 = vmatpush1.msra.mxu0 0.0
    %6035 = vmatprep.subr.mxu0 0.0
    %6036 = vmatpush1.msra.mxu0 0.0
    %6037 = vmatprep.subr.mxu0 0.0
    %6038 = vmatpush1.msra.mxu0 0.0
    %6039 = vmatprep.subr.mxu0 0.0
    %6040 = vmatpush1.msra.mxu0 0.0
    %6041 = vmatprep.subr.mxu0 0.0
    %6042 = vmatpush1.msra.mxu0 0.0
    %6043 = vmatprep.subr.mxu0 0.0
    %6044 = vmatpush1.msra.mxu0 0.0
    %6045 = vmatprep.subr.mxu0 0.0
    %6046 = vmatpush1.msra.mxu0 0.0
    %6047 = vmatprep.subr.mxu0 0.0
    %6048 = vmatpush1.msra.mxu0 0.0
    %6049 = vmatprep.subr.mxu0 0.0
    %6050 = vmatpush1.msra.mxu0 0.0
    %6051 = vmatprep.subr.mxu0 0.0
    %6052 = vmatpush1.msra.mxu0 0.0
    %6053 = vmatprep.subr.mxu0 0.0
    %6054 = vmatpush1.msra.mxu0 0.0
    %6055 = vmatprep.subr.mxu0 0.0
    %6056 = vmatpush1.msra.mxu0 0.0
    %6057 = vmatprep.subr.mxu0 0.0
    %6058 = vmatpush1.msra.mxu0 0.0
    %6059 = vmatprep.subr.mxu0 0.0
    %6060 = vmatpush1.msra.mxu0 0.0
    %6061 = vmatprep.mubr.f32.mxu0 0.0
    %v6062 = vand.u32 %v5706, 4294901760
    %v6063 = vsub.f32 %v5706, %v6062
    %6064 = vmatmul.mubr.f32.gmra.mrb[0].mxu0 %v6063
    %v6065 = vpop.f32.mrb[0].mxu0
    %v6066 = vadd.f32 %v5962, %v6065
    %v6067 = vpop.f32.mrb[0].mxu0
    %6068 = vdwg.mxu0
    %6069 = vmatprep.subr.mxu0 0.0
    %v6070 = vand.u32 %v5707, 4294901760
    %6071 = vmatpush1.msra.mxu0 %v6070
    %6072 = vmatprep.subr.mxu0 0.0
    %v6073 = vand.u32 %v5708, 4294901760
    %6074 = vmatpush1.msra.mxu0 %v6073
    %6075 = vmatprep.subr.mxu0 0.0
    %v6076 = vand.u32 %v5709, 4294901760
    %6077 = vmatpush1.msra.mxu0 %v6076
    %6078 = vmatprep.subr.mxu0 0.0
    %v6079 = vand.u32 %v5710, 4294901760
    %6080 = vmatpush1.msra.mxu0 %v6079
    %6081 = vmatprep.subr.mxu0 0.0
    %v6082 = vand.u32 %v5711, 4294901760
    %6083 = vmatpush1.msra.mxu0 %v6082
    %6084 = vmatprep.subr.mxu0 0.0
    %v6085 = vand.u32 %v5712, 4294901760
    %6086 = vmatpush1.msra.mxu0 %v6085
    %6087 = vmatprep.subr.mxu0 0.0
    %v6088 = vand.u32 %v5713, 4294901760
    %6089 = vmatpush1.msra.mxu0 %v6088
    %6090 = vmatprep.subr.mxu0 0.0
    %v6091 = vand.u32 %v5714, 4294901760
    %6092 = vmatpush1.msra.mxu0 %v6091
    %6093 = vmatprep.subr.mxu0 0.0
    %v6094 = vand.u32 %v5715, 4294901760
    %6095 = vmatpush1.msra.mxu0 %v6094
    %6096 = vmatprep.subr.mxu0 0.0
    %v6097 = vand.u32 %v5716, 4294901760
    %6098 = vmatpush1.msra.mxu0 %v6097
    %6099 = vmatprep.subr.mxu0 0.0
    %v6100 = vand.u32 %v5717, 4294901760
    %6101 = vmatpush1.msra.mxu0 %v6100
    %6102 = vmatprep.subr.mxu0 0.0
    %v6103 = vand.u32 %v5718, 4294901760
    %6104 = vmatpush1.msra.mxu0 %v6103
    %6105 = vmatprep.subr.mxu0 0.0
    %v6106 = vand.u32 %v5719, 4294901760
    %6107 = vmatpush1.msra.mxu0 %v6106
    %6108 = vmatprep.subr.mxu0 0.0
    %v6109 = vand.u32 %v5720, 4294901760
    %6110 = vmatpush1.msra.mxu0 %v6109
    %6111 = vmatprep.subr.mxu0 0.0
    %v6112 = vand.u32 %v5721, 4294901760
    %6113 = vmatpush1.msra.mxu0 %v6112
    %6114 = vmatprep.subr.mxu0 0.0
    %v6115 = vand.u32 %v5722, 4294901760
    %6116 = vmatpush1.msra.mxu0 %v6115
    %6117 = vmatprep.subr.mxu0 0.0
    %6118 = vmatpush1.msra.mxu0 0.0
    %6119 = vmatprep.subr.mxu0 0.0
    %6120 = vmatpush1.msra.mxu0 0.0
    %6121 = vmatprep.subr.mxu0 0.0
    %6122 = vmatpush1.msra.mxu0 0.0
    %6123 = vmatprep.subr.mxu0 0.0
    %6124 = vmatpush1.msra.mxu0 0.0
    %6125 = vmatprep.subr.mxu0 0.0
    %6126 = vmatpush1.msra.mxu0 0.0
    %6127 = vmatprep.subr.mxu0 0.0
    %6128 = vmatpush1.msra.mxu0 0.0
    %6129 = vmatprep.subr.mxu0 0.0
    %6130 = vmatpush1.msra.mxu0 0.0
    %6131 = vmatprep.subr.mxu0 0.0
    %6132 = vmatpush1.msra.mxu0 0.0
    %6133 = vmatprep.subr.mxu0 0.0
    %6134 = vmatpush1.msra.mxu0 0.0
    %6135 = vmatprep.subr.mxu0 0.0
    %6136 = vmatpush1.msra.mxu0 0.0
    %6137 = vmatprep.subr.mxu0 0.0
    %6138 = vmatpush1.msra.mxu0 0.0
    %6139 = vmatprep.subr.mxu0 0.0
    %6140 = vmatpush1.msra.mxu0 0.0
    %6141 = vmatprep.subr.mxu0 0.0
    %6142 = vmatpush1.msra.mxu0 0.0
    %6143 = vmatprep.subr.mxu0 0.0
    %6144 = vmatpush1.msra.mxu0 0.0
    %6145 = vmatprep.subr.mxu0 0.0
    %6146 = vmatpush1.msra.mxu0 0.0
    %6147 = vmatprep.subr.mxu0 0.0
    %6148 = vmatpush1.msra.mxu0 0.0
    %6149 = vmatprep.mubr.f32.mxu0 0.0
    %v6150 = vand.u32 %v5706, 4294901760
    %v6151 = vsub.f32 %v5706, %v6150
    %v6152 = vand.u32 %v6151, 4294901760
    %6153 = vmatmul.mubr.f32.gmra.mrb[0].mxu0 %v6152
    %v6154 = vpop.f32.mrb[0].mxu0
    %v6155 = vadd.f32 %v6066, %v6154
    %v6156 = vpop.f32.mrb[0].mxu0
    %6157 = vdwg.mxu0
    %6158 = vmatprep.subr.mxu0 0.0
    %v6159 = vand.u32 %v5707, 4294901760
    %v6160 = vsub.f32 %v5707, %v6159
    %v6161 = vand.u32 %v6160, 4294901760
    %6162 = vmatpush1.msra.mxu0 %v6161
    %6163 = vmatprep.subr.mxu0 0.0
    %v6164 = vand.u32 %v5708, 4294901760
    %v6165 = vsub.f32 %v5708, %v6164
    %v6166 = vand.u32 %v6165, 4294901760
    %6167 = vmatpush1.msra.mxu0 %v6166
    %6168 = vmatprep.subr.mxu0 0.0
    %v6169 = vand.u32 %v5709, 4294901760
    %v6170 = vsub.f32 %v5709, %v6169
    %v6171 = vand.u32 %v6170, 4294901760
    %6172 = vmatpush1.msra.mxu0 %v6171
    %6173 = vmatprep.subr.mxu0 0.0
    %v6174 = vand.u32 %v5710, 4294901760
    %v6175 = vsub.f32 %v5710, %v6174
    %v6176 = vand.u32 %v6175, 4294901760
    %6177 = vmatpush1.msra.mxu0 %v6176
    %6178 = vmatprep.subr.mxu0 0.0
    %v6179 = vand.u32 %v5711, 4294901760
    %v6180 = vsub.f32 %v5711, %v6179
    %v6181 = vand.u32 %v6180, 4294901760
    %6182 = vmatpush1.msra.mxu0 %v6181
    %6183 = vmatprep.subr.mxu0 0.0
    %v6184 = vand.u32 %v5712, 4294901760
    %v6185 = vsub.f32 %v5712, %v6184
    %v6186 = vand.u32 %v6185, 4294901760
    %6187 = vmatpush1.msra.mxu0 %v6186
    %6188 = vmatprep.subr.mxu0 0.0
    %v6189 = vand.u32 %v5713, 4294901760
    %v6190 = vsub.f32 %v5713, %v6189
    %v6191 = vand.u32 %v6190, 4294901760
    %6192 = vmatpush1.msra.mxu0 %v6191
    %6193 = vmatprep.subr.mxu0 0.0
    %v6194 = vand.u32 %v5714, 4294901760
    %v6195 = vsub.f32 %v5714, %v6194
    %v6196 = vand.u32 %v6195, 4294901760
    %6197 = vmatpush1.msra.mxu0 %v6196
    %6198 = vmatprep.subr.mxu0 0.0
    %v6199 = vand.u32 %v5715, 4294901760
    %v6200 = vsub.f32 %v5715, %v6199
    %v6201 = vand.u32 %v6200, 4294901760
    %6202 = vmatpush1.msra.mxu0 %v6201
    %6203 = vmatprep.subr.mxu0 0.0
    %v6204 = vand.u32 %v5716, 4294901760
    %v6205 = vsub.f32 %v5716, %v6204
    %v6206 = vand.u32 %v6205, 4294901760
    %6207 = vmatpush1.msra.mxu0 %v6206
    %6208 = vmatprep.subr.mxu0 0.0
    %v6209 = vand.u32 %v5717, 4294901760
    %v6210 = vsub.f32 %v5717, %v6209
    %v6211 = vand.u32 %v6210, 4294901760
    %6212 = vmatpush1.msra.mxu0 %v6211
    %6213 = vmatprep.subr.mxu0 0.0
    %v6214 = vand.u32 %v5718, 4294901760
    %v6215 = vsub.f32 %v5718, %v6214
    %v6216 = vand.u32 %v6215, 4294901760
    %6217 = vmatpush1.msra.mxu0 %v6216
    %6218 = vmatprep.subr.mxu0 0.0
    %v6219 = vand.u32 %v5719, 4294901760
    %v6220 = vsub.f32 %v5719, %v6219
    %v6221 = vand.u32 %v6220, 4294901760
    %6222 = vmatpush1.msra.mxu0 %v6221
    %6223 = vmatprep.subr.mxu0 0.0
    %v6224 = vand.u32 %v5720, 4294901760
    %v6225 = vsub.f32 %v5720, %v6224
    %v6226 = vand.u32 %v6225, 4294901760
    %6227 = vmatpush1.msra.mxu0 %v6226
    %6228 = vmatprep.subr.mxu0 0.0
    %v6229 = vand.u32 %v5721, 4294901760
    %v6230 = vsub.f32 %v5721, %v6229
    %v6231 = vand.u32 %v6230, 4294901760
    %6232 = vmatpush1.msra.mxu0 %v6231
    %6233 = vmatprep.subr.mxu0 0.0
    %v6234 = vand.u32 %v5722, 4294901760
    %v6235 = vsub.f32 %v5722, %v6234
    %v6236 = vand.u32 %v6235, 4294901760
    %6237 = vmatpush1.msra.mxu0 %v6236
    %6238 = vmatprep.subr.mxu0 0.0
    %6239 = vmatpush1.msra.mxu0 0.0
    %6240 = vmatprep.subr.mxu0 0.0
    %6241 = vmatpush1.msra.mxu0 0.0
    %6242 = vmatprep.subr.mxu0 0.0
    %6243 = vmatpush1.msra.mxu0 0.0
    %6244 = vmatprep.subr.mxu0 0.0
    %6245 = vmatpush1.msra.mxu0 0.0
    %6246 = vmatprep.subr.mxu0 0.0
    %6247 = vmatpush1.msra.mxu0 0.0
    %6248 = vmatprep.subr.mxu0 0.0
    %6249 = vmatpush1.msra.mxu0 0.0
    %6250 = vmatprep.subr.mxu0 0.0
    %6251 = vmatpush1.msra.mxu0 0.0
    %6252 = vmatprep.subr.mxu0 0.0
    %6253 = vmatpush1.msra.mxu0 0.0
    %6254 = vmatprep.subr.mxu0 0.0
    %6255 = vmatpush1.msra.mxu0 0.0
    %6256 = vmatprep.subr.mxu0 0.0
    %6257 = vmatpush1.msra.mxu0 0.0
    %6258 = vmatprep.subr.mxu0 0.0
    %6259 = vmatpush1.msra.mxu0 0.0
    %6260 = vmatprep.subr.mxu0 0.0
    %6261 = vmatpush1.msra.mxu0 0.0
    %6262 = vmatprep.subr.mxu0 0.0
    %6263 = vmatpush1.msra.mxu0 0.0
    %6264 = vmatprep.subr.mxu0 0.0
    %6265 = vmatpush1.msra.mxu0 0.0
    %6266 = vmatprep.subr.mxu0 0.0
    %6267 = vmatpush1.msra.mxu0 0.0
    %6268 = vmatprep.subr.mxu0 0.0
    %6269 = vmatpush1.msra.mxu0 0.0
    %6270 = vmatprep.mubr.f32.mxu0 0.0
    %v6271 = vand.u32 %v5706, 4294901760
    %6272 = vmatmul.mubr.f32.gmra.mrb[0].mxu0 %v6271
    %v6273 = vpop.f32.mrb[0].mxu0
    %v6274 = vadd.f32 %v6155, %v6273
    %v6275 = vpop.f32.mrb[0].mxu0
    %6276 = vdwg.mxu0
    %6277 = vmatprep.subr.mxu0 0.0
    %v6278 = vand.u32 %v5707, 4294901760
    %6279 = vmatpush1.msra.mxu0 %v6278
    %6280 = vmatprep.subr.mxu0 0.0
    %v6281 = vand.u32 %v5708, 4294901760
    %6282 = vmatpush1.msra.mxu0 %v6281
    %6283 = vmatprep.subr.mxu0 0.0
    %v6284 = vand.u32 %v5709, 4294901760
    %6285 = vmatpush1.msra.mxu0 %v6284
    %6286 = vmatprep.subr.mxu0 0.0
    %v6287 = vand.u32 %v5710, 4294901760
    %6288 = vmatpush1.msra.mxu0 %v6287
    %6289 = vmatprep.subr.mxu0 0.0
    %v6290 = vand.u32 %v5711, 4294901760
    %6291 = vmatpush1.msra.mxu0 %v6290
    %6292 = vmatprep.subr.mxu0 0.0
    %v6293 = vand.u32 %v5712, 4294901760
    %6294 = vmatpush1.msra.mxu0 %v6293
    %6295 = vmatprep.subr.mxu0 0.0
    %v6296 = vand.u32 %v5713, 4294901760
    %6297 = vmatpush1.msra.mxu0 %v6296
    %6298 = vmatprep.subr.mxu0 0.0
    %v6299 = vand.u32 %v5714, 4294901760
    %6300 = vmatpush1.msra.mxu0 %v6299
    %6301 = vmatprep.subr.mxu0 0.0
    %v6302 = vand.u32 %v5715, 4294901760
    %6303 = vmatpush1.msra.mxu0 %v6302
    %6304 = vmatprep.subr.mxu0 0.0
    %v6305 = vand.u32 %v5716, 4294901760
    %6306 = vmatpush1.msra.mxu0 %v6305
    %6307 = vmatprep.subr.mxu0 0.0
    %v6308 = vand.u32 %v5717, 4294901760
    %6309 = vmatpush1.msra.mxu0 %v6308
    %6310 = vmatprep.subr.mxu0 0.0
    %v6311 = vand.u32 %v5718, 4294901760
    %6312 = vmatpush1.msra.mxu0 %v6311
    %6313 = vmatprep.subr.mxu0 0.0
    %v6314 = vand.u32 %v5719, 4294901760
    %6315 = vmatpush1.msra.mxu0 %v6314
    %6316 = vmatprep.subr.mxu0 0.0
    %v6317 = vand.u32 %v5720, 4294901760
    %6318 = vmatpush1.msra.mxu0 %v6317
    %6319 = vmatprep.subr.mxu0 0.0
    %v6320 = vand.u32 %v5721, 4294901760
    %6321 = vmatpush1.msra.mxu0 %v6320
    %6322 = vmatprep.subr.mxu0 0.0
    %v6323 = vand.u32 %v5722, 4294901760
    %6324 = vmatpush1.msra.mxu0 %v6323
    %6325 = vmatprep.subr.mxu0 0.0
    %6326 = vmatpush1.msra.mxu0 0.0
    %6327 = vmatprep.subr.mxu0 0.0
    %6328 = vmatpush1.msra.mxu0 0.0
    %6329 = vmatprep.subr.mxu0 0.0
    %6330 = vmatpush1.msra.mxu0 0.0
    %6331 = vmatprep.subr.mxu0 0.0
    %6332 = vmatpush1.msra.mxu0 0.0
    %6333 = vmatprep.subr.mxu0 0.0
    %6334 = vmatpush1.msra.mxu0 0.0
    %6335 = vmatprep.subr.mxu0 0.0
    %6336 = vmatpush1.msra.mxu0 0.0
    %6337 = vmatprep.subr.mxu0 0.0
    %6338 = vmatpush1.msra.mxu0 0.0
    %6339 = vmatprep.subr.mxu0 0.0
    %6340 = vmatpush1.msra.mxu0 0.0
    %6341 = vmatprep.subr.mxu0 0.0
    %6342 = vmatpush1.msra.mxu0 0.0
    %6343 = vmatprep.subr.mxu0 0.0
    %6344 = vmatpush1.msra.mxu0 0.0
    %6345 = vmatprep.subr.mxu0 0.0
    %6346 = vmatpush1.msra.mxu0 0.0
    %6347 = vmatprep.subr.mxu0 0.0
    %6348 = vmatpush1.msra.mxu0 0.0
    %6349 = vmatprep.subr.mxu0 0.0
    %6350 = vmatpush1.msra.mxu0 0.0
    %6351 = vmatprep.subr.mxu0 0.0
    %6352 = vmatpush1.msra.mxu0 0.0
    %6353 = vmatprep.subr.mxu0 0.0
    %6354 = vmatpush1.msra.mxu0 0.0
    %6355 = vmatprep.subr.mxu0 0.0
    %6356 = vmatpush1.msra.mxu0 0.0
    %6357 = vmatprep.mubr.f32.mxu0 0.0
    %v6358 = vand.u32 %v5706, 4294901760
    %6359 = vmatmul.mubr.f32.gmra.mrb[0].mxu0 %v6358
    %v6360 = vpop.f32.mrb[0].mxu0
    %v6361 = vadd.f32 %v6274, %v6360
    %v6362 = vpop.f32.mrb[0].mxu0
    %6363 = vdwg.mxu0
    %v6364 = vadd.f32 %v4804, %v6361
    %v6365 = vtanh.pop %v6364
    %v6366 = vsub.f32 1.0, %v5698
    %v6367 = vmul.f32 %v6366, %v4800
    %v6368 = vmul.f32 %v5698, %v6365
    %v6369 = vadd.f32 %v6367, %v6368
    %s6370 = scalar_lea.vmem [#allocation11], 24
    %6371 = vst [vmem:[%s6370] sm:$0xff] %v6369
    %s6372 = scalar_lea.vmem [#allocation6], 32
    %v6373 = vld [vmem:[%s6372] sm:$0xff]
    %v6374 = vmul.f32 %v6373, %v6369
    %s6375 = scalar_lea.vmem [#allocation3], 96
    %v6376 = vld [vmem:[%s6375] sm:$0xff]
    %v6377 = vld [vmem:[%s6375 + $0x8] sm:$0xff]
    %v6378 = vld [vmem:[%s6375 + $0x10] sm:$0xff]
    %v6379 = vld [vmem:[#allocation8] sm:$0xff]
    %v6380 = vld [vmem:[#allocation8 + $0x8] sm:$0xff]
    %v6381 = vld [vmem:[#allocation8 + $0x10] sm:$0xff]
    %v6382 = vld [vmem:[#allocation8 + $0x18] sm:$0xff]
    %v6383 = vld [vmem:[#allocation8 + $0x20] sm:$0xff]
    %v6384 = vld [vmem:[#allocation8 + $0x28] sm:$0xff]
    %v6385 = vld [vmem:[#allocation8 + $0x30] sm:$0xff]
    %v6386 = vld [vmem:[#allocation8 + $0x38] sm:$0xff]
    %v6387 = vld [vmem:[#allocation8 + $0x40] sm:$0xff]
    %v6388 = vld [vmem:[#allocation8 + $0x48] sm:$0xff]
    %v6389 = vld [vmem:[#allocation8 + $0x50] sm:$0xff]
    %v6390 = vld [vmem:[#allocation8 + $0x58] sm:$0xff]
    %v6391 = vld [vmem:[#allocation8 + $0x60] sm:$0xff]
    %v6392 = vld [vmem:[#allocation8 + $0x68] sm:$0xff]
    %v6393 = vld [vmem:[#allocation8 + $0x70] sm:$0xff]
    %v6394 = vld [vmem:[#allocation8 + $0x78] sm:$0xff]
    %v6395 = vld [vmem:[#allocation8 + $0x80] sm:$0xff]
    %v6396 = vld [vmem:[#allocation8 + $0x88] sm:$0xff]
    %v6397 = vld [vmem:[#allocation8 + $0x90] sm:$0xff]
    %v6398 = vld [vmem:[#allocation8 + $0x98] sm:$0xff]
    %v6399 = vld [vmem:[#allocation8 + $0xa0] sm:$0xff]
    %v6400 = vld [vmem:[#allocation8 + $0xa8] sm:$0xff]
    %v6401 = vld [vmem:[#allocation8 + $0xb0] sm:$0xff]
    %v6402 = vld [vmem:[#allocation8 + $0xb8] sm:$0xff]
    %v6403 = vld [vmem:[#allocation8 + $0xc0] sm:$0xff]
    %v6404 = vld [vmem:[#allocation8 + $0xc8] sm:$0xff]
    %v6405 = vld [vmem:[#allocation8 + $0xd0] sm:$0xff]
    %v6406 = vld [vmem:[#allocation8 + $0xd8] sm:$0xff]
    %v6407 = vld [vmem:[#allocation8 + $0xe0] sm:$0xff]
    %v6408 = vld [vmem:[#allocation8 + $0xe8] sm:$0xff]
    %v6409 = vld [vmem:[#allocation8 + $0xf0] sm:$0xff]
    %v6410 = vld [vmem:[#allocation8 + $0xf8] sm:$0xff]
    %v6411 = vand.u32 %v6380, 4294901760
    %6412 = vmatprep.subr.mxu0 %v6411
    %v6413 = vand.u32 %v6379, 4294901760
    %6414 = vmatpush1.msra.mxu0 %v6413
    %v6415 = vand.u32 %v6382, 4294901760
    %6416 = vmatprep.subr.mxu0 %v6415
    %v6417 = vand.u32 %v6381, 4294901760
    %6418 = vmatpush1.msra.mxu0 %v6417
    %v6419 = vand.u32 %v6384, 4294901760
    %6420 = vmatprep.subr.mxu0 %v6419
    %v6421 = vand.u32 %v6383, 4294901760
    %6422 = vmatpush1.msra.mxu0 %v6421
    %v6423 = vand.u32 %v6386, 4294901760
    %6424 = vmatprep.subr.mxu0 %v6423
    %v6425 = vand.u32 %v6385, 4294901760
    %6426 = vmatpush1.msra.mxu0 %v6425
    %v6427 = vand.u32 %v6388, 4294901760
    %6428 = vmatprep.subr.mxu0 %v6427
    %v6429 = vand.u32 %v6387, 4294901760
    %6430 = vmatpush1.msra.mxu0 %v6429
    %v6431 = vand.u32 %v6390, 4294901760
    %6432 = vmatprep.subr.mxu0 %v6431
    %v6433 = vand.u32 %v6389, 4294901760
    %6434 = vmatpush1.msra.mxu0 %v6433
    %v6435 = vand.u32 %v6392, 4294901760
    %6436 = vmatprep.subr.mxu0 %v6435
    %v6437 = vand.u32 %v6391, 4294901760
    %6438 = vmatpush1.msra.mxu0 %v6437
    %v6439 = vand.u32 %v6394, 4294901760
    %6440 = vmatprep.subr.mxu0 %v6439
    %v6441 = vand.u32 %v6393, 4294901760
    %6442 = vmatpush1.msra.mxu0 %v6441
    %v6443 = vand.u32 %v6396, 4294901760
    %6444 = vmatprep.subr.mxu0 %v6443
    %v6445 = vand.u32 %v6395, 4294901760
    %6446 = vmatpush1.msra.mxu0 %v6445
    %v6447 = vand.u32 %v6398, 4294901760
    %6448 = vmatprep.subr.mxu0 %v6447
    %v6449 = vand.u32 %v6397, 4294901760
    %6450 = vmatpush1.msra.mxu0 %v6449
    %v6451 = vand.u32 %v6400, 4294901760
    %6452 = vmatprep.subr.mxu0 %v6451
    %v6453 = vand.u32 %v6399, 4294901760
    %6454 = vmatpush1.msra.mxu0 %v6453
    %v6455 = vand.u32 %v6402, 4294901760
    %6456 = vmatprep.subr.mxu0 %v6455
    %v6457 = vand.u32 %v6401, 4294901760
    %6458 = vmatpush1.msra.mxu0 %v6457
    %v6459 = vand.u32 %v6404, 4294901760
    %6460 = vmatprep.subr.mxu0 %v6459
    %v6461 = vand.u32 %v6403, 4294901760
    %6462 = vmatpush1.msra.mxu0 %v6461
    %v6463 = vand.u32 %v6406, 4294901760
    %6464 = vmatprep.subr.mxu0 %v6463
    %v6465 = vand.u32 %v6405, 4294901760
    %6466 = vmatpush1.msra.mxu0 %v6465
    %v6467 = vand.u32 %v6408, 4294901760
    %6468 = vmatprep.subr.mxu0 %v6467
    %v6469 = vand.u32 %v6407, 4294901760
    %6470 = vmatpush1.msra.mxu0 %v6469
    %v6471 = vand.u32 %v6410, 4294901760
    %6472 = vmatprep.subr.mxu0 %v6471
    %v6473 = vand.u32 %v6409, 4294901760
    %6474 = vmatpush1.msra.mxu0 %v6473
    %6475 = vmatprep.subr.mxu0 0.0
    %6476 = vmatpush1.msra.mxu0 0.0
    %6477 = vmatprep.subr.mxu0 0.0
    %6478 = vmatpush1.msra.mxu0 0.0
    %6479 = vmatprep.subr.mxu0 0.0
    %6480 = vmatpush1.msra.mxu0 0.0
    %6481 = vmatprep.subr.mxu0 0.0
    %6482 = vmatpush1.msra.mxu0 0.0
    %6483 = vmatprep.subr.mxu0 0.0
    %6484 = vmatpush1.msra.mxu0 0.0
    %6485 = vmatprep.subr.mxu0 0.0
    %6486 = vmatpush1.msra.mxu0 0.0
    %6487 = vmatprep.subr.mxu0 0.0
    %6488 = vmatpush1.msra.mxu0 0.0
    %6489 = vmatprep.subr.mxu0 0.0
    %6490 = vmatpush1.msra.mxu0 0.0
    %6491 = vmatprep.subr.mxu0 0.0
    %6492 = vmatpush1.msra.mxu0 0.0
    %6493 = vmatprep.subr.mxu0 0.0
    %6494 = vmatpush1.msra.mxu0 0.0
    %6495 = vmatprep.subr.mxu0 0.0
    %6496 = vmatpush1.msra.mxu0 0.0
    %6497 = vmatprep.subr.mxu0 0.0
    %6498 = vmatpush1.msra.mxu0 0.0
    %6499 = vmatprep.subr.mxu0 0.0
    %6500 = vmatpush1.msra.mxu0 0.0
    %6501 = vmatprep.subr.mxu0 0.0
    %6502 = vmatpush1.msra.mxu0 0.0
    %6503 = vmatprep.subr.mxu0 0.0
    %6504 = vmatpush1.msra.mxu0 0.0
    %6505 = vmatprep.subr.mxu0 0.0
    %6506 = vmatpush1.msra.mxu0 0.0
    %6507 = vmatprep.mubr.f32.mxu0 0.0
    %v6508 = vand.u32 %v6374, 4294901760
    %v6509 = vsub.f32 %v6374, %v6508
    %v6510 = vand.u32 %v6509, 4294901760
    %v6511 = vsub.f32 %v6509, %v6510
    %v6512 = vand.u32 %v6511, 4294901760
    %6513 = vmatmul.mubr.f32.gmra.mrb[0].mxu0 %v6512
    %v6514 = vpop.f32.mrb[0].mxu0
    %v6515 = vadd.f32 0.0, %v6514
    %v6516 = vpop.f32.mrb[0].mxu0
    %v6517 = vadd.f32 0.0, %v6516
    %6518 = vdwg.mxu0
    %v6519 = vand.u32 %v6380, 4294901760
    %v6520 = vsub.f32 %v6380, %v6519
    %v6521 = vand.u32 %v6520, 4294901760
    %v6522 = vsub.f32 %v6520, %v6521
    %v6523 = vand.u32 %v6522, 4294901760
    %6524 = vmatprep.subr.mxu0 %v6523
    %v6525 = vand.u32 %v6379, 4294901760
    %v6526 = vsub.f32 %v6379, %v6525
    %v6527 = vand.u32 %v6526, 4294901760
    %v6528 = vsub.f32 %v6526, %v6527
    %v6529 = vand.u32 %v6528, 4294901760
    %6530 = vmatpush1.msra.mxu0 %v6529
    %v6531 = vand.u32 %v6382, 4294901760
    %v6532 = vsub.f32 %v6382, %v6531
    %v6533 = vand.u32 %v6532, 4294901760
    %v6534 = vsub.f32 %v6532, %v6533
    %v6535 = vand.u32 %v6534, 4294901760
    %6536 = vmatprep.subr.mxu0 %v6535
    %v6537 = vand.u32 %v6381, 4294901760
    %v6538 = vsub.f32 %v6381, %v6537
    %v6539 = vand.u32 %v6538, 4294901760
    %v6540 = vsub.f32 %v6538, %v6539
    %v6541 = vand.u32 %v6540, 4294901760
    %6542 = vmatpush1.msra.mxu0 %v6541
    %v6543 = vand.u32 %v6384, 4294901760
    %v6544 = vsub.f32 %v6384, %v6543
    %v6545 = vand.u32 %v6544, 4294901760
    %v6546 = vsub.f32 %v6544, %v6545
    %v6547 = vand.u32 %v6546, 4294901760
    %6548 = vmatprep.subr.mxu0 %v6547
    %v6549 = vand.u32 %v6383, 4294901760
    %v6550 = vsub.f32 %v6383, %v6549
    %v6551 = vand.u32 %v6550, 4294901760
    %v6552 = vsub.f32 %v6550, %v6551
    %v6553 = vand.u32 %v6552, 4294901760
    %6554 = vmatpush1.msra.mxu0 %v6553
    %v6555 = vand.u32 %v6386, 4294901760
    %v6556 = vsub.f32 %v6386, %v6555
    %v6557 = vand.u32 %v6556, 4294901760
    %v6558 = vsub.f32 %v6556, %v6557
    %v6559 = vand.u32 %v6558, 4294901760
    %6560 = vmatprep.subr.mxu0 %v6559
    %v6561 = vand.u32 %v6385, 4294901760
    %v6562 = vsub.f32 %v6385, %v6561
    %v6563 = vand.u32 %v6562, 4294901760
    %v6564 = vsub.f32 %v6562, %v6563
    %v6565 = vand.u32 %v6564, 4294901760
    %6566 = vmatpush1.msra.mxu0 %v6565
    %v6567 = vand.u32 %v6388, 4294901760
    %v6568 = vsub.f32 %v6388, %v6567
    %v6569 = vand.u32 %v6568, 4294901760
    %v6570 = vsub.f32 %v6568, %v6569
    %v6571 = vand.u32 %v6570, 4294901760
    %6572 = vmatprep.subr.mxu0 %v6571
    %v6573 = vand.u32 %v6387, 4294901760
    %v6574 = vsub.f32 %v6387, %v6573
    %v6575 = vand.u32 %v6574, 4294901760
    %v6576 = vsub.f32 %v6574, %v6575
    %v6577 = vand.u32 %v6576, 4294901760
    %6578 = vmatpush1.msra.mxu0 %v6577
    %v6579 = vand.u32 %v6390, 4294901760
    %v6580 = vsub.f32 %v6390, %v6579
    %v6581 = vand.u32 %v6580, 4294901760
    %v6582 = vsub.f32 %v6580, %v6581
    %v6583 = vand.u32 %v6582, 4294901760
    %6584 = vmatprep.subr.mxu0 %v6583
    %v6585 = vand.u32 %v6389, 4294901760
    %v6586 = vsub.f32 %v6389, %v6585
    %v6587 = vand.u32 %v6586, 4294901760
    %v6588 = vsub.f32 %v6586, %v6587
    %v6589 = vand.u32 %v6588, 4294901760
    %6590 = vmatpush1.msra.mxu0 %v6589
    %v6591 = vand.u32 %v6392, 4294901760
    %v6592 = vsub.f32 %v6392, %v6591
    %v6593 = vand.u32 %v6592, 4294901760
    %v6594 = vsub.f32 %v6592, %v6593
    %v6595 = vand.u32 %v6594, 4294901760
    %6596 = vmatprep.subr.mxu0 %v6595
    %v6597 = vand.u32 %v6391, 4294901760
    %v6598 = vsub.f32 %v6391, %v6597
    %v6599 = vand.u32 %v6598, 4294901760
    %v6600 = vsub.f32 %v6598, %v6599
    %v6601 = vand.u32 %v6600, 4294901760
    %6602 = vmatpush1.msra.mxu0 %v6601
    %v6603 = vand.u32 %v6394, 4294901760
    %v6604 = vsub.f32 %v6394, %v6603
    %v6605 = vand.u32 %v6604, 4294901760
    %v6606 = vsub.f32 %v6604, %v6605
    %v6607 = vand.u32 %v6606, 4294901760
    %6608 = vmatprep.subr.mxu0 %v6607
    %v6609 = vand.u32 %v6393, 4294901760
    %v6610 = vsub.f32 %v6393, %v6609
    %v6611 = vand.u32 %v6610, 4294901760
    %v6612 = vsub.f32 %v6610, %v6611
    %v6613 = vand.u32 %v6612, 4294901760
    %6614 = vmatpush1.msra.mxu0 %v6613
    %v6615 = vand.u32 %v6396, 4294901760
    %v6616 = vsub.f32 %v6396, %v6615
    %v6617 = vand.u32 %v6616, 4294901760
    %v6618 = vsub.f32 %v6616, %v6617
    %v6619 = vand.u32 %v6618, 4294901760
    %6620 = vmatprep.subr.mxu0 %v6619
    %v6621 = vand.u32 %v6395, 4294901760
    %v6622 = vsub.f32 %v6395, %v6621
    %v6623 = vand.u32 %v6622, 4294901760
    %v6624 = vsub.f32 %v6622, %v6623
    %v6625 = vand.u32 %v6624, 4294901760
    %6626 = vmatpush1.msra.mxu0 %v6625
    %v6627 = vand.u32 %v6398, 4294901760
    %v6628 = vsub.f32 %v6398, %v6627
    %v6629 = vand.u32 %v6628, 4294901760
    %v6630 = vsub.f32 %v6628, %v6629
    %v6631 = vand.u32 %v6630, 4294901760
    %6632 = vmatprep.subr.mxu0 %v6631
    %v6633 = vand.u32 %v6397, 4294901760
    %v6634 = vsub.f32 %v6397, %v6633
    %v6635 = vand.u32 %v6634, 4294901760
    %v6636 = vsub.f32 %v6634, %v6635
    %v6637 = vand.u32 %v6636, 4294901760
    %6638 = vmatpush1.msra.mxu0 %v6637
    %v6639 = vand.u32 %v6400, 4294901760
    %v6640 = vsub.f32 %v6400, %v6639
    %v6641 = vand.u32 %v6640, 4294901760
    %v6642 = vsub.f32 %v6640, %v6641
    %v6643 = vand.u32 %v6642, 4294901760
    %6644 = vmatprep.subr.mxu0 %v6643
    %v6645 = vand.u32 %v6399, 4294901760
    %v6646 = vsub.f32 %v6399, %v6645
    %v6647 = vand.u32 %v6646, 4294901760
    %v6648 = vsub.f32 %v6646, %v6647
    %v6649 = vand.u32 %v6648, 4294901760
    %6650 = vmatpush1.msra.mxu0 %v6649
    %v6651 = vand.u32 %v6402, 4294901760
    %v6652 = vsub.f32 %v6402, %v6651
    %v6653 = vand.u32 %v6652, 4294901760
    %v6654 = vsub.f32 %v6652, %v6653
    %v6655 = vand.u32 %v6654, 4294901760
    %6656 = vmatprep.subr.mxu0 %v6655
    %v6657 = vand.u32 %v6401, 4294901760
    %v6658 = vsub.f32 %v6401, %v6657
    %v6659 = vand.u32 %v6658, 4294901760
    %v6660 = vsub.f32 %v6658, %v6659
    %v6661 = vand.u32 %v6660, 4294901760
    %6662 = vmatpush1.msra.mxu0 %v6661
    %v6663 = vand.u32 %v6404, 4294901760
    %v6664 = vsub.f32 %v6404, %v6663
    %v6665 = vand.u32 %v6664, 4294901760
    %v6666 = vsub.f32 %v6664, %v6665
    %v6667 = vand.u32 %v6666, 4294901760
    %6668 = vmatprep.subr.mxu0 %v6667
    %v6669 = vand.u32 %v6403, 4294901760
    %v6670 = vsub.f32 %v6403, %v6669
    %v6671 = vand.u32 %v6670, 4294901760
    %v6672 = vsub.f32 %v6670, %v6671
    %v6673 = vand.u32 %v6672, 4294901760
    %6674 = vmatpush1.msra.mxu0 %v6673
    %v6675 = vand.u32 %v6406, 4294901760
    %v6676 = vsub.f32 %v6406, %v6675
    %v6677 = vand.u32 %v6676, 4294901760
    %v6678 = vsub.f32 %v6676, %v6677
    %v6679 = vand.u32 %v6678, 4294901760
    %6680 = vmatprep.subr.mxu0 %v6679
    %v6681 = vand.u32 %v6405, 4294901760
    %v6682 = vsub.f32 %v6405, %v6681
    %v6683 = vand.u32 %v6682, 4294901760
    %v6684 = vsub.f32 %v6682, %v6683
    %v6685 = vand.u32 %v6684, 4294901760
    %6686 = vmatpush1.msra.mxu0 %v6685
    %v6687 = vand.u32 %v6408, 4294901760
    %v6688 = vsub.f32 %v6408, %v6687
    %v6689 = vand.u32 %v6688, 4294901760
    %v6690 = vsub.f32 %v6688, %v6689
    %v6691 = vand.u32 %v6690, 4294901760
    %6692 = vmatprep.subr.mxu0 %v6691
    %v6693 = vand.u32 %v6407, 4294901760
    %v6694 = vsub.f32 %v6407, %v6693
    %v6695 = vand.u32 %v6694, 4294901760
    %v6696 = vsub.f32 %v6694, %v6695
    %v6697 = vand.u32 %v6696, 4294901760
    %6698 = vmatpush1.msra.mxu0 %v6697
    %v6699 = vand.u32 %v6410, 4294901760
    %v6700 = vsub.f32 %v6410, %v6699
    %v6701 = vand.u32 %v6700, 4294901760
    %v6702 = vsub.f32 %v6700, %v6701
    %v6703 = vand.u32 %v6702, 4294901760
    %6704 = vmatprep.subr.mxu0 %v6703
    %v6705 = vand.u32 %v6409, 4294901760
    %v6706 = vsub.f32 %v6409, %v6705
    %v6707 = vand.u32 %v6706, 4294901760
    %v6708 = vsub.f32 %v6706, %v6707
    %v6709 = vand.u32 %v6708, 4294901760
    %6710 = vmatpush1.msra.mxu0 %v6709
    %6711 = vmatprep.subr.mxu0 0.0
    %6712 = vmatpush1.msra.mxu0 0.0
    %6713 = vmatprep.subr.mxu0 0.0
    %6714 = vmatpush1.msra.mxu0 0.0
    %6715 = vmatprep.subr.mxu0 0.0
    %6716 = vmatpush1.msra.mxu0 0.0
    %6717 = vmatprep.subr.mxu0 0.0
    %6718 = vmatpush1.msra.mxu0 0.0
    %6719 = vmatprep.subr.mxu0 0.0
    %6720 = vmatpush1.msra.mxu0 0.0
    %6721 = vmatprep.subr.mxu0 0.0
    %6722 = vmatpush1.msra.mxu0 0.0
    %6723 = vmatprep.subr.mxu0 0.0
    %6724 = vmatpush1.msra.mxu0 0.0
    %6725 = vmatprep.subr.mxu0 0.0
    %6726 = vmatpush1.msra.mxu0 0.0
    %6727 = vmatprep.subr.mxu0 0.0
    %6728 = vmatpush1.msra.mxu0 0.0
    %6729 = vmatprep.subr.mxu0 0.0
    %6730 = vmatpush1.msra.mxu0 0.0
    %6731 = vmatprep.subr.mxu0 0.0
    %6732 = vmatpush1.msra.mxu0 0.0
    %6733 = vmatprep.subr.mxu0 0.0
    %6734 = vmatpush1.msra.mxu0 0.0
    %6735 = vmatprep.subr.mxu0 0.0
    %6736 = vmatpush1.msra.mxu0 0.0
    %6737 = vmatprep.subr.mxu0 0.0
    %6738 = vmatpush1.msra.mxu0 0.0
    %6739 = vmatprep.subr.mxu0 0.0
    %6740 = vmatpush1.msra.mxu0 0.0
    %6741 = vmatprep.subr.mxu0 0.0
    %6742 = vmatpush1.msra.mxu0 0.0
    %6743 = vmatprep.mubr.f32.mxu0 0.0
    %v6744 = vand.u32 %v6374, 4294901760
    %6745 = vmatmul.mubr.f32.gmra.mrb[0].mxu0 %v6744
    %v6746 = vpop.f32.mrb[0].mxu0
    %v6747 = vadd.f32 %v6515, %v6746
    %v6748 = vpop.f32.mrb[0].mxu0
    %v6749 = vadd.f32 %v6517, %v6748
    %6750 = vdwg.mxu0
    %v6751 = vand.u32 %v6380, 4294901760
    %v6752 = vsub.f32 %v6380, %v6751
    %6753 = vmatprep.subr.mxu0 %v6752
    %v6754 = vand.u32 %v6379, 4294901760
    %v6755 = vsub.f32 %v6379, %v6754
    %6756 = vmatpush1.msra.mxu0 %v6755
    %v6757 = vand.u32 %v6382, 4294901760
    %v6758 = vsub.f32 %v6382, %v6757
    %6759 = vmatprep.subr.mxu0 %v6758
    %v6760 = vand.u32 %v6381, 4294901760
    %v6761 = vsub.f32 %v6381, %v6760
    %6762 = vmatpush1.msra.mxu0 %v6761
    %v6763 = vand.u32 %v6384, 4294901760
    %v6764 = vsub.f32 %v6384, %v6763
    %6765 = vmatprep.subr.mxu0 %v6764
    %v6766 = vand.u32 %v6383, 4294901760
    %v6767 = vsub.f32 %v6383, %v6766
    %6768 = vmatpush1.msra.mxu0 %v6767
    %v6769 = vand.u32 %v6386, 4294901760
    %v6770 = vsub.f32 %v6386, %v6769
    %6771 = vmatprep.subr.mxu0 %v6770
    %v6772 = vand.u32 %v6385, 4294901760
    %v6773 = vsub.f32 %v6385, %v6772
    %6774 = vmatpush1.msra.mxu0 %v6773
    %v6775 = vand.u32 %v6388, 4294901760
    %v6776 = vsub.f32 %v6388, %v6775
    %6777 = vmatprep.subr.mxu0 %v6776
    %v6778 = vand.u32 %v6387, 4294901760
    %v6779 = vsub.f32 %v6387, %v6778
    %6780 = vmatpush1.msra.mxu0 %v6779
    %v6781 = vand.u32 %v6390, 4294901760
    %v6782 = vsub.f32 %v6390, %v6781
    %6783 = vmatprep.subr.mxu0 %v6782
    %v6784 = vand.u32 %v6389, 4294901760
    %v6785 = vsub.f32 %v6389, %v6784
    %6786 = vmatpush1.msra.mxu0 %v6785
    %v6787 = vand.u32 %v6392, 4294901760
    %v6788 = vsub.f32 %v6392, %v6787
    %6789 = vmatprep.subr.mxu0 %v6788
    %v6790 = vand.u32 %v6391, 4294901760
    %v6791 = vsub.f32 %v6391, %v6790
    %6792 = vmatpush1.msra.mxu0 %v6791
    %v6793 = vand.u32 %v6394, 4294901760
    %v6794 = vsub.f32 %v6394, %v6793
    %6795 = vmatprep.subr.mxu0 %v6794
    %v6796 = vand.u32 %v6393, 4294901760
    %v6797 = vsub.f32 %v6393, %v6796
    %6798 = vmatpush1.msra.mxu0 %v6797
    %v6799 = vand.u32 %v6396, 4294901760
    %v6800 = vsub.f32 %v6396, %v6799
    %6801 = vmatprep.subr.mxu0 %v6800
    %v6802 = vand.u32 %v6395, 4294901760
    %v6803 = vsub.f32 %v6395, %v6802
    %6804 = vmatpush1.msra.mxu0 %v6803
    %v6805 = vand.u32 %v6398, 4294901760
    %v6806 = vsub.f32 %v6398, %v6805
    %6807 = vmatprep.subr.mxu0 %v6806
    %v6808 = vand.u32 %v6397, 4294901760
    %v6809 = vsub.f32 %v6397, %v6808
    %6810 = vmatpush1.msra.mxu0 %v6809
    %v6811 = vand.u32 %v6400, 4294901760
    %v6812 = vsub.f32 %v6400, %v6811
    %6813 = vmatprep.subr.mxu0 %v6812
    %v6814 = vand.u32 %v6399, 4294901760
    %v6815 = vsub.f32 %v6399, %v6814
    %6816 = vmatpush1.msra.mxu0 %v6815
    %v6817 = vand.u32 %v6402, 4294901760
    %v6818 = vsub.f32 %v6402, %v6817
    %6819 = vmatprep.subr.mxu0 %v6818
    %v6820 = vand.u32 %v6401, 4294901760
    %v6821 = vsub.f32 %v6401, %v6820
    %6822 = vmatpush1.msra.mxu0 %v6821
    %v6823 = vand.u32 %v6404, 4294901760
    %v6824 = vsub.f32 %v6404, %v6823
    %6825 = vmatprep.subr.mxu0 %v6824
    %v6826 = vand.u32 %v6403, 4294901760
    %v6827 = vsub.f32 %v6403, %v6826
    %6828 = vmatpush1.msra.mxu0 %v6827
    %v6829 = vand.u32 %v6406, 4294901760
    %v6830 = vsub.f32 %v6406, %v6829
    %6831 = vmatprep.subr.mxu0 %v6830
    %v6832 = vand.u32 %v6405, 4294901760
    %v6833 = vsub.f32 %v6405, %v6832
    %6834 = vmatpush1.msra.mxu0 %v6833
    %v6835 = vand.u32 %v6408, 4294901760
    %v6836 = vsub.f32 %v6408, %v6835
    %6837 = vmatprep.subr.mxu0 %v6836
    %v6838 = vand.u32 %v6407, 4294901760
    %v6839 = vsub.f32 %v6407, %v6838
    %6840 = vmatpush1.msra.mxu0 %v6839
    %v6841 = vand.u32 %v6410, 4294901760
    %v6842 = vsub.f32 %v6410, %v6841
    %6843 = vmatprep.subr.mxu0 %v6842
    %v6844 = vand.u32 %v6409, 4294901760
    %v6845 = vsub.f32 %v6409, %v6844
    %6846 = vmatpush1.msra.mxu0 %v6845
    %6847 = vmatprep.subr.mxu0 0.0
    %6848 = vmatpush1.msra.mxu0 0.0
    %6849 = vmatprep.subr.mxu0 0.0
    %6850 = vmatpush1.msra.mxu0 0.0
    %6851 = vmatprep.subr.mxu0 0.0
    %6852 = vmatpush1.msra.mxu0 0.0
    %6853 = vmatprep.subr.mxu0 0.0
    %6854 = vmatpush1.msra.mxu0 0.0
    %6855 = vmatprep.subr.mxu0 0.0
    %6856 = vmatpush1.msra.mxu0 0.0
    %6857 = vmatprep.subr.mxu0 0.0
    %6858 = vmatpush1.msra.mxu0 0.0
    %6859 = vmatprep.subr.mxu0 0.0
    %6860 = vmatpush1.msra.mxu0 0.0
    %6861 = vmatprep.subr.mxu0 0.0
    %6862 = vmatpush1.msra.mxu0 0.0
    %6863 = vmatprep.subr.mxu0 0.0
    %6864 = vmatpush1.msra.mxu0 0.0
    %6865 = vmatprep.subr.mxu0 0.0
    %6866 = vmatpush1.msra.mxu0 0.0
    %6867 = vmatprep.subr.mxu0 0.0
    %6868 = vmatpush1.msra.mxu0 0.0
    %6869 = vmatprep.subr.mxu0 0.0
    %6870 = vmatpush1.msra.mxu0 0.0
    %6871 = vmatprep.subr.mxu0 0.0
    %6872 = vmatpush1.msra.mxu0 0.0
    %6873 = vmatprep.subr.mxu0 0.0
    %6874 = vmatpush1.msra.mxu0 0.0
    %6875 = vmatprep.subr.mxu0 0.0
    %6876 = vmatpush1.msra.mxu0 0.0
    %6877 = vmatprep.subr.mxu0 0.0
    %6878 = vmatpush1.msra.mxu0 0.0
    %6879 = vmatprep.mubr.f32.mxu0 0.0
    %v6880 = vand.u32 %v6374, 4294901760
    %v6881 = vsub.f32 %v6374, %v6880
    %6882 = vmatmul.mubr.f32.gmra.mrb[0].mxu0 %v6881
    %v6883 = vpop.f32.mrb[0].mxu0
    %v6884 = vadd.f32 %v6747, %v6883
    %v6885 = vpop.f32.mrb[0].mxu0
    %v6886 = vadd.f32 %v6749, %v6885
    %6887 = vdwg.mxu0
    %v6888 = vand.u32 %v6380, 4294901760
    %6889 = vmatprep.subr.mxu0 %v6888
    %v6890 = vand.u32 %v6379, 4294901760
    %6891 = vmatpush1.msra.mxu0 %v6890
    %v6892 = vand.u32 %v6382, 4294901760
    %6893 = vmatprep.subr.mxu0 %v6892
    %v6894 = vand.u32 %v6381, 4294901760
    %6895 = vmatpush1.msra.mxu0 %v6894
    %v6896 = vand.u32 %v6384, 4294901760
    %6897 = vmatprep.subr.mxu0 %v6896
    %v6898 = vand.u32 %v6383, 4294901760
    %6899 = vmatpush1.msra.mxu0 %v6898
    %v6900 = vand.u32 %v6386, 4294901760
    %6901 = vmatprep.subr.mxu0 %v6900
    %v6902 = vand.u32 %v6385, 4294901760
    %6903 = vmatpush1.msra.mxu0 %v6902
    %v6904 = vand.u32 %v6388, 4294901760
    %6905 = vmatprep.subr.mxu0 %v6904
    %v6906 = vand.u32 %v6387, 4294901760
    %6907 = vmatpush1.msra.mxu0 %v6906
    %v6908 = vand.u32 %v6390, 4294901760
    %6909 = vmatprep.subr.mxu0 %v6908
    %v6910 = vand.u32 %v6389, 4294901760
    %6911 = vmatpush1.msra.mxu0 %v6910
    %v6912 = vand.u32 %v6392, 4294901760
    %6913 = vmatprep.subr.mxu0 %v6912
    %v6914 = vand.u32 %v6391, 4294901760
    %6915 = vmatpush1.msra.mxu0 %v6914
    %v6916 = vand.u32 %v6394, 4294901760
    %6917 = vmatprep.subr.mxu0 %v6916
    %v6918 = vand.u32 %v6393, 4294901760
    %6919 = vmatpush1.msra.mxu0 %v6918
    %v6920 = vand.u32 %v6396, 4294901760
    %6921 = vmatprep.subr.mxu0 %v6920
    %v6922 = vand.u32 %v6395, 4294901760
    %6923 = vmatpush1.msra.mxu0 %v6922
    %v6924 = vand.u32 %v6398, 4294901760
    %6925 = vmatprep.subr.mxu0 %v6924
    %v6926 = vand.u32 %v6397, 4294901760
    %6927 = vmatpush1.msra.mxu0 %v6926
    %v6928 = vand.u32 %v6400, 4294901760
    %6929 = vmatprep.subr.mxu0 %v6928
    %v6930 = vand.u32 %v6399, 4294901760
    %6931 = vmatpush1.msra.mxu0 %v6930
    %v6932 = vand.u32 %v6402, 4294901760
    %6933 = vmatprep.subr.mxu0 %v6932
    %v6934 = vand.u32 %v6401, 4294901760
    %6935 = vmatpush1.msra.mxu0 %v6934
    %v6936 = vand.u32 %v6404, 4294901760
    %6937 = vmatprep.subr.mxu0 %v6936
    %v6938 = vand.u32 %v6403, 4294901760
    %6939 = vmatpush1.msra.mxu0 %v6938
    %v6940 = vand.u32 %v6406, 4294901760
    %6941 = vmatprep.subr.mxu0 %v6940
    %v6942 = vand.u32 %v6405, 4294901760
    %6943 = vmatpush1.msra.mxu0 %v6942
    %v6944 = vand.u32 %v6408, 4294901760
    %6945 = vmatprep.subr.mxu0 %v6944
    %v6946 = vand.u32 %v6407, 4294901760
    %6947 = vmatpush1.msra.mxu0 %v6946
    %v6948 = vand.u32 %v6410, 4294901760
    %6949 = vmatprep.subr.mxu0 %v6948
    %v6950 = vand.u32 %v6409, 4294901760
    %6951 = vmatpush1.msra.mxu0 %v6950
    %6952 = vmatprep.subr.mxu0 0.0
    %6953 = vmatpush1.msra.mxu0 0.0
    %6954 = vmatprep.subr.mxu0 0.0
    %6955 = vmatpush1.msra.mxu0 0.0
    %6956 = vmatprep.subr.mxu0 0.0
    %6957 = vmatpush1.msra.mxu0 0.0
    %6958 = vmatprep.subr.mxu0 0.0
    %6959 = vmatpush1.msra.mxu0 0.0
    %6960 = vmatprep.subr.mxu0 0.0
    %6961 = vmatpush1.msra.mxu0 0.0
    %6962 = vmatprep.subr.mxu0 0.0
    %6963 = vmatpush1.msra.mxu0 0.0
    %6964 = vmatprep.subr.mxu0 0.0
    %6965 = vmatpush1.msra.mxu0 0.0
    %6966 = vmatprep.subr.mxu0 0.0
    %6967 = vmatpush1.msra.mxu0 0.0
    %6968 = vmatprep.subr.mxu0 0.0
    %6969 = vmatpush1.msra.mxu0 0.0
    %6970 = vmatprep.subr.mxu0 0.0
    %6971 = vmatpush1.msra.mxu0 0.0
    %6972 = vmatprep.subr.mxu0 0.0
    %6973 = vmatpush1.msra.mxu0 0.0
    %6974 = vmatprep.subr.mxu0 0.0
    %6975 = vmatpush1.msra.mxu0 0.0
    %6976 = vmatprep.subr.mxu0 0.0
    %6977 = vmatpush1.msra.mxu0 0.0
    %6978 = vmatprep.subr.mxu0 0.0
    %6979 = vmatpush1.msra.mxu0 0.0
    %6980 = vmatprep.subr.mxu0 0.0
    %6981 = vmatpush1.msra.mxu0 0.0
    %6982 = vmatprep.subr.mxu0 0.0
    %6983 = vmatpush1.msra.mxu0 0.0
    %6984 = vmatprep.mubr.f32.mxu0 0.0
    %v6985 = vand.u32 %v6374, 4294901760
    %v6986 = vsub.f32 %v6374, %v6985
    %v6987 = vand.u32 %v6986, 4294901760
    %6988 = vmatmul.mubr.f32.gmra.mrb[0].mxu0 %v6987
    %v6989 = vpop.f32.mrb[0].mxu0
    %v6990 = vadd.f32 %v6884, %v6989
    %v6991 = vpop.f32.mrb[0].mxu0
    %v6992 = vadd.f32 %v6886, %v6991
    %6993 = vdwg.mxu0
    %v6994 = vand.u32 %v6380, 4294901760
    %v6995 = vsub.f32 %v6380, %v6994
    %v6996 = vand.u32 %v6995, 4294901760
    %6997 = vmatprep.subr.mxu0 %v6996
    %v6998 = vand.u32 %v6379, 4294901760
    %v6999 = vsub.f32 %v6379, %v6998
    %v7000 = vand.u32 %v6999, 4294901760
    %7001 = vmatpush1.msra.mxu0 %v7000
    %v7002 = vand.u32 %v6382, 4294901760
    %v7003 = vsub.f32 %v6382, %v7002
    %v7004 = vand.u32 %v7003, 4294901760
    %7005 = vmatprep.subr.mxu0 %v7004
    %v7006 = vand.u32 %v6381, 4294901760
    %v7007 = vsub.f32 %v6381, %v7006
    %v7008 = vand.u32 %v7007, 4294901760
    %7009 = vmatpush1.msra.mxu0 %v7008
    %v7010 = vand.u32 %v6384, 4294901760
    %v7011 = vsub.f32 %v6384, %v7010
    %v7012 = vand.u32 %v7011, 4294901760
    %7013 = vmatprep.subr.mxu0 %v7012
    %v7014 = vand.u32 %v6383, 4294901760
    %v7015 = vsub.f32 %v6383, %v7014
    %v7016 = vand.u32 %v7015, 4294901760
    %7017 = vmatpush1.msra.mxu0 %v7016
    %v7018 = vand.u32 %v6386, 4294901760
    %v7019 = vsub.f32 %v6386, %v7018
    %v7020 = vand.u32 %v7019, 4294901760
    %7021 = vmatprep.subr.mxu0 %v7020
    %v7022 = vand.u32 %v6385, 4294901760
    %v7023 = vsub.f32 %v6385, %v7022
    %v7024 = vand.u32 %v7023, 4294901760
    %7025 = vmatpush1.msra.mxu0 %v7024
    %v7026 = vand.u32 %v6388, 4294901760
    %v7027 = vsub.f32 %v6388, %v7026
    %v7028 = vand.u32 %v7027, 4294901760
    %7029 = vmatprep.subr.mxu0 %v7028
    %v7030 = vand.u32 %v6387, 4294901760
    %v7031 = vsub.f32 %v6387, %v7030
    %v7032 = vand.u32 %v7031, 4294901760
    %7033 = vmatpush1.msra.mxu0 %v7032
    %v7034 = vand.u32 %v6390, 4294901760
    %v7035 = vsub.f32 %v6390, %v7034
    %v7036 = vand.u32 %v7035, 4294901760
    %7037 = vmatprep.subr.mxu0 %v7036
    %v7038 = vand.u32 %v6389, 4294901760
    %v7039 = vsub.f32 %v6389, %v7038
    %v7040 = vand.u32 %v7039, 4294901760
    %7041 = vmatpush1.msra.mxu0 %v7040
    %v7042 = vand.u32 %v6392, 4294901760
    %v7043 = vsub.f32 %v6392, %v7042
    %v7044 = vand.u32 %v7043, 4294901760
    %7045 = vmatprep.subr.mxu0 %v7044
    %v7046 = vand.u32 %v6391, 4294901760
    %v7047 = vsub.f32 %v6391, %v7046
    %v7048 = vand.u32 %v7047, 4294901760
    %7049 = vmatpush1.msra.mxu0 %v7048
    %v7050 = vand.u32 %v6394, 4294901760
    %v7051 = vsub.f32 %v6394, %v7050
    %v7052 = vand.u32 %v7051, 4294901760
    %7053 = vmatprep.subr.mxu0 %v7052
    %v7054 = vand.u32 %v6393, 4294901760
    %v7055 = vsub.f32 %v6393, %v7054
    %v7056 = vand.u32 %v7055, 4294901760
    %7057 = vmatpush1.msra.mxu0 %v7056
    %v7058 = vand.u32 %v6396, 4294901760
    %v7059 = vsub.f32 %v6396, %v7058
    %v7060 = vand.u32 %v7059, 4294901760
    %7061 = vmatprep.subr.mxu0 %v7060
    %v7062 = vand.u32 %v6395, 4294901760
    %v7063 = vsub.f32 %v6395, %v7062
    %v7064 = vand.u32 %v7063, 4294901760
    %7065 = vmatpush1.msra.mxu0 %v7064
    %v7066 = vand.u32 %v6398, 4294901760
    %v7067 = vsub.f32 %v6398, %v7066
    %v7068 = vand.u32 %v7067, 4294901760
    %7069 = vmatprep.subr.mxu0 %v7068
    %v7070 = vand.u32 %v6397, 4294901760
    %v7071 = vsub.f32 %v6397, %v7070
    %v7072 = vand.u32 %v7071, 4294901760
    %7073 = vmatpush1.msra.mxu0 %v7072
    %v7074 = vand.u32 %v6400, 4294901760
    %v7075 = vsub.f32 %v6400, %v7074
    %v7076 = vand.u32 %v7075, 4294901760
    %7077 = vmatprep.subr.mxu0 %v7076
    %v7078 = vand.u32 %v6399, 4294901760
    %v7079 = vsub.f32 %v6399, %v7078
    %v7080 = vand.u32 %v7079, 4294901760
    %7081 = vmatpush1.msra.mxu0 %v7080
    %v7082 = vand.u32 %v6402, 4294901760
    %v7083 = vsub.f32 %v6402, %v7082
    %v7084 = vand.u32 %v7083, 4294901760
    %7085 = vmatprep.subr.mxu0 %v7084
    %v7086 = vand.u32 %v6401, 4294901760
    %v7087 = vsub.f32 %v6401, %v7086
    %v7088 = vand.u32 %v7087, 4294901760
    %7089 = vmatpush1.msra.mxu0 %v7088
    %v7090 = vand.u32 %v6404, 4294901760
    %v7091 = vsub.f32 %v6404, %v7090
    %v7092 = vand.u32 %v7091, 4294901760
    %7093 = vmatprep.subr.mxu0 %v7092
    %v7094 = vand.u32 %v6403, 4294901760
    %v7095 = vsub.f32 %v6403, %v7094
    %v7096 = vand.u32 %v7095, 4294901760
    %7097 = vmatpush1.msra.mxu0 %v7096
    %v7098 = vand.u32 %v6406, 4294901760
    %v7099 = vsub.f32 %v6406, %v7098
    %v7100 = vand.u32 %v7099, 4294901760
    %7101 = vmatprep.subr.mxu0 %v7100
    %v7102 = vand.u32 %v6405, 4294901760
    %v7103 = vsub.f32 %v6405, %v7102
    %v7104 = vand.u32 %v7103, 4294901760
    %7105 = vmatpush1.msra.mxu0 %v7104
    %v7106 = vand.u32 %v6408, 4294901760
    %v7107 = vsub.f32 %v6408, %v7106
    %v7108 = vand.u32 %v7107, 4294901760
    %7109 = vmatprep.subr.mxu0 %v7108
    %v7110 = vand.u32 %v6407, 4294901760
    %v7111 = vsub.f32 %v6407, %v7110
    %v7112 = vand.u32 %v7111, 4294901760
    %7113 = vmatpush1.msra.mxu0 %v7112
    %v7114 = vand.u32 %v6410, 4294901760
    %v7115 = vsub.f32 %v6410, %v7114
    %v7116 = vand.u32 %v7115, 4294901760
    %7117 = vmatprep.subr.mxu0 %v7116
    %v7118 = vand.u32 %v6409, 4294901760
    %v7119 = vsub.f32 %v6409, %v7118
    %v7120 = vand.u32 %v7119, 4294901760
    %7121 = vmatpush1.msra.mxu0 %v7120
    %7122 = vmatprep.subr.mxu0 0.0
    %7123 = vmatpush1.msra.mxu0 0.0
    %7124 = vmatprep.subr.mxu0 0.0
    %7125 = vmatpush1.msra.mxu0 0.0
    %7126 = vmatprep.subr.mxu0 0.0
    %7127 = vmatpush1.msra.mxu0 0.0
    %7128 = vmatprep.subr.mxu0 0.0
    %7129 = vmatpush1.msra.mxu0 0.0
    %7130 = vmatprep.subr.mxu0 0.0
    %7131 = vmatpush1.msra.mxu0 0.0
    %7132 = vmatprep.subr.mxu0 0.0
    %7133 = vmatpush1.msra.mxu0 0.0
    %7134 = vmatprep.subr.mxu0 0.0
    %7135 = vmatpush1.msra.mxu0 0.0
    %7136 = vmatprep.subr.mxu0 0.0
    %7137 = vmatpush1.msra.mxu0 0.0
    %7138 = vmatprep.subr.mxu0 0.0
    %7139 = vmatpush1.msra.mxu0 0.0
    %7140 = vmatprep.subr.mxu0 0.0
    %7141 = vmatpush1.msra.mxu0 0.0
    %7142 = vmatprep.subr.mxu0 0.0
    %7143 = vmatpush1.msra.mxu0 0.0
    %7144 = vmatprep.subr.mxu0 0.0
    %7145 = vmatpush1.msra.mxu0 0.0
    %7146 = vmatprep.subr.mxu0 0.0
    %7147 = vmatpush1.msra.mxu0 0.0
    %7148 = vmatprep.subr.mxu0 0.0
    %7149 = vmatpush1.msra.mxu0 0.0
    %7150 = vmatprep.subr.mxu0 0.0
    %7151 = vmatpush1.msra.mxu0 0.0
    %7152 = vmatprep.subr.mxu0 0.0
    %7153 = vmatpush1.msra.mxu0 0.0
    %7154 = vmatprep.mubr.f32.mxu0 0.0
    %v7155 = vand.u32 %v6374, 4294901760
    %7156 = vmatmul.mubr.f32.gmra.mrb[0].mxu0 %v7155
    %v7157 = vpop.f32.mrb[0].mxu0
    %v7158 = vadd.f32 %v6990, %v7157
    %v7159 = vpop.f32.mrb[0].mxu0
    %v7160 = vadd.f32 %v6992, %v7159
    %7161 = vdwg.mxu0
    %v7162 = vand.u32 %v6380, 4294901760
    %7163 = vmatprep.subr.mxu0 %v7162
    %v7164 = vand.u32 %v6379, 4294901760
    %7165 = vmatpush1.msra.mxu0 %v7164
    %v7166 = vand.u32 %v6382, 4294901760
    %7167 = vmatprep.subr.mxu0 %v7166
    %v7168 = vand.u32 %v6381, 4294901760
    %7169 = vmatpush1.msra.mxu0 %v7168
    %v7170 = vand.u32 %v6384, 4294901760
    %7171 = vmatprep.subr.mxu0 %v7170
    %v7172 = vand.u32 %v6383, 4294901760
    %7173 = vmatpush1.msra.mxu0 %v7172
    %v7174 = vand.u32 %v6386, 4294901760
    %7175 = vmatprep.subr.mxu0 %v7174
    %v7176 = vand.u32 %v6385, 4294901760
    %7177 = vmatpush1.msra.mxu0 %v7176
    %v7178 = vand.u32 %v6388, 4294901760
    %7179 = vmatprep.subr.mxu0 %v7178
    %v7180 = vand.u32 %v6387, 4294901760
    %7181 = vmatpush1.msra.mxu0 %v7180
    %v7182 = vand.u32 %v6390, 4294901760
    %7183 = vmatprep.subr.mxu0 %v7182
    %v7184 = vand.u32 %v6389, 4294901760
    %7185 = vmatpush1.msra.mxu0 %v7184
    %v7186 = vand.u32 %v6392, 4294901760
    %7187 = vmatprep.subr.mxu0 %v7186
    %v7188 = vand.u32 %v6391, 4294901760
    %7189 = vmatpush1.msra.mxu0 %v7188
    %v7190 = vand.u32 %v6394, 4294901760
    %7191 = vmatprep.subr.mxu0 %v7190
    %v7192 = vand.u32 %v6393, 4294901760
    %7193 = vmatpush1.msra.mxu0 %v7192
    %v7194 = vand.u32 %v6396, 4294901760
    %7195 = vmatprep.subr.mxu0 %v7194
    %v7196 = vand.u32 %v6395, 4294901760
    %7197 = vmatpush1.msra.mxu0 %v7196
    %v7198 = vand.u32 %v6398, 4294901760
    %7199 = vmatprep.subr.mxu0 %v7198
    %v7200 = vand.u32 %v6397, 4294901760
    %7201 = vmatpush1.msra.mxu0 %v7200
    %v7202 = vand.u32 %v6400, 4294901760
    %7203 = vmatprep.subr.mxu0 %v7202
    %v7204 = vand.u32 %v6399, 4294901760
    %7205 = vmatpush1.msra.mxu0 %v7204
    %v7206 = vand.u32 %v6402, 4294901760
    %7207 = vmatprep.subr.mxu0 %v7206
    %v7208 = vand.u32 %v6401, 4294901760
    %7209 = vmatpush1.msra.mxu0 %v7208
    %v7210 = vand.u32 %v6404, 4294901760
    %7211 = vmatprep.subr.mxu0 %v7210
    %v7212 = vand.u32 %v6403, 4294901760
    %7213 = vmatpush1.msra.mxu0 %v7212
    %v7214 = vand.u32 %v6406, 4294901760
    %7215 = vmatprep.subr.mxu0 %v7214
    %v7216 = vand.u32 %v6405, 4294901760
    %7217 = vmatpush1.msra.mxu0 %v7216
    %v7218 = vand.u32 %v6408, 4294901760
    %7219 = vmatprep.subr.mxu0 %v7218
    %v7220 = vand.u32 %v6407, 4294901760
    %7221 = vmatpush1.msra.mxu0 %v7220
    %v7222 = vand.u32 %v6410, 4294901760
    %7223 = vmatprep.subr.mxu0 %v7222
    %v7224 = vand.u32 %v6409, 4294901760
    %7225 = vmatpush1.msra.mxu0 %v7224
    %7226 = vmatprep.subr.mxu0 0.0
    %7227 = vmatpush1.msra.mxu0 0.0
    %7228 = vmatprep.subr.mxu0 0.0
    %7229 = vmatpush1.msra.mxu0 0.0
    %7230 = vmatprep.subr.mxu0 0.0
    %7231 = vmatpush1.msra.mxu0 0.0
    %7232 = vmatprep.subr.mxu0 0.0
    %7233 = vmatpush1.msra.mxu0 0.0
    %7234 = vmatprep.subr.mxu0 0.0
    %7235 = vmatpush1.msra.mxu0 0.0
    %7236 = vmatprep.subr.mxu0 0.0
    %7237 = vmatpush1.msra.mxu0 0.0
    %7238 = vmatprep.subr.mxu0 0.0
    %7239 = vmatpush1.msra.mxu0 0.0
    %7240 = vmatprep.subr.mxu0 0.0
    %7241 = vmatpush1.msra.mxu0 0.0
    %7242 = vmatprep.subr.mxu0 0.0
    %7243 = vmatpush1.msra.mxu0 0.0
    %7244 = vmatprep.subr.mxu0 0.0
    %7245 = vmatpush1.msra.mxu0 0.0
    %7246 = vmatprep.subr.mxu0 0.0
    %7247 = vmatpush1.msra.mxu0 0.0
    %7248 = vmatprep.subr.mxu0 0.0
    %7249 = vmatpush1.msra.mxu0 0.0
    %7250 = vmatprep.subr.mxu0 0.0
    %7251 = vmatpush1.msra.mxu0 0.0
    %7252 = vmatprep.subr.mxu0 0.0
    %7253 = vmatpush1.msra.mxu0 0.0
    %7254 = vmatprep.subr.mxu0 0.0
    %7255 = vmatpush1.msra.mxu0 0.0
    %7256 = vmatprep.subr.mxu0 0.0
    %7257 = vmatpush1.msra.mxu0 0.0
    %7258 = vmatprep.mubr.f32.mxu0 0.0
    %v7259 = vand.u32 %v6374, 4294901760
    %7260 = vmatmul.mubr.f32.gmra.mrb[0].mxu0 %v7259
    %v7261 = vpop.f32.mrb[0].mxu0
    %v7262 = vadd.f32 %v7158, %v7261
    %v7263 = vpop.f32.mrb[0].mxu0
    %v7264 = vadd.f32 %v7160, %v7263
    %7265 = vdwg.mxu0
    %v7266 = vadd.f32 %v6376, %v7262
    %v7267 = vxor.u32 %v7266, 2147483648
    %v7268 = vmul.f32 %v7267, 1.442695
    %v7269 = vpow.pop %v7268
    %v7270 = vadd.f32 %v7269, 1.0
    %v7271 = vrcp.pop %v7270
    %v7272 = vmul.f32 1.0, %v7271
    %v7273 = vadd.f32 %v6377, %v7264
    %v7274 = vxor.u32 %v7273, 2147483648
    %v7275 = vmul.f32 %v7274, 1.442695
    %v7276 = vpow.pop %v7275
    %v7277 = vadd.f32 %v7276, 1.0
    %v7278 = vrcp.pop %v7277
    %v7279 = vmul.f32 1.0, %v7278
    %v7280 = vmul.f32 %v7279, %v6374
    %v7281 = vld [vmem:[#allocation9] sm:$0xff]
    %v7282 = vld [vmem:[#allocation9 + $0x8] sm:$0xff]
    %v7283 = vld [vmem:[#allocation9 + $0x10] sm:$0xff]
    %v7284 = vld [vmem:[#allocation9 + $0x18] sm:$0xff]
    %v7285 = vld [vmem:[#allocation9 + $0x20] sm:$0xff]
    %v7286 = vld [vmem:[#allocation9 + $0x28] sm:$0xff]
    %v7287 = vld [vmem:[#allocation9 + $0x30] sm:$0xff]
    %v7288 = vld [vmem:[#allocation9 + $0x38] sm:$0xff]
    %v7289 = vld [vmem:[#allocation9 + $0x40] sm:$0xff]
    %v7290 = vld [vmem:[#allocation9 + $0x48] sm:$0xff]
    %v7291 = vld [vmem:[#allocation9 + $0x50] sm:$0xff]
    %v7292 = vld [vmem:[#allocation9 + $0x58] sm:$0xff]
    %v7293 = vld [vmem:[#allocation9 + $0x60] sm:$0xff]
    %v7294 = vld [vmem:[#allocation9 + $0x68] sm:$0xff]
    %v7295 = vld [vmem:[#allocation9 + $0x70] sm:$0xff]
    %v7296 = vld [vmem:[#allocation9 + $0x78] sm:$0xff]
    %7297 = vmatprep.subr.mxu0 0.0
    %v7298 = vand.u32 %v7281, 4294901760
    %7299 = vmatpush1.msra.mxu0 %v7298
    %7300 = vmatprep.subr.mxu0 0.0
    %v7301 = vand.u32 %v7282, 4294901760
    %7302 = vmatpush1.msra.mxu0 %v7301
    %7303 = vmatprep.subr.mxu0 0.0
    %v7304 = vand.u32 %v7283, 4294901760
    %7305 = vmatpush1.msra.mxu0 %v7304
    %7306 = vmatprep.subr.mxu0 0.0
    %v7307 = vand.u32 %v7284, 4294901760
    %7308 = vmatpush1.msra.mxu0 %v7307
    %7309 = vmatprep.subr.mxu0 0.0
    %v7310 = vand.u32 %v7285, 4294901760
    %7311 = vmatpush1.msra.mxu0 %v7310
    %7312 = vmatprep.subr.mxu0 0.0
    %v7313 = vand.u32 %v7286, 4294901760
    %7314 = vmatpush1.msra.mxu0 %v7313
    %7315 = vmatprep.subr.mxu0 0.0
    %v7316 = vand.u32 %v7287, 4294901760
    %7317 = vmatpush1.msra.mxu0 %v7316
    %7318 = vmatprep.subr.mxu0 0.0
    %v7319 = vand.u32 %v7288, 4294901760
    %7320 = vmatpush1.msra.mxu0 %v7319
    %7321 = vmatprep.subr.mxu0 0.0
    %v7322 = vand.u32 %v7289, 4294901760
    %7323 = vmatpush1.msra.mxu0 %v7322
    %7324 = vmatprep.subr.mxu0 0.0
    %v7325 = vand.u32 %v7290, 4294901760
    %7326 = vmatpush1.msra.mxu0 %v7325
    %7327 = vmatprep.subr.mxu0 0.0
    %v7328 = vand.u32 %v7291, 4294901760
    %7329 = vmatpush1.msra.mxu0 %v7328
    %7330 = vmatprep.subr.mxu0 0.0
    %v7331 = vand.u32 %v7292, 4294901760
    %7332 = vmatpush1.msra.mxu0 %v7331
    %7333 = vmatprep.subr.mxu0 0.0
    %v7334 = vand.u32 %v7293, 4294901760
    %7335 = vmatpush1.msra.mxu0 %v7334
    %7336 = vmatprep.subr.mxu0 0.0
    %v7337 = vand.u32 %v7294, 4294901760
    %7338 = vmatpush1.msra.mxu0 %v7337
    %7339 = vmatprep.subr.mxu0 0.0
    %v7340 = vand.u32 %v7295, 4294901760
    %7341 = vmatpush1.msra.mxu0 %v7340
    %7342 = vmatprep.subr.mxu0 0.0
    %v7343 = vand.u32 %v7296, 4294901760
    %7344 = vmatpush1.msra.mxu0 %v7343
    %7345 = vmatprep.subr.mxu0 0.0
    %7346 = vmatpush1.msra.mxu0 0.0
    %7347 = vmatprep.subr.mxu0 0.0
    %7348 = vmatpush1.msra.mxu0 0.0
    %7349 = vmatprep.subr.mxu0 0.0
    %7350 = vmatpush1.msra.mxu0 0.0
    %7351 = vmatprep.subr.mxu0 0.0
    %7352 = vmatpush1.msra.mxu0 0.0
    %7353 = vmatprep.subr.mxu0 0.0
    %7354 = vmatpush1.msra.mxu0 0.0
    %7355 = vmatprep.subr.mxu0 0.0
    %7356 = vmatpush1.msra.mxu0 0.0
    %7357 = vmatprep.subr.mxu0 0.0
    %7358 = vmatpush1.msra.mxu0 0.0
    %7359 = vmatprep.subr.mxu0 0.0
    %7360 = vmatpush1.msra.mxu0 0.0
    %7361 = vmatprep.subr.mxu0 0.0
    %7362 = vmatpush1.msra.mxu0 0.0
    %7363 = vmatprep.subr.mxu0 0.0
    %7364 = vmatpush1.msra.mxu0 0.0
    %7365 = vmatprep.subr.mxu0 0.0
    %7366 = vmatpush1.msra.mxu0 0.0
    %7367 = vmatprep.subr.mxu0 0.0
    %7368 = vmatpush1.msra.mxu0 0.0
    %7369 = vmatprep.subr.mxu0 0.0
    %7370 = vmatpush1.msra.mxu0 0.0
    %7371 = vmatprep.subr.mxu0 0.0
    %7372 = vmatpush1.msra.mxu0 0.0
    %7373 = vmatprep.subr.mxu0 0.0
    %7374 = vmatpush1.msra.mxu0 0.0
    %7375 = vmatprep.subr.mxu0 0.0
    %7376 = vmatpush1.msra.mxu0 0.0
    %7377 = vmatprep.mubr.f32.mxu0 0.0
    %v7378 = vand.u32 %v7280, 4294901760
    %v7379 = vsub.f32 %v7280, %v7378
    %v7380 = vand.u32 %v7379, 4294901760
    %v7381 = vsub.f32 %v7379, %v7380
    %v7382 = vand.u32 %v7381, 4294901760
    %7383 = vmatmul.mubr.f32.gmra.mrb[0].mxu0 %v7382
    %v7384 = vpop.f32.mrb[0].mxu0
    %v7385 = vadd.f32 0.0, %v7384
    %v7386 = vpop.f32.mrb[0].mxu0
    %7387 = vdwg.mxu0
    %7388 = vmatprep.subr.mxu0 0.0
    %v7389 = vand.u32 %v7281, 4294901760
    %v7390 = vsub.f32 %v7281, %v7389
    %v7391 = vand.u32 %v7390, 4294901760
    %v7392 = vsub.f32 %v7390, %v7391
    %v7393 = vand.u32 %v7392, 4294901760
    %7394 = vmatpush1.msra.mxu0 %v7393
    %7395 = vmatprep.subr.mxu0 0.0
    %v7396 = vand.u32 %v7282, 4294901760
    %v7397 = vsub.f32 %v7282, %v7396
    %v7398 = vand.u32 %v7397, 4294901760
    %v7399 = vsub.f32 %v7397, %v7398
    %v7400 = vand.u32 %v7399, 4294901760
    %7401 = vmatpush1.msra.mxu0 %v7400
    %7402 = vmatprep.subr.mxu0 0.0
    %v7403 = vand.u32 %v7283, 4294901760
    %v7404 = vsub.f32 %v7283, %v7403
    %v7405 = vand.u32 %v7404, 4294901760
    %v7406 = vsub.f32 %v7404, %v7405
    %v7407 = vand.u32 %v7406, 4294901760
    %7408 = vmatpush1.msra.mxu0 %v7407
    %7409 = vmatprep.subr.mxu0 0.0
    %v7410 = vand.u32 %v7284, 4294901760
    %v7411 = vsub.f32 %v7284, %v7410
    %v7412 = vand.u32 %v7411, 4294901760
    %v7413 = vsub.f32 %v7411, %v7412
    %v7414 = vand.u32 %v7413, 4294901760
    %7415 = vmatpush1.msra.mxu0 %v7414
    %7416 = vmatprep.subr.mxu0 0.0
    %v7417 = vand.u32 %v7285, 4294901760
    %v7418 = vsub.f32 %v7285, %v7417
    %v7419 = vand.u32 %v7418, 4294901760
    %v7420 = vsub.f32 %v7418, %v7419
    %v7421 = vand.u32 %v7420, 4294901760
    %7422 = vmatpush1.msra.mxu0 %v7421
    %7423 = vmatprep.subr.mxu0 0.0
    %v7424 = vand.u32 %v7286, 4294901760
    %v7425 = vsub.f32 %v7286, %v7424
    %v7426 = vand.u32 %v7425, 4294901760
    %v7427 = vsub.f32 %v7425, %v7426
    %v7428 = vand.u32 %v7427, 4294901760
    %7429 = vmatpush1.msra.mxu0 %v7428
    %7430 = vmatprep.subr.mxu0 0.0
    %v7431 = vand.u32 %v7287, 4294901760
    %v7432 = vsub.f32 %v7287, %v7431
    %v7433 = vand.u32 %v7432, 4294901760
    %v7434 = vsub.f32 %v7432, %v7433
    %v7435 = vand.u32 %v7434, 4294901760
    %7436 = vmatpush1.msra.mxu0 %v7435
    %7437 = vmatprep.subr.mxu0 0.0
    %v7438 = vand.u32 %v7288, 4294901760
    %v7439 = vsub.f32 %v7288, %v7438
    %v7440 = vand.u32 %v7439, 4294901760
    %v7441 = vsub.f32 %v7439, %v7440
    %v7442 = vand.u32 %v7441, 4294901760
    %7443 = vmatpush1.msra.mxu0 %v7442
    %7444 = vmatprep.subr.mxu0 0.0
    %v7445 = vand.u32 %v7289, 4294901760
    %v7446 = vsub.f32 %v7289, %v7445
    %v7447 = vand.u32 %v7446, 4294901760
    %v7448 = vsub.f32 %v7446, %v7447
    %v7449 = vand.u32 %v7448, 4294901760
    %7450 = vmatpush1.msra.mxu0 %v7449
    %7451 = vmatprep.subr.mxu0 0.0
    %v7452 = vand.u32 %v7290, 4294901760
    %v7453 = vsub.f32 %v7290, %v7452
    %v7454 = vand.u32 %v7453, 4294901760
    %v7455 = vsub.f32 %v7453, %v7454
    %v7456 = vand.u32 %v7455, 4294901760
    %7457 = vmatpush1.msra.mxu0 %v7456
    %7458 = vmatprep.subr.mxu0 0.0
    %v7459 = vand.u32 %v7291, 4294901760
    %v7460 = vsub.f32 %v7291, %v7459
    %v7461 = vand.u32 %v7460, 4294901760
    %v7462 = vsub.f32 %v7460, %v7461
    %v7463 = vand.u32 %v7462, 4294901760
    %7464 = vmatpush1.msra.mxu0 %v7463
    %7465 = vmatprep.subr.mxu0 0.0
    %v7466 = vand.u32 %v7292, 4294901760
    %v7467 = vsub.f32 %v7292, %v7466
    %v7468 = vand.u32 %v7467, 4294901760
    %v7469 = vsub.f32 %v7467, %v7468
    %v7470 = vand.u32 %v7469, 4294901760
    %7471 = vmatpush1.msra.mxu0 %v7470
    %7472 = vmatprep.subr.mxu0 0.0
    %v7473 = vand.u32 %v7293, 4294901760
    %v7474 = vsub.f32 %v7293, %v7473
    %v7475 = vand.u32 %v7474, 4294901760
    %v7476 = vsub.f32 %v7474, %v7475
    %v7477 = vand.u32 %v7476, 4294901760
    %7478 = vmatpush1.msra.mxu0 %v7477
    %7479 = vmatprep.subr.mxu0 0.0
    %v7480 = vand.u32 %v7294, 4294901760
    %v7481 = vsub.f32 %v7294, %v7480
    %v7482 = vand.u32 %v7481, 4294901760
    %v7483 = vsub.f32 %v7481, %v7482
    %v7484 = vand.u32 %v7483, 4294901760
    %7485 = vmatpush1.msra.mxu0 %v7484
    %7486 = vmatprep.subr.mxu0 0.0
    %v7487 = vand.u32 %v7295, 4294901760
    %v7488 = vsub.f32 %v7295, %v7487
    %v7489 = vand.u32 %v7488, 4294901760
    %v7490 = vsub.f32 %v7488, %v7489
    %v7491 = vand.u32 %v7490, 4294901760
    %7492 = vmatpush1.msra.mxu0 %v7491
    %7493 = vmatprep.subr.mxu0 0.0
    %v7494 = vand.u32 %v7296, 4294901760
    %v7495 = vsub.f32 %v7296, %v7494
    %v7496 = vand.u32 %v7495, 4294901760
    %v7497 = vsub.f32 %v7495, %v7496
    %v7498 = vand.u32 %v7497, 4294901760
    %7499 = vmatpush1.msra.mxu0 %v7498
    %7500 = vmatprep.subr.mxu0 0.0
    %7501 = vmatpush1.msra.mxu0 0.0
    %7502 = vmatprep.subr.mxu0 0.0
    %7503 = vmatpush1.msra.mxu0 0.0
    %7504 = vmatprep.subr.mxu0 0.0
    %7505 = vmatpush1.msra.mxu0 0.0
    %7506 = vmatprep.subr.mxu0 0.0
    %7507 = vmatpush1.msra.mxu0 0.0
    %7508 = vmatprep.subr.mxu0 0.0
    %7509 = vmatpush1.msra.mxu0 0.0
    %7510 = vmatprep.subr.mxu0 0.0
    %7511 = vmatpush1.msra.mxu0 0.0
    %7512 = vmatprep.subr.mxu0 0.0
    %7513 = vmatpush1.msra.mxu0 0.0
    %7514 = vmatprep.subr.mxu0 0.0
    %7515 = vmatpush1.msra.mxu0 0.0
    %7516 = vmatprep.subr.mxu0 0.0
    %7517 = vmatpush1.msra.mxu0 0.0
    %7518 = vmatprep.subr.mxu0 0.0
    %7519 = vmatpush1.msra.mxu0 0.0
    %7520 = vmatprep.subr.mxu0 0.0
    %7521 = vmatpush1.msra.mxu0 0.0
    %7522 = vmatprep.subr.mxu0 0.0
    %7523 = vmatpush1.msra.mxu0 0.0
    %7524 = vmatprep.subr.mxu0 0.0
    %7525 = vmatpush1.msra.mxu0 0.0
    %7526 = vmatprep.subr.mxu0 0.0
    %7527 = vmatpush1.msra.mxu0 0.0
    %7528 = vmatprep.subr.mxu0 0.0
    %7529 = vmatpush1.msra.mxu0 0.0
    %7530 = vmatprep.subr.mxu0 0.0
    %7531 = vmatpush1.msra.mxu0 0.0
    %7532 = vmatprep.mubr.f32.mxu0 0.0
    %v7533 = vand.u32 %v7280, 4294901760
    %7534 = vmatmul.mubr.f32.gmra.mrb[0].mxu0 %v7533
    %v7535 = vpop.f32.mrb[0].mxu0
    %v7536 = vadd.f32 %v7385, %v7535
    %v7537 = vpop.f32.mrb[0].mxu0
    %7538 = vdwg.mxu0
    %7539 = vmatprep.subr.mxu0 0.0
    %v7540 = vand.u32 %v7281, 4294901760
    %v7541 = vsub.f32 %v7281, %v7540
    %7542 = vmatpush1.msra.mxu0 %v7541
    %7543 = vmatprep.subr.mxu0 0.0
    %v7544 = vand.u32 %v7282, 4294901760
    %v7545 = vsub.f32 %v7282, %v7544
    %7546 = vmatpush1.msra.mxu0 %v7545
    %7547 = vmatprep.subr.mxu0 0.0
    %v7548 = vand.u32 %v7283, 4294901760
    %v7549 = vsub.f32 %v7283, %v7548
    %7550 = vmatpush1.msra.mxu0 %v7549
    %7551 = vmatprep.subr.mxu0 0.0
    %v7552 = vand.u32 %v7284, 4294901760
    %v7553 = vsub.f32 %v7284, %v7552
    %7554 = vmatpush1.msra.mxu0 %v7553
    %7555 = vmatprep.subr.mxu0 0.0
    %v7556 = vand.u32 %v7285, 4294901760
    %v7557 = vsub.f32 %v7285, %v7556
    %7558 = vmatpush1.msra.mxu0 %v7557
    %7559 = vmatprep.subr.mxu0 0.0
    %v7560 = vand.u32 %v7286, 4294901760
    %v7561 = vsub.f32 %v7286, %v7560
    %7562 = vmatpush1.msra.mxu0 %v7561
    %7563 = vmatprep.subr.mxu0 0.0
    %v7564 = vand.u32 %v7287, 4294901760
    %v7565 = vsub.f32 %v7287, %v7564
    %7566 = vmatpush1.msra.mxu0 %v7565
    %7567 = vmatprep.subr.mxu0 0.0
    %v7568 = vand.u32 %v7288, 4294901760
    %v7569 = vsub.f32 %v7288, %v7568
    %7570 = vmatpush1.msra.mxu0 %v7569
    %7571 = vmatprep.subr.mxu0 0.0
    %v7572 = vand.u32 %v7289, 4294901760
    %v7573 = vsub.f32 %v7289, %v7572
    %7574 = vmatpush1.msra.mxu0 %v7573
    %7575 = vmatprep.subr.mxu0 0.0
    %v7576 = vand.u32 %v7290, 4294901760
    %v7577 = vsub.f32 %v7290, %v7576
    %7578 = vmatpush1.msra.mxu0 %v7577
    %7579 = vmatprep.subr.mxu0 0.0
    %v7580 = vand.u32 %v7291, 4294901760
    %v7581 = vsub.f32 %v7291, %v7580
    %7582 = vmatpush1.msra.mxu0 %v7581
    %7583 = vmatprep.subr.mxu0 0.0
    %v7584 = vand.u32 %v7292, 4294901760
    %v7585 = vsub.f32 %v7292, %v7584
    %7586 = vmatpush1.msra.mxu0 %v7585
    %7587 = vmatprep.subr.mxu0 0.0
    %v7588 = vand.u32 %v7293, 4294901760
    %v7589 = vsub.f32 %v7293, %v7588
    %7590 = vmatpush1.msra.mxu0 %v7589
    %7591 = vmatprep.subr.mxu0 0.0
    %v7592 = vand.u32 %v7294, 4294901760
    %v7593 = vsub.f32 %v7294, %v7592
    %7594 = vmatpush1.msra.mxu0 %v7593
    %7595 = vmatprep.subr.mxu0 0.0
    %v7596 = vand.u32 %v7295, 4294901760
    %v7597 = vsub.f32 %v7295, %v7596
    %7598 = vmatpush1.msra.mxu0 %v7597
    %7599 = vmatprep.subr.mxu0 0.0
    %v7600 = vand.u32 %v7296, 4294901760
    %v7601 = vsub.f32 %v7296, %v7600
    %7602 = vmatpush1.msra.mxu0 %v7601
    %7603 = vmatprep.subr.mxu0 0.0
    %7604 = vmatpush1.msra.mxu0 0.0
    %7605 = vmatprep.subr.mxu0 0.0
    %7606 = vmatpush1.msra.mxu0 0.0
    %7607 = vmatprep.subr.mxu0 0.0
    %7608 = vmatpush1.msra.mxu0 0.0
    %7609 = vmatprep.subr.mxu0 0.0
    %7610 = vmatpush1.msra.mxu0 0.0
    %7611 = vmatprep.subr.mxu0 0.0
    %7612 = vmatpush1.msra.mxu0 0.0
    %7613 = vmatprep.subr.mxu0 0.0
    %7614 = vmatpush1.msra.mxu0 0.0
    %7615 = vmatprep.subr.mxu0 0.0
    %7616 = vmatpush1.msra.mxu0 0.0
    %7617 = vmatprep.subr.mxu0 0.0
    %7618 = vmatpush1.msra.mxu0 0.0
    %7619 = vmatprep.subr.mxu0 0.0
    %7620 = vmatpush1.msra.mxu0 0.0
    %7621 = vmatprep.subr.mxu0 0.0
    %7622 = vmatpush1.msra.mxu0 0.0
    %7623 = vmatprep.subr.mxu0 0.0
    %7624 = vmatpush1.msra.mxu0 0.0
    %7625 = vmatprep.subr.mxu0 0.0
    %7626 = vmatpush1.msra.mxu0 0.0
    %7627 = vmatprep.subr.mxu0 0.0
    %7628 = vmatpush1.msra.mxu0 0.0
    %7629 = vmatprep.subr.mxu0 0.0
    %7630 = vmatpush1.msra.mxu0 0.0
    %7631 = vmatprep.subr.mxu0 0.0
    %7632 = vmatpush1.msra.mxu0 0.0
    %7633 = vmatprep.subr.mxu0 0.0
    %7634 = vmatpush1.msra.mxu0 0.0
    %7635 = vmatprep.mubr.f32.mxu0 0.0
    %v7636 = vand.u32 %v7280, 4294901760
    %v7637 = vsub.f32 %v7280, %v7636
    %7638 = vmatmul.mubr.f32.gmra.mrb[0].mxu0 %v7637
    %v7639 = vpop.f32.mrb[0].mxu0
    %v7640 = vadd.f32 %v7536, %v7639
    %v7641 = vpop.f32.mrb[0].mxu0
    %7642 = vdwg.mxu0
    %7643 = vmatprep.subr.mxu0 0.0
    %v7644 = vand.u32 %v7281, 4294901760
    %7645 = vmatpush1.msra.mxu0 %v7644
    %7646 = vmatprep.subr.mxu0 0.0
    %v7647 = vand.u32 %v7282, 4294901760
    %7648 = vmatpush1.msra.mxu0 %v7647
    %7649 = vmatprep.subr.mxu0 0.0
    %v7650 = vand.u32 %v7283, 4294901760
    %7651 = vmatpush1.msra.mxu0 %v7650
    %7652 = vmatprep.subr.mxu0 0.0
    %v7653 = vand.u32 %v7284, 4294901760
    %7654 = vmatpush1.msra.mxu0 %v7653
    %7655 = vmatprep.subr.mxu0 0.0
    %v7656 = vand.u32 %v7285, 4294901760
    %7657 = vmatpush1.msra.mxu0 %v7656
    %7658 = vmatprep.subr.mxu0 0.0
    %v7659 = vand.u32 %v7286, 4294901760
    %7660 = vmatpush1.msra.mxu0 %v7659
    %7661 = vmatprep.subr.mxu0 0.0
    %v7662 = vand.u32 %v7287, 4294901760
    %7663 = vmatpush1.msra.mxu0 %v7662
    %7664 = vmatprep.subr.mxu0 0.0
    %v7665 = vand.u32 %v7288, 4294901760
    %7666 = vmatpush1.msra.mxu0 %v7665
    %7667 = vmatprep.subr.mxu0 0.0
    %v7668 = vand.u32 %v7289, 4294901760
    %7669 = vmatpush1.msra.mxu0 %v7668
    %7670 = vmatprep.subr.mxu0 0.0
    %v7671 = vand.u32 %v7290, 4294901760
    %7672 = vmatpush1.msra.mxu0 %v7671
    %7673 = vmatprep.subr.mxu0 0.0
    %v7674 = vand.u32 %v7291, 4294901760
    %7675 = vmatpush1.msra.mxu0 %v7674
    %7676 = vmatprep.subr.mxu0 0.0
    %v7677 = vand.u32 %v7292, 4294901760
    %7678 = vmatpush1.msra.mxu0 %v7677
    %7679 = vmatprep.subr.mxu0 0.0
    %v7680 = vand.u32 %v7293, 4294901760
    %7681 = vmatpush1.msra.mxu0 %v7680
    %7682 = vmatprep.subr.mxu0 0.0
    %v7683 = vand.u32 %v7294, 4294901760
    %7684 = vmatpush1.msra.mxu0 %v7683
    %7685 = vmatprep.subr.mxu0 0.0
    %v7686 = vand.u32 %v7295, 4294901760
    %7687 = vmatpush1.msra.mxu0 %v7686
    %7688 = vmatprep.subr.mxu0 0.0
    %v7689 = vand.u32 %v7296, 4294901760
    %7690 = vmatpush1.msra.mxu0 %v7689
    %7691 = vmatprep.subr.mxu0 0.0
    %7692 = vmatpush1.msra.mxu0 0.0
    %7693 = vmatprep.subr.mxu0 0.0
    %7694 = vmatpush1.msra.mxu0 0.0
    %7695 = vmatprep.subr.mxu0 0.0
    %7696 = vmatpush1.msra.mxu0 0.0
    %7697 = vmatprep.subr.mxu0 0.0
    %7698 = vmatpush1.msra.mxu0 0.0
    %7699 = vmatprep.subr.mxu0 0.0
    %7700 = vmatpush1.msra.mxu0 0.0
    %7701 = vmatprep.subr.mxu0 0.0
    %7702 = vmatpush1.msra.mxu0 0.0
    %7703 = vmatprep.subr.mxu0 0.0
    %7704 = vmatpush1.msra.mxu0 0.0
    %7705 = vmatprep.subr.mxu0 0.0
    %7706 = vmatpush1.msra.mxu0 0.0
    %7707 = vmatprep.subr.mxu0 0.0
    %7708 = vmatpush1.msra.mxu0 0.0
    %7709 = vmatprep.subr.mxu0 0.0
    %7710 = vmatpush1.msra.mxu0 0.0
    %7711 = vmatprep.subr.mxu0 0.0
    %7712 = vmatpush1.msra.mxu0 0.0
    %7713 = vmatprep.subr.mxu0 0.0
    %7714 = vmatpush1.msra.mxu0 0.0
    %7715 = vmatprep.subr.mxu0 0.0
    %7716 = vmatpush1.msra.mxu0 0.0
    %7717 = vmatprep.subr.mxu0 0.0
    %7718 = vmatpush1.msra.mxu0 0.0
    %7719 = vmatprep.subr.mxu0 0.0
    %7720 = vmatpush1.msra.mxu0 0.0
    %7721 = vmatprep.subr.mxu0 0.0
    %7722 = vmatpush1.msra.mxu0 0.0
    %7723 = vmatprep.mubr.f32.mxu0 0.0
    %v7724 = vand.u32 %v7280, 4294901760
    %v7725 = vsub.f32 %v7280, %v7724
    %v7726 = vand.u32 %v7725, 4294901760
    %7727 = vmatmul.mubr.f32.gmra.mrb[0].mxu0 %v7726
    %v7728 = vpop.f32.mrb[0].mxu0
    %v7729 = vadd.f32 %v7640, %v7728
    %v7730 = vpop.f32.mrb[0].mxu0
    %7731 = vdwg.mxu0
    %7732 = vmatprep.subr.mxu0 0.0
    %v7733 = vand.u32 %v7281, 4294901760
    %v7734 = vsub.f32 %v7281, %v7733
    %v7735 = vand.u32 %v7734, 4294901760
    %7736 = vmatpush1.msra.mxu0 %v7735
    %7737 = vmatprep.subr.mxu0 0.0
    %v7738 = vand.u32 %v7282, 4294901760
    %v7739 = vsub.f32 %v7282, %v7738
    %v7740 = vand.u32 %v7739, 4294901760
    %7741 = vmatpush1.msra.mxu0 %v7740
    %7742 = vmatprep.subr.mxu0 0.0
    %v7743 = vand.u32 %v7283, 4294901760
    %v7744 = vsub.f32 %v7283, %v7743
    %v7745 = vand.u32 %v7744, 4294901760
    %7746 = vmatpush1.msra.mxu0 %v7745
    %7747 = vmatprep.subr.mxu0 0.0
    %v7748 = vand.u32 %v7284, 4294901760
    %v7749 = vsub.f32 %v7284, %v7748
    %v7750 = vand.u32 %v7749, 4294901760
    %7751 = vmatpush1.msra.mxu0 %v7750
    %7752 = vmatprep.subr.mxu0 0.0
    %v7753 = vand.u32 %v7285, 4294901760
    %v7754 = vsub.f32 %v7285, %v7753
    %v7755 = vand.u32 %v7754, 4294901760
    %7756 = vmatpush1.msra.mxu0 %v7755
    %7757 = vmatprep.subr.mxu0 0.0
    %v7758 = vand.u32 %v7286, 4294901760
    %v7759 = vsub.f32 %v7286, %v7758
    %v7760 = vand.u32 %v7759, 4294901760
    %7761 = vmatpush1.msra.mxu0 %v7760
    %7762 = vmatprep.subr.mxu0 0.0
    %v7763 = vand.u32 %v7287, 4294901760
    %v7764 = vsub.f32 %v7287, %v7763
    %v7765 = vand.u32 %v7764, 4294901760
    %7766 = vmatpush1.msra.mxu0 %v7765
    %7767 = vmatprep.subr.mxu0 0.0
    %v7768 = vand.u32 %v7288, 4294901760
    %v7769 = vsub.f32 %v7288, %v7768
    %v7770 = vand.u32 %v7769, 4294901760
    %7771 = vmatpush1.msra.mxu0 %v7770
    %7772 = vmatprep.subr.mxu0 0.0
    %v7773 = vand.u32 %v7289, 4294901760
    %v7774 = vsub.f32 %v7289, %v7773
    %v7775 = vand.u32 %v7774, 4294901760
    %7776 = vmatpush1.msra.mxu0 %v7775
    %7777 = vmatprep.subr.mxu0 0.0
    %v7778 = vand.u32 %v7290, 4294901760
    %v7779 = vsub.f32 %v7290, %v7778
    %v7780 = vand.u32 %v7779, 4294901760
    %7781 = vmatpush1.msra.mxu0 %v7780
    %7782 = vmatprep.subr.mxu0 0.0
    %v7783 = vand.u32 %v7291, 4294901760
    %v7784 = vsub.f32 %v7291, %v7783
    %v7785 = vand.u32 %v7784, 4294901760
    %7786 = vmatpush1.msra.mxu0 %v7785
    %7787 = vmatprep.subr.mxu0 0.0
    %v7788 = vand.u32 %v7292, 4294901760
    %v7789 = vsub.f32 %v7292, %v7788
    %v7790 = vand.u32 %v7789, 4294901760
    %7791 = vmatpush1.msra.mxu0 %v7790
    %7792 = vmatprep.subr.mxu0 0.0
    %v7793 = vand.u32 %v7293, 4294901760
    %v7794 = vsub.f32 %v7293, %v7793
    %v7795 = vand.u32 %v7794, 4294901760
    %7796 = vmatpush1.msra.mxu0 %v7795
    %7797 = vmatprep.subr.mxu0 0.0
    %v7798 = vand.u32 %v7294, 4294901760
    %v7799 = vsub.f32 %v7294, %v7798
    %v7800 = vand.u32 %v7799, 4294901760
    %7801 = vmatpush1.msra.mxu0 %v7800
    %7802 = vmatprep.subr.mxu0 0.0
    %v7803 = vand.u32 %v7295, 4294901760
    %v7804 = vsub.f32 %v7295, %v7803
    %v7805 = vand.u32 %v7804, 4294901760
    %7806 = vmatpush1.msra.mxu0 %v7805
    %7807 = vmatprep.subr.mxu0 0.0
    %v7808 = vand.u32 %v7296, 4294901760
    %v7809 = vsub.f32 %v7296, %v7808
    %v7810 = vand.u32 %v7809, 4294901760
    %7811 = vmatpush1.msra.mxu0 %v7810
    %7812 = vmatprep.subr.mxu0 0.0
    %7813 = vmatpush1.msra.mxu0 0.0
    %7814 = vmatprep.subr.mxu0 0.0
    %7815 = vmatpush1.msra.mxu0 0.0
    %7816 = vmatprep.subr.mxu0 0.0
    %7817 = vmatpush1.msra.mxu0 0.0
    %7818 = vmatprep.subr.mxu0 0.0
    %7819 = vmatpush1.msra.mxu0 0.0
    %7820 = vmatprep.subr.mxu0 0.0
    %7821 = vmatpush1.msra.mxu0 0.0
    %7822 = vmatprep.subr.mxu0 0.0
    %7823 = vmatpush1.msra.mxu0 0.0
    %7824 = vmatprep.subr.mxu0 0.0
    %7825 = vmatpush1.msra.mxu0 0.0
    %7826 = vmatprep.subr.mxu0 0.0
    %7827 = vmatpush1.msra.mxu0 0.0
    %7828 = vmatprep.subr.mxu0 0.0
    %7829 = vmatpush1.msra.mxu0 0.0
    %7830 = vmatprep.subr.mxu0 0.0
    %7831 = vmatpush1.msra.mxu0 0.0
    %7832 = vmatprep.subr.mxu0 0.0
    %7833 = vmatpush1.msra.mxu0 0.0
    %7834 = vmatprep.subr.mxu0 0.0
    %7835 = vmatpush1.msra.mxu0 0.0
    %7836 = vmatprep.subr.mxu0 0.0
    %7837 = vmatpush1.msra.mxu0 0.0
    %7838 = vmatprep.subr.mxu0 0.0
    %7839 = vmatpush1.msra.mxu0 0.0
    %7840 = vmatprep.subr.mxu0 0.0
    %7841 = vmatpush1.msra.mxu0 0.0
    %7842 = vmatprep.subr.mxu0 0.0
    %7843 = vmatpush1.msra.mxu0 0.0
    %7844 = vmatprep.mubr.f32.mxu0 0.0
    %v7845 = vand.u32 %v7280, 4294901760
    %7846 = vmatmul.mubr.f32.gmra.mrb[0].mxu0 %v7845
    %v7847 = vpop.f32.mrb[0].mxu0
    %v7848 = vadd.f32 %v7729, %v7847
    %v7849 = vpop.f32.mrb[0].mxu0
    %7850 = vdwg.mxu0
    %7851 = vmatprep.subr.mxu0 0.0
    %v7852 = vand.u32 %v7281, 4294901760
    %7853 = vmatpush1.msra.mxu0 %v7852
    %7854 = vmatprep.subr.mxu0 0.0
    %v7855 = vand.u32 %v7282, 4294901760
    %7856 = vmatpush1.msra.mxu0 %v7855
    %7857 = vmatprep.subr.mxu0 0.0
    %v7858 = vand.u32 %v7283, 4294901760
    %7859 = vmatpush1.msra.mxu0 %v7858
    %7860 = vmatprep.subr.mxu0 0.0
    %v7861 = vand.u32 %v7284, 4294901760
    %7862 = vmatpush1.msra.mxu0 %v7861
    %7863 = vmatprep.subr.mxu0 0.0
    %v7864 = vand.u32 %v7285, 4294901760
    %7865 = vmatpush1.msra.mxu0 %v7864
    %7866 = vmatprep.subr.mxu0 0.0
    %v7867 = vand.u32 %v7286, 4294901760
    %7868 = vmatpush1.msra.mxu0 %v7867
    %7869 = vmatprep.subr.mxu0 0.0
    %v7870 = vand.u32 %v7287, 4294901760
    %7871 = vmatpush1.msra.mxu0 %v7870
    %7872 = vmatprep.subr.mxu0 0.0
    %v7873 = vand.u32 %v7288, 4294901760
    %7874 = vmatpush1.msra.mxu0 %v7873
    %7875 = vmatprep.subr.mxu0 0.0
    %v7876 = vand.u32 %v7289, 4294901760
    %7877 = vmatpush1.msra.mxu0 %v7876
    %7878 = vmatprep.subr.mxu0 0.0
    %v7879 = vand.u32 %v7290, 4294901760
    %7880 = vmatpush1.msra.mxu0 %v7879
    %7881 = vmatprep.subr.mxu0 0.0
    %v7882 = vand.u32 %v7291, 4294901760
    %7883 = vmatpush1.msra.mxu0 %v7882
    %7884 = vmatprep.subr.mxu0 0.0
    %v7885 = vand.u32 %v7292, 4294901760
    %7886 = vmatpush1.msra.mxu0 %v7885
    %7887 = vmatprep.subr.mxu0 0.0
    %v7888 = vand.u32 %v7293, 4294901760
    %7889 = vmatpush1.msra.mxu0 %v7888
    %7890 = vmatprep.subr.mxu0 0.0
    %v7891 = vand.u32 %v7294, 4294901760
    %7892 = vmatpush1.msra.mxu0 %v7891
    %7893 = vmatprep.subr.mxu0 0.0
    %v7894 = vand.u32 %v7295, 4294901760
    %7895 = vmatpush1.msra.mxu0 %v7894
    %7896 = vmatprep.subr.mxu0 0.0
    %v7897 = vand.u32 %v7296, 4294901760
    %7898 = vmatpush1.msra.mxu0 %v7897
    %7899 = vmatprep.subr.mxu0 0.0
    %7900 = vmatpush1.msra.mxu0 0.0
    %7901 = vmatprep.subr.mxu0 0.0
    %7902 = vmatpush1.msra.mxu0 0.0
    %7903 = vmatprep.subr.mxu0 0.0
    %7904 = vmatpush1.msra.mxu0 0.0
    %7905 = vmatprep.subr.mxu0 0.0
    %7906 = vmatpush1.msra.mxu0 0.0
    %7907 = vmatprep.subr.mxu0 0.0
    %7908 = vmatpush1.msra.mxu0 0.0
    %7909 = vmatprep.subr.mxu0 0.0
    %7910 = vmatpush1.msra.mxu0 0.0
    %7911 = vmatprep.subr.mxu0 0.0
    %7912 = vmatpush1.msra.mxu0 0.0
    %7913 = vmatprep.subr.mxu0 0.0
    %7914 = vmatpush1.msra.mxu0 0.0
    %7915 = vmatprep.subr.mxu0 0.0
    %7916 = vmatpush1.msra.mxu0 0.0
    %7917 = vmatprep.subr.mxu0 0.0
    %7918 = vmatpush1.msra.mxu0 0.0
    %7919 = vmatprep.subr.mxu0 0.0
    %7920 = vmatpush1.msra.mxu0 0.0
    %7921 = vmatprep.subr.mxu0 0.0
    %7922 = vmatpush1.msra.mxu0 0.0
    %7923 = vmatprep.subr.mxu0 0.0
    %7924 = vmatpush1.msra.mxu0 0.0
    %7925 = vmatprep.subr.mxu0 0.0
    %7926 = vmatpush1.msra.mxu0 0.0
    %7927 = vmatprep.subr.mxu0 0.0
    %7928 = vmatpush1.msra.mxu0 0.0
    %7929 = vmatprep.subr.mxu0 0.0
    %7930 = vmatpush1.msra.mxu0 0.0
    %7931 = vmatprep.mubr.f32.mxu0 0.0
    %v7932 = vand.u32 %v7280, 4294901760
    %7933 = vmatmul.mubr.f32.gmra.mrb[0].mxu0 %v7932
    %v7934 = vpop.f32.mrb[0].mxu0
    %v7935 = vadd.f32 %v7848, %v7934
    %v7936 = vpop.f32.mrb[0].mxu0
    %7937 = vdwg.mxu0
    %v7938 = vadd.f32 %v6378, %v7935
    %v7939 = vtanh.pop %v7938
    %v7940 = vsub.f32 1.0, %v7272
    %v7941 = vmul.f32 %v7940, %v6374
    %v7942 = vmul.f32 %v7272, %v7939
    %v7943 = vadd.f32 %v7941, %v7942
    %s7944 = scalar_lea.vmem [#allocation11], 32
    %7945 = vst [vmem:[%s7944] sm:$0xff] %v7943
    %s7946 = scalar_lea.vmem [#allocation6], 40
    %v7947 = vld [vmem:[%s7946] sm:$0xff]
    %v7948 = vmul.f32 %v7947, %v7943
    %s7949 = scalar_lea.vmem [#allocation3], 120
    %v7950 = vld [vmem:[%s7949] sm:$0xff]
    %v7951 = vld [vmem:[%s7949 + $0x8] sm:$0xff]
    %v7952 = vld [vmem:[%s7949 + $0x10] sm:$0xff]
    %v7953 = vld [vmem:[#allocation8] sm:$0xff]
    %v7954 = vld [vmem:[#allocation8 + $0x8] sm:$0xff]
    %v7955 = vld [vmem:[#allocation8 + $0x10] sm:$0xff]
    %v7956 = vld [vmem:[#allocation8 + $0x18] sm:$0xff]
    %v7957 = vld [vmem:[#allocation8 + $0x20] sm:$0xff]
    %v7958 = vld [vmem:[#allocation8 + $0x28] sm:$0xff]
    %v7959 = vld [vmem:[#allocation8 + $0x30] sm:$0xff]
    %v7960 = vld [vmem:[#allocation8 + $0x38] sm:$0xff]
    %v7961 = vld [vmem:[#allocation8 + $0x40] sm:$0xff]
    %v7962 = vld [vmem:[#allocation8 + $0x48] sm:$0xff]
    %v7963 = vld [vmem:[#allocation8 + $0x50] sm:$0xff]
    %v7964 = vld [vmem:[#allocation8 + $0x58] sm:$0xff]
    %v7965 = vld [vmem:[#allocation8 + $0x60] sm:$0xff]
    %v7966 = vld [vmem:[#allocation8 + $0x68] sm:$0xff]
    %v7967 = vld [vmem:[#allocation8 + $0x70] sm:$0xff]
    %v7968 = vld [vmem:[#allocation8 + $0x78] sm:$0xff]
    %v7969 = vld [vmem:[#allocation8 + $0x80] sm:$0xff]
    %v7970 = vld [vmem:[#allocation8 + $0x88] sm:$0xff]
    %v7971 = vld [vmem:[#allocation8 + $0x90] sm:$0xff]
    %v7972 = vld [vmem:[#allocation8 + $0x98] sm:$0xff]
    %v7973 = vld [vmem:[#allocation8 + $0xa0] sm:$0xff]
    %v7974 = vld [vmem:[#allocation8 + $0xa8] sm:$0xff]
    %v7975 = vld [vmem:[#allocation8 + $0xb0] sm:$0xff]
    %v7976 = vld [vmem:[#allocation8 + $0xb8] sm:$0xff]
    %v7977 = vld [vmem:[#allocation8 + $0xc0] sm:$0xff]
    %v7978 = vld [vmem:[#allocation8 + $0xc8] sm:$0xff]
    %v7979 = vld [vmem:[#allocation8 + $0xd0] sm:$0xff]
    %v7980 = vld [vmem:[#allocation8 + $0xd8] sm:$0xff]
    %v7981 = vld [vmem:[#allocation8 + $0xe0] sm:$0xff]
    %v7982 = vld [vmem:[#allocation8 + $0xe8] sm:$0xff]
    %v7983 = vld [vmem:[#allocation8 + $0xf0] sm:$0xff]
    %v7984 = vld [vmem:[#allocation8 + $0xf8] sm:$0xff]
    %v7985 = vand.u32 %v7954, 4294901760
    %7986 = vmatprep.subr.mxu0 %v7985
    %v7987 = vand.u32 %v7953, 4294901760
    %7988 = vmatpush1.msra.mxu0 %v7987
    %v7989 = vand.u32 %v7956, 4294901760
    %7990 = vmatprep.subr.mxu0 %v7989
    %v7991 = vand.u32 %v7955, 4294901760
    %7992 = vmatpush1.msra.mxu0 %v7991
    %v7993 = vand.u32 %v7958, 4294901760
    %7994 = vmatprep.subr.mxu0 %v7993
    %v7995 = vand.u32 %v7957, 4294901760
    %7996 = vmatpush1.msra.mxu0 %v7995
    %v7997 = vand.u32 %v7960, 4294901760
    %7998 = vmatprep.subr.mxu0 %v7997
    %v7999 = vand.u32 %v7959, 4294901760
    %8000 = vmatpush1.msra.mxu0 %v7999
    %v8001 = vand.u32 %v7962, 4294901760
    %8002 = vmatprep.subr.mxu0 %v8001
    %v8003 = vand.u32 %v7961, 4294901760
    %8004 = vmatpush1.msra.mxu0 %v8003
    %v8005 = vand.u32 %v7964, 4294901760
    %8006 = vmatprep.subr.mxu0 %v8005
    %v8007 = vand.u32 %v7963, 4294901760
    %8008 = vmatpush1.msra.mxu0 %v8007
    %v8009 = vand.u32 %v7966, 4294901760
    %8010 = vmatprep.subr.mxu0 %v8009
    %v8011 = vand.u32 %v7965, 4294901760
    %8012 = vmatpush1.msra.mxu0 %v8011
    %v8013 = vand.u32 %v7968, 4294901760
    %8014 = vmatprep.subr.mxu0 %v8013
    %v8015 = vand.u32 %v7967, 4294901760
    %8016 = vmatpush1.msra.mxu0 %v8015
    %v8017 = vand.u32 %v7970, 4294901760
    %8018 = vmatprep.subr.mxu0 %v8017
    %v8019 = vand.u32 %v7969, 4294901760
    %8020 = vmatpush1.msra.mxu0 %v8019
    %v8021 = vand.u32 %v7972, 4294901760
    %8022 = vmatprep.subr.mxu0 %v8021
    %v8023 = vand.u32 %v7971, 4294901760
    %8024 = vmatpush1.msra.mxu0 %v8023
    %v8025 = vand.u32 %v7974, 4294901760
    %8026 = vmatprep.subr.mxu0 %v8025
    %v8027 = vand.u32 %v7973, 4294901760
    %8028 = vmatpush1.msra.mxu0 %v8027
    %v8029 = vand.u32 %v7976, 4294901760
    %8030 = vmatprep.subr.mxu0 %v8029
    %v8031 = vand.u32 %v7975, 4294901760
    %8032 = vmatpush1.msra.mxu0 %v8031
    %v8033 = vand.u32 %v7978, 4294901760
    %8034 = vmatprep.subr.mxu0 %v8033
    %v8035 = vand.u32 %v7977, 4294901760
    %8036 = vmatpush1.msra.mxu0 %v8035
    %v8037 = vand.u32 %v7980, 4294901760
    %8038 = vmatprep.subr.mxu0 %v8037
    %v8039 = vand.u32 %v7979, 4294901760
    %8040 = vmatpush1.msra.mxu0 %v8039
    %v8041 = vand.u32 %v7982, 4294901760
    %8042 = vmatprep.subr.mxu0 %v8041
    %v8043 = vand.u32 %v7981, 4294901760
    %8044 = vmatpush1.msra.mxu0 %v8043
    %v8045 = vand.u32 %v7984, 4294901760
    %8046 = vmatprep.subr.mxu0 %v8045
    %v8047 = vand.u32 %v7983, 4294901760
    %8048 = vmatpush1.msra.mxu0 %v8047
    %8049 = vmatprep.subr.mxu0 0.0
    %8050 = vmatpush1.msra.mxu0 0.0
    %8051 = vmatprep.subr.mxu0 0.0
    %8052 = vmatpush1.msra.mxu0 0.0
    %8053 = vmatprep.subr.mxu0 0.0
    %8054 = vmatpush1.msra.mxu0 0.0
    %8055 = vmatprep.subr.mxu0 0.0
    %8056 = vmatpush1.msra.mxu0 0.0
    %8057 = vmatprep.subr.mxu0 0.0
    %8058 = vmatpush1.msra.mxu0 0.0
    %8059 = vmatprep.subr.mxu0 0.0
    %8060 = vmatpush1.msra.mxu0 0.0
    %8061 = vmatprep.subr.mxu0 0.0
    %8062 = vmatpush1.msra.mxu0 0.0
    %8063 = vmatprep.subr.mxu0 0.0
    %8064 = vmatpush1.msra.mxu0 0.0
    %8065 = vmatprep.subr.mxu0 0.0
    %8066 = vmatpush1.msra.mxu0 0.0
    %8067 = vmatprep.subr.mxu0 0.0
    %8068 = vmatpush1.msra.mxu0 0.0
    %8069 = vmatprep.subr.mxu0 0.0
    %8070 = vmatpush1.msra.mxu0 0.0
    %8071 = vmatprep.subr.mxu0 0.0
    %8072 = vmatpush1.msra.mxu0 0.0
    %8073 = vmatprep.subr.mxu0 0.0
    %8074 = vmatpush1.msra.mxu0 0.0
    %8075 = vmatprep.subr.mxu0 0.0
    %8076 = vmatpush1.msra.mxu0 0.0
    %8077 = vmatprep.subr.mxu0 0.0
    %8078 = vmatpush1.msra.mxu0 0.0
    %8079 = vmatprep.subr.mxu0 0.0
    %8080 = vmatpush1.msra.mxu0 0.0
    %8081 = vmatprep.mubr.f32.mxu0 0.0
    %v8082 = vand.u32 %v7948, 4294901760
    %v8083 = vsub.f32 %v7948, %v8082
    %v8084 = vand.u32 %v8083, 4294901760
    %v8085 = vsub.f32 %v8083, %v8084
    %v8086 = vand.u32 %v8085, 4294901760
    %8087 = vmatmul.mubr.f32.gmra.mrb[0].mxu0 %v8086
    %v8088 = vpop.f32.mrb[0].mxu0
    %v8089 = vadd.f32 0.0, %v8088
    %v8090 = vpop.f32.mrb[0].mxu0
    %v8091 = vadd.f32 0.0, %v8090
    %8092 = vdwg.mxu0
    %v8093 = vand.u32 %v7954, 4294901760
    %v8094 = vsub.f32 %v7954, %v8093
    %v8095 = vand.u32 %v8094, 4294901760
    %v8096 = vsub.f32 %v8094, %v8095
    %v8097 = vand.u32 %v8096, 4294901760
    %8098 = vmatprep.subr.mxu0 %v8097
    %v8099 = vand.u32 %v7953, 4294901760
    %v8100 = vsub.f32 %v7953, %v8099
    %v8101 = vand.u32 %v8100, 4294901760
    %v8102 = vsub.f32 %v8100, %v8101
    %v8103 = vand.u32 %v8102, 4294901760
    %8104 = vmatpush1.msra.mxu0 %v8103
    %v8105 = vand.u32 %v7956, 4294901760
    %v8106 = vsub.f32 %v7956, %v8105
    %v8107 = vand.u32 %v8106, 4294901760
    %v8108 = vsub.f32 %v8106, %v8107
    %v8109 = vand.u32 %v8108, 4294901760
    %8110 = vmatprep.subr.mxu0 %v8109
    %v8111 = vand.u32 %v7955, 4294901760
    %v8112 = vsub.f32 %v7955, %v8111
    %v8113 = vand.u32 %v8112, 4294901760
    %v8114 = vsub.f32 %v8112, %v8113
    %v8115 = vand.u32 %v8114, 4294901760
    %8116 = vmatpush1.msra.mxu0 %v8115
    %v8117 = vand.u32 %v7958, 4294901760
    %v8118 = vsub.f32 %v7958, %v8117
    %v8119 = vand.u32 %v8118, 4294901760
    %v8120 = vsub.f32 %v8118, %v8119
    %v8121 = vand.u32 %v8120, 4294901760
    %8122 = vmatprep.subr.mxu0 %v8121
    %v8123 = vand.u32 %v7957, 4294901760
    %v8124 = vsub.f32 %v7957, %v8123
    %v8125 = vand.u32 %v8124, 4294901760
    %v8126 = vsub.f32 %v8124, %v8125
    %v8127 = vand.u32 %v8126, 4294901760
    %8128 = vmatpush1.msra.mxu0 %v8127
    %v8129 = vand.u32 %v7960, 4294901760
    %v8130 = vsub.f32 %v7960, %v8129
    %v8131 = vand.u32 %v8130, 4294901760
    %v8132 = vsub.f32 %v8130, %v8131
    %v8133 = vand.u32 %v8132, 4294901760
    %8134 = vmatprep.subr.mxu0 %v8133
    %v8135 = vand.u32 %v7959, 4294901760
    %v8136 = vsub.f32 %v7959, %v8135
    %v8137 = vand.u32 %v8136, 4294901760
    %v8138 = vsub.f32 %v8136, %v8137
    %v8139 = vand.u32 %v8138, 4294901760
    %8140 = vmatpush1.msra.mxu0 %v8139
    %v8141 = vand.u32 %v7962, 4294901760
    %v8142 = vsub.f32 %v7962, %v8141
    %v8143 = vand.u32 %v8142, 4294901760
    %v8144 = vsub.f32 %v8142, %v8143
    %v8145 = vand.u32 %v8144, 4294901760
    %8146 = vmatprep.subr.mxu0 %v8145
    %v8147 = vand.u32 %v7961, 4294901760
    %v8148 = vsub.f32 %v7961, %v8147
    %v8149 = vand.u32 %v8148, 4294901760
    %v8150 = vsub.f32 %v8148, %v8149
    %v8151 = vand.u32 %v8150, 4294901760
    %8152 = vmatpush1.msra.mxu0 %v8151
    %v8153 = vand.u32 %v7964, 4294901760
    %v8154 = vsub.f32 %v7964, %v8153
    %v8155 = vand.u32 %v8154, 4294901760
    %v8156 = vsub.f32 %v8154, %v8155
    %v8157 = vand.u32 %v8156, 4294901760
    %8158 = vmatprep.subr.mxu0 %v8157
    %v8159 = vand.u32 %v7963, 4294901760
    %v8160 = vsub.f32 %v7963, %v8159
    %v8161 = vand.u32 %v8160, 4294901760
    %v8162 = vsub.f32 %v8160, %v8161
    %v8163 = vand.u32 %v8162, 4294901760
    %8164 = vmatpush1.msra.mxu0 %v8163
    %v8165 = vand.u32 %v7966, 4294901760
    %v8166 = vsub.f32 %v7966, %v8165
    %v8167 = vand.u32 %v8166, 4294901760
    %v8168 = vsub.f32 %v8166, %v8167
    %v8169 = vand.u32 %v8168, 4294901760
    %8170 = vmatprep.subr.mxu0 %v8169
    %v8171 = vand.u32 %v7965, 4294901760
    %v8172 = vsub.f32 %v7965, %v8171
    %v8173 = vand.u32 %v8172, 4294901760
    %v8174 = vsub.f32 %v8172, %v8173
    %v8175 = vand.u32 %v8174, 4294901760
    %8176 = vmatpush1.msra.mxu0 %v8175
    %v8177 = vand.u32 %v7968, 4294901760
    %v8178 = vsub.f32 %v7968, %v8177
    %v8179 = vand.u32 %v8178, 4294901760
    %v8180 = vsub.f32 %v8178, %v8179
    %v8181 = vand.u32 %v8180, 4294901760
    %8182 = vmatprep.subr.mxu0 %v8181
    %v8183 = vand.u32 %v7967, 4294901760
    %v8184 = vsub.f32 %v7967, %v8183
    %v8185 = vand.u32 %v8184, 4294901760
    %v8186 = vsub.f32 %v8184, %v8185
    %v8187 = vand.u32 %v8186, 4294901760
    %8188 = vmatpush1.msra.mxu0 %v8187
    %v8189 = vand.u32 %v7970, 4294901760
    %v8190 = vsub.f32 %v7970, %v8189
    %v8191 = vand.u32 %v8190, 4294901760
    %v8192 = vsub.f32 %v8190, %v8191
    %v8193 = vand.u32 %v8192, 4294901760
    %8194 = vmatprep.subr.mxu0 %v8193
    %v8195 = vand.u32 %v7969, 4294901760
    %v8196 = vsub.f32 %v7969, %v8195
    %v8197 = vand.u32 %v8196, 4294901760
    %v8198 = vsub.f32 %v8196, %v8197
    %v8199 = vand.u32 %v8198, 4294901760
    %8200 = vmatpush1.msra.mxu0 %v8199
    %v8201 = vand.u32 %v7972, 4294901760
    %v8202 = vsub.f32 %v7972, %v8201
    %v8203 = vand.u32 %v8202, 4294901760
    %v8204 = vsub.f32 %v8202, %v8203
    %v8205 = vand.u32 %v8204, 4294901760
    %8206 = vmatprep.subr.mxu0 %v8205
    %v8207 = vand.u32 %v7971, 4294901760
    %v8208 = vsub.f32 %v7971, %v8207
    %v8209 = vand.u32 %v8208, 4294901760
    %v8210 = vsub.f32 %v8208, %v8209
    %v8211 = vand.u32 %v8210, 4294901760
    %8212 = vmatpush1.msra.mxu0 %v8211
    %v8213 = vand.u32 %v7974, 4294901760
    %v8214 = vsub.f32 %v7974, %v8213
    %v8215 = vand.u32 %v8214, 4294901760
    %v8216 = vsub.f32 %v8214, %v8215
    %v8217 = vand.u32 %v8216, 4294901760
    %8218 = vmatprep.subr.mxu0 %v8217
    %v8219 = vand.u32 %v7973, 4294901760
    %v8220 = vsub.f32 %v7973, %v8219
    %v8221 = vand.u32 %v8220, 4294901760
    %v8222 = vsub.f32 %v8220, %v8221
    %v8223 = vand.u32 %v8222, 4294901760
    %8224 = vmatpush1.msra.mxu0 %v8223
    %v8225 = vand.u32 %v7976, 4294901760
    %v8226 = vsub.f32 %v7976, %v8225
    %v8227 = vand.u32 %v8226, 4294901760
    %v8228 = vsub.f32 %v8226, %v8227
    %v8229 = vand.u32 %v8228, 4294901760
    %8230 = vmatprep.subr.mxu0 %v8229
    %v8231 = vand.u32 %v7975, 4294901760
    %v8232 = vsub.f32 %v7975, %v8231
    %v8233 = vand.u32 %v8232, 4294901760
    %v8234 = vsub.f32 %v8232, %v8233
    %v8235 = vand.u32 %v8234, 4294901760
    %8236 = vmatpush1.msra.mxu0 %v8235
    %v8237 = vand.u32 %v7978, 4294901760
    %v8238 = vsub.f32 %v7978, %v8237
    %v8239 = vand.u32 %v8238, 4294901760
    %v8240 = vsub.f32 %v8238, %v8239
    %v8241 = vand.u32 %v8240, 4294901760
    %8242 = vmatprep.subr.mxu0 %v8241
    %v8243 = vand.u32 %v7977, 4294901760
    %v8244 = vsub.f32 %v7977, %v8243
    %v8245 = vand.u32 %v8244, 4294901760
    %v8246 = vsub.f32 %v8244, %v8245
    %v8247 = vand.u32 %v8246, 4294901760
    %8248 = vmatpush1.msra.mxu0 %v8247
    %v8249 = vand.u32 %v7980, 4294901760
    %v8250 = vsub.f32 %v7980, %v8249
    %v8251 = vand.u32 %v8250, 4294901760
    %v8252 = vsub.f32 %v8250, %v8251
    %v8253 = vand.u32 %v8252, 4294901760
    %8254 = vmatprep.subr.mxu0 %v8253
    %v8255 = vand.u32 %v7979, 4294901760
    %v8256 = vsub.f32 %v7979, %v8255
    %v8257 = vand.u32 %v8256, 4294901760
    %v8258 = vsub.f32 %v8256, %v8257
    %v8259 = vand.u32 %v8258, 4294901760
    %8260 = vmatpush1.msra.mxu0 %v8259
    %v8261 = vand.u32 %v7982, 4294901760
    %v8262 = vsub.f32 %v7982, %v8261
    %v8263 = vand.u32 %v8262, 4294901760
    %v8264 = vsub.f32 %v8262, %v8263
    %v8265 = vand.u32 %v8264, 4294901760
    %8266 = vmatprep.subr.mxu0 %v8265
    %v8267 = vand.u32 %v7981, 4294901760
    %v8268 = vsub.f32 %v7981, %v8267
    %v8269 = vand.u32 %v8268, 4294901760
    %v8270 = vsub.f32 %v8268, %v8269
    %v8271 = vand.u32 %v8270, 4294901760
    %8272 = vmatpush1.msra.mxu0 %v8271
    %v8273 = vand.u32 %v7984, 4294901760
    %v8274 = vsub.f32 %v7984, %v8273
    %v8275 = vand.u32 %v8274, 4294901760
    %v8276 = vsub.f32 %v8274, %v8275
    %v8277 = vand.u32 %v8276, 4294901760
    %8278 = vmatprep.subr.mxu0 %v8277
    %v8279 = vand.u32 %v7983, 4294901760
    %v8280 = vsub.f32 %v7983, %v8279
    %v8281 = vand.u32 %v8280, 4294901760
    %v8282 = vsub.f32 %v8280, %v8281
    %v8283 = vand.u32 %v8282, 4294901760
    %8284 = vmatpush1.msra.mxu0 %v8283
    %8285 = vmatprep.subr.mxu0 0.0
    %8286 = vmatpush1.msra.mxu0 0.0
    %8287 = vmatprep.subr.mxu0 0.0
    %8288 = vmatpush1.msra.mxu0 0.0
    %8289 = vmatprep.subr.mxu0 0.0
    %8290 = vmatpush1.msra.mxu0 0.0
    %8291 = vmatprep.subr.mxu0 0.0
    %8292 = vmatpush1.msra.mxu0 0.0
    %8293 = vmatprep.subr.mxu0 0.0
    %8294 = vmatpush1.msra.mxu0 0.0
    %8295 = vmatprep.subr.mxu0 0.0
    %8296 = vmatpush1.msra.mxu0 0.0
    %8297 = vmatprep.subr.mxu0 0.0
    %8298 = vmatpush1.msra.mxu0 0.0
    %8299 = vmatprep.subr.mxu0 0.0
    %8300 = vmatpush1.msra.mxu0 0.0
    %8301 = vmatprep.subr.mxu0 0.0
    %8302 = vmatpush1.msra.mxu0 0.0
    %8303 = vmatprep.subr.mxu0 0.0
    %8304 = vmatpush1.msra.mxu0 0.0
    %8305 = vmatprep.subr.mxu0 0.0
    %8306 = vmatpush1.msra.mxu0 0.0
    %8307 = vmatprep.subr.mxu0 0.0
    %8308 = vmatpush1.msra.mxu0 0.0
    %8309 = vmatprep.subr.mxu0 0.0
    %8310 = vmatpush1.msra.mxu0 0.0
    %8311 = vmatprep.subr.mxu0 0.0
    %8312 = vmatpush1.msra.mxu0 0.0
    %8313 = vmatprep.subr.mxu0 0.0
    %8314 = vmatpush1.msra.mxu0 0.0
    %8315 = vmatprep.subr.mxu0 0.0
    %8316 = vmatpush1.msra.mxu0 0.0
    %8317 = vmatprep.mubr.f32.mxu0 0.0
    %v8318 = vand.u32 %v7948, 4294901760
    %8319 = vmatmul.mubr.f32.gmra.mrb[0].mxu0 %v8318
    %v8320 = vpop.f32.mrb[0].mxu0
    %v8321 = vadd.f32 %v8089, %v8320
    %v8322 = vpop.f32.mrb[0].mxu0
    %v8323 = vadd.f32 %v8091, %v8322
    %8324 = vdwg.mxu0
    %v8325 = vand.u32 %v7954, 4294901760
    %v8326 = vsub.f32 %v7954, %v8325
    %8327 = vmatprep.subr.mxu0 %v8326
    %v8328 = vand.u32 %v7953, 4294901760
    %v8329 = vsub.f32 %v7953, %v8328
    %8330 = vmatpush1.msra.mxu0 %v8329
    %v8331 = vand.u32 %v7956, 4294901760
    %v8332 = vsub.f32 %v7956, %v8331
    %8333 = vmatprep.subr.mxu0 %v8332
    %v8334 = vand.u32 %v7955, 4294901760
    %v8335 = vsub.f32 %v7955, %v8334
    %8336 = vmatpush1.msra.mxu0 %v8335
    %v8337 = vand.u32 %v7958, 4294901760
    %v8338 = vsub.f32 %v7958, %v8337
    %8339 = vmatprep.subr.mxu0 %v8338
    %v8340 = vand.u32 %v7957, 4294901760
    %v8341 = vsub.f32 %v7957, %v8340
    %8342 = vmatpush1.msra.mxu0 %v8341
    %v8343 = vand.u32 %v7960, 4294901760
    %v8344 = vsub.f32 %v7960, %v8343
    %8345 = vmatprep.subr.mxu0 %v8344
    %v8346 = vand.u32 %v7959, 4294901760
    %v8347 = vsub.f32 %v7959, %v8346
    %8348 = vmatpush1.msra.mxu0 %v8347
    %v8349 = vand.u32 %v7962, 4294901760
    %v8350 = vsub.f32 %v7962, %v8349
    %8351 = vmatprep.subr.mxu0 %v8350
    %v8352 = vand.u32 %v7961, 4294901760
    %v8353 = vsub.f32 %v7961, %v8352
    %8354 = vmatpush1.msra.mxu0 %v8353
    %v8355 = vand.u32 %v7964, 4294901760
    %v8356 = vsub.f32 %v7964, %v8355
    %8357 = vmatprep.subr.mxu0 %v8356
    %v8358 = vand.u32 %v7963, 4294901760
    %v8359 = vsub.f32 %v7963, %v8358
    %8360 = vmatpush1.msra.mxu0 %v8359
    %v8361 = vand.u32 %v7966, 4294901760
    %v8362 = vsub.f32 %v7966, %v8361
    %8363 = vmatprep.subr.mxu0 %v8362
    %v8364 = vand.u32 %v7965, 4294901760
    %v8365 = vsub.f32 %v7965, %v8364
    %8366 = vmatpush1.msra.mxu0 %v8365
    %v8367 = vand.u32 %v7968, 4294901760
    %v8368 = vsub.f32 %v7968, %v8367
    %8369 = vmatprep.subr.mxu0 %v8368
    %v8370 = vand.u32 %v7967, 4294901760
    %v8371 = vsub.f32 %v7967, %v8370
    %8372 = vmatpush1.msra.mxu0 %v8371
    %v8373 = vand.u32 %v7970, 4294901760
    %v8374 = vsub.f32 %v7970, %v8373
    %8375 = vmatprep.subr.mxu0 %v8374
    %v8376 = vand.u32 %v7969, 4294901760
    %v8377 = vsub.f32 %v7969, %v8376
    %8378 = vmatpush1.msra.mxu0 %v8377
    %v8379 = vand.u32 %v7972, 4294901760
    %v8380 = vsub.f32 %v7972, %v8379
    %8381 = vmatprep.subr.mxu0 %v8380
    %v8382 = vand.u32 %v7971, 4294901760
    %v8383 = vsub.f32 %v7971, %v8382
    %8384 = vmatpush1.msra.mxu0 %v8383
    %v8385 = vand.u32 %v7974, 4294901760
    %v8386 = vsub.f32 %v7974, %v8385
    %8387 = vmatprep.subr.mxu0 %v8386
    %v8388 = vand.u32 %v7973, 4294901760
    %v8389 = vsub.f32 %v7973, %v8388
    %8390 = vmatpush1.msra.mxu0 %v8389
    %v8391 = vand.u32 %v7976, 4294901760
    %v8392 = vsub.f32 %v7976, %v8391
    %8393 = vmatprep.subr.mxu0 %v8392
    %v8394 = vand.u32 %v7975, 4294901760
    %v8395 = vsub.f32 %v7975, %v8394
    %8396 = vmatpush1.msra.mxu0 %v8395
    %v8397 = vand.u32 %v7978, 4294901760
    %v8398 = vsub.f32 %v7978, %v8397
    %8399 = vmatprep.subr.mxu0 %v8398
    %v8400 = vand.u32 %v7977, 4294901760
    %v8401 = vsub.f32 %v7977, %v8400
    %8402 = vmatpush1.msra.mxu0 %v8401
    %v8403 = vand.u32 %v7980, 4294901760
    %v8404 = vsub.f32 %v7980, %v8403
    %8405 = vmatprep.subr.mxu0 %v8404
    %v8406 = vand.u32 %v7979, 4294901760
    %v8407 = vsub.f32 %v7979, %v8406
    %8408 = vmatpush1.msra.mxu0 %v8407
    %v8409 = vand.u32 %v7982, 4294901760
    %v8410 = vsub.f32 %v7982, %v8409
    %8411 = vmatprep.subr.mxu0 %v8410
    %v8412 = vand.u32 %v7981, 4294901760
    %v8413 = vsub.f32 %v7981, %v8412
    %8414 = vmatpush1.msra.mxu0 %v8413
    %v8415 = vand.u32 %v7984, 4294901760
    %v8416 = vsub.f32 %v7984, %v8415
    %8417 = vmatprep.subr.mxu0 %v8416
    %v8418 = vand.u32 %v7983, 4294901760
    %v8419 = vsub.f32 %v7983, %v8418
    %8420 = vmatpush1.msra.mxu0 %v8419
    %8421 = vmatprep.subr.mxu0 0.0
    %8422 = vmatpush1.msra.mxu0 0.0
    %8423 = vmatprep.subr.mxu0 0.0
    %8424 = vmatpush1.msra.mxu0 0.0
    %8425 = vmatprep.subr.mxu0 0.0
    %8426 = vmatpush1.msra.mxu0 0.0
    %8427 = vmatprep.subr.mxu0 0.0
    %8428 = vmatpush1.msra.mxu0 0.0
    %8429 = vmatprep.subr.mxu0 0.0
    %8430 = vmatpush1.msra.mxu0 0.0
    %8431 = vmatprep.subr.mxu0 0.0
    %8432 = vmatpush1.msra.mxu0 0.0
    %8433 = vmatprep.subr.mxu0 0.0
    %8434 = vmatpush1.msra.mxu0 0.0
    %8435 = vmatprep.subr.mxu0 0.0
    %8436 = vmatpush1.msra.mxu0 0.0
    %8437 = vmatprep.subr.mxu0 0.0
    %8438 = vmatpush1.msra.mxu0 0.0
    %8439 = vmatprep.subr.mxu0 0.0
    %8440 = vmatpush1.msra.mxu0 0.0
    %8441 = vmatprep.subr.mxu0 0.0
    %8442 = vmatpush1.msra.mxu0 0.0
    %8443 = vmatprep.subr.mxu0 0.0
    %8444 = vmatpush1.msra.mxu0 0.0
    %8445 = vmatprep.subr.mxu0 0.0
    %8446 = vmatpush1.msra.mxu0 0.0
    %8447 = vmatprep.subr.mxu0 0.0
    %8448 = vmatpush1.msra.mxu0 0.0
    %8449 = vmatprep.subr.mxu0 0.0
    %8450 = vmatpush1.msra.mxu0 0.0
    %8451 = vmatprep.subr.mxu0 0.0
    %8452 = vmatpush1.msra.mxu0 0.0
    %8453 = vmatprep.mubr.f32.mxu0 0.0
    %v8454 = vand.u32 %v7948, 4294901760
    %v8455 = vsub.f32 %v7948, %v8454
    %8456 = vmatmul.mubr.f32.gmra.mrb[0].mxu0 %v8455
    %v8457 = vpop.f32.mrb[0].mxu0
    %v8458 = vadd.f32 %v8321, %v8457
    %v8459 = vpop.f32.mrb[0].mxu0
    %v8460 = vadd.f32 %v8323, %v8459
    %8461 = vdwg.mxu0
    %v8462 = vand.u32 %v7954, 4294901760
    %8463 = vmatprep.subr.mxu0 %v8462
    %v8464 = vand.u32 %v7953, 4294901760
    %8465 = vmatpush1.msra.mxu0 %v8464
    %v8466 = vand.u32 %v7956, 4294901760
    %8467 = vmatprep.subr.mxu0 %v8466
    %v8468 = vand.u32 %v7955, 4294901760
    %8469 = vmatpush1.msra.mxu0 %v8468
    %v8470 = vand.u32 %v7958, 4294901760
    %8471 = vmatprep.subr.mxu0 %v8470
    %v8472 = vand.u32 %v7957, 4294901760
    %8473 = vmatpush1.msra.mxu0 %v8472
    %v8474 = vand.u32 %v7960, 4294901760
    %8475 = vmatprep.subr.mxu0 %v8474
    %v8476 = vand.u32 %v7959, 4294901760
    %8477 = vmatpush1.msra.mxu0 %v8476
    %v8478 = vand.u32 %v7962, 4294901760
    %8479 = vmatprep.subr.mxu0 %v8478
    %v8480 = vand.u32 %v7961, 4294901760
    %8481 = vmatpush1.msra.mxu0 %v8480
    %v8482 = vand.u32 %v7964, 4294901760
    %8483 = vmatprep.subr.mxu0 %v8482
    %v8484 = vand.u32 %v7963, 4294901760
    %8485 = vmatpush1.msra.mxu0 %v8484
    %v8486 = vand.u32 %v7966, 4294901760
    %8487 = vmatprep.subr.mxu0 %v8486
    %v8488 = vand.u32 %v7965, 4294901760
    %8489 = vmatpush1.msra.mxu0 %v8488
    %v8490 = vand.u32 %v7968, 4294901760
    %8491 = vmatprep.subr.mxu0 %v8490
    %v8492 = vand.u32 %v7967, 4294901760
    %8493 = vmatpush1.msra.mxu0 %v8492
    %v8494 = vand.u32 %v7970, 4294901760
    %8495 = vmatprep.subr.mxu0 %v8494
    %v8496 = vand.u32 %v7969, 4294901760
    %8497 = vmatpush1.msra.mxu0 %v8496
    %v8498 = vand.u32 %v7972, 4294901760
    %8499 = vmatprep.subr.mxu0 %v8498
    %v8500 = vand.u32 %v7971, 4294901760
    %8501 = vmatpush1.msra.mxu0 %v8500
    %v8502 = vand.u32 %v7974, 4294901760
    %8503 = vmatprep.subr.mxu0 %v8502
    %v8504 = vand.u32 %v7973, 4294901760
    %8505 = vmatpush1.msra.mxu0 %v8504
    %v8506 = vand.u32 %v7976, 4294901760
    %8507 = vmatprep.subr.mxu0 %v8506
    %v8508 = vand.u32 %v7975, 4294901760
    %8509 = vmatpush1.msra.mxu0 %v8508
    %v8510 = vand.u32 %v7978, 4294901760
    %8511 = vmatprep.subr.mxu0 %v8510
    %v8512 = vand.u32 %v7977, 4294901760
    %8513 = vmatpush1.msra.mxu0 %v8512
    %v8514 = vand.u32 %v7980, 4294901760
    %8515 = vmatprep.subr.mxu0 %v8514
    %v8516 = vand.u32 %v7979, 4294901760
    %8517 = vmatpush1.msra.mxu0 %v8516
    %v8518 = vand.u32 %v7982, 4294901760
    %8519 = vmatprep.subr.mxu0 %v8518
    %v8520 = vand.u32 %v7981, 4294901760
    %8521 = vmatpush1.msra.mxu0 %v8520
    %v8522 = vand.u32 %v7984, 4294901760
    %8523 = vmatprep.subr.mxu0 %v8522
    %v8524 = vand.u32 %v7983, 4294901760
    %8525 = vmatpush1.msra.mxu0 %v8524
    %8526 = vmatprep.subr.mxu0 0.0
    %8527 = vmatpush1.msra.mxu0 0.0
    %8528 = vmatprep.subr.mxu0 0.0
    %8529 = vmatpush1.msra.mxu0 0.0
    %8530 = vmatprep.subr.mxu0 0.0
    %8531 = vmatpush1.msra.mxu0 0.0
    %8532 = vmatprep.subr.mxu0 0.0
    %8533 = vmatpush1.msra.mxu0 0.0
    %8534 = vmatprep.subr.mxu0 0.0
    %8535 = vmatpush1.msra.mxu0 0.0
    %8536 = vmatprep.subr.mxu0 0.0
    %8537 = vmatpush1.msra.mxu0 0.0
    %8538 = vmatprep.subr.mxu0 0.0
    %8539 = vmatpush1.msra.mxu0 0.0
    %8540 = vmatprep.subr.mxu0 0.0
    %8541 = vmatpush1.msra.mxu0 0.0
    %8542 = vmatprep.subr.mxu0 0.0
    %8543 = vmatpush1.msra.mxu0 0.0
    %8544 = vmatprep.subr.mxu0 0.0
    %8545 = vmatpush1.msra.mxu0 0.0
    %8546 = vmatprep.subr.mxu0 0.0
    %8547 = vmatpush1.msra.mxu0 0.0
    %8548 = vmatprep.subr.mxu0 0.0
    %8549 = vmatpush1.msra.mxu0 0.0
    %8550 = vmatprep.subr.mxu0 0.0
    %8551 = vmatpush1.msra.mxu0 0.0
    %8552 = vmatprep.subr.mxu0 0.0
    %8553 = vmatpush1.msra.mxu0 0.0
    %8554 = vmatprep.subr.mxu0 0.0
    %8555 = vmatpush1.msra.mxu0 0.0
    %8556 = vmatprep.subr.mxu0 0.0
    %8557 = vmatpush1.msra.mxu0 0.0
    %8558 = vmatprep.mubr.f32.mxu0 0.0
    %v8559 = vand.u32 %v7948, 4294901760
    %v8560 = vsub.f32 %v7948, %v8559
    %v8561 = vand.u32 %v8560, 4294901760
    %8562 = vmatmul.mubr.f32.gmra.mrb[0].mxu0 %v8561
    %v8563 = vpop.f32.mrb[0].mxu0
    %v8564 = vadd.f32 %v8458, %v8563
    %v8565 = vpop.f32.mrb[0].mxu0
    %v8566 = vadd.f32 %v8460, %v8565
    %8567 = vdwg.mxu0
    %v8568 = vand.u32 %v7954, 4294901760
    %v8569 = vsub.f32 %v7954, %v8568
    %v8570 = vand.u32 %v8569, 4294901760
    %8571 = vmatprep.subr.mxu0 %v8570
    %v8572 = vand.u32 %v7953, 4294901760
    %v8573 = vsub.f32 %v7953, %v8572
    %v8574 = vand.u32 %v8573, 4294901760
    %8575 = vmatpush1.msra.mxu0 %v8574
    %v8576 = vand.u32 %v7956, 4294901760
    %v8577 = vsub.f32 %v7956, %v8576
    %v8578 = vand.u32 %v8577, 4294901760
    %8579 = vmatprep.subr.mxu0 %v8578
    %v8580 = vand.u32 %v7955, 4294901760
    %v8581 = vsub.f32 %v7955, %v8580
    %v8582 = vand.u32 %v8581, 4294901760
    %8583 = vmatpush1.msra.mxu0 %v8582
    %v8584 = vand.u32 %v7958, 4294901760
    %v8585 = vsub.f32 %v7958, %v8584
    %v8586 = vand.u32 %v8585, 4294901760
    %8587 = vmatprep.subr.mxu0 %v8586
    %v8588 = vand.u32 %v7957, 4294901760
    %v8589 = vsub.f32 %v7957, %v8588
    %v8590 = vand.u32 %v8589, 4294901760
    %8591 = vmatpush1.msra.mxu0 %v8590
    %v8592 = vand.u32 %v7960, 4294901760
    %v8593 = vsub.f32 %v7960, %v8592
    %v8594 = vand.u32 %v8593, 4294901760
    %8595 = vmatprep.subr.mxu0 %v8594
    %v8596 = vand.u32 %v7959, 4294901760
    %v8597 = vsub.f32 %v7959, %v8596
    %v8598 = vand.u32 %v8597, 4294901760
    %8599 = vmatpush1.msra.mxu0 %v8598
    %v8600 = vand.u32 %v7962, 4294901760
    %v8601 = vsub.f32 %v7962, %v8600
    %v8602 = vand.u32 %v8601, 4294901760
    %8603 = vmatprep.subr.mxu0 %v8602
    %v8604 = vand.u32 %v7961, 4294901760
    %v8605 = vsub.f32 %v7961, %v8604
    %v8606 = vand.u32 %v8605, 4294901760
    %8607 = vmatpush1.msra.mxu0 %v8606
    %v8608 = vand.u32 %v7964, 4294901760
    %v8609 = vsub.f32 %v7964, %v8608
    %v8610 = vand.u32 %v8609, 4294901760
    %8611 = vmatprep.subr.mxu0 %v8610
    %v8612 = vand.u32 %v7963, 4294901760
    %v8613 = vsub.f32 %v7963, %v8612
    %v8614 = vand.u32 %v8613, 4294901760
    %8615 = vmatpush1.msra.mxu0 %v8614
    %v8616 = vand.u32 %v7966, 4294901760
    %v8617 = vsub.f32 %v7966, %v8616
    %v8618 = vand.u32 %v8617, 4294901760
    %8619 = vmatprep.subr.mxu0 %v8618
    %v8620 = vand.u32 %v7965, 4294901760
    %v8621 = vsub.f32 %v7965, %v8620
    %v8622 = vand.u32 %v8621, 4294901760
    %8623 = vmatpush1.msra.mxu0 %v8622
    %v8624 = vand.u32 %v7968, 4294901760
    %v8625 = vsub.f32 %v7968, %v8624
    %v8626 = vand.u32 %v8625, 4294901760
    %8627 = vmatprep.subr.mxu0 %v8626
    %v8628 = vand.u32 %v7967, 4294901760
    %v8629 = vsub.f32 %v7967, %v8628
    %v8630 = vand.u32 %v8629, 4294901760
    %8631 = vmatpush1.msra.mxu0 %v8630
    %v8632 = vand.u32 %v7970, 4294901760
    %v8633 = vsub.f32 %v7970, %v8632
    %v8634 = vand.u32 %v8633, 4294901760
    %8635 = vmatprep.subr.mxu0 %v8634
    %v8636 = vand.u32 %v7969, 4294901760
    %v8637 = vsub.f32 %v7969, %v8636
    %v8638 = vand.u32 %v8637, 4294901760
    %8639 = vmatpush1.msra.mxu0 %v8638
    %v8640 = vand.u32 %v7972, 4294901760
    %v8641 = vsub.f32 %v7972, %v8640
    %v8642 = vand.u32 %v8641, 4294901760
    %8643 = vmatprep.subr.mxu0 %v8642
    %v8644 = vand.u32 %v7971, 4294901760
    %v8645 = vsub.f32 %v7971, %v8644
    %v8646 = vand.u32 %v8645, 4294901760
    %8647 = vmatpush1.msra.mxu0 %v8646
    %v8648 = vand.u32 %v7974, 4294901760
    %v8649 = vsub.f32 %v7974, %v8648
    %v8650 = vand.u32 %v8649, 4294901760
    %8651 = vmatprep.subr.mxu0 %v8650
    %v8652 = vand.u32 %v7973, 4294901760
    %v8653 = vsub.f32 %v7973, %v8652
    %v8654 = vand.u32 %v8653, 4294901760
    %8655 = vmatpush1.msra.mxu0 %v8654
    %v8656 = vand.u32 %v7976, 4294901760
    %v8657 = vsub.f32 %v7976, %v8656
    %v8658 = vand.u32 %v8657, 4294901760
    %8659 = vmatprep.subr.mxu0 %v8658
    %v8660 = vand.u32 %v7975, 4294901760
    %v8661 = vsub.f32 %v7975, %v8660
    %v8662 = vand.u32 %v8661, 4294901760
    %8663 = vmatpush1.msra.mxu0 %v8662
    %v8664 = vand.u32 %v7978, 4294901760
    %v8665 = vsub.f32 %v7978, %v8664
    %v8666 = vand.u32 %v8665, 4294901760
    %8667 = vmatprep.subr.mxu0 %v8666
    %v8668 = vand.u32 %v7977, 4294901760
    %v8669 = vsub.f32 %v7977, %v8668
    %v8670 = vand.u32 %v8669, 4294901760
    %8671 = vmatpush1.msra.mxu0 %v8670
    %v8672 = vand.u32 %v7980, 4294901760
    %v8673 = vsub.f32 %v7980, %v8672
    %v8674 = vand.u32 %v8673, 4294901760
    %8675 = vmatprep.subr.mxu0 %v8674
    %v8676 = vand.u32 %v7979, 4294901760
    %v8677 = vsub.f32 %v7979, %v8676
    %v8678 = vand.u32 %v8677, 4294901760
    %8679 = vmatpush1.msra.mxu0 %v8678
    %v8680 = vand.u32 %v7982, 4294901760
    %v8681 = vsub.f32 %v7982, %v8680
    %v8682 = vand.u32 %v8681, 4294901760
    %8683 = vmatprep.subr.mxu0 %v8682
    %v8684 = vand.u32 %v7981, 4294901760
    %v8685 = vsub.f32 %v7981, %v8684
    %v8686 = vand.u32 %v8685, 4294901760
    %8687 = vmatpush1.msra.mxu0 %v8686
    %v8688 = vand.u32 %v7984, 4294901760
    %v8689 = vsub.f32 %v7984, %v8688
    %v8690 = vand.u32 %v8689, 4294901760
    %8691 = vmatprep.subr.mxu0 %v8690
    %v8692 = vand.u32 %v7983, 4294901760
    %v8693 = vsub.f32 %v7983, %v8692
    %v8694 = vand.u32 %v8693, 4294901760
    %8695 = vmatpush1.msra.mxu0 %v8694
    %8696 = vmatprep.subr.mxu0 0.0
    %8697 = vmatpush1.msra.mxu0 0.0
    %8698 = vmatprep.subr.mxu0 0.0
    %8699 = vmatpush1.msra.mxu0 0.0
    %8700 = vmatprep.subr.mxu0 0.0
    %8701 = vmatpush1.msra.mxu0 0.0
    %8702 = vmatprep.subr.mxu0 0.0
    %8703 = vmatpush1.msra.mxu0 0.0
    %8704 = vmatprep.subr.mxu0 0.0
    %8705 = vmatpush1.msra.mxu0 0.0
    %8706 = vmatprep.subr.mxu0 0.0
    %8707 = vmatpush1.msra.mxu0 0.0
    %8708 = vmatprep.subr.mxu0 0.0
    %8709 = vmatpush1.msra.mxu0 0.0
    %8710 = vmatprep.subr.mxu0 0.0
    %8711 = vmatpush1.msra.mxu0 0.0
    %8712 = vmatprep.subr.mxu0 0.0
    %8713 = vmatpush1.msra.mxu0 0.0
    %8714 = vmatprep.subr.mxu0 0.0
    %8715 = vmatpush1.msra.mxu0 0.0
    %8716 = vmatprep.subr.mxu0 0.0
    %8717 = vmatpush1.msra.mxu0 0.0
    %8718 = vmatprep.subr.mxu0 0.0
    %8719 = vmatpush1.msra.mxu0 0.0
    %8720 = vmatprep.subr.mxu0 0.0
    %8721 = vmatpush1.msra.mxu0 0.0
    %8722 = vmatprep.subr.mxu0 0.0
    %8723 = vmatpush1.msra.mxu0 0.0
    %8724 = vmatprep.subr.mxu0 0.0
    %8725 = vmatpush1.msra.mxu0 0.0
    %8726 = vmatprep.subr.mxu0 0.0
    %8727 = vmatpush1.msra.mxu0 0.0
    %8728 = vmatprep.mubr.f32.mxu0 0.0
    %v8729 = vand.u32 %v7948, 4294901760
    %8730 = vmatmul.mubr.f32.gmra.mrb[0].mxu0 %v8729
    %v8731 = vpop.f32.mrb[0].mxu0
    %v8732 = vadd.f32 %v8564, %v8731
    %v8733 = vpop.f32.mrb[0].mxu0
    %v8734 = vadd.f32 %v8566, %v8733
    %8735 = vdwg.mxu0
    %v8736 = vand.u32 %v7954, 4294901760
    %8737 = vmatprep.subr.mxu0 %v8736
    %v8738 = vand.u32 %v7953, 4294901760
    %8739 = vmatpush1.msra.mxu0 %v8738
    %v8740 = vand.u32 %v7956, 4294901760
    %8741 = vmatprep.subr.mxu0 %v8740
    %v8742 = vand.u32 %v7955, 4294901760
    %8743 = vmatpush1.msra.mxu0 %v8742
    %v8744 = vand.u32 %v7958, 4294901760
    %8745 = vmatprep.subr.mxu0 %v8744
    %v8746 = vand.u32 %v7957, 4294901760
    %8747 = vmatpush1.msra.mxu0 %v8746
    %v8748 = vand.u32 %v7960, 4294901760
    %8749 = vmatprep.subr.mxu0 %v8748
    %v8750 = vand.u32 %v7959, 4294901760
    %8751 = vmatpush1.msra.mxu0 %v8750
    %v8752 = vand.u32 %v7962, 4294901760
    %8753 = vmatprep.subr.mxu0 %v8752
    %v8754 = vand.u32 %v7961, 4294901760
    %8755 = vmatpush1.msra.mxu0 %v8754
    %v8756 = vand.u32 %v7964, 4294901760
    %8757 = vmatprep.subr.mxu0 %v8756
    %v8758 = vand.u32 %v7963, 4294901760
    %8759 = vmatpush1.msra.mxu0 %v8758
    %v8760 = vand.u32 %v7966, 4294901760
    %8761 = vmatprep.subr.mxu0 %v8760
    %v8762 = vand.u32 %v7965, 4294901760
    %8763 = vmatpush1.msra.mxu0 %v8762
    %v8764 = vand.u32 %v7968, 4294901760
    %8765 = vmatprep.subr.mxu0 %v8764
    %v8766 = vand.u32 %v7967, 4294901760
    %8767 = vmatpush1.msra.mxu0 %v8766
    %v8768 = vand.u32 %v7970, 4294901760
    %8769 = vmatprep.subr.mxu0 %v8768
    %v8770 = vand.u32 %v7969, 4294901760
    %8771 = vmatpush1.msra.mxu0 %v8770
    %v8772 = vand.u32 %v7972, 4294901760
    %8773 = vmatprep.subr.mxu0 %v8772
    %v8774 = vand.u32 %v7971, 4294901760
    %8775 = vmatpush1.msra.mxu0 %v8774
    %v8776 = vand.u32 %v7974, 4294901760
    %8777 = vmatprep.subr.mxu0 %v8776
    %v8778 = vand.u32 %v7973, 4294901760
    %8779 = vmatpush1.msra.mxu0 %v8778
    %v8780 = vand.u32 %v7976, 4294901760
    %8781 = vmatprep.subr.mxu0 %v8780
    %v8782 = vand.u32 %v7975, 4294901760
    %8783 = vmatpush1.msra.mxu0 %v8782
    %v8784 = vand.u32 %v7978, 4294901760
    %8785 = vmatprep.subr.mxu0 %v8784
    %v8786 = vand.u32 %v7977, 4294901760
    %8787 = vmatpush1.msra.mxu0 %v8786
    %v8788 = vand.u32 %v7980, 4294901760
    %8789 = vmatprep.subr.mxu0 %v8788
    %v8790 = vand.u32 %v7979, 4294901760
    %8791 = vmatpush1.msra.mxu0 %v8790
    %v8792 = vand.u32 %v7982, 4294901760
    %8793 = vmatprep.subr.mxu0 %v8792
    %v8794 = vand.u32 %v7981, 4294901760
    %8795 = vmatpush1.msra.mxu0 %v8794
    %v8796 = vand.u32 %v7984, 4294901760
    %8797 = vmatprep.subr.mxu0 %v8796
    %v8798 = vand.u32 %v7983, 4294901760
    %8799 = vmatpush1.msra.mxu0 %v8798
    %8800 = vmatprep.subr.mxu0 0.0
    %8801 = vmatpush1.msra.mxu0 0.0
    %8802 = vmatprep.subr.mxu0 0.0
    %8803 = vmatpush1.msra.mxu0 0.0
    %8804 = vmatprep.subr.mxu0 0.0
    %8805 = vmatpush1.msra.mxu0 0.0
    %8806 = vmatprep.subr.mxu0 0.0
    %8807 = vmatpush1.msra.mxu0 0.0
    %8808 = vmatprep.subr.mxu0 0.0
    %8809 = vmatpush1.msra.mxu0 0.0
    %8810 = vmatprep.subr.mxu0 0.0
    %8811 = vmatpush1.msra.mxu0 0.0
    %8812 = vmatprep.subr.mxu0 0.0
    %8813 = vmatpush1.msra.mxu0 0.0
    %8814 = vmatprep.subr.mxu0 0.0
    %8815 = vmatpush1.msra.mxu0 0.0
    %8816 = vmatprep.subr.mxu0 0.0
    %8817 = vmatpush1.msra.mxu0 0.0
    %8818 = vmatprep.subr.mxu0 0.0
    %8819 = vmatpush1.msra.mxu0 0.0
    %8820 = vmatprep.subr.mxu0 0.0
    %8821 = vmatpush1.msra.mxu0 0.0
    %8822 = vmatprep.subr.mxu0 0.0
    %8823 = vmatpush1.msra.mxu0 0.0
    %8824 = vmatprep.subr.mxu0 0.0
    %8825 = vmatpush1.msra.mxu0 0.0
    %8826 = vmatprep.subr.mxu0 0.0
    %8827 = vmatpush1.msra.mxu0 0.0
    %8828 = vmatprep.subr.mxu0 0.0
    %8829 = vmatpush1.msra.mxu0 0.0
    %8830 = vmatprep.subr.mxu0 0.0
    %8831 = vmatpush1.msra.mxu0 0.0
    %8832 = vmatprep.mubr.f32.mxu0 0.0
    %v8833 = vand.u32 %v7948, 4294901760
    %8834 = vmatmul.mubr.f32.gmra.mrb[0].mxu0 %v8833
    %v8835 = vpop.f32.mrb[0].mxu0
    %v8836 = vadd.f32 %v8732, %v8835
    %v8837 = vpop.f32.mrb[0].mxu0
    %v8838 = vadd.f32 %v8734, %v8837
    %8839 = vdwg.mxu0
    %v8840 = vadd.f32 %v7950, %v8836
    %v8841 = vxor.u32 %v8840, 2147483648
    %v8842 = vmul.f32 %v8841, 1.442695
    %v8843 = vpow.pop %v8842
    %v8844 = vadd.f32 %v8843, 1.0
    %v8845 = vrcp.pop %v8844
    %v8846 = vmul.f32 1.0, %v8845
    %v8847 = vadd.f32 %v7951, %v8838
    %v8848 = vxor.u32 %v8847, 2147483648
    %v8849 = vmul.f32 %v8848, 1.442695
    %v8850 = vpow.pop %v8849
    %v8851 = vadd.f32 %v8850, 1.0
    %v8852 = vrcp.pop %v8851
    %v8853 = vmul.f32 1.0, %v8852
    %v8854 = vmul.f32 %v8853, %v7948
    %v8855 = vld [vmem:[#allocation9] sm:$0xff]
    %v8856 = vld [vmem:[#allocation9 + $0x8] sm:$0xff]
    %v8857 = vld [vmem:[#allocation9 + $0x10] sm:$0xff]
    %v8858 = vld [vmem:[#allocation9 + $0x18] sm:$0xff]
    %v8859 = vld [vmem:[#allocation9 + $0x20] sm:$0xff]
    %v8860 = vld [vmem:[#allocation9 + $0x28] sm:$0xff]
    %v8861 = vld [vmem:[#allocation9 + $0x30] sm:$0xff]
    %v8862 = vld [vmem:[#allocation9 + $0x38] sm:$0xff]
    %v8863 = vld [vmem:[#allocation9 + $0x40] sm:$0xff]
    %v8864 = vld [vmem:[#allocation9 + $0x48] sm:$0xff]
    %v8865 = vld [vmem:[#allocation9 + $0x50] sm:$0xff]
    %v8866 = vld [vmem:[#allocation9 + $0x58] sm:$0xff]
    %v8867 = vld [vmem:[#allocation9 + $0x60] sm:$0xff]
    %v8868 = vld [vmem:[#allocation9 + $0x68] sm:$0xff]
    %v8869 = vld [vmem:[#allocation9 + $0x70] sm:$0xff]
    %v8870 = vld [vmem:[#allocation9 + $0x78] sm:$0xff]
    %8871 = vmatprep.subr.mxu0 0.0
    %v8872 = vand.u32 %v8855, 4294901760
    %8873 = vmatpush1.msra.mxu0 %v8872
    %8874 = vmatprep.subr.mxu0 0.0
    %v8875 = vand.u32 %v8856, 4294901760
    %8876 = vmatpush1.msra.mxu0 %v8875
    %8877 = vmatprep.subr.mxu0 0.0
    %v8878 = vand.u32 %v8857, 4294901760
    %8879 = vmatpush1.msra.mxu0 %v8878
    %8880 = vmatprep.subr.mxu0 0.0
    %v8881 = vand.u32 %v8858, 4294901760
    %8882 = vmatpush1.msra.mxu0 %v8881
    %8883 = vmatprep.subr.mxu0 0.0
    %v8884 = vand.u32 %v8859, 4294901760
    %8885 = vmatpush1.msra.mxu0 %v8884
    %8886 = vmatprep.subr.mxu0 0.0
    %v8887 = vand.u32 %v8860, 4294901760
    %8888 = vmatpush1.msra.mxu0 %v8887
    %8889 = vmatprep.subr.mxu0 0.0
    %v8890 = vand.u32 %v8861, 4294901760
    %8891 = vmatpush1.msra.mxu0 %v8890
    %8892 = vmatprep.subr.mxu0 0.0
    %v8893 = vand.u32 %v8862, 4294901760
    %8894 = vmatpush1.msra.mxu0 %v8893
    %8895 = vmatprep.subr.mxu0 0.0
    %v8896 = vand.u32 %v8863, 4294901760
    %8897 = vmatpush1.msra.mxu0 %v8896
    %8898 = vmatprep.subr.mxu0 0.0
    %v8899 = vand.u32 %v8864, 4294901760
    %8900 = vmatpush1.msra.mxu0 %v8899
    %8901 = vmatprep.subr.mxu0 0.0
    %v8902 = vand.u32 %v8865, 4294901760
    %8903 = vmatpush1.msra.mxu0 %v8902
    %8904 = vmatprep.subr.mxu0 0.0
    %v8905 = vand.u32 %v8866, 4294901760
    %8906 = vmatpush1.msra.mxu0 %v8905
    %8907 = vmatprep.subr.mxu0 0.0
    %v8908 = vand.u32 %v8867, 4294901760
    %8909 = vmatpush1.msra.mxu0 %v8908
    %8910 = vmatprep.subr.mxu0 0.0
    %v8911 = vand.u32 %v8868, 4294901760
    %8912 = vmatpush1.msra.mxu0 %v8911
    %8913 = vmatprep.subr.mxu0 0.0
    %v8914 = vand.u32 %v8869, 4294901760
    %8915 = vmatpush1.msra.mxu0 %v8914
    %8916 = vmatprep.subr.mxu0 0.0
    %v8917 = vand.u32 %v8870, 4294901760
    %8918 = vmatpush1.msra.mxu0 %v8917
    %8919 = vmatprep.subr.mxu0 0.0
    %8920 = vmatpush1.msra.mxu0 0.0
    %8921 = vmatprep.subr.mxu0 0.0
    %8922 = vmatpush1.msra.mxu0 0.0
    %8923 = vmatprep.subr.mxu0 0.0
    %8924 = vmatpush1.msra.mxu0 0.0
    %8925 = vmatprep.subr.mxu0 0.0
    %8926 = vmatpush1.msra.mxu0 0.0
    %8927 = vmatprep.subr.mxu0 0.0
    %8928 = vmatpush1.msra.mxu0 0.0
    %8929 = vmatprep.subr.mxu0 0.0
    %8930 = vmatpush1.msra.mxu0 0.0
    %8931 = vmatprep.subr.mxu0 0.0
    %8932 = vmatpush1.msra.mxu0 0.0
    %8933 = vmatprep.subr.mxu0 0.0
    %8934 = vmatpush1.msra.mxu0 0.0
    %8935 = vmatprep.subr.mxu0 0.0
    %8936 = vmatpush1.msra.mxu0 0.0
    %8937 = vmatprep.subr.mxu0 0.0
    %8938 = vmatpush1.msra.mxu0 0.0
    %8939 = vmatprep.subr.mxu0 0.0
    %8940 = vmatpush1.msra.mxu0 0.0
    %8941 = vmatprep.subr.mxu0 0.0
    %8942 = vmatpush1.msra.mxu0 0.0
    %8943 = vmatprep.subr.mxu0 0.0
    %8944 = vmatpush1.msra.mxu0 0.0
    %8945 = vmatprep.subr.mxu0 0.0
    %8946 = vmatpush1.msra.mxu0 0.0
    %8947 = vmatprep.subr.mxu0 0.0
    %8948 = vmatpush1.msra.mxu0 0.0
    %8949 = vmatprep.subr.mxu0 0.0
    %8950 = vmatpush1.msra.mxu0 0.0
    %8951 = vmatprep.mubr.f32.mxu0 0.0
    %v8952 = vand.u32 %v8854, 4294901760
    %v8953 = vsub.f32 %v8854, %v8952
    %v8954 = vand.u32 %v8953, 4294901760
    %v8955 = vsub.f32 %v8953, %v8954
    %v8956 = vand.u32 %v8955, 4294901760
    %8957 = vmatmul.mubr.f32.gmra.mrb[0].mxu0 %v8956
    %v8958 = vpop.f32.mrb[0].mxu0
    %v8959 = vadd.f32 0.0, %v8958
    %v8960 = vpop.f32.mrb[0].mxu0
    %8961 = vdwg.mxu0
    %8962 = vmatprep.subr.mxu0 0.0
    %v8963 = vand.u32 %v8855, 4294901760
    %v8964 = vsub.f32 %v8855, %v8963
    %v8965 = vand.u32 %v8964, 4294901760
    %v8966 = vsub.f32 %v8964, %v8965
    %v8967 = vand.u32 %v8966, 4294901760
    %8968 = vmatpush1.msra.mxu0 %v8967
    %8969 = vmatprep.subr.mxu0 0.0
    %v8970 = vand.u32 %v8856, 4294901760
    %v8971 = vsub.f32 %v8856, %v8970
    %v8972 = vand.u32 %v8971, 4294901760
    %v8973 = vsub.f32 %v8971, %v8972
    %v8974 = vand.u32 %v8973, 4294901760
    %8975 = vmatpush1.msra.mxu0 %v8974
    %8976 = vmatprep.subr.mxu0 0.0
    %v8977 = vand.u32 %v8857, 4294901760
    %v8978 = vsub.f32 %v8857, %v8977
    %v8979 = vand.u32 %v8978, 4294901760
    %v8980 = vsub.f32 %v8978, %v8979
    %v8981 = vand.u32 %v8980, 4294901760
    %8982 = vmatpush1.msra.mxu0 %v8981
    %8983 = vmatprep.subr.mxu0 0.0
    %v8984 = vand.u32 %v8858, 4294901760
    %v8985 = vsub.f32 %v8858, %v8984
    %v8986 = vand.u32 %v8985, 4294901760
    %v8987 = vsub.f32 %v8985, %v8986
    %v8988 = vand.u32 %v8987, 4294901760
    %8989 = vmatpush1.msra.mxu0 %v8988
    %8990 = vmatprep.subr.mxu0 0.0
    %v8991 = vand.u32 %v8859, 4294901760
    %v8992 = vsub.f32 %v8859, %v8991
    %v8993 = vand.u32 %v8992, 4294901760
    %v8994 = vsub.f32 %v8992, %v8993
    %v8995 = vand.u32 %v8994, 4294901760
    %8996 = vmatpush1.msra.mxu0 %v8995
    %8997 = vmatprep.subr.mxu0 0.0
    %v8998 = vand.u32 %v8860, 4294901760
    %v8999 = vsub.f32 %v8860, %v8998
    %v9000 = vand.u32 %v8999, 4294901760
    %v9001 = vsub.f32 %v8999, %v9000
    %v9002 = vand.u32 %v9001, 4294901760
    %9003 = vmatpush1.msra.mxu0 %v9002
    %9004 = vmatprep.subr.mxu0 0.0
    %v9005 = vand.u32 %v8861, 4294901760
    %v9006 = vsub.f32 %v8861, %v9005
    %v9007 = vand.u32 %v9006, 4294901760
    %v9008 = vsub.f32 %v9006, %v9007
    %v9009 = vand.u32 %v9008, 4294901760
    %9010 = vmatpush1.msra.mxu0 %v9009
    %9011 = vmatprep.subr.mxu0 0.0
    %v9012 = vand.u32 %v8862, 4294901760
    %v9013 = vsub.f32 %v8862, %v9012
    %v9014 = vand.u32 %v9013, 4294901760
    %v9015 = vsub.f32 %v9013, %v9014
    %v9016 = vand.u32 %v9015, 4294901760
    %9017 = vmatpush1.msra.mxu0 %v9016
    %9018 = vmatprep.subr.mxu0 0.0
    %v9019 = vand.u32 %v8863, 4294901760
    %v9020 = vsub.f32 %v8863, %v9019
    %v9021 = vand.u32 %v9020, 4294901760
    %v9022 = vsub.f32 %v9020, %v9021
    %v9023 = vand.u32 %v9022, 4294901760
    %9024 = vmatpush1.msra.mxu0 %v9023
    %9025 = vmatprep.subr.mxu0 0.0
    %v9026 = vand.u32 %v8864, 4294901760
    %v9027 = vsub.f32 %v8864, %v9026
    %v9028 = vand.u32 %v9027, 4294901760
    %v9029 = vsub.f32 %v9027, %v9028
    %v9030 = vand.u32 %v9029, 4294901760
    %9031 = vmatpush1.msra.mxu0 %v9030
    %9032 = vmatprep.subr.mxu0 0.0
    %v9033 = vand.u32 %v8865, 4294901760
    %v9034 = vsub.f32 %v8865, %v9033
    %v9035 = vand.u32 %v9034, 4294901760
    %v9036 = vsub.f32 %v9034, %v9035
    %v9037 = vand.u32 %v9036, 4294901760
    %9038 = vmatpush1.msra.mxu0 %v9037
    %9039 = vmatprep.subr.mxu0 0.0
    %v9040 = vand.u32 %v8866, 4294901760
    %v9041 = vsub.f32 %v8866, %v9040
    %v9042 = vand.u32 %v9041, 4294901760
    %v9043 = vsub.f32 %v9041, %v9042
    %v9044 = vand.u32 %v9043, 4294901760
    %9045 = vmatpush1.msra.mxu0 %v9044
    %9046 = vmatprep.subr.mxu0 0.0
    %v9047 = vand.u32 %v8867, 4294901760
    %v9048 = vsub.f32 %v8867, %v9047
    %v9049 = vand.u32 %v9048, 4294901760
    %v9050 = vsub.f32 %v9048, %v9049
    %v9051 = vand.u32 %v9050, 4294901760
    %9052 = vmatpush1.msra.mxu0 %v9051
    %9053 = vmatprep.subr.mxu0 0.0
    %v9054 = vand.u32 %v8868, 4294901760
    %v9055 = vsub.f32 %v8868, %v9054
    %v9056 = vand.u32 %v9055, 4294901760
    %v9057 = vsub.f32 %v9055, %v9056
    %v9058 = vand.u32 %v9057, 4294901760
    %9059 = vmatpush1.msra.mxu0 %v9058
    %9060 = vmatprep.subr.mxu0 0.0
    %v9061 = vand.u32 %v8869, 4294901760
    %v9062 = vsub.f32 %v8869, %v9061
    %v9063 = vand.u32 %v9062, 4294901760
    %v9064 = vsub.f32 %v9062, %v9063
    %v9065 = vand.u32 %v9064, 4294901760
    %9066 = vmatpush1.msra.mxu0 %v9065
    %9067 = vmatprep.subr.mxu0 0.0
    %v9068 = vand.u32 %v8870, 4294901760
    %v9069 = vsub.f32 %v8870, %v9068
    %v9070 = vand.u32 %v9069, 4294901760
    %v9071 = vsub.f32 %v9069, %v9070
    %v9072 = vand.u32 %v9071, 4294901760
    %9073 = vmatpush1.msra.mxu0 %v9072
    %9074 = vmatprep.subr.mxu0 0.0
    %9075 = vmatpush1.msra.mxu0 0.0
    %9076 = vmatprep.subr.mxu0 0.0
    %9077 = vmatpush1.msra.mxu0 0.0
    %9078 = vmatprep.subr.mxu0 0.0
    %9079 = vmatpush1.msra.mxu0 0.0
    %9080 = vmatprep.subr.mxu0 0.0
    %9081 = vmatpush1.msra.mxu0 0.0
    %9082 = vmatprep.subr.mxu0 0.0
    %9083 = vmatpush1.msra.mxu0 0.0
    %9084 = vmatprep.subr.mxu0 0.0
    %9085 = vmatpush1.msra.mxu0 0.0
    %9086 = vmatprep.subr.mxu0 0.0
    %9087 = vmatpush1.msra.mxu0 0.0
    %9088 = vmatprep.subr.mxu0 0.0
    %9089 = vmatpush1.msra.mxu0 0.0
    %9090 = vmatprep.subr.mxu0 0.0
    %9091 = vmatpush1.msra.mxu0 0.0
    %9092 = vmatprep.subr.mxu0 0.0
    %9093 = vmatpush1.msra.mxu0 0.0
    %9094 = vmatprep.subr.mxu0 0.0
    %9095 = vmatpush1.msra.mxu0 0.0
    %9096 = vmatprep.subr.mxu0 0.0
    %9097 = vmatpush1.msra.mxu0 0.0
    %9098 = vmatprep.subr.mxu0 0.0
    %9099 = vmatpush1.msra.mxu0 0.0
    %9100 = vmatprep.subr.mxu0 0.0
    %9101 = vmatpush1.msra.mxu0 0.0
    %9102 = vmatprep.subr.mxu0 0.0
    %9103 = vmatpush1.msra.mxu0 0.0
    %9104 = vmatprep.subr.mxu0 0.0
    %9105 = vmatpush1.msra.mxu0 0.0
    %9106 = vmatprep.mubr.f32.mxu0 0.0
    %v9107 = vand.u32 %v8854, 4294901760
    %9108 = vmatmul.mubr.f32.gmra.mrb[0].mxu0 %v9107
    %v9109 = vpop.f32.mrb[0].mxu0
    %v9110 = vadd.f32 %v8959, %v9109
    %v9111 = vpop.f32.mrb[0].mxu0
    %9112 = vdwg.mxu0
    %9113 = vmatprep.subr.mxu0 0.0
    %v9114 = vand.u32 %v8855, 4294901760
    %v9115 = vsub.f32 %v8855, %v9114
    %9116 = vmatpush1.msra.mxu0 %v9115
    %9117 = vmatprep.subr.mxu0 0.0
    %v9118 = vand.u32 %v8856, 4294901760
    %v9119 = vsub.f32 %v8856, %v9118
    %9120 = vmatpush1.msra.mxu0 %v9119
    %9121 = vmatprep.subr.mxu0 0.0
    %v9122 = vand.u32 %v8857, 4294901760
    %v9123 = vsub.f32 %v8857, %v9122
    %9124 = vmatpush1.msra.mxu0 %v9123
    %9125 = vmatprep.subr.mxu0 0.0
    %v9126 = vand.u32 %v8858, 4294901760
    %v9127 = vsub.f32 %v8858, %v9126
    %9128 = vmatpush1.msra.mxu0 %v9127
    %9129 = vmatprep.subr.mxu0 0.0
    %v9130 = vand.u32 %v8859, 4294901760
    %v9131 = vsub.f32 %v8859, %v9130
    %9132 = vmatpush1.msra.mxu0 %v9131
    %9133 = vmatprep.subr.mxu0 0.0
    %v9134 = vand.u32 %v8860, 4294901760
    %v9135 = vsub.f32 %v8860, %v9134
    %9136 = vmatpush1.msra.mxu0 %v9135
    %9137 = vmatprep.subr.mxu0 0.0
    %v9138 = vand.u32 %v8861, 4294901760
    %v9139 = vsub.f32 %v8861, %v9138
    %9140 = vmatpush1.msra.mxu0 %v9139
    %9141 = vmatprep.subr.mxu0 0.0
    %v9142 = vand.u32 %v8862, 4294901760
    %v9143 = vsub.f32 %v8862, %v9142
    %9144 = vmatpush1.msra.mxu0 %v9143
    %9145 = vmatprep.subr.mxu0 0.0
    %v9146 = vand.u32 %v8863, 4294901760
    %v9147 = vsub.f32 %v8863, %v9146
    %9148 = vmatpush1.msra.mxu0 %v9147
    %9149 = vmatprep.subr.mxu0 0.0
    %v9150 = vand.u32 %v8864, 4294901760
    %v9151 = vsub.f32 %v8864, %v9150
    %9152 = vmatpush1.msra.mxu0 %v9151
    %9153 = vmatprep.subr.mxu0 0.0
    %v9154 = vand.u32 %v8865, 4294901760
    %v9155 = vsub.f32 %v8865, %v9154
    %9156 = vmatpush1.msra.mxu0 %v9155
    %9157 = vmatprep.subr.mxu0 0.0
    %v9158 = vand.u32 %v8866, 4294901760
    %v9159 = vsub.f32 %v8866, %v9158
    %9160 = vmatpush1.msra.mxu0 %v9159
    %9161 = vmatprep.subr.mxu0 0.0
    %v9162 = vand.u32 %v8867, 4294901760
    %v9163 = vsub.f32 %v8867, %v9162
    %9164 = vmatpush1.msra.mxu0 %v9163
    %9165 = vmatprep.subr.mxu0 0.0
    %v9166 = vand.u32 %v8868, 4294901760
    %v9167 = vsub.f32 %v8868, %v9166
    %9168 = vmatpush1.msra.mxu0 %v9167
    %9169 = vmatprep.subr.mxu0 0.0
    %v9170 = vand.u32 %v8869, 4294901760
    %v9171 = vsub.f32 %v8869, %v9170
    %9172 = vmatpush1.msra.mxu0 %v9171
    %9173 = vmatprep.subr.mxu0 0.0
    %v9174 = vand.u32 %v8870, 4294901760
    %v9175 = vsub.f32 %v8870, %v9174
    %9176 = vmatpush1.msra.mxu0 %v9175
    %9177 = vmatprep.subr.mxu0 0.0
    %9178 = vmatpush1.msra.mxu0 0.0
    %9179 = vmatprep.subr.mxu0 0.0
    %9180 = vmatpush1.msra.mxu0 0.0
    %9181 = vmatprep.subr.mxu0 0.0
    %9182 = vmatpush1.msra.mxu0 0.0
    %9183 = vmatprep.subr.mxu0 0.0
    %9184 = vmatpush1.msra.mxu0 0.0
    %9185 = vmatprep.subr.mxu0 0.0
    %9186 = vmatpush1.msra.mxu0 0.0
    %9187 = vmatprep.subr.mxu0 0.0
    %9188 = vmatpush1.msra.mxu0 0.0
    %9189 = vmatprep.subr.mxu0 0.0
    %9190 = vmatpush1.msra.mxu0 0.0
    %9191 = vmatprep.subr.mxu0 0.0
    %9192 = vmatpush1.msra.mxu0 0.0
    %9193 = vmatprep.subr.mxu0 0.0
    %9194 = vmatpush1.msra.mxu0 0.0
    %9195 = vmatprep.subr.mxu0 0.0
    %9196 = vmatpush1.msra.mxu0 0.0
    %9197 = vmatprep.subr.mxu0 0.0
    %9198 = vmatpush1.msra.mxu0 0.0
    %9199 = vmatprep.subr.mxu0 0.0
    %9200 = vmatpush1.msra.mxu0 0.0
    %9201 = vmatprep.subr.mxu0 0.0
    %9202 = vmatpush1.msra.mxu0 0.0
    %9203 = vmatprep.subr.mxu0 0.0
    %9204 = vmatpush1.msra.mxu0 0.0
    %9205 = vmatprep.subr.mxu0 0.0
    %9206 = vmatpush1.msra.mxu0 0.0
    %9207 = vmatprep.subr.mxu0 0.0
    %9208 = vmatpush1.msra.mxu0 0.0
    %9209 = vmatprep.mubr.f32.mxu0 0.0
    %v9210 = vand.u32 %v8854, 4294901760
    %v9211 = vsub.f32 %v8854, %v9210
    %9212 = vmatmul.mubr.f32.gmra.mrb[0].mxu0 %v9211
    %v9213 = vpop.f32.mrb[0].mxu0
    %v9214 = vadd.f32 %v9110, %v9213
    %v9215 = vpop.f32.mrb[0].mxu0
    %9216 = vdwg.mxu0
    %9217 = vmatprep.subr.mxu0 0.0
    %v9218 = vand.u32 %v8855, 4294901760
    %9219 = vmatpush1.msra.mxu0 %v9218
    %9220 = vmatprep.subr.mxu0 0.0
    %v9221 = vand.u32 %v8856, 4294901760
    %9222 = vmatpush1.msra.mxu0 %v9221
    %9223 = vmatprep.subr.mxu0 0.0
    %v9224 = vand.u32 %v8857, 4294901760
    %9225 = vmatpush1.msra.mxu0 %v9224
    %9226 = vmatprep.subr.mxu0 0.0
    %v9227 = vand.u32 %v8858, 4294901760
    %9228 = vmatpush1.msra.mxu0 %v9227
    %9229 = vmatprep.subr.mxu0 0.0
    %v9230 = vand.u32 %v8859, 4294901760
    %9231 = vmatpush1.msra.mxu0 %v9230
    %9232 = vmatprep.subr.mxu0 0.0
    %v9233 = vand.u32 %v8860, 4294901760
    %9234 = vmatpush1.msra.mxu0 %v9233
    %9235 = vmatprep.subr.mxu0 0.0
    %v9236 = vand.u32 %v8861, 4294901760
    %9237 = vmatpush1.msra.mxu0 %v9236
    %9238 = vmatprep.subr.mxu0 0.0
    %v9239 = vand.u32 %v8862, 4294901760
    %9240 = vmatpush1.msra.mxu0 %v9239
    %9241 = vmatprep.subr.mxu0 0.0
    %v9242 = vand.u32 %v8863, 4294901760
    %9243 = vmatpush1.msra.mxu0 %v9242
    %9244 = vmatprep.subr.mxu0 0.0
    %v9245 = vand.u32 %v8864, 4294901760
    %9246 = vmatpush1.msra.mxu0 %v9245
    %9247 = vmatprep.subr.mxu0 0.0
    %v9248 = vand.u32 %v8865, 4294901760
    %9249 = vmatpush1.msra.mxu0 %v9248
    %9250 = vmatprep.subr.mxu0 0.0
    %v9251 = vand.u32 %v8866, 4294901760
    %9252 = vmatpush1.msra.mxu0 %v9251
    %9253 = vmatprep.subr.mxu0 0.0
    %v9254 = vand.u32 %v8867, 4294901760
    %9255 = vmatpush1.msra.mxu0 %v9254
    %9256 = vmatprep.subr.mxu0 0.0
    %v9257 = vand.u32 %v8868, 4294901760
    %9258 = vmatpush1.msra.mxu0 %v9257
    %9259 = vmatprep.subr.mxu0 0.0
    %v9260 = vand.u32 %v8869, 4294901760
    %9261 = vmatpush1.msra.mxu0 %v9260
    %9262 = vmatprep.subr.mxu0 0.0
    %v9263 = vand.u32 %v8870, 4294901760
    %9264 = vmatpush1.msra.mxu0 %v9263
    %9265 = vmatprep.subr.mxu0 0.0
    %9266 = vmatpush1.msra.mxu0 0.0
    %9267 = vmatprep.subr.mxu0 0.0
    %9268 = vmatpush1.msra.mxu0 0.0
    %9269 = vmatprep.subr.mxu0 0.0
    %9270 = vmatpush1.msra.mxu0 0.0
    %9271 = vmatprep.subr.mxu0 0.0
    %9272 = vmatpush1.msra.mxu0 0.0
    %9273 = vmatprep.subr.mxu0 0.0
    %9274 = vmatpush1.msra.mxu0 0.0
    %9275 = vmatprep.subr.mxu0 0.0
    %9276 = vmatpush1.msra.mxu0 0.0
    %9277 = vmatprep.subr.mxu0 0.0
    %9278 = vmatpush1.msra.mxu0 0.0
    %9279 = vmatprep.subr.mxu0 0.0
    %9280 = vmatpush1.msra.mxu0 0.0
    %9281 = vmatprep.subr.mxu0 0.0
    %9282 = vmatpush1.msra.mxu0 0.0
    %9283 = vmatprep.subr.mxu0 0.0
    %9284 = vmatpush1.msra.mxu0 0.0
    %9285 = vmatprep.subr.mxu0 0.0
    %9286 = vmatpush1.msra.mxu0 0.0
    %9287 = vmatprep.subr.mxu0 0.0
    %9288 = vmatpush1.msra.mxu0 0.0
    %9289 = vmatprep.subr.mxu0 0.0
    %9290 = vmatpush1.msra.mxu0 0.0
    %9291 = vmatprep.subr.mxu0 0.0
    %9292 = vmatpush1.msra.mxu0 0.0
    %9293 = vmatprep.subr.mxu0 0.0
    %9294 = vmatpush1.msra.mxu0 0.0
    %9295 = vmatprep.subr.mxu0 0.0
    %9296 = vmatpush1.msra.mxu0 0.0
    %9297 = vmatprep.mubr.f32.mxu0 0.0
    %v9298 = vand.u32 %v8854, 4294901760
    %v9299 = vsub.f32 %v8854, %v9298
    %v9300 = vand.u32 %v9299, 4294901760
    %9301 = vmatmul.mubr.f32.gmra.mrb[0].mxu0 %v9300
    %v9302 = vpop.f32.mrb[0].mxu0
    %v9303 = vadd.f32 %v9214, %v9302
    %v9304 = vpop.f32.mrb[0].mxu0
    %9305 = vdwg.mxu0
    %9306 = vmatprep.subr.mxu0 0.0
    %v9307 = vand.u32 %v8855, 4294901760
    %v9308 = vsub.f32 %v8855, %v9307
    %v9309 = vand.u32 %v9308, 4294901760
    %9310 = vmatpush1.msra.mxu0 %v9309
    %9311 = vmatprep.subr.mxu0 0.0
    %v9312 = vand.u32 %v8856, 4294901760
    %v9313 = vsub.f32 %v8856, %v9312
    %v9314 = vand.u32 %v9313, 4294901760
    %9315 = vmatpush1.msra.mxu0 %v9314
    %9316 = vmatprep.subr.mxu0 0.0
    %v9317 = vand.u32 %v8857, 4294901760
    %v9318 = vsub.f32 %v8857, %v9317
    %v9319 = vand.u32 %v9318, 4294901760
    %9320 = vmatpush1.msra.mxu0 %v9319
    %9321 = vmatprep.subr.mxu0 0.0
    %v9322 = vand.u32 %v8858, 4294901760
    %v9323 = vsub.f32 %v8858, %v9322
    %v9324 = vand.u32 %v9323, 4294901760
    %9325 = vmatpush1.msra.mxu0 %v9324
    %9326 = vmatprep.subr.mxu0 0.0
    %v9327 = vand.u32 %v8859, 4294901760
    %v9328 = vsub.f32 %v8859, %v9327
    %v9329 = vand.u32 %v9328, 4294901760
    %9330 = vmatpush1.msra.mxu0 %v9329
    %9331 = vmatprep.subr.mxu0 0.0
    %v9332 = vand.u32 %v8860, 4294901760
    %v9333 = vsub.f32 %v8860, %v9332
    %v9334 = vand.u32 %v9333, 4294901760
    %9335 = vmatpush1.msra.mxu0 %v9334
    %9336 = vmatprep.subr.mxu0 0.0
    %v9337 = vand.u32 %v8861, 4294901760
    %v9338 = vsub.f32 %v8861, %v9337
    %v9339 = vand.u32 %v9338, 4294901760
    %9340 = vmatpush1.msra.mxu0 %v9339
    %9341 = vmatprep.subr.mxu0 0.0
    %v9342 = vand.u32 %v8862, 4294901760
    %v9343 = vsub.f32 %v8862, %v9342
    %v9344 = vand.u32 %v9343, 4294901760
    %9345 = vmatpush1.msra.mxu0 %v9344
    %9346 = vmatprep.subr.mxu0 0.0
    %v9347 = vand.u32 %v8863, 4294901760
    %v9348 = vsub.f32 %v8863, %v9347
    %v9349 = vand.u32 %v9348, 4294901760
    %9350 = vmatpush1.msra.mxu0 %v9349
    %9351 = vmatprep.subr.mxu0 0.0
    %v9352 = vand.u32 %v8864, 4294901760
    %v9353 = vsub.f32 %v8864, %v9352
    %v9354 = vand.u32 %v9353, 4294901760
    %9355 = vmatpush1.msra.mxu0 %v9354
    %9356 = vmatprep.subr.mxu0 0.0
    %v9357 = vand.u32 %v8865, 4294901760
    %v9358 = vsub.f32 %v8865, %v9357
    %v9359 = vand.u32 %v9358, 4294901760
    %9360 = vmatpush1.msra.mxu0 %v9359
    %9361 = vmatprep.subr.mxu0 0.0
    %v9362 = vand.u32 %v8866, 4294901760
    %v9363 = vsub.f32 %v8866, %v9362
    %v9364 = vand.u32 %v9363, 4294901760
    %9365 = vmatpush1.msra.mxu0 %v9364
    %9366 = vmatprep.subr.mxu0 0.0
    %v9367 = vand.u32 %v8867, 4294901760
    %v9368 = vsub.f32 %v8867, %v9367
    %v9369 = vand.u32 %v9368, 4294901760
    %9370 = vmatpush1.msra.mxu0 %v9369
    %9371 = vmatprep.subr.mxu0 0.0
    %v9372 = vand.u32 %v8868, 4294901760
    %v9373 = vsub.f32 %v8868, %v9372
    %v9374 = vand.u32 %v9373, 4294901760
    %9375 = vmatpush1.msra.mxu0 %v9374
    %9376 = vmatprep.subr.mxu0 0.0
    %v9377 = vand.u32 %v8869, 4294901760
    %v9378 = vsub.f32 %v8869, %v9377
    %v9379 = vand.u32 %v9378, 4294901760
    %9380 = vmatpush1.msra.mxu0 %v9379
    %9381 = vmatprep.subr.mxu0 0.0
    %v9382 = vand.u32 %v8870, 4294901760
    %v9383 = vsub.f32 %v8870, %v9382
    %v9384 = vand.u32 %v9383, 4294901760
    %9385 = vmatpush1.msra.mxu0 %v9384
    %9386 = vmatprep.subr.mxu0 0.0
    %9387 = vmatpush1.msra.mxu0 0.0
    %9388 = vmatprep.subr.mxu0 0.0
    %9389 = vmatpush1.msra.mxu0 0.0
    %9390 = vmatprep.subr.mxu0 0.0
    %9391 = vmatpush1.msra.mxu0 0.0
    %9392 = vmatprep.subr.mxu0 0.0
    %9393 = vmatpush1.msra.mxu0 0.0
    %9394 = vmatprep.subr.mxu0 0.0
    %9395 = vmatpush1.msra.mxu0 0.0
    %9396 = vmatprep.subr.mxu0 0.0
    %9397 = vmatpush1.msra.mxu0 0.0
    %9398 = vmatprep.subr.mxu0 0.0
    %9399 = vmatpush1.msra.mxu0 0.0
    %9400 = vmatprep.subr.mxu0 0.0
    %9401 = vmatpush1.msra.mxu0 0.0
    %9402 = vmatprep.subr.mxu0 0.0
    %9403 = vmatpush1.msra.mxu0 0.0
    %9404 = vmatprep.subr.mxu0 0.0
    %9405 = vmatpush1.msra.mxu0 0.0
    %9406 = vmatprep.subr.mxu0 0.0
    %9407 = vmatpush1.msra.mxu0 0.0
    %9408 = vmatprep.subr.mxu0 0.0
    %9409 = vmatpush1.msra.mxu0 0.0
    %9410 = vmatprep.subr.mxu0 0.0
    %9411 = vmatpush1.msra.mxu0 0.0
    %9412 = vmatprep.subr.mxu0 0.0
    %9413 = vmatpush1.msra.mxu0 0.0
    %9414 = vmatprep.subr.mxu0 0.0
    %9415 = vmatpush1.msra.mxu0 0.0
    %9416 = vmatprep.subr.mxu0 0.0
    %9417 = vmatpush1.msra.mxu0 0.0
    %9418 = vmatprep.mubr.f32.mxu0 0.0
    %v9419 = vand.u32 %v8854, 4294901760
    %9420 = vmatmul.mubr.f32.gmra.mrb[0].mxu0 %v9419
    %v9421 = vpop.f32.mrb[0].mxu0
    %v9422 = vadd.f32 %v9303, %v9421
    %v9423 = vpop.f32.mrb[0].mxu0
    %9424 = vdwg.mxu0
    %9425 = vmatprep.subr.mxu0 0.0
    %v9426 = vand.u32 %v8855, 4294901760
    %9427 = vmatpush1.msra.mxu0 %v9426
    %9428 = vmatprep.subr.mxu0 0.0
    %v9429 = vand.u32 %v8856, 4294901760
    %9430 = vmatpush1.msra.mxu0 %v9429
    %9431 = vmatprep.subr.mxu0 0.0
    %v9432 = vand.u32 %v8857, 4294901760
    %9433 = vmatpush1.msra.mxu0 %v9432
    %9434 = vmatprep.subr.mxu0 0.0
    %v9435 = vand.u32 %v8858, 4294901760
    %9436 = vmatpush1.msra.mxu0 %v9435
    %9437 = vmatprep.subr.mxu0 0.0
    %v9438 = vand.u32 %v8859, 4294901760
    %9439 = vmatpush1.msra.mxu0 %v9438
    %9440 = vmatprep.subr.mxu0 0.0
    %v9441 = vand.u32 %v8860, 4294901760
    %9442 = vmatpush1.msra.mxu0 %v9441
    %9443 = vmatprep.subr.mxu0 0.0
    %v9444 = vand.u32 %v8861, 4294901760
    %9445 = vmatpush1.msra.mxu0 %v9444
    %9446 = vmatprep.subr.mxu0 0.0
    %v9447 = vand.u32 %v8862, 4294901760
    %9448 = vmatpush1.msra.mxu0 %v9447
    %9449 = vmatprep.subr.mxu0 0.0
    %v9450 = vand.u32 %v8863, 4294901760
    %9451 = vmatpush1.msra.mxu0 %v9450
    %9452 = vmatprep.subr.mxu0 0.0
    %v9453 = vand.u32 %v8864, 4294901760
    %9454 = vmatpush1.msra.mxu0 %v9453
    %9455 = vmatprep.subr.mxu0 0.0
    %v9456 = vand.u32 %v8865, 4294901760
    %9457 = vmatpush1.msra.mxu0 %v9456
    %9458 = vmatprep.subr.mxu0 0.0
    %v9459 = vand.u32 %v8866, 4294901760
    %9460 = vmatpush1.msra.mxu0 %v9459
    %9461 = vmatprep.subr.mxu0 0.0
    %v9462 = vand.u32 %v8867, 4294901760
    %9463 = vmatpush1.msra.mxu0 %v9462
    %9464 = vmatprep.subr.mxu0 0.0
    %v9465 = vand.u32 %v8868, 4294901760
    %9466 = vmatpush1.msra.mxu0 %v9465
    %9467 = vmatprep.subr.mxu0 0.0
    %v9468 = vand.u32 %v8869, 4294901760
    %9469 = vmatpush1.msra.mxu0 %v9468
    %9470 = vmatprep.subr.mxu0 0.0
    %v9471 = vand.u32 %v8870, 4294901760
    %9472 = vmatpush1.msra.mxu0 %v9471
    %9473 = vmatprep.subr.mxu0 0.0
    %9474 = vmatpush1.msra.mxu0 0.0
    %9475 = vmatprep.subr.mxu0 0.0
    %9476 = vmatpush1.msra.mxu0 0.0
    %9477 = vmatprep.subr.mxu0 0.0
    %9478 = vmatpush1.msra.mxu0 0.0
    %9479 = vmatprep.subr.mxu0 0.0
    %9480 = vmatpush1.msra.mxu0 0.0
    %9481 = vmatprep.subr.mxu0 0.0
    %9482 = vmatpush1.msra.mxu0 0.0
    %9483 = vmatprep.subr.mxu0 0.0
    %9484 = vmatpush1.msra.mxu0 0.0
    %9485 = vmatprep.subr.mxu0 0.0
    %9486 = vmatpush1.msra.mxu0 0.0
    %9487 = vmatprep.subr.mxu0 0.0
    %9488 = vmatpush1.msra.mxu0 0.0
    %9489 = vmatprep.subr.mxu0 0.0
    %9490 = vmatpush1.msra.mxu0 0.0
    %9491 = vmatprep.subr.mxu0 0.0
    %9492 = vmatpush1.msra.mxu0 0.0
    %9493 = vmatprep.subr.mxu0 0.0
    %9494 = vmatpush1.msra.mxu0 0.0
    %9495 = vmatprep.subr.mxu0 0.0
    %9496 = vmatpush1.msra.mxu0 0.0
    %9497 = vmatprep.subr.mxu0 0.0
    %9498 = vmatpush1.msra.mxu0 0.0
    %9499 = vmatprep.subr.mxu0 0.0
    %9500 = vmatpush1.msra.mxu0 0.0
    %9501 = vmatprep.subr.mxu0 0.0
    %9502 = vmatpush1.msra.mxu0 0.0
    %9503 = vmatprep.subr.mxu0 0.0
    %9504 = vmatpush1.msra.mxu0 0.0
    %9505 = vmatprep.mubr.f32.mxu0 0.0
    %v9506 = vand.u32 %v8854, 4294901760
    %9507 = vmatmul.mubr.f32.gmra.mrb[0].mxu0 %v9506
    %v9508 = vpop.f32.mrb[0].mxu0
    %v9509 = vadd.f32 %v9422, %v9508
    %v9510 = vpop.f32.mrb[0].mxu0
    %9511 = vdwg.mxu0
    %v9512 = vadd.f32 %v7952, %v9509
    %v9513 = vtanh.pop %v9512
    %v9514 = vsub.f32 1.0, %v8846
    %v9515 = vmul.f32 %v9514, %v7948
    %v9516 = vmul.f32 %v8846, %v9513
    %v9517 = vadd.f32 %v9515, %v9516
    %s9518 = scalar_lea.vmem [#allocation11], 40
    %9519 = vst [vmem:[%s9518] sm:$0xff] %v9517
    %s9520 = scalar_lea.vmem [#allocation6], 48
    %v9521 = vld [vmem:[%s9520] sm:$0xff]
    %v9522 = vmul.f32 %v9521, %v9517
    %s9523 = scalar_lea.vmem [#allocation3], 144
    %v9524 = vld [vmem:[%s9523] sm:$0xff]
    %v9525 = vld [vmem:[%s9523 + $0x8] sm:$0xff]
    %v9526 = vld [vmem:[%s9523 + $0x10] sm:$0xff]
    %v9527 = vld [vmem:[#allocation8] sm:$0xff]
    %v9528 = vld [vmem:[#allocation8 + $0x8] sm:$0xff]
    %v9529 = vld [vmem:[#allocation8 + $0x10] sm:$0xff]
    %v9530 = vld [vmem:[#allocation8 + $0x18] sm:$0xff]
    %v9531 = vld [vmem:[#allocation8 + $0x20] sm:$0xff]
    %v9532 = vld [vmem:[#allocation8 + $0x28] sm:$0xff]
    %v9533 = vld [vmem:[#allocation8 + $0x30] sm:$0xff]
    %v9534 = vld [vmem:[#allocation8 + $0x38] sm:$0xff]
    %v9535 = vld [vmem:[#allocation8 + $0x40] sm:$0xff]
    %v9536 = vld [vmem:[#allocation8 + $0x48] sm:$0xff]
    %v9537 = vld [vmem:[#allocation8 + $0x50] sm:$0xff]
    %v9538 = vld [vmem:[#allocation8 + $0x58] sm:$0xff]
    %v9539 = vld [vmem:[#allocation8 + $0x60] sm:$0xff]
    %v9540 = vld [vmem:[#allocation8 + $0x68] sm:$0xff]
    %v9541 = vld [vmem:[#allocation8 + $0x70] sm:$0xff]
    %v9542 = vld [vmem:[#allocation8 + $0x78] sm:$0xff]
    %v9543 = vld [vmem:[#allocation8 + $0x80] sm:$0xff]
    %v9544 = vld [vmem:[#allocation8 + $0x88] sm:$0xff]
    %v9545 = vld [vmem:[#allocation8 + $0x90] sm:$0xff]
    %v9546 = vld [vmem:[#allocation8 + $0x98] sm:$0xff]
    %v9547 = vld [vmem:[#allocation8 + $0xa0] sm:$0xff]
    %v9548 = vld [vmem:[#allocation8 + $0xa8] sm:$0xff]
    %v9549 = vld [vmem:[#allocation8 + $0xb0] sm:$0xff]
    %v9550 = vld [vmem:[#allocation8 + $0xb8] sm:$0xff]
    %v9551 = vld [vmem:[#allocation8 + $0xc0] sm:$0xff]
    %v9552 = vld [vmem:[#allocation8 + $0xc8] sm:$0xff]
    %v9553 = vld [vmem:[#allocation8 + $0xd0] sm:$0xff]
    %v9554 = vld [vmem:[#allocation8 + $0xd8] sm:$0xff]
    %v9555 = vld [vmem:[#allocation8 + $0xe0] sm:$0xff]
    %v9556 = vld [vmem:[#allocation8 + $0xe8] sm:$0xff]
    %v9557 = vld [vmem:[#allocation8 + $0xf0] sm:$0xff]
    %v9558 = vld [vmem:[#allocation8 + $0xf8] sm:$0xff]
    %v9559 = vand.u32 %v9528, 4294901760
    %9560 = vmatprep.subr.mxu0 %v9559
    %v9561 = vand.u32 %v9527, 4294901760
    %9562 = vmatpush1.msra.mxu0 %v9561
    %v9563 = vand.u32 %v9530, 4294901760
    %9564 = vmatprep.subr.mxu0 %v9563
    %v9565 = vand.u32 %v9529, 4294901760
    %9566 = vmatpush1.msra.mxu0 %v9565
    %v9567 = vand.u32 %v9532, 4294901760
    %9568 = vmatprep.subr.mxu0 %v9567
    %v9569 = vand.u32 %v9531, 4294901760
    %9570 = vmatpush1.msra.mxu0 %v9569
    %v9571 = vand.u32 %v9534, 4294901760
    %9572 = vmatprep.subr.mxu0 %v9571
    %v9573 = vand.u32 %v9533, 4294901760
    %9574 = vmatpush1.msra.mxu0 %v9573
    %v9575 = vand.u32 %v9536, 4294901760
    %9576 = vmatprep.subr.mxu0 %v9575
    %v9577 = vand.u32 %v9535, 4294901760
    %9578 = vmatpush1.msra.mxu0 %v9577
    %v9579 = vand.u32 %v9538, 4294901760
    %9580 = vmatprep.subr.mxu0 %v9579
    %v9581 = vand.u32 %v9537, 4294901760
    %9582 = vmatpush1.msra.mxu0 %v9581
    %v9583 = vand.u32 %v9540, 4294901760
    %9584 = vmatprep.subr.mxu0 %v9583
    %v9585 = vand.u32 %v9539, 4294901760
    %9586 = vmatpush1.msra.mxu0 %v9585
    %v9587 = vand.u32 %v9542, 4294901760
    %9588 = vmatprep.subr.mxu0 %v9587
    %v9589 = vand.u32 %v9541, 4294901760
    %9590 = vmatpush1.msra.mxu0 %v9589
    %v9591 = vand.u32 %v9544, 4294901760
    %9592 = vmatprep.subr.mxu0 %v9591
    %v9593 = vand.u32 %v9543, 4294901760
    %9594 = vmatpush1.msra.mxu0 %v9593
    %v9595 = vand.u32 %v9546, 4294901760
    %9596 = vmatprep.subr.mxu0 %v9595
    %v9597 = vand.u32 %v9545, 4294901760
    %9598 = vmatpush1.msra.mxu0 %v9597
    %v9599 = vand.u32 %v9548, 4294901760
    %9600 = vmatprep.subr.mxu0 %v9599
    %v9601 = vand.u32 %v9547, 4294901760
    %9602 = vmatpush1.msra.mxu0 %v9601
    %v9603 = vand.u32 %v9550, 4294901760
    %9604 = vmatprep.subr.mxu0 %v9603
    %v9605 = vand.u32 %v9549, 4294901760
    %9606 = vmatpush1.msra.mxu0 %v9605
    %v9607 = vand.u32 %v9552, 4294901760
    %9608 = vmatprep.subr.mxu0 %v9607
    %v9609 = vand.u32 %v9551, 4294901760
    %9610 = vmatpush1.msra.mxu0 %v9609
    %v9611 = vand.u32 %v9554, 4294901760
    %9612 = vmatprep.subr.mxu0 %v9611
    %v9613 = vand.u32 %v9553, 4294901760
    %9614 = vmatpush1.msra.mxu0 %v9613
    %v9615 = vand.u32 %v9556, 4294901760
    %9616 = vmatprep.subr.mxu0 %v9615
    %v9617 = vand.u32 %v9555, 4294901760
    %9618 = vmatpush1.msra.mxu0 %v9617
    %v9619 = vand.u32 %v9558, 4294901760
    %9620 = vmatprep.subr.mxu0 %v9619
    %v9621 = vand.u32 %v9557, 4294901760
    %9622 = vmatpush1.msra.mxu0 %v9621
    %9623 = vmatprep.subr.mxu0 0.0
    %9624 = vmatpush1.msra.mxu0 0.0
    %9625 = vmatprep.subr.mxu0 0.0
    %9626 = vmatpush1.msra.mxu0 0.0
    %9627 = vmatprep.subr.mxu0 0.0
    %9628 = vmatpush1.msra.mxu0 0.0
    %9629 = vmatprep.subr.mxu0 0.0
    %9630 = vmatpush1.msra.mxu0 0.0
    %9631 = vmatprep.subr.mxu0 0.0
    %9632 = vmatpush1.msra.mxu0 0.0
    %9633 = vmatprep.subr.mxu0 0.0
    %9634 = vmatpush1.msra.mxu0 0.0
    %9635 = vmatprep.subr.mxu0 0.0
    %9636 = vmatpush1.msra.mxu0 0.0
    %9637 = vmatprep.subr.mxu0 0.0
    %9638 = vmatpush1.msra.mxu0 0.0
    %9639 = vmatprep.subr.mxu0 0.0
    %9640 = vmatpush1.msra.mxu0 0.0
    %9641 = vmatprep.subr.mxu0 0.0
    %9642 = vmatpush1.msra.mxu0 0.0
    %9643 = vmatprep.subr.mxu0 0.0
    %9644 = vmatpush1.msra.mxu0 0.0
    %9645 = vmatprep.subr.mxu0 0.0
    %9646 = vmatpush1.msra.mxu0 0.0
    %9647 = vmatprep.subr.mxu0 0.0
    %9648 = vmatpush1.msra.mxu0 0.0
    %9649 = vmatprep.subr.mxu0 0.0
    %9650 = vmatpush1.msra.mxu0 0.0
    %9651 = vmatprep.subr.mxu0 0.0
    %9652 = vmatpush1.msra.mxu0 0.0
    %9653 = vmatprep.subr.mxu0 0.0
    %9654 = vmatpush1.msra.mxu0 0.0
    %9655 = vmatprep.mubr.f32.mxu0 0.0
    %v9656 = vand.u32 %v9522, 4294901760
    %v9657 = vsub.f32 %v9522, %v9656
    %v9658 = vand.u32 %v9657, 4294901760
    %v9659 = vsub.f32 %v9657, %v9658
    %v9660 = vand.u32 %v9659, 4294901760
    %9661 = vmatmul.mubr.f32.gmra.mrb[0].mxu0 %v9660
    %v9662 = vpop.f32.mrb[0].mxu0
    %v9663 = vadd.f32 0.0, %v9662
    %v9664 = vpop.f32.mrb[0].mxu0
    %v9665 = vadd.f32 0.0, %v9664
    %9666 = vdwg.mxu0
    %v9667 = vand.u32 %v9528, 4294901760
    %v9668 = vsub.f32 %v9528, %v9667
    %v9669 = vand.u32 %v9668, 4294901760
    %v9670 = vsub.f32 %v9668, %v9669
    %v9671 = vand.u32 %v9670, 4294901760
    %9672 = vmatprep.subr.mxu0 %v9671
    %v9673 = vand.u32 %v9527, 4294901760
    %v9674 = vsub.f32 %v9527, %v9673
    %v9675 = vand.u32 %v9674, 4294901760
    %v9676 = vsub.f32 %v9674, %v9675
    %v9677 = vand.u32 %v9676, 4294901760
    %9678 = vmatpush1.msra.mxu0 %v9677
    %v9679 = vand.u32 %v9530, 4294901760
    %v9680 = vsub.f32 %v9530, %v9679
    %v9681 = vand.u32 %v9680, 4294901760
    %v9682 = vsub.f32 %v9680, %v9681
    %v9683 = vand.u32 %v9682, 4294901760
    %9684 = vmatprep.subr.mxu0 %v9683
    %v9685 = vand.u32 %v9529, 4294901760
    %v9686 = vsub.f32 %v9529, %v9685
    %v9687 = vand.u32 %v9686, 4294901760
    %v9688 = vsub.f32 %v9686, %v9687
    %v9689 = vand.u32 %v9688, 4294901760
    %9690 = vmatpush1.msra.mxu0 %v9689
    %v9691 = vand.u32 %v9532, 4294901760
    %v9692 = vsub.f32 %v9532, %v9691
    %v9693 = vand.u32 %v9692, 4294901760
    %v9694 = vsub.f32 %v9692, %v9693
    %v9695 = vand.u32 %v9694, 4294901760
    %9696 = vmatprep.subr.mxu0 %v9695
    %v9697 = vand.u32 %v9531, 4294901760
    %v9698 = vsub.f32 %v9531, %v9697
    %v9699 = vand.u32 %v9698, 4294901760
    %v9700 = vsub.f32 %v9698, %v9699
    %v9701 = vand.u32 %v9700, 4294901760
    %9702 = vmatpush1.msra.mxu0 %v9701
    %v9703 = vand.u32 %v9534, 4294901760
    %v9704 = vsub.f32 %v9534, %v9703
    %v9705 = vand.u32 %v9704, 4294901760
    %v9706 = vsub.f32 %v9704, %v9705
    %v9707 = vand.u32 %v9706, 4294901760
    %9708 = vmatprep.subr.mxu0 %v9707
    %v9709 = vand.u32 %v9533, 4294901760
    %v9710 = vsub.f32 %v9533, %v9709
    %v9711 = vand.u32 %v9710, 4294901760
    %v9712 = vsub.f32 %v9710, %v9711
    %v9713 = vand.u32 %v9712, 4294901760
    %9714 = vmatpush1.msra.mxu0 %v9713
    %v9715 = vand.u32 %v9536, 4294901760
    %v9716 = vsub.f32 %v9536, %v9715
    %v9717 = vand.u32 %v9716, 4294901760
    %v9718 = vsub.f32 %v9716, %v9717
    %v9719 = vand.u32 %v9718, 4294901760
    %9720 = vmatprep.subr.mxu0 %v9719
    %v9721 = vand.u32 %v9535, 4294901760
    %v9722 = vsub.f32 %v9535, %v9721
    %v9723 = vand.u32 %v9722, 4294901760
    %v9724 = vsub.f32 %v9722, %v9723
    %v9725 = vand.u32 %v9724, 4294901760
    %9726 = vmatpush1.msra.mxu0 %v9725
    %v9727 = vand.u32 %v9538, 4294901760
    %v9728 = vsub.f32 %v9538, %v9727
    %v9729 = vand.u32 %v9728, 4294901760
    %v9730 = vsub.f32 %v9728, %v9729
    %v9731 = vand.u32 %v9730, 4294901760
    %9732 = vmatprep.subr.mxu0 %v9731
    %v9733 = vand.u32 %v9537, 4294901760
    %v9734 = vsub.f32 %v9537, %v9733
    %v9735 = vand.u32 %v9734, 4294901760
    %v9736 = vsub.f32 %v9734, %v9735
    %v9737 = vand.u32 %v9736, 4294901760
    %9738 = vmatpush1.msra.mxu0 %v9737
    %v9739 = vand.u32 %v9540, 4294901760
    %v9740 = vsub.f32 %v9540, %v9739
    %v9741 = vand.u32 %v9740, 4294901760
    %v9742 = vsub.f32 %v9740, %v9741
    %v9743 = vand.u32 %v9742, 4294901760
    %9744 = vmatprep.subr.mxu0 %v9743
    %v9745 = vand.u32 %v9539, 4294901760
    %v9746 = vsub.f32 %v9539, %v9745
    %v9747 = vand.u32 %v9746, 4294901760
    %v9748 = vsub.f32 %v9746, %v9747
    %v9749 = vand.u32 %v9748, 4294901760
    %9750 = vmatpush1.msra.mxu0 %v9749
    %v9751 = vand.u32 %v9542, 4294901760
    %v9752 = vsub.f32 %v9542, %v9751
    %v9753 = vand.u32 %v9752, 4294901760
    %v9754 = vsub.f32 %v9752, %v9753
    %v9755 = vand.u32 %v9754, 4294901760
    %9756 = vmatprep.subr.mxu0 %v9755
    %v9757 = vand.u32 %v9541, 4294901760
    %v9758 = vsub.f32 %v9541, %v9757
    %v9759 = vand.u32 %v9758, 4294901760
    %v9760 = vsub.f32 %v9758, %v9759
    %v9761 = vand.u32 %v9760, 4294901760
    %9762 = vmatpush1.msra.mxu0 %v9761
    %v9763 = vand.u32 %v9544, 4294901760
    %v9764 = vsub.f32 %v9544, %v9763
    %v9765 = vand.u32 %v9764, 4294901760
    %v9766 = vsub.f32 %v9764, %v9765
    %v9767 = vand.u32 %v9766, 4294901760
    %9768 = vmatprep.subr.mxu0 %v9767
    %v9769 = vand.u32 %v9543, 4294901760
    %v9770 = vsub.f32 %v9543, %v9769
    %v9771 = vand.u32 %v9770, 4294901760
    %v9772 = vsub.f32 %v9770, %v9771
    %v9773 = vand.u32 %v9772, 4294901760
    %9774 = vmatpush1.msra.mxu0 %v9773
    %v9775 = vand.u32 %v9546, 4294901760
    %v9776 = vsub.f32 %v9546, %v9775
    %v9777 = vand.u32 %v9776, 4294901760
    %v9778 = vsub.f32 %v9776, %v9777
    %v9779 = vand.u32 %v9778, 4294901760
    %9780 = vmatprep.subr.mxu0 %v9779
    %v9781 = vand.u32 %v9545, 4294901760
    %v9782 = vsub.f32 %v9545, %v9781
    %v9783 = vand.u32 %v9782, 4294901760
    %v9784 = vsub.f32 %v9782, %v9783
    %v9785 = vand.u32 %v9784, 4294901760
    %9786 = vmatpush1.msra.mxu0 %v9785
    %v9787 = vand.u32 %v9548, 4294901760
    %v9788 = vsub.f32 %v9548, %v9787
    %v9789 = vand.u32 %v9788, 4294901760
    %v9790 = vsub.f32 %v9788, %v9789
    %v9791 = vand.u32 %v9790, 4294901760
    %9792 = vmatprep.subr.mxu0 %v9791
    %v9793 = vand.u32 %v9547, 4294901760
    %v9794 = vsub.f32 %v9547, %v9793
    %v9795 = vand.u32 %v9794, 4294901760
    %v9796 = vsub.f32 %v9794, %v9795
    %v9797 = vand.u32 %v9796, 4294901760
    %9798 = vmatpush1.msra.mxu0 %v9797
    %v9799 = vand.u32 %v9550, 4294901760
    %v9800 = vsub.f32 %v9550, %v9799
    %v9801 = vand.u32 %v9800, 4294901760
    %v9802 = vsub.f32 %v9800, %v9801
    %v9803 = vand.u32 %v9802, 4294901760
    %9804 = vmatprep.subr.mxu0 %v9803
    %v9805 = vand.u32 %v9549, 4294901760
    %v9806 = vsub.f32 %v9549, %v9805
    %v9807 = vand.u32 %v9806, 4294901760
    %v9808 = vsub.f32 %v9806, %v9807
    %v9809 = vand.u32 %v9808, 4294901760
    %9810 = vmatpush1.msra.mxu0 %v9809
    %v9811 = vand.u32 %v9552, 4294901760
    %v9812 = vsub.f32 %v9552, %v9811
    %v9813 = vand.u32 %v9812, 4294901760
    %v9814 = vsub.f32 %v9812, %v9813
    %v9815 = vand.u32 %v9814, 4294901760
    %9816 = vmatprep.subr.mxu0 %v9815
    %v9817 = vand.u32 %v9551, 4294901760
    %v9818 = vsub.f32 %v9551, %v9817
    %v9819 = vand.u32 %v9818, 4294901760
    %v9820 = vsub.f32 %v9818, %v9819
    %v9821 = vand.u32 %v9820, 4294901760
    %9822 = vmatpush1.msra.mxu0 %v9821
    %v9823 = vand.u32 %v9554, 4294901760
    %v9824 = vsub.f32 %v9554, %v9823
    %v9825 = vand.u32 %v9824, 4294901760
    %v9826 = vsub.f32 %v9824, %v9825
    %v9827 = vand.u32 %v9826, 4294901760
    %9828 = vmatprep.subr.mxu0 %v9827
    %v9829 = vand.u32 %v9553, 4294901760
    %v9830 = vsub.f32 %v9553, %v9829
    %v9831 = vand.u32 %v9830, 4294901760
    %v9832 = vsub.f32 %v9830, %v9831
    %v9833 = vand.u32 %v9832, 4294901760
    %9834 = vmatpush1.msra.mxu0 %v9833
    %v9835 = vand.u32 %v9556, 4294901760
    %v9836 = vsub.f32 %v9556, %v9835
    %v9837 = vand.u32 %v9836, 4294901760
    %v9838 = vsub.f32 %v9836, %v9837
    %v9839 = vand.u32 %v9838, 4294901760
    %9840 = vmatprep.subr.mxu0 %v9839
    %v9841 = vand.u32 %v9555, 4294901760
    %v9842 = vsub.f32 %v9555, %v9841
    %v9843 = vand.u32 %v9842, 4294901760
    %v9844 = vsub.f32 %v9842, %v9843
    %v9845 = vand.u32 %v9844, 4294901760
    %9846 = vmatpush1.msra.mxu0 %v9845
    %v9847 = vand.u32 %v9558, 4294901760
    %v9848 = vsub.f32 %v9558, %v9847
    %v9849 = vand.u32 %v9848, 4294901760
    %v9850 = vsub.f32 %v9848, %v9849
    %v9851 = vand.u32 %v9850, 4294901760
    %9852 = vmatprep.subr.mxu0 %v9851
    %v9853 = vand.u32 %v9557, 4294901760
    %v9854 = vsub.f32 %v9557, %v9853
    %v9855 = vand.u32 %v9854, 4294901760
    %v9856 = vsub.f32 %v9854, %v9855
    %v9857 = vand.u32 %v9856, 4294901760
    %9858 = vmatpush1.msra.mxu0 %v9857
    %9859 = vmatprep.subr.mxu0 0.0
    %9860 = vmatpush1.msra.mxu0 0.0
    %9861 = vmatprep.subr.mxu0 0.0
    %9862 = vmatpush1.msra.mxu0 0.0
    %9863 = vmatprep.subr.mxu0 0.0
    %9864 = vmatpush1.msra.mxu0 0.0
    %9865 = vmatprep.subr.mxu0 0.0
    %9866 = vmatpush1.msra.mxu0 0.0
    %9867 = vmatprep.subr.mxu0 0.0
    %9868 = vmatpush1.msra.mxu0 0.0
    %9869 = vmatprep.subr.mxu0 0.0
    %9870 = vmatpush1.msra.mxu0 0.0
    %9871 = vmatprep.subr.mxu0 0.0
    %9872 = vmatpush1.msra.mxu0 0.0
    %9873 = vmatprep.subr.mxu0 0.0
    %9874 = vmatpush1.msra.mxu0 0.0
    %9875 = vmatprep.subr.mxu0 0.0
    %9876 = vmatpush1.msra.mxu0 0.0
    %9877 = vmatprep.subr.mxu0 0.0
    %9878 = vmatpush1.msra.mxu0 0.0
    %9879 = vmatprep.subr.mxu0 0.0
    %9880 = vmatpush1.msra.mxu0 0.0
    %9881 = vmatprep.subr.mxu0 0.0
    %9882 = vmatpush1.msra.mxu0 0.0
    %9883 = vmatprep.subr.mxu0 0.0
    %9884 = vmatpush1.msra.mxu0 0.0
    %9885 = vmatprep.subr.mxu0 0.0
    %9886 = vmatpush1.msra.mxu0 0.0
    %9887 = vmatprep.subr.mxu0 0.0
    %9888 = vmatpush1.msra.mxu0 0.0
    %9889 = vmatprep.subr.mxu0 0.0
    %9890 = vmatpush1.msra.mxu0 0.0
    %9891 = vmatprep.mubr.f32.mxu0 0.0
    %v9892 = vand.u32 %v9522, 4294901760
    %9893 = vmatmul.mubr.f32.gmra.mrb[0].mxu0 %v9892
    %v9894 = vpop.f32.mrb[0].mxu0
    %v9895 = vadd.f32 %v9663, %v9894
    %v9896 = vpop.f32.mrb[0].mxu0
    %v9897 = vadd.f32 %v9665, %v9896
    %9898 = vdwg.mxu0
    %v9899 = vand.u32 %v9528, 4294901760
    %v9900 = vsub.f32 %v9528, %v9899
    %9901 = vmatprep.subr.mxu0 %v9900
    %v9902 = vand.u32 %v9527, 4294901760
    %v9903 = vsub.f32 %v9527, %v9902
    %9904 = vmatpush1.msra.mxu0 %v9903
    %v9905 = vand.u32 %v9530, 4294901760
    %v9906 = vsub.f32 %v9530, %v9905
    %9907 = vmatprep.subr.mxu0 %v9906
    %v9908 = vand.u32 %v9529, 4294901760
    %v9909 = vsub.f32 %v9529, %v9908
    %9910 = vmatpush1.msra.mxu0 %v9909
    %v9911 = vand.u32 %v9532, 4294901760
    %v9912 = vsub.f32 %v9532, %v9911
    %9913 = vmatprep.subr.mxu0 %v9912
    %v9914 = vand.u32 %v9531, 4294901760
    %v9915 = vsub.f32 %v9531, %v9914
    %9916 = vmatpush1.msra.mxu0 %v9915
    %v9917 = vand.u32 %v9534, 4294901760
    %v9918 = vsub.f32 %v9534, %v9917
    %9919 = vmatprep.subr.mxu0 %v9918
    %v9920 = vand.u32 %v9533, 4294901760
    %v9921 = vsub.f32 %v9533, %v9920
    %9922 = vmatpush1.msra.mxu0 %v9921
    %v9923 = vand.u32 %v9536, 4294901760
    %v9924 = vsub.f32 %v9536, %v9923
    %9925 = vmatprep.subr.mxu0 %v9924
    %v9926 = vand.u32 %v9535, 4294901760
    %v9927 = vsub.f32 %v9535, %v9926
    %9928 = vmatpush1.msra.mxu0 %v9927
    %v9929 = vand.u32 %v9538, 4294901760
    %v9930 = vsub.f32 %v9538, %v9929
    %9931 = vmatprep.subr.mxu0 %v9930
    %v9932 = vand.u32 %v9537, 4294901760
    %v9933 = vsub.f32 %v9537, %v9932
    %9934 = vmatpush1.msra.mxu0 %v9933
    %v9935 = vand.u32 %v9540, 4294901760
    %v9936 = vsub.f32 %v9540, %v9935
    %9937 = vmatprep.subr.mxu0 %v9936
    %v9938 = vand.u32 %v9539, 4294901760
    %v9939 = vsub.f32 %v9539, %v9938
    %9940 = vmatpush1.msra.mxu0 %v9939
    %v9941 = vand.u32 %v9542, 4294901760
    %v9942 = vsub.f32 %v9542, %v9941
    %9943 = vmatprep.subr.mxu0 %v9942
    %v9944 = vand.u32 %v9541, 4294901760
    %v9945 = vsub.f32 %v9541, %v9944
    %9946 = vmatpush1.msra.mxu0 %v9945
    %v9947 = vand.u32 %v9544, 4294901760
    %v9948 = vsub.f32 %v9544, %v9947
    %9949 = vmatprep.subr.mxu0 %v9948
    %v9950 = vand.u32 %v9543, 4294901760
    %v9951 = vsub.f32 %v9543, %v9950
    %9952 = vmatpush1.msra.mxu0 %v9951
    %v9953 = vand.u32 %v9546, 4294901760
    %v9954 = vsub.f32 %v9546, %v9953
    %9955 = vmatprep.subr.mxu0 %v9954
    %v9956 = vand.u32 %v9545, 4294901760
    %v9957 = vsub.f32 %v9545, %v9956
    %9958 = vmatpush1.msra.mxu0 %v9957
    %v9959 = vand.u32 %v9548, 4294901760
    %v9960 = vsub.f32 %v9548, %v9959
    %9961 = vmatprep.subr.mxu0 %v9960
    %v9962 = vand.u32 %v9547, 4294901760
    %v9963 = vsub.f32 %v9547, %v9962
    %9964 = vmatpush1.msra.mxu0 %v9963
    %v9965 = vand.u32 %v9550, 4294901760
    %v9966 = vsub.f32 %v9550, %v9965
    %9967 = vmatprep.subr.mxu0 %v9966
    %v9968 = vand.u32 %v9549, 4294901760
    %v9969 = vsub.f32 %v9549, %v9968
    %9970 = vmatpush1.msra.mxu0 %v9969
    %v9971 = vand.u32 %v9552, 4294901760
    %v9972 = vsub.f32 %v9552, %v9971
    %9973 = vmatprep.subr.mxu0 %v9972
    %v9974 = vand.u32 %v9551, 4294901760
    %v9975 = vsub.f32 %v9551, %v9974
    %9976 = vmatpush1.msra.mxu0 %v9975
    %v9977 = vand.u32 %v9554, 4294901760
    %v9978 = vsub.f32 %v9554, %v9977
    %9979 = vmatprep.subr.mxu0 %v9978
    %v9980 = vand.u32 %v9553, 4294901760
    %v9981 = vsub.f32 %v9553, %v9980
    %9982 = vmatpush1.msra.mxu0 %v9981
    %v9983 = vand.u32 %v9556, 4294901760
    %v9984 = vsub.f32 %v9556, %v9983
    %9985 = vmatprep.subr.mxu0 %v9984
    %v9986 = vand.u32 %v9555, 4294901760
    %v9987 = vsub.f32 %v9555, %v9986
    %9988 = vmatpush1.msra.mxu0 %v9987
    %v9989 = vand.u32 %v9558, 4294901760
    %v9990 = vsub.f32 %v9558, %v9989
    %9991 = vmatprep.subr.mxu0 %v9990
    %v9992 = vand.u32 %v9557, 4294901760
    %v9993 = vsub.f32 %v9557, %v9992
    %9994 = vmatpush1.msra.mxu0 %v9993
    %9995 = vmatprep.subr.mxu0 0.0
    %9996 = vmatpush1.msra.mxu0 0.0
    %9997 = vmatprep.subr.mxu0 0.0
    %9998 = vmatpush1.msra.mxu0 0.0
    %9999 = vmatprep.subr.mxu0 0.0
    %10000 = vmatpush1.msra.mxu0 0.0
    %10001 = vmatprep.subr.mxu0 0.0
    %10002 = vmatpush1.msra.mxu0 0.0
    %10003 = vmatprep.subr.mxu0 0.0
    %10004 = vmatpush1.msra.mxu0 0.0
    %10005 = vmatprep.subr.mxu0 0.0
    %10006 = vmatpush1.msra.mxu0 0.0
    %10007 = vmatprep.subr.mxu0 0.0
    %10008 = vmatpush1.msra.mxu0 0.0
    %10009 = vmatprep.subr.mxu0 0.0
    %10010 = vmatpush1.msra.mxu0 0.0
    %10011 = vmatprep.subr.mxu0 0.0
    %10012 = vmatpush1.msra.mxu0 0.0
    %10013 = vmatprep.subr.mxu0 0.0
    %10014 = vmatpush1.msra.mxu0 0.0
    %10015 = vmatprep.subr.mxu0 0.0
    %10016 = vmatpush1.msra.mxu0 0.0
    %10017 = vmatprep.subr.mxu0 0.0
    %10018 = vmatpush1.msra.mxu0 0.0
    %10019 = vmatprep.subr.mxu0 0.0
    %10020 = vmatpush1.msra.mxu0 0.0
    %10021 = vmatprep.subr.mxu0 0.0
    %10022 = vmatpush1.msra.mxu0 0.0
    %10023 = vmatprep.subr.mxu0 0.0
    %10024 = vmatpush1.msra.mxu0 0.0
    %10025 = vmatprep.subr.mxu0 0.0
    %10026 = vmatpush1.msra.mxu0 0.0
    %10027 = vmatprep.mubr.f32.mxu0 0.0
    %v10028 = vand.u32 %v9522, 4294901760
    %v10029 = vsub.f32 %v9522, %v10028
    %10030 = vmatmul.mubr.f32.gmra.mrb[0].mxu0 %v10029
    %v10031 = vpop.f32.mrb[0].mxu0
    %v10032 = vadd.f32 %v9895, %v10031
    %v10033 = vpop.f32.mrb[0].mxu0
    %v10034 = vadd.f32 %v9897, %v10033
    %10035 = vdwg.mxu0
    %v10036 = vand.u32 %v9528, 4294901760
    %10037 = vmatprep.subr.mxu0 %v10036
    %v10038 = vand.u32 %v9527, 4294901760
    %10039 = vmatpush1.msra.mxu0 %v10038
    %v10040 = vand.u32 %v9530, 4294901760
    %10041 = vmatprep.subr.mxu0 %v10040
    %v10042 = vand.u32 %v9529, 4294901760
    %10043 = vmatpush1.msra.mxu0 %v10042
    %v10044 = vand.u32 %v9532, 4294901760
    %10045 = vmatprep.subr.mxu0 %v10044
    %v10046 = vand.u32 %v9531, 4294901760
    %10047 = vmatpush1.msra.mxu0 %v10046
    %v10048 = vand.u32 %v9534, 4294901760
    %10049 = vmatprep.subr.mxu0 %v10048
    %v10050 = vand.u32 %v9533, 4294901760
    %10051 = vmatpush1.msra.mxu0 %v10050
    %v10052 = vand.u32 %v9536, 4294901760
    %10053 = vmatprep.subr.mxu0 %v10052
    %v10054 = vand.u32 %v9535, 4294901760
    %10055 = vmatpush1.msra.mxu0 %v10054
    %v10056 = vand.u32 %v9538, 4294901760
    %10057 = vmatprep.subr.mxu0 %v10056
    %v10058 = vand.u32 %v9537, 4294901760
    %10059 = vmatpush1.msra.mxu0 %v10058
    %v10060 = vand.u32 %v9540, 4294901760
    %10061 = vmatprep.subr.mxu0 %v10060
    %v10062 = vand.u32 %v9539, 4294901760
    %10063 = vmatpush1.msra.mxu0 %v10062
    %v10064 = vand.u32 %v9542, 4294901760
    %10065 = vmatprep.subr.mxu0 %v10064
    %v10066 = vand.u32 %v9541, 4294901760
    %10067 = vmatpush1.msra.mxu0 %v10066
    %v10068 = vand.u32 %v9544, 4294901760
    %10069 = vmatprep.subr.mxu0 %v10068
    %v10070 = vand.u32 %v9543, 4294901760
    %10071 = vmatpush1.msra.mxu0 %v10070
    %v10072 = vand.u32 %v9546, 4294901760
    %10073 = vmatprep.subr.mxu0 %v10072
    %v10074 = vand.u32 %v9545, 4294901760
    %10075 = vmatpush1.msra.mxu0 %v10074
    %v10076 = vand.u32 %v9548, 4294901760
    %10077 = vmatprep.subr.mxu0 %v10076
    %v10078 = vand.u32 %v9547, 4294901760
    %10079 = vmatpush1.msra.mxu0 %v10078
    %v10080 = vand.u32 %v9550, 4294901760
    %10081 = vmatprep.subr.mxu0 %v10080
    %v10082 = vand.u32 %v9549, 4294901760
    %10083 = vmatpush1.msra.mxu0 %v10082
    %v10084 = vand.u32 %v9552, 4294901760
    %10085 = vmatprep.subr.mxu0 %v10084
    %v10086 = vand.u32 %v9551, 4294901760
    %10087 = vmatpush1.msra.mxu0 %v10086
    %v10088 = vand.u32 %v9554, 4294901760
    %10089 = vmatprep.subr.mxu0 %v10088
    %v10090 = vand.u32 %v9553, 4294901760
    %10091 = vmatpush1.msra.mxu0 %v10090
    %v10092 = vand.u32 %v9556, 4294901760
    %10093 = vmatprep.subr.mxu0 %v10092
    %v10094 = vand.u32 %v9555, 4294901760
    %10095 = vmatpush1.msra.mxu0 %v10094
    %v10096 = vand.u32 %v9558, 4294901760
    %10097 = vmatprep.subr.mxu0 %v10096
    %v10098 = vand.u32 %v9557, 4294901760
    %10099 = vmatpush1.msra.mxu0 %v10098
    %10100 = vmatprep.subr.mxu0 0.0
    %10101 = vmatpush1.msra.mxu0 0.0
    %10102 = vmatprep.subr.mxu0 0.0
    %10103 = vmatpush1.msra.mxu0 0.0
    %10104 = vmatprep.subr.mxu0 0.0
    %10105 = vmatpush1.msra.mxu0 0.0
    %10106 = vmatprep.subr.mxu0 0.0
    %10107 = vmatpush1.msra.mxu0 0.0
    %10108 = vmatprep.subr.mxu0 0.0
    %10109 = vmatpush1.msra.mxu0 0.0
    %10110 = vmatprep.subr.mxu0 0.0
    %10111 = vmatpush1.msra.mxu0 0.0
    %10112 = vmatprep.subr.mxu0 0.0
    %10113 = vmatpush1.msra.mxu0 0.0
    %10114 = vmatprep.subr.mxu0 0.0
    %10115 = vmatpush1.msra.mxu0 0.0
    %10116 = vmatprep.subr.mxu0 0.0
    %10117 = vmatpush1.msra.mxu0 0.0
    %10118 = vmatprep.subr.mxu0 0.0
    %10119 = vmatpush1.msra.mxu0 0.0
    %10120 = vmatprep.subr.mxu0 0.0
    %10121 = vmatpush1.msra.mxu0 0.0
    %10122 = vmatprep.subr.mxu0 0.0
    %10123 = vmatpush1.msra.mxu0 0.0
    %10124 = vmatprep.subr.mxu0 0.0
    %10125 = vmatpush1.msra.mxu0 0.0
    %10126 = vmatprep.subr.mxu0 0.0
    %10127 = vmatpush1.msra.mxu0 0.0
    %10128 = vmatprep.subr.mxu0 0.0
    %10129 = vmatpush1.msra.mxu0 0.0
    %10130 = vmatprep.subr.mxu0 0.0
    %10131 = vmatpush1.msra.mxu0 0.0
    %10132 = vmatprep.mubr.f32.mxu0 0.0
    %v10133 = vand.u32 %v9522, 4294901760
    %v10134 = vsub.f32 %v9522, %v10133
    %v10135 = vand.u32 %v10134, 4294901760
    %10136 = vmatmul.mubr.f32.gmra.mrb[0].mxu0 %v10135
    %v10137 = vpop.f32.mrb[0].mxu0
    %v10138 = vadd.f32 %v10032, %v10137
    %v10139 = vpop.f32.mrb[0].mxu0
    %v10140 = vadd.f32 %v10034, %v10139
    %10141 = vdwg.mxu0
    %v10142 = vand.u32 %v9528, 4294901760
    %v10143 = vsub.f32 %v9528, %v10142
    %v10144 = vand.u32 %v10143, 4294901760
    %10145 = vmatprep.subr.mxu0 %v10144
    %v10146 = vand.u32 %v9527, 4294901760
    %v10147 = vsub.f32 %v9527, %v10146
    %v10148 = vand.u32 %v10147, 4294901760
    %10149 = vmatpush1.msra.mxu0 %v10148
    %v10150 = vand.u32 %v9530, 4294901760
    %v10151 = vsub.f32 %v9530, %v10150
    %v10152 = vand.u32 %v10151, 4294901760
    %10153 = vmatprep.subr.mxu0 %v10152
    %v10154 = vand.u32 %v9529, 4294901760
    %v10155 = vsub.f32 %v9529, %v10154
    %v10156 = vand.u32 %v10155, 4294901760
    %10157 = vmatpush1.msra.mxu0 %v10156
    %v10158 = vand.u32 %v9532, 4294901760
    %v10159 = vsub.f32 %v9532, %v10158
    %v10160 = vand.u32 %v10159, 4294901760
    %10161 = vmatprep.subr.mxu0 %v10160
    %v10162 = vand.u32 %v9531, 4294901760
    %v10163 = vsub.f32 %v9531, %v10162
    %v10164 = vand.u32 %v10163, 4294901760
    %10165 = vmatpush1.msra.mxu0 %v10164
    %v10166 = vand.u32 %v9534, 4294901760
    %v10167 = vsub.f32 %v9534, %v10166
    %v10168 = vand.u32 %v10167, 4294901760
    %10169 = vmatprep.subr.mxu0 %v10168
    %v10170 = vand.u32 %v9533, 4294901760
    %v10171 = vsub.f32 %v9533, %v10170
    %v10172 = vand.u32 %v10171, 4294901760
    %10173 = vmatpush1.msra.mxu0 %v10172
    %v10174 = vand.u32 %v9536, 4294901760
    %v10175 = vsub.f32 %v9536, %v10174
    %v10176 = vand.u32 %v10175, 4294901760
    %10177 = vmatprep.subr.mxu0 %v10176
    %v10178 = vand.u32 %v9535, 4294901760
    %v10179 = vsub.f32 %v9535, %v10178
    %v10180 = vand.u32 %v10179, 4294901760
    %10181 = vmatpush1.msra.mxu0 %v10180
    %v10182 = vand.u32 %v9538, 4294901760
    %v10183 = vsub.f32 %v9538, %v10182
    %v10184 = vand.u32 %v10183, 4294901760
    %10185 = vmatprep.subr.mxu0 %v10184
    %v10186 = vand.u32 %v9537, 4294901760
    %v10187 = vsub.f32 %v9537, %v10186
    %v10188 = vand.u32 %v10187, 4294901760
    %10189 = vmatpush1.msra.mxu0 %v10188
    %v10190 = vand.u32 %v9540, 4294901760
    %v10191 = vsub.f32 %v9540, %v10190
    %v10192 = vand.u32 %v10191, 4294901760
    %10193 = vmatprep.subr.mxu0 %v10192
    %v10194 = vand.u32 %v9539, 4294901760
    %v10195 = vsub.f32 %v9539, %v10194
    %v10196 = vand.u32 %v10195, 4294901760
    %10197 = vmatpush1.msra.mxu0 %v10196
    %v10198 = vand.u32 %v9542, 4294901760
    %v10199 = vsub.f32 %v9542, %v10198
    %v10200 = vand.u32 %v10199, 4294901760
    %10201 = vmatprep.subr.mxu0 %v10200
    %v10202 = vand.u32 %v9541, 4294901760
    %v10203 = vsub.f32 %v9541, %v10202
    %v10204 = vand.u32 %v10203, 4294901760
    %10205 = vmatpush1.msra.mxu0 %v10204
    %v10206 = vand.u32 %v9544, 4294901760
    %v10207 = vsub.f32 %v9544, %v10206
    %v10208 = vand.u32 %v10207, 4294901760
    %10209 = vmatprep.subr.mxu0 %v10208
    %v10210 = vand.u32 %v9543, 4294901760
    %v10211 = vsub.f32 %v9543, %v10210
    %v10212 = vand.u32 %v10211, 4294901760
    %10213 = vmatpush1.msra.mxu0 %v10212
    %v10214 = vand.u32 %v9546, 4294901760
    %v10215 = vsub.f32 %v9546, %v10214
    %v10216 = vand.u32 %v10215, 4294901760
    %10217 = vmatprep.subr.mxu0 %v10216
    %v10218 = vand.u32 %v9545, 4294901760
    %v10219 = vsub.f32 %v9545, %v10218
    %v10220 = vand.u32 %v10219, 4294901760
    %10221 = vmatpush1.msra.mxu0 %v10220
    %v10222 = vand.u32 %v9548, 4294901760
    %v10223 = vsub.f32 %v9548, %v10222
    %v10224 = vand.u32 %v10223, 4294901760
    %10225 = vmatprep.subr.mxu0 %v10224
    %v10226 = vand.u32 %v9547, 4294901760
    %v10227 = vsub.f32 %v9547, %v10226
    %v10228 = vand.u32 %v10227, 4294901760
    %10229 = vmatpush1.msra.mxu0 %v10228
    %v10230 = vand.u32 %v9550, 4294901760
    %v10231 = vsub.f32 %v9550, %v10230
    %v10232 = vand.u32 %v10231, 4294901760
    %10233 = vmatprep.subr.mxu0 %v10232
    %v10234 = vand.u32 %v9549, 4294901760
    %v10235 = vsub.f32 %v9549, %v10234
    %v10236 = vand.u32 %v10235, 4294901760
    %10237 = vmatpush1.msra.mxu0 %v10236
    %v10238 = vand.u32 %v9552, 4294901760
    %v10239 = vsub.f32 %v9552, %v10238
    %v10240 = vand.u32 %v10239, 4294901760
    %10241 = vmatprep.subr.mxu0 %v10240
    %v10242 = vand.u32 %v9551, 4294901760
    %v10243 = vsub.f32 %v9551, %v10242
    %v10244 = vand.u32 %v10243, 4294901760
    %10245 = vmatpush1.msra.mxu0 %v10244
    %v10246 = vand.u32 %v9554, 4294901760
    %v10247 = vsub.f32 %v9554, %v10246
    %v10248 = vand.u32 %v10247, 4294901760
    %10249 = vmatprep.subr.mxu0 %v10248
    %v10250 = vand.u32 %v9553, 4294901760
    %v10251 = vsub.f32 %v9553, %v10250
    %v10252 = vand.u32 %v10251, 4294901760
    %10253 = vmatpush1.msra.mxu0 %v10252
    %v10254 = vand.u32 %v9556, 4294901760
    %v10255 = vsub.f32 %v9556, %v10254
    %v10256 = vand.u32 %v10255, 4294901760
    %10257 = vmatprep.subr.mxu0 %v10256
    %v10258 = vand.u32 %v9555, 4294901760
    %v10259 = vsub.f32 %v9555, %v10258
    %v10260 = vand.u32 %v10259, 4294901760
    %10261 = vmatpush1.msra.mxu0 %v10260
    %v10262 = vand.u32 %v9558, 4294901760
    %v10263 = vsub.f32 %v9558, %v10262
    %v10264 = vand.u32 %v10263, 4294901760
    %10265 = vmatprep.subr.mxu0 %v10264
    %v10266 = vand.u32 %v9557, 4294901760
    %v10267 = vsub.f32 %v9557, %v10266
    %v10268 = vand.u32 %v10267, 4294901760
    %10269 = vmatpush1.msra.mxu0 %v10268
    %10270 = vmatprep.subr.mxu0 0.0
    %10271 = vmatpush1.msra.mxu0 0.0
    %10272 = vmatprep.subr.mxu0 0.0
    %10273 = vmatpush1.msra.mxu0 0.0
    %10274 = vmatprep.subr.mxu0 0.0
    %10275 = vmatpush1.msra.mxu0 0.0
    %10276 = vmatprep.subr.mxu0 0.0
    %10277 = vmatpush1.msra.mxu0 0.0
    %10278 = vmatprep.subr.mxu0 0.0
    %10279 = vmatpush1.msra.mxu0 0.0
    %10280 = vmatprep.subr.mxu0 0.0
    %10281 = vmatpush1.msra.mxu0 0.0
    %10282 = vmatprep.subr.mxu0 0.0
    %10283 = vmatpush1.msra.mxu0 0.0
    %10284 = vmatprep.subr.mxu0 0.0
    %10285 = vmatpush1.msra.mxu0 0.0
    %10286 = vmatprep.subr.mxu0 0.0
    %10287 = vmatpush1.msra.mxu0 0.0
    %10288 = vmatprep.subr.mxu0 0.0
    %10289 = vmatpush1.msra.mxu0 0.0
    %10290 = vmatprep.subr.mxu0 0.0
    %10291 = vmatpush1.msra.mxu0 0.0
    %10292 = vmatprep.subr.mxu0 0.0
    %10293 = vmatpush1.msra.mxu0 0.0
    %10294 = vmatprep.subr.mxu0 0.0
    %10295 = vmatpush1.msra.mxu0 0.0
    %10296 = vmatprep.subr.mxu0 0.0
    %10297 = vmatpush1.msra.mxu0 0.0
    %10298 = vmatprep.subr.mxu0 0.0
    %10299 = vmatpush1.msra.mxu0 0.0
    %10300 = vmatprep.subr.mxu0 0.0
    %10301 = vmatpush1.msra.mxu0 0.0
    %10302 = vmatprep.mubr.f32.mxu0 0.0
    %v10303 = vand.u32 %v9522, 4294901760
    %10304 = vmatmul.mubr.f32.gmra.mrb[0].mxu0 %v10303
    %v10305 = vpop.f32.mrb[0].mxu0
    %v10306 = vadd.f32 %v10138, %v10305
    %v10307 = vpop.f32.mrb[0].mxu0
    %v10308 = vadd.f32 %v10140, %v10307
    %10309 = vdwg.mxu0
    %v10310 = vand.u32 %v9528, 4294901760
    %10311 = vmatprep.subr.mxu0 %v10310
    %v10312 = vand.u32 %v9527, 4294901760
    %10313 = vmatpush1.msra.mxu0 %v10312
    %v10314 = vand.u32 %v9530, 4294901760
    %10315 = vmatprep.subr.mxu0 %v10314
    %v10316 = vand.u32 %v9529, 4294901760
    %10317 = vmatpush1.msra.mxu0 %v10316
    %v10318 = vand.u32 %v9532, 4294901760
    %10319 = vmatprep.subr.mxu0 %v10318
    %v10320 = vand.u32 %v9531, 4294901760
    %10321 = vmatpush1.msra.mxu0 %v10320
    %v10322 = vand.u32 %v9534, 4294901760
    %10323 = vmatprep.subr.mxu0 %v10322
    %v10324 = vand.u32 %v9533, 4294901760
    %10325 = vmatpush1.msra.mxu0 %v10324
    %v10326 = vand.u32 %v9536, 4294901760
    %10327 = vmatprep.subr.mxu0 %v10326
    %v10328 = vand.u32 %v9535, 4294901760
    %10329 = vmatpush1.msra.mxu0 %v10328
    %v10330 = vand.u32 %v9538, 4294901760
    %10331 = vmatprep.subr.mxu0 %v10330
    %v10332 = vand.u32 %v9537, 4294901760
    %10333 = vmatpush1.msra.mxu0 %v10332
    %v10334 = vand.u32 %v9540, 4294901760
    %10335 = vmatprep.subr.mxu0 %v10334
    %v10336 = vand.u32 %v9539, 4294901760
    %10337 = vmatpush1.msra.mxu0 %v10336
    %v10338 = vand.u32 %v9542, 4294901760
    %10339 = vmatprep.subr.mxu0 %v10338
    %v10340 = vand.u32 %v9541, 4294901760
    %10341 = vmatpush1.msra.mxu0 %v10340
    %v10342 = vand.u32 %v9544, 4294901760
    %10343 = vmatprep.subr.mxu0 %v10342
    %v10344 = vand.u32 %v9543, 4294901760
    %10345 = vmatpush1.msra.mxu0 %v10344
    %v10346 = vand.u32 %v9546, 4294901760
    %10347 = vmatprep.subr.mxu0 %v10346
    %v10348 = vand.u32 %v9545, 4294901760
    %10349 = vmatpush1.msra.mxu0 %v10348
    %v10350 = vand.u32 %v9548, 4294901760
    %10351 = vmatprep.subr.mxu0 %v10350
    %v10352 = vand.u32 %v9547, 4294901760
    %10353 = vmatpush1.msra.mxu0 %v10352
    %v10354 = vand.u32 %v9550, 4294901760
    %10355 = vmatprep.subr.mxu0 %v10354
    %v10356 = vand.u32 %v9549, 4294901760
    %10357 = vmatpush1.msra.mxu0 %v10356
    %v10358 = vand.u32 %v9552, 4294901760
    %10359 = vmatprep.subr.mxu0 %v10358
    %v10360 = vand.u32 %v9551, 4294901760
    %10361 = vmatpush1.msra.mxu0 %v10360
    %v10362 = vand.u32 %v9554, 4294901760
    %10363 = vmatprep.subr.mxu0 %v10362
    %v10364 = vand.u32 %v9553, 4294901760
    %10365 = vmatpush1.msra.mxu0 %v10364
    %v10366 = vand.u32 %v9556, 4294901760
    %10367 = vmatprep.subr.mxu0 %v10366
    %v10368 = vand.u32 %v9555, 4294901760
    %10369 = vmatpush1.msra.mxu0 %v10368
    %v10370 = vand.u32 %v9558, 4294901760
    %10371 = vmatprep.subr.mxu0 %v10370
    %v10372 = vand.u32 %v9557, 4294901760
    %10373 = vmatpush1.msra.mxu0 %v10372
    %10374 = vmatprep.subr.mxu0 0.0
    %10375 = vmatpush1.msra.mxu0 0.0
    %10376 = vmatprep.subr.mxu0 0.0
    %10377 = vmatpush1.msra.mxu0 0.0
    %10378 = vmatprep.subr.mxu0 0.0
    %10379 = vmatpush1.msra.mxu0 0.0
    %10380 = vmatprep.subr.mxu0 0.0
    %10381 = vmatpush1.msra.mxu0 0.0
    %10382 = vmatprep.subr.mxu0 0.0
    %10383 = vmatpush1.msra.mxu0 0.0
    %10384 = vmatprep.subr.mxu0 0.0
    %10385 = vmatpush1.msra.mxu0 0.0
    %10386 = vmatprep.subr.mxu0 0.0
    %10387 = vmatpush1.msra.mxu0 0.0
    %10388 = vmatprep.subr.mxu0 0.0
    %10389 = vmatpush1.msra.mxu0 0.0
    %10390 = vmatprep.subr.mxu0 0.0
    %10391 = vmatpush1.msra.mxu0 0.0
    %10392 = vmatprep.subr.mxu0 0.0
    %10393 = vmatpush1.msra.mxu0 0.0
    %10394 = vmatprep.subr.mxu0 0.0
    %10395 = vmatpush1.msra.mxu0 0.0
    %10396 = vmatprep.subr.mxu0 0.0
    %10397 = vmatpush1.msra.mxu0 0.0
    %10398 = vmatprep.subr.mxu0 0.0
    %10399 = vmatpush1.msra.mxu0 0.0
    %10400 = vmatprep.subr.mxu0 0.0
    %10401 = vmatpush1.msra.mxu0 0.0
    %10402 = vmatprep.subr.mxu0 0.0
    %10403 = vmatpush1.msra.mxu0 0.0
    %10404 = vmatprep.subr.mxu0 0.0
    %10405 = vmatpush1.msra.mxu0 0.0
    %10406 = vmatprep.mubr.f32.mxu0 0.0
    %v10407 = vand.u32 %v9522, 4294901760
    %10408 = vmatmul.mubr.f32.gmra.mrb[0].mxu0 %v10407
    %v10409 = vpop.f32.mrb[0].mxu0
    %v10410 = vadd.f32 %v10306, %v10409
    %v10411 = vpop.f32.mrb[0].mxu0
    %v10412 = vadd.f32 %v10308, %v10411
    %10413 = vdwg.mxu0
    %v10414 = vadd.f32 %v9524, %v10410
    %v10415 = vxor.u32 %v10414, 2147483648
    %v10416 = vmul.f32 %v10415, 1.442695
    %v10417 = vpow.pop %v10416
    %v10418 = vadd.f32 %v10417, 1.0
    %v10419 = vrcp.pop %v10418
    %v10420 = vmul.f32 1.0, %v10419
    %v10421 = vadd.f32 %v9525, %v10412
    %v10422 = vxor.u32 %v10421, 2147483648
    %v10423 = vmul.f32 %v10422, 1.442695
    %v10424 = vpow.pop %v10423
    %v10425 = vadd.f32 %v10424, 1.0
    %v10426 = vrcp.pop %v10425
    %v10427 = vmul.f32 1.0, %v10426
    %v10428 = vmul.f32 %v10427, %v9522
    %v10429 = vld [vmem:[#allocation9] sm:$0xff]
    %v10430 = vld [vmem:[#allocation9 + $0x8] sm:$0xff]
    %v10431 = vld [vmem:[#allocation9 + $0x10] sm:$0xff]
    %v10432 = vld [vmem:[#allocation9 + $0x18] sm:$0xff]
    %v10433 = vld [vmem:[#allocation9 + $0x20] sm:$0xff]
    %v10434 = vld [vmem:[#allocation9 + $0x28] sm:$0xff]
    %v10435 = vld [vmem:[#allocation9 + $0x30] sm:$0xff]
    %v10436 = vld [vmem:[#allocation9 + $0x38] sm:$0xff]
    %v10437 = vld [vmem:[#allocation9 + $0x40] sm:$0xff]
    %v10438 = vld [vmem:[#allocation9 + $0x48] sm:$0xff]
    %v10439 = vld [vmem:[#allocation9 + $0x50] sm:$0xff]
    %v10440 = vld [vmem:[#allocation9 + $0x58] sm:$0xff]
    %v10441 = vld [vmem:[#allocation9 + $0x60] sm:$0xff]
    %v10442 = vld [vmem:[#allocation9 + $0x68] sm:$0xff]
    %v10443 = vld [vmem:[#allocation9 + $0x70] sm:$0xff]
    %v10444 = vld [vmem:[#allocation9 + $0x78] sm:$0xff]
    %10445 = vmatprep.subr.mxu0 0.0
    %v10446 = vand.u32 %v10429, 4294901760
    %10447 = vmatpush1.msra.mxu0 %v10446
    %10448 = vmatprep.subr.mxu0 0.0
    %v10449 = vand.u32 %v10430, 4294901760
    %10450 = vmatpush1.msra.mxu0 %v10449
    %10451 = vmatprep.subr.mxu0 0.0
    %v10452 = vand.u32 %v10431, 4294901760
    %10453 = vmatpush1.msra.mxu0 %v10452
    %10454 = vmatprep.subr.mxu0 0.0
    %v10455 = vand.u32 %v10432, 4294901760
    %10456 = vmatpush1.msra.mxu0 %v10455
    %10457 = vmatprep.subr.mxu0 0.0
    %v10458 = vand.u32 %v10433, 4294901760
    %10459 = vmatpush1.msra.mxu0 %v10458
    %10460 = vmatprep.subr.mxu0 0.0
    %v10461 = vand.u32 %v10434, 4294901760
    %10462 = vmatpush1.msra.mxu0 %v10461
    %10463 = vmatprep.subr.mxu0 0.0
    %v10464 = vand.u32 %v10435, 4294901760
    %10465 = vmatpush1.msra.mxu0 %v10464
    %10466 = vmatprep.subr.mxu0 0.0
    %v10467 = vand.u32 %v10436, 4294901760
    %10468 = vmatpush1.msra.mxu0 %v10467
    %10469 = vmatprep.subr.mxu0 0.0
    %v10470 = vand.u32 %v10437, 4294901760
    %10471 = vmatpush1.msra.mxu0 %v10470
    %10472 = vmatprep.subr.mxu0 0.0
    %v10473 = vand.u32 %v10438, 4294901760
    %10474 = vmatpush1.msra.mxu0 %v10473
    %10475 = vmatprep.subr.mxu0 0.0
    %v10476 = vand.u32 %v10439, 4294901760
    %10477 = vmatpush1.msra.mxu0 %v10476
    %10478 = vmatprep.subr.mxu0 0.0
    %v10479 = vand.u32 %v10440, 4294901760
    %10480 = vmatpush1.msra.mxu0 %v10479
    %10481 = vmatprep.subr.mxu0 0.0
    %v10482 = vand.u32 %v10441, 4294901760
    %10483 = vmatpush1.msra.mxu0 %v10482
    %10484 = vmatprep.subr.mxu0 0.0
    %v10485 = vand.u32 %v10442, 4294901760
    %10486 = vmatpush1.msra.mxu0 %v10485
    %10487 = vmatprep.subr.mxu0 0.0
    %v10488 = vand.u32 %v10443, 4294901760
    %10489 = vmatpush1.msra.mxu0 %v10488
    %10490 = vmatprep.subr.mxu0 0.0
    %v10491 = vand.u32 %v10444, 4294901760
    %10492 = vmatpush1.msra.mxu0 %v10491
    %10493 = vmatprep.subr.mxu0 0.0
    %10494 = vmatpush1.msra.mxu0 0.0
    %10495 = vmatprep.subr.mxu0 0.0
    %10496 = vmatpush1.msra.mxu0 0.0
    %10497 = vmatprep.subr.mxu0 0.0
    %10498 = vmatpush1.msra.mxu0 0.0
    %10499 = vmatprep.subr.mxu0 0.0
    %10500 = vmatpush1.msra.mxu0 0.0
    %10501 = vmatprep.subr.mxu0 0.0
    %10502 = vmatpush1.msra.mxu0 0.0
    %10503 = vmatprep.subr.mxu0 0.0
    %10504 = vmatpush1.msra.mxu0 0.0
    %10505 = vmatprep.subr.mxu0 0.0
    %10506 = vmatpush1.msra.mxu0 0.0
    %10507 = vmatprep.subr.mxu0 0.0
    %10508 = vmatpush1.msra.mxu0 0.0
    %10509 = vmatprep.subr.mxu0 0.0
    %10510 = vmatpush1.msra.mxu0 0.0
    %10511 = vmatprep.subr.mxu0 0.0
    %10512 = vmatpush1.msra.mxu0 0.0
    %10513 = vmatprep.subr.mxu0 0.0
    %10514 = vmatpush1.msra.mxu0 0.0
    %10515 = vmatprep.subr.mxu0 0.0
    %10516 = vmatpush1.msra.mxu0 0.0
    %10517 = vmatprep.subr.mxu0 0.0
    %10518 = vmatpush1.msra.mxu0 0.0
    %10519 = vmatprep.subr.mxu0 0.0
    %10520 = vmatpush1.msra.mxu0 0.0
    %10521 = vmatprep.subr.mxu0 0.0
    %10522 = vmatpush1.msra.mxu0 0.0
    %10523 = vmatprep.subr.mxu0 0.0
    %10524 = vmatpush1.msra.mxu0 0.0
    %10525 = vmatprep.mubr.f32.mxu0 0.0
    %v10526 = vand.u32 %v10428, 4294901760
    %v10527 = vsub.f32 %v10428, %v10526
    %v10528 = vand.u32 %v10527, 4294901760
    %v10529 = vsub.f32 %v10527, %v10528
    %v10530 = vand.u32 %v10529, 4294901760
    %10531 = vmatmul.mubr.f32.gmra.mrb[0].mxu0 %v10530
    %v10532 = vpop.f32.mrb[0].mxu0
    %v10533 = vadd.f32 0.0, %v10532
    %v10534 = vpop.f32.mrb[0].mxu0
    %10535 = vdwg.mxu0
    %10536 = vmatprep.subr.mxu0 0.0
    %v10537 = vand.u32 %v10429, 4294901760
    %v10538 = vsub.f32 %v10429, %v10537
    %v10539 = vand.u32 %v10538, 4294901760
    %v10540 = vsub.f32 %v10538, %v10539
    %v10541 = vand.u32 %v10540, 4294901760
    %10542 = vmatpush1.msra.mxu0 %v10541
    %10543 = vmatprep.subr.mxu0 0.0
    %v10544 = vand.u32 %v10430, 4294901760
    %v10545 = vsub.f32 %v10430, %v10544
    %v10546 = vand.u32 %v10545, 4294901760
    %v10547 = vsub.f32 %v10545, %v10546
    %v10548 = vand.u32 %v10547, 4294901760
    %10549 = vmatpush1.msra.mxu0 %v10548
    %10550 = vmatprep.subr.mxu0 0.0
    %v10551 = vand.u32 %v10431, 4294901760
    %v10552 = vsub.f32 %v10431, %v10551
    %v10553 = vand.u32 %v10552, 4294901760
    %v10554 = vsub.f32 %v10552, %v10553
    %v10555 = vand.u32 %v10554, 4294901760
    %10556 = vmatpush1.msra.mxu0 %v10555
    %10557 = vmatprep.subr.mxu0 0.0
    %v10558 = vand.u32 %v10432, 4294901760
    %v10559 = vsub.f32 %v10432, %v10558
    %v10560 = vand.u32 %v10559, 4294901760
    %v10561 = vsub.f32 %v10559, %v10560
    %v10562 = vand.u32 %v10561, 4294901760
    %10563 = vmatpush1.msra.mxu0 %v10562
    %10564 = vmatprep.subr.mxu0 0.0
    %v10565 = vand.u32 %v10433, 4294901760
    %v10566 = vsub.f32 %v10433, %v10565
    %v10567 = vand.u32 %v10566, 4294901760
    %v10568 = vsub.f32 %v10566, %v10567
    %v10569 = vand.u32 %v10568, 4294901760
    %10570 = vmatpush1.msra.mxu0 %v10569
    %10571 = vmatprep.subr.mxu0 0.0
    %v10572 = vand.u32 %v10434, 4294901760
    %v10573 = vsub.f32 %v10434, %v10572
    %v10574 = vand.u32 %v10573, 4294901760
    %v10575 = vsub.f32 %v10573, %v10574
    %v10576 = vand.u32 %v10575, 4294901760
    %10577 = vmatpush1.msra.mxu0 %v10576
    %10578 = vmatprep.subr.mxu0 0.0
    %v10579 = vand.u32 %v10435, 4294901760
    %v10580 = vsub.f32 %v10435, %v10579
    %v10581 = vand.u32 %v10580, 4294901760
    %v10582 = vsub.f32 %v10580, %v10581
    %v10583 = vand.u32 %v10582, 4294901760
    %10584 = vmatpush1.msra.mxu0 %v10583
    %10585 = vmatprep.subr.mxu0 0.0
    %v10586 = vand.u32 %v10436, 4294901760
    %v10587 = vsub.f32 %v10436, %v10586
    %v10588 = vand.u32 %v10587, 4294901760
    %v10589 = vsub.f32 %v10587, %v10588
    %v10590 = vand.u32 %v10589, 4294901760
    %10591 = vmatpush1.msra.mxu0 %v10590
    %10592 = vmatprep.subr.mxu0 0.0
    %v10593 = vand.u32 %v10437, 4294901760
    %v10594 = vsub.f32 %v10437, %v10593
    %v10595 = vand.u32 %v10594, 4294901760
    %v10596 = vsub.f32 %v10594, %v10595
    %v10597 = vand.u32 %v10596, 4294901760
    %10598 = vmatpush1.msra.mxu0 %v10597
    %10599 = vmatprep.subr.mxu0 0.0
    %v10600 = vand.u32 %v10438, 4294901760
    %v10601 = vsub.f32 %v10438, %v10600
    %v10602 = vand.u32 %v10601, 4294901760
    %v10603 = vsub.f32 %v10601, %v10602
    %v10604 = vand.u32 %v10603, 4294901760
    %10605 = vmatpush1.msra.mxu0 %v10604
    %10606 = vmatprep.subr.mxu0 0.0
    %v10607 = vand.u32 %v10439, 4294901760
    %v10608 = vsub.f32 %v10439, %v10607
    %v10609 = vand.u32 %v10608, 4294901760
    %v10610 = vsub.f32 %v10608, %v10609
    %v10611 = vand.u32 %v10610, 4294901760
    %10612 = vmatpush1.msra.mxu0 %v10611
    %10613 = vmatprep.subr.mxu0 0.0
    %v10614 = vand.u32 %v10440, 4294901760
    %v10615 = vsub.f32 %v10440, %v10614
    %v10616 = vand.u32 %v10615, 4294901760
    %v10617 = vsub.f32 %v10615, %v10616
    %v10618 = vand.u32 %v10617, 4294901760
    %10619 = vmatpush1.msra.mxu0 %v10618
    %10620 = vmatprep.subr.mxu0 0.0
    %v10621 = vand.u32 %v10441, 4294901760
    %v10622 = vsub.f32 %v10441, %v10621
    %v10623 = vand.u32 %v10622, 4294901760
    %v10624 = vsub.f32 %v10622, %v10623
    %v10625 = vand.u32 %v10624, 4294901760
    %10626 = vmatpush1.msra.mxu0 %v10625
    %10627 = vmatprep.subr.mxu0 0.0
    %v10628 = vand.u32 %v10442, 4294901760
    %v10629 = vsub.f32 %v10442, %v10628
    %v10630 = vand.u32 %v10629, 4294901760
    %v10631 = vsub.f32 %v10629, %v10630
    %v10632 = vand.u32 %v10631, 4294901760
    %10633 = vmatpush1.msra.mxu0 %v10632
    %10634 = vmatprep.subr.mxu0 0.0
    %v10635 = vand.u32 %v10443, 4294901760
    %v10636 = vsub.f32 %v10443, %v10635
    %v10637 = vand.u32 %v10636, 4294901760
    %v10638 = vsub.f32 %v10636, %v10637
    %v10639 = vand.u32 %v10638, 4294901760
    %10640 = vmatpush1.msra.mxu0 %v10639
    %10641 = vmatprep.subr.mxu0 0.0
    %v10642 = vand.u32 %v10444, 4294901760
    %v10643 = vsub.f32 %v10444, %v10642
    %v10644 = vand.u32 %v10643, 4294901760
    %v10645 = vsub.f32 %v10643, %v10644
    %v10646 = vand.u32 %v10645, 4294901760
    %10647 = vmatpush1.msra.mxu0 %v10646
    %10648 = vmatprep.subr.mxu0 0.0
    %10649 = vmatpush1.msra.mxu0 0.0
    %10650 = vmatprep.subr.mxu0 0.0
    %10651 = vmatpush1.msra.mxu0 0.0
    %10652 = vmatprep.subr.mxu0 0.0
    %10653 = vmatpush1.msra.mxu0 0.0
    %10654 = vmatprep.subr.mxu0 0.0
    %10655 = vmatpush1.msra.mxu0 0.0
    %10656 = vmatprep.subr.mxu0 0.0
    %10657 = vmatpush1.msra.mxu0 0.0
    %10658 = vmatprep.subr.mxu0 0.0
    %10659 = vmatpush1.msra.mxu0 0.0
    %10660 = vmatprep.subr.mxu0 0.0
    %10661 = vmatpush1.msra.mxu0 0.0
    %10662 = vmatprep.subr.mxu0 0.0
    %10663 = vmatpush1.msra.mxu0 0.0
    %10664 = vmatprep.subr.mxu0 0.0
    %10665 = vmatpush1.msra.mxu0 0.0
    %10666 = vmatprep.subr.mxu0 0.0
    %10667 = vmatpush1.msra.mxu0 0.0
    %10668 = vmatprep.subr.mxu0 0.0
    %10669 = vmatpush1.msra.mxu0 0.0
    %10670 = vmatprep.subr.mxu0 0.0
    %10671 = vmatpush1.msra.mxu0 0.0
    %10672 = vmatprep.subr.mxu0 0.0
    %10673 = vmatpush1.msra.mxu0 0.0
    %10674 = vmatprep.subr.mxu0 0.0
    %10675 = vmatpush1.msra.mxu0 0.0
    %10676 = vmatprep.subr.mxu0 0.0
    %10677 = vmatpush1.msra.mxu0 0.0
    %10678 = vmatprep.subr.mxu0 0.0
    %10679 = vmatpush1.msra.mxu0 0.0
    %10680 = vmatprep.mubr.f32.mxu0 0.0
    %v10681 = vand.u32 %v10428, 4294901760
    %10682 = vmatmul.mubr.f32.gmra.mrb[0].mxu0 %v10681
    %v10683 = vpop.f32.mrb[0].mxu0
    %v10684 = vadd.f32 %v10533, %v10683
    %v10685 = vpop.f32.mrb[0].mxu0
    %10686 = vdwg.mxu0
    %10687 = vmatprep.subr.mxu0 0.0
    %v10688 = vand.u32 %v10429, 4294901760
    %v10689 = vsub.f32 %v10429, %v10688
    %10690 = vmatpush1.msra.mxu0 %v10689
    %10691 = vmatprep.subr.mxu0 0.0
    %v10692 = vand.u32 %v10430, 4294901760
    %v10693 = vsub.f32 %v10430, %v10692
    %10694 = vmatpush1.msra.mxu0 %v10693
    %10695 = vmatprep.subr.mxu0 0.0
    %v10696 = vand.u32 %v10431, 4294901760
    %v10697 = vsub.f32 %v10431, %v10696
    %10698 = vmatpush1.msra.mxu0 %v10697
    %10699 = vmatprep.subr.mxu0 0.0
    %v10700 = vand.u32 %v10432, 4294901760
    %v10701 = vsub.f32 %v10432, %v10700
    %10702 = vmatpush1.msra.mxu0 %v10701
    %10703 = vmatprep.subr.mxu0 0.0
    %v10704 = vand.u32 %v10433, 4294901760
    %v10705 = vsub.f32 %v10433, %v10704
    %10706 = vmatpush1.msra.mxu0 %v10705
    %10707 = vmatprep.subr.mxu0 0.0
    %v10708 = vand.u32 %v10434, 4294901760
    %v10709 = vsub.f32 %v10434, %v10708
    %10710 = vmatpush1.msra.mxu0 %v10709
    %10711 = vmatprep.subr.mxu0 0.0
    %v10712 = vand.u32 %v10435, 4294901760
    %v10713 = vsub.f32 %v10435, %v10712
    %10714 = vmatpush1.msra.mxu0 %v10713
    %10715 = vmatprep.subr.mxu0 0.0
    %v10716 = vand.u32 %v10436, 4294901760
    %v10717 = vsub.f32 %v10436, %v10716
    %10718 = vmatpush1.msra.mxu0 %v10717
    %10719 = vmatprep.subr.mxu0 0.0
    %v10720 = vand.u32 %v10437, 4294901760
    %v10721 = vsub.f32 %v10437, %v10720
    %10722 = vmatpush1.msra.mxu0 %v10721
    %10723 = vmatprep.subr.mxu0 0.0
    %v10724 = vand.u32 %v10438, 4294901760
    %v10725 = vsub.f32 %v10438, %v10724
    %10726 = vmatpush1.msra.mxu0 %v10725
    %10727 = vmatprep.subr.mxu0 0.0
    %v10728 = vand.u32 %v10439, 4294901760
    %v10729 = vsub.f32 %v10439, %v10728
    %10730 = vmatpush1.msra.mxu0 %v10729
    %10731 = vmatprep.subr.mxu0 0.0
    %v10732 = vand.u32 %v10440, 4294901760
    %v10733 = vsub.f32 %v10440, %v10732
    %10734 = vmatpush1.msra.mxu0 %v10733
    %10735 = vmatprep.subr.mxu0 0.0
    %v10736 = vand.u32 %v10441, 4294901760
    %v10737 = vsub.f32 %v10441, %v10736
    %10738 = vmatpush1.msra.mxu0 %v10737
    %10739 = vmatprep.subr.mxu0 0.0
    %v10740 = vand.u32 %v10442, 4294901760
    %v10741 = vsub.f32 %v10442, %v10740
    %10742 = vmatpush1.msra.mxu0 %v10741
    %10743 = vmatprep.subr.mxu0 0.0
    %v10744 = vand.u32 %v10443, 4294901760
    %v10745 = vsub.f32 %v10443, %v10744
    %10746 = vmatpush1.msra.mxu0 %v10745
    %10747 = vmatprep.subr.mxu0 0.0
    %v10748 = vand.u32 %v10444, 4294901760
    %v10749 = vsub.f32 %v10444, %v10748
    %10750 = vmatpush1.msra.mxu0 %v10749
    %10751 = vmatprep.subr.mxu0 0.0
    %10752 = vmatpush1.msra.mxu0 0.0
    %10753 = vmatprep.subr.mxu0 0.0
    %10754 = vmatpush1.msra.mxu0 0.0
    %10755 = vmatprep.subr.mxu0 0.0
    %10756 = vmatpush1.msra.mxu0 0.0
    %10757 = vmatprep.subr.mxu0 0.0
    %10758 = vmatpush1.msra.mxu0 0.0
    %10759 = vmatprep.subr.mxu0 0.0
    %10760 = vmatpush1.msra.mxu0 0.0
    %10761 = vmatprep.subr.mxu0 0.0
    %10762 = vmatpush1.msra.mxu0 0.0
    %10763 = vmatprep.subr.mxu0 0.0
    %10764 = vmatpush1.msra.mxu0 0.0
    %10765 = vmatprep.subr.mxu0 0.0
    %10766 = vmatpush1.msra.mxu0 0.0
    %10767 = vmatprep.subr.mxu0 0.0
    %10768 = vmatpush1.msra.mxu0 0.0
    %10769 = vmatprep.subr.mxu0 0.0
    %10770 = vmatpush1.msra.mxu0 0.0
    %10771 = vmatprep.subr.mxu0 0.0
    %10772 = vmatpush1.msra.mxu0 0.0
    %10773 = vmatprep.subr.mxu0 0.0
    %10774 = vmatpush1.msra.mxu0 0.0
    %10775 = vmatprep.subr.mxu0 0.0
    %10776 = vmatpush1.msra.mxu0 0.0
    %10777 = vmatprep.subr.mxu0 0.0
    %10778 = vmatpush1.msra.mxu0 0.0
    %10779 = vmatprep.subr.mxu0 0.0
    %10780 = vmatpush1.msra.mxu0 0.0
    %10781 = vmatprep.subr.mxu0 0.0
    %10782 = vmatpush1.msra.mxu0 0.0
    %10783 = vmatprep.mubr.f32.mxu0 0.0
    %v10784 = vand.u32 %v10428, 4294901760
    %v10785 = vsub.f32 %v10428, %v10784
    %10786 = vmatmul.mubr.f32.gmra.mrb[0].mxu0 %v10785
    %v10787 = vpop.f32.mrb[0].mxu0
    %v10788 = vadd.f32 %v10684, %v10787
    %v10789 = vpop.f32.mrb[0].mxu0
    %10790 = vdwg.mxu0
    %10791 = vmatprep.subr.mxu0 0.0
    %v10792 = vand.u32 %v10429, 4294901760
    %10793 = vmatpush1.msra.mxu0 %v10792
    %10794 = vmatprep.subr.mxu0 0.0
    %v10795 = vand.u32 %v10430, 4294901760
    %10796 = vmatpush1.msra.mxu0 %v10795
    %10797 = vmatprep.subr.mxu0 0.0
    %v10798 = vand.u32 %v10431, 4294901760
    %10799 = vmatpush1.msra.mxu0 %v10798
    %10800 = vmatprep.subr.mxu0 0.0
    %v10801 = vand.u32 %v10432, 4294901760
    %10802 = vmatpush1.msra.mxu0 %v10801
    %10803 = vmatprep.subr.mxu0 0.0
    %v10804 = vand.u32 %v10433, 4294901760
    %10805 = vmatpush1.msra.mxu0 %v10804
    %10806 = vmatprep.subr.mxu0 0.0
    %v10807 = vand.u32 %v10434, 4294901760
    %10808 = vmatpush1.msra.mxu0 %v10807
    %10809 = vmatprep.subr.mxu0 0.0
    %v10810 = vand.u32 %v10435, 4294901760
    %10811 = vmatpush1.msra.mxu0 %v10810
    %10812 = vmatprep.subr.mxu0 0.0
    %v10813 = vand.u32 %v10436, 4294901760
    %10814 = vmatpush1.msra.mxu0 %v10813
    %10815 = vmatprep.subr.mxu0 0.0
    %v10816 = vand.u32 %v10437, 4294901760
    %10817 = vmatpush1.msra.mxu0 %v10816
    %10818 = vmatprep.subr.mxu0 0.0
    %v10819 = vand.u32 %v10438, 4294901760
    %10820 = vmatpush1.msra.mxu0 %v10819
    %10821 = vmatprep.subr.mxu0 0.0
    %v10822 = vand.u32 %v10439, 4294901760
    %10823 = vmatpush1.msra.mxu0 %v10822
    %10824 = vmatprep.subr.mxu0 0.0
    %v10825 = vand.u32 %v10440, 4294901760
    %10826 = vmatpush1.msra.mxu0 %v10825
    %10827 = vmatprep.subr.mxu0 0.0
    %v10828 = vand.u32 %v10441, 4294901760
    %10829 = vmatpush1.msra.mxu0 %v10828
    %10830 = vmatprep.subr.mxu0 0.0
    %v10831 = vand.u32 %v10442, 4294901760
    %10832 = vmatpush1.msra.mxu0 %v10831
    %10833 = vmatprep.subr.mxu0 0.0
    %v10834 = vand.u32 %v10443, 4294901760
    %10835 = vmatpush1.msra.mxu0 %v10834
    %10836 = vmatprep.subr.mxu0 0.0
    %v10837 = vand.u32 %v10444, 4294901760
    %10838 = vmatpush1.msra.mxu0 %v10837
    %10839 = vmatprep.subr.mxu0 0.0
    %10840 = vmatpush1.msra.mxu0 0.0
    %10841 = vmatprep.subr.mxu0 0.0
    %10842 = vmatpush1.msra.mxu0 0.0
    %10843 = vmatprep.subr.mxu0 0.0
    %10844 = vmatpush1.msra.mxu0 0.0
    %10845 = vmatprep.subr.mxu0 0.0
    %10846 = vmatpush1.msra.mxu0 0.0
    %10847 = vmatprep.subr.mxu0 0.0
    %10848 = vmatpush1.msra.mxu0 0.0
    %10849 = vmatprep.subr.mxu0 0.0
    %10850 = vmatpush1.msra.mxu0 0.0
    %10851 = vmatprep.subr.mxu0 0.0
    %10852 = vmatpush1.msra.mxu0 0.0
    %10853 = vmatprep.subr.mxu0 0.0
    %10854 = vmatpush1.msra.mxu0 0.0
    %10855 = vmatprep.subr.mxu0 0.0
    %10856 = vmatpush1.msra.mxu0 0.0
    %10857 = vmatprep.subr.mxu0 0.0
    %10858 = vmatpush1.msra.mxu0 0.0
    %10859 = vmatprep.subr.mxu0 0.0
    %10860 = vmatpush1.msra.mxu0 0.0
    %10861 = vmatprep.subr.mxu0 0.0
    %10862 = vmatpush1.msra.mxu0 0.0
    %10863 = vmatprep.subr.mxu0 0.0
    %10864 = vmatpush1.msra.mxu0 0.0
    %10865 = vmatprep.subr.mxu0 0.0
    %10866 = vmatpush1.msra.mxu0 0.0
    %10867 = vmatprep.subr.mxu0 0.0
    %10868 = vmatpush1.msra.mxu0 0.0
    %10869 = vmatprep.subr.mxu0 0.0
    %10870 = vmatpush1.msra.mxu0 0.0
    %10871 = vmatprep.mubr.f32.mxu0 0.0
    %v10872 = vand.u32 %v10428, 4294901760
    %v10873 = vsub.f32 %v10428, %v10872
    %v10874 = vand.u32 %v10873, 4294901760
    %10875 = vmatmul.mubr.f32.gmra.mrb[0].mxu0 %v10874
    %v10876 = vpop.f32.mrb[0].mxu0
    %v10877 = vadd.f32 %v10788, %v10876
    %v10878 = vpop.f32.mrb[0].mxu0
    %10879 = vdwg.mxu0
    %10880 = vmatprep.subr.mxu0 0.0
    %v10881 = vand.u32 %v10429, 4294901760
    %v10882 = vsub.f32 %v10429, %v10881
    %v10883 = vand.u32 %v10882, 4294901760
    %10884 = vmatpush1.msra.mxu0 %v10883
    %10885 = vmatprep.subr.mxu0 0.0
    %v10886 = vand.u32 %v10430, 4294901760
    %v10887 = vsub.f32 %v10430, %v10886
    %v10888 = vand.u32 %v10887, 4294901760
    %10889 = vmatpush1.msra.mxu0 %v10888
    %10890 = vmatprep.subr.mxu0 0.0
    %v10891 = vand.u32 %v10431, 4294901760
    %v10892 = vsub.f32 %v10431, %v10891
    %v10893 = vand.u32 %v10892, 4294901760
    %10894 = vmatpush1.msra.mxu0 %v10893
    %10895 = vmatprep.subr.mxu0 0.0
    %v10896 = vand.u32 %v10432, 4294901760
    %v10897 = vsub.f32 %v10432, %v10896
    %v10898 = vand.u32 %v10897, 4294901760
    %10899 = vmatpush1.msra.mxu0 %v10898
    %10900 = vmatprep.subr.mxu0 0.0
    %v10901 = vand.u32 %v10433, 4294901760
    %v10902 = vsub.f32 %v10433, %v10901
    %v10903 = vand.u32 %v10902, 4294901760
    %10904 = vmatpush1.msra.mxu0 %v10903
    %10905 = vmatprep.subr.mxu0 0.0
    %v10906 = vand.u32 %v10434, 4294901760
    %v10907 = vsub.f32 %v10434, %v10906
    %v10908 = vand.u32 %v10907, 4294901760
    %10909 = vmatpush1.msra.mxu0 %v10908
    %10910 = vmatprep.subr.mxu0 0.0
    %v10911 = vand.u32 %v10435, 4294901760
    %v10912 = vsub.f32 %v10435, %v10911
    %v10913 = vand.u32 %v10912, 4294901760
    %10914 = vmatpush1.msra.mxu0 %v10913
    %10915 = vmatprep.subr.mxu0 0.0
    %v10916 = vand.u32 %v10436, 4294901760
    %v10917 = vsub.f32 %v10436, %v10916
    %v10918 = vand.u32 %v10917, 4294901760
    %10919 = vmatpush1.msra.mxu0 %v10918
    %10920 = vmatprep.subr.mxu0 0.0
    %v10921 = vand.u32 %v10437, 4294901760
    %v10922 = vsub.f32 %v10437, %v10921
    %v10923 = vand.u32 %v10922, 4294901760
    %10924 = vmatpush1.msra.mxu0 %v10923
    %10925 = vmatprep.subr.mxu0 0.0
    %v10926 = vand.u32 %v10438, 4294901760
    %v10927 = vsub.f32 %v10438, %v10926
    %v10928 = vand.u32 %v10927, 4294901760
    %10929 = vmatpush1.msra.mxu0 %v10928
    %10930 = vmatprep.subr.mxu0 0.0
    %v10931 = vand.u32 %v10439, 4294901760
    %v10932 = vsub.f32 %v10439, %v10931
    %v10933 = vand.u32 %v10932, 4294901760
    %10934 = vmatpush1.msra.mxu0 %v10933
    %10935 = vmatprep.subr.mxu0 0.0
    %v10936 = vand.u32 %v10440, 4294901760
    %v10937 = vsub.f32 %v10440, %v10936
    %v10938 = vand.u32 %v10937, 4294901760
    %10939 = vmatpush1.msra.mxu0 %v10938
    %10940 = vmatprep.subr.mxu0 0.0
    %v10941 = vand.u32 %v10441, 4294901760
    %v10942 = vsub.f32 %v10441, %v10941
    %v10943 = vand.u32 %v10942, 4294901760
    %10944 = vmatpush1.msra.mxu0 %v10943
    %10945 = vmatprep.subr.mxu0 0.0
    %v10946 = vand.u32 %v10442, 4294901760
    %v10947 = vsub.f32 %v10442, %v10946
    %v10948 = vand.u32 %v10947, 4294901760
    %10949 = vmatpush1.msra.mxu0 %v10948
    %10950 = vmatprep.subr.mxu0 0.0
    %v10951 = vand.u32 %v10443, 4294901760
    %v10952 = vsub.f32 %v10443, %v10951
    %v10953 = vand.u32 %v10952, 4294901760
    %10954 = vmatpush1.msra.mxu0 %v10953
    %10955 = vmatprep.subr.mxu0 0.0
    %v10956 = vand.u32 %v10444, 4294901760
    %v10957 = vsub.f32 %v10444, %v10956
    %v10958 = vand.u32 %v10957, 4294901760
    %10959 = vmatpush1.msra.mxu0 %v10958
    %10960 = vmatprep.subr.mxu0 0.0
    %10961 = vmatpush1.msra.mxu0 0.0
    %10962 = vmatprep.subr.mxu0 0.0
    %10963 = vmatpush1.msra.mxu0 0.0
    %10964 = vmatprep.subr.mxu0 0.0
    %10965 = vmatpush1.msra.mxu0 0.0
    %10966 = vmatprep.subr.mxu0 0.0
    %10967 = vmatpush1.msra.mxu0 0.0
    %10968 = vmatprep.subr.mxu0 0.0
    %10969 = vmatpush1.msra.mxu0 0.0
    %10970 = vmatprep.subr.mxu0 0.0
    %10971 = vmatpush1.msra.mxu0 0.0
    %10972 = vmatprep.subr.mxu0 0.0
    %10973 = vmatpush1.msra.mxu0 0.0
    %10974 = vmatprep.subr.mxu0 0.0
    %10975 = vmatpush1.msra.mxu0 0.0
    %10976 = vmatprep.subr.mxu0 0.0
    %10977 = vmatpush1.msra.mxu0 0.0
    %10978 = vmatprep.subr.mxu0 0.0
    %10979 = vmatpush1.msra.mxu0 0.0
    %10980 = vmatprep.subr.mxu0 0.0
    %10981 = vmatpush1.msra.mxu0 0.0
    %10982 = vmatprep.subr.mxu0 0.0
    %10983 = vmatpush1.msra.mxu0 0.0
    %10984 = vmatprep.subr.mxu0 0.0
    %10985 = vmatpush1.msra.mxu0 0.0
    %10986 = vmatprep.subr.mxu0 0.0
    %10987 = vmatpush1.msra.mxu0 0.0
    %10988 = vmatprep.subr.mxu0 0.0
    %10989 = vmatpush1.msra.mxu0 0.0
    %10990 = vmatprep.subr.mxu0 0.0
    %10991 = vmatpush1.msra.mxu0 0.0
    %10992 = vmatprep.mubr.f32.mxu0 0.0
    %v10993 = vand.u32 %v10428, 4294901760
    %10994 = vmatmul.mubr.f32.gmra.mrb[0].mxu0 %v10993
    %v10995 = vpop.f32.mrb[0].mxu0
    %v10996 = vadd.f32 %v10877, %v10995
    %v10997 = vpop.f32.mrb[0].mxu0
    %10998 = vdwg.mxu0
    %10999 = vmatprep.subr.mxu0 0.0
    %v11000 = vand.u32 %v10429, 4294901760
    %11001 = vmatpush1.msra.mxu0 %v11000
    %11002 = vmatprep.subr.mxu0 0.0
    %v11003 = vand.u32 %v10430, 4294901760
    %11004 = vmatpush1.msra.mxu0 %v11003
    %11005 = vmatprep.subr.mxu0 0.0
    %v11006 = vand.u32 %v10431, 4294901760
    %11007 = vmatpush1.msra.mxu0 %v11006
    %11008 = vmatprep.subr.mxu0 0.0
    %v11009 = vand.u32 %v10432, 4294901760
    %11010 = vmatpush1.msra.mxu0 %v11009
    %11011 = vmatprep.subr.mxu0 0.0
    %v11012 = vand.u32 %v10433, 4294901760
    %11013 = vmatpush1.msra.mxu0 %v11012
    %11014 = vmatprep.subr.mxu0 0.0
    %v11015 = vand.u32 %v10434, 4294901760
    %11016 = vmatpush1.msra.mxu0 %v11015
    %11017 = vmatprep.subr.mxu0 0.0
    %v11018 = vand.u32 %v10435, 4294901760
    %11019 = vmatpush1.msra.mxu0 %v11018
    %11020 = vmatprep.subr.mxu0 0.0
    %v11021 = vand.u32 %v10436, 4294901760
    %11022 = vmatpush1.msra.mxu0 %v11021
    %11023 = vmatprep.subr.mxu0 0.0
    %v11024 = vand.u32 %v10437, 4294901760
    %11025 = vmatpush1.msra.mxu0 %v11024
    %11026 = vmatprep.subr.mxu0 0.0
    %v11027 = vand.u32 %v10438, 4294901760
    %11028 = vmatpush1.msra.mxu0 %v11027
    %11029 = vmatprep.subr.mxu0 0.0
    %v11030 = vand.u32 %v10439, 4294901760
    %11031 = vmatpush1.msra.mxu0 %v11030
    %11032 = vmatprep.subr.mxu0 0.0
    %v11033 = vand.u32 %v10440, 4294901760
    %11034 = vmatpush1.msra.mxu0 %v11033
    %11035 = vmatprep.subr.mxu0 0.0
    %v11036 = vand.u32 %v10441, 4294901760
    %11037 = vmatpush1.msra.mxu0 %v11036
    %11038 = vmatprep.subr.mxu0 0.0
    %v11039 = vand.u32 %v10442, 4294901760
    %11040 = vmatpush1.msra.mxu0 %v11039
    %11041 = vmatprep.subr.mxu0 0.0
    %v11042 = vand.u32 %v10443, 4294901760
    %11043 = vmatpush1.msra.mxu0 %v11042
    %11044 = vmatprep.subr.mxu0 0.0
    %v11045 = vand.u32 %v10444, 4294901760
    %11046 = vmatpush1.msra.mxu0 %v11045
    %11047 = vmatprep.subr.mxu0 0.0
    %11048 = vmatpush1.msra.mxu0 0.0
    %11049 = vmatprep.subr.mxu0 0.0
    %11050 = vmatpush1.msra.mxu0 0.0
    %11051 = vmatprep.subr.mxu0 0.0
    %11052 = vmatpush1.msra.mxu0 0.0
    %11053 = vmatprep.subr.mxu0 0.0
    %11054 = vmatpush1.msra.mxu0 0.0
    %11055 = vmatprep.subr.mxu0 0.0
    %11056 = vmatpush1.msra.mxu0 0.0
    %11057 = vmatprep.subr.mxu0 0.0
    %11058 = vmatpush1.msra.mxu0 0.0
    %11059 = vmatprep.subr.mxu0 0.0
    %11060 = vmatpush1.msra.mxu0 0.0
    %11061 = vmatprep.subr.mxu0 0.0
    %11062 = vmatpush1.msra.mxu0 0.0
    %11063 = vmatprep.subr.mxu0 0.0
    %11064 = vmatpush1.msra.mxu0 0.0
    %11065 = vmatprep.subr.mxu0 0.0
    %11066 = vmatpush1.msra.mxu0 0.0
    %11067 = vmatprep.subr.mxu0 0.0
    %11068 = vmatpush1.msra.mxu0 0.0
    %11069 = vmatprep.subr.mxu0 0.0
    %11070 = vmatpush1.msra.mxu0 0.0
    %11071 = vmatprep.subr.mxu0 0.0
    %11072 = vmatpush1.msra.mxu0 0.0
    %11073 = vmatprep.subr.mxu0 0.0
    %11074 = vmatpush1.msra.mxu0 0.0
    %11075 = vmatprep.subr.mxu0 0.0
    %11076 = vmatpush1.msra.mxu0 0.0
    %11077 = vmatprep.subr.mxu0 0.0
    %11078 = vmatpush1.msra.mxu0 0.0
    %11079 = vmatprep.mubr.f32.mxu0 0.0
    %v11080 = vand.u32 %v10428, 4294901760
    %11081 = vmatmul.mubr.f32.gmra.mrb[0].mxu0 %v11080
    %v11082 = vpop.f32.mrb[0].mxu0
    %v11083 = vadd.f32 %v10996, %v11082
    %v11084 = vpop.f32.mrb[0].mxu0
    %11085 = vdwg.mxu0
    %v11086 = vadd.f32 %v9526, %v11083
    %v11087 = vtanh.pop %v11086
    %v11088 = vsub.f32 1.0, %v10420
    %v11089 = vmul.f32 %v11088, %v9522
    %v11090 = vmul.f32 %v10420, %v11087
    %v11091 = vadd.f32 %v11089, %v11090
    %s11092 = scalar_lea.vmem [#allocation11], 48
    %11093 = vst [vmem:[%s11092] sm:$0xff] %v11091
    %11094 = vst [vmem:[#allocation2] sm:$0xff] %v11091
    // Predicated region
    $region38: #{tpu_custom_call.1} parent=1 // pred_check
      _
    $region39: #{tpu_custom_call.1} parent=1 // pred_check_branch
      %11096 = sbr.rel (0) target = $region41
    $region40: #{tpu_custom_call.1} parent=1 // pred_region
      %s11098 = ssub.s32 896, 896
      %11099 = vsyncadd [#allocation5], %s11098
      %s11100 = sshll.u32 [#allocation11], 4
      %s11101 = int_to_ptr.vmem [resolvable:$true] %s11100
      %11106 = dma.vmem_to_hbm [thread:$0]  %s11101, 896, %s4, [#allocation5], 128, 128, 8
    $region41: #{tpu_custom_call.1} parent=1 // pred_fallthru
      _
    // Predicated region
    $region42: #{tpu_custom_call.1} parent=1 // pred_check
      _
    $region43: #{tpu_custom_call.1} parent=1 // pred_check_branch
      %11108 = sbr.rel (0) target = $region45
    $region44: #{tpu_custom_call.1} parent=1 // pred_region
      %11109 = dma.done [#allocation5], 896
    $region45: #{tpu_custom_call.1} parent=1 // pred_fallthru
      _
    %11110 = vsyncpa [#allocation4], 1
    %11111 = vsyncpa [#allocation7], 1
    %11112 = vsyncpa [#allocation10], 1
    %11113 = vsyncpa [#allocation5], 1

</llo_original>
